<compile_context>
chip_gen: v5e
topology: v5e:2x2
jax: 0.10.0
libtpu: 0.0.40
codegen_flags: <defaults>
</compile_context>

<pallas_src>
import functools

import jax
import jax.numpy as jnp
import numpy as np
from jax import lax
from jax.experimental import pallas as pl
from jax.experimental.pallas import tpu as pltpu

# Network constants (match PtSrcnn).
K1, PAD1, C1 = 9, 4, 64      # conv1: 9x9, c_dim -> 64, pad 4
C2 = 32                      # conv2: 1x1, 64 -> 32
K3, PAD3 = 5, 2              # conv3: 5x5, 32 -> c_dim, pad 2


def _srcnn_kernel(x_ref, w1_ref, b1_ref, w2_ref, b2_ref, w3_ref, b3_ref,
                  o_ref, xw_ref, h2p_ref, h2w_ref, *, B, H, W, c_in, cp):
    """Fused SRCNN forward for B images resident in VMEM.

    All convs run as wide-K GEMMs on the MXU (bf16 operands, f32 accumulate);
    per-kh partial sums are carried in vregs and written out once.
    """
    M = B * H * W
    HP3, WP3 = H + 2 * PAD3, W + 2 * PAD3

    # ---------------- conv1 row-im2col assembly (once per block) ----------------
    # xw[b, r, j, kw*c_in + c] = x_pad[b, r, j + kw, c]
    for kw in range(K1):
        xw_ref[:, :, :, kw * c_in:(kw + 1) * c_in] = (
            x_ref[:, :, kw:kw + W, :].astype(jnp.bfloat16))

    # ---------------- conv1 (9x9, c_in -> 64) + ReLU: 9 GEMMs, K = K1*c_in ------
    acc1 = jnp.zeros((M, C1), jnp.float32)
    for kh in range(K1):
        lhs = xw_ref[:, kh:kh + H, :, :].reshape(M, K1 * c_in)      # bf16, contiguous
        acc1 = acc1 + jnp.dot(lhs, w1_ref[kh],
                              preferred_element_type=jnp.float32)
    h1 = jnp.maximum(acc1 + b1_ref[...], 0.0)                       # (M, C1) f32

    # ---------------- conv2 (1x1, 64 -> 32) + ReLU: a single GEMM ---------------
    h2 = jnp.maximum(
        jnp.dot(h1.astype(jnp.bfloat16), w2_ref[...],
                preferred_element_type=jnp.float32) + b2_ref[...],
        0.0)                                                        # (M, C2) f32

    # ---------------- conv3 halo pad: zero ONLY the PAD3 ring -------------------
    # (interior is overwritten every grid step; ring re-zeroed per step so the
    #  kernel is correct under megacore grid splitting.)
    h2p_ref[:, 0:PAD3, :, :] = jnp.zeros((B, PAD3, WP3, C2), jnp.bfloat16)
    h2p_ref[:, PAD3 + H:HP3, :, :] = jnp.zeros((B, PAD3, WP3, C2), jnp.bfloat16)
    h2p_ref[:, PAD3:PAD3 + H, 0:PAD3, :] = jnp.zeros((B, H, PAD3, C2), jnp.bfloat16)
    h2p_ref[:, PAD3:PAD3 + H, PAD3 + W:WP3, :] = jnp.zeros((B, H, PAD3, C2), jnp.bfloat16)
    h2p_ref[:, PAD3:PAD3 + H, PAD3:PAD3 + W, :] = (
        h2.astype(jnp.bfloat16).reshape(B, H, W, C2))

    # ---------------- conv3 row-im2col assembly ----------------------------------
    # h2w[b, r, j, kw*C2 + c] = h2_pad[b, r, j + kw, c]
    for kw in range(K3):
        h2w_ref[:, :, :, kw * C2:(kw + 1) * C2] = h2p_ref[:, :, kw:kw + W, :]

    # ---------------- conv3 (5x5, 32 -> cp) + ReLU: 5 GEMMs, K = K3*C2 = 160 ----
    acc3 = jnp.zeros((M, cp), jnp.float32)
    for kh in range(K3):
        lhs = h2w_ref[:, kh:kh + H, :, :].reshape(M, K3 * C2)       # bf16, contiguous
        acc3 = acc3 + jnp.dot(lhs, w3_ref[kh],
                              preferred_element_type=jnp.float32)
    out = jnp.maximum(acc3 + b3_ref[...], 0.0)                      # (M, cp) f32

    # ---------------- lane-dense epilogue: (cp, H*W) per image -------------------
    outb = out.reshape(B, H * W, cp)
    for b in range(B):
        o_ref[b] = outb[b].T                                        # (cp, H*W)


def _pick_batch_tile(n):
    """Largest divisor of n <= 8, preferring >= 2 grid steps (megacore split)."""
    divs = [d for d in range(1, min(n, 8) + 1) if n % d == 0]
    two_step = [d for d in divs if n // d >= 2]
    return max(two_step) if two_step else max(divs)


def _srcnn_forward_impl(x_nchw, params):
    N, c_in, H, W = x_nchw.shape
    c_out = c_in
    HW = H * W
    cp = ((c_out + 7) // 8) * 8                   # pad output channels to 8
    Hp, Wp = H + 2 * PAD1, W + 2 * PAD1
    bt = _pick_batch_tile(N)

    # Layout glue on the tiny input only: NCHW -> NHWC + conv1 halo padding.
    x_nhwc = jnp.transpose(x_nchw, (0, 2, 3, 1)).astype(jnp.float32)
    xp = jnp.pad(x_nhwc, ((0, 0), (PAD1, PAD1), (PAD1, PAD1), (0, 0)))

    # Dense per-kh weight slabs, cast once to bf16 MXU operands in the wrapper.
    w1p = params["w1"].reshape(K1, K1 * c_in, C1).astype(jnp.bfloat16)
    w2p = params["w2"].reshape(C1, C2).astype(jnp.bfloat16)
    w3f = jnp.pad(params["w3"], ((0, 0), (0, 0), (0, 0), (0, cp - c_out)))
    w3p = w3f.reshape(K3, K3 * C2, cp).astype(jnp.bfloat16)
    b1 = params["b1"].reshape(1, C1).astype(jnp.float32)
    b2 = params["b2"].reshape(1, C2).astype(jnp.float32)
    b3 = jnp.pad(params["b3"], (0, cp - c_out)).reshape(1, cp).astype(jnp.float32)

    kernel = functools.partial(_srcnn_kernel, B=bt, H=H, W=W, c_in=c_in, cp=cp)

    flops = 2 * N * HW * (K1 * K1 * c_in * C1 + C1 * C2 + K3 * K3 * C2 * cp)
    bytes_accessed = (4 * (xp.size + b1.size + b2.size + b3.size + N * cp * HW)
                      + 2 * (w1p.size + w2p.size + w3p.size))

    out = pl.pallas_call(
        kernel,
        out_shape=jax.ShapeDtypeStruct((N, cp, HW), jnp.float32),
        grid_spec=pltpu.PrefetchScalarGridSpec(
            num_scalar_prefetch=0,
            grid=(N // bt,),
            in_specs=[
                pl.BlockSpec((bt, Hp, Wp, c_in), lambda n: (n, 0, 0, 0)),
                pl.BlockSpec((K1, K1 * c_in, C1), lambda n: (0, 0, 0)),
                pl.BlockSpec((1, C1), lambda n: (0, 0)),
                pl.BlockSpec((C1, C2), lambda n: (0, 0)),
                pl.BlockSpec((1, C2), lambda n: (0, 0)),
                pl.BlockSpec((K3, K3 * C2, cp), lambda n: (0, 0, 0)),
                pl.BlockSpec((1, cp), lambda n: (0, 0)),
            ],
            out_specs=pl.BlockSpec((bt, cp, HW), lambda n: (n, 0, 0)),
            scratch_shapes=[
                pltpu.VMEM((bt, Hp, W, K1 * c_in), jnp.bfloat16),             # conv1 row-im2col
                pltpu.VMEM((bt, H + 2 * PAD3, W + 2 * PAD3, C2), jnp.bfloat16),  # padded h2
                pltpu.VMEM((bt, H + 2 * PAD3, W, K3 * C2), jnp.bfloat16),     # conv3 row-im2col
            ],
        ),
        compiler_params=pltpu.CompilerParams(
            dimension_semantics=("parallel",),        # megacore: shard over batch blocks
            vmem_limit_bytes=32 * 1024 * 1024,
        ),
        cost_estimate=pl.CostEstimate(
            flops=flops, transcendentals=0, bytes_accessed=bytes_accessed),
    )(xp, w1p, b1, w2p, b2, w3p, b3)

    # Lane-dense kernel output (N, cp, HW): slice padded channels, free reshape.
    return out[:, :c_out, :].reshape(N, c_out, H, W)


srcnn_forward = jax.jit(_srcnn_forward_impl)


def init_srcnn_params(c_dim, key):
    """Deterministic synthetic parameters (shapes match nn.Conv2d in PtSrcnn)."""
    ks = jax.random.split(key, 6)

    def init_conv(kw_key, kb_key, k, cin, cout):
        fan_in = k * k * cin
        w = jax.random.normal(kw_key, (k, k, cin, cout), jnp.float32) / np.sqrt(fan_in)
        b = jax.random.normal(kb_key, (cout,), jnp.float32) * 0.01
        return w, b

    w1, b1 = init_conv(ks[0], ks[1], K1, c_dim, C1)
    w2, b2 = init_conv(ks[2], ks[3], 1, C1, C2)
    w3, b3 = init_conv(ks[4], ks[5], K3, C2, c_dim)
    return dict(w1=w1, b1=b1, w2=w2, b2=b2, w3=w3, b3=b3)


def srcnn_reference(x_nchw, params):
    """Pure-JAX reference (lax.conv, f32 highest precision) for correctness."""
    x = jnp.transpose(x_nchw, (0, 2, 3, 1))
    dn = lax.conv_dimension_numbers(x.shape, params["w1"].shape,
                                    ("NHWC", "HWIO", "NHWC"))

    def conv(h, w, b, pad):
        y = lax.conv_general_dilated(h, w, (1, 1), [(pad, pad), (pad, pad)],
                                     dimension_numbers=dn,
                                     precision=lax.Precision.HIGHEST)
        return jnp.maximum(y + b, 0.0)

    h = conv(x, params["w1"], params["b1"], PAD1)
    h = conv(h, params["w2"], params["b2"], 0)
    h = conv(h, params["w3"], params["b3"], PAD3)
    return jnp.transpose(h, (0, 3, 1, 2))


if __name__ == "__main__":
    key = jax.random.PRNGKey(0)
    k_x, k_p = jax.random.split(key)

    C_DIM = 4
    x = jax.random.normal(k_x, (2, C_DIM, 16, 16), jnp.float32)   # NCHW, like PyTorch
    params = init_srcnn_params(C_DIM, k_p)

    out = jax.block_until_ready(srcnn_forward(x, params))
    ref = jax.block_until_ready(srcnn_reference(x, params))

    assert out.shape == (2, C_DIM, 16, 16)
    # bf16 MXU operands with f32 accumulation -> loosened tolerance per review.
    np.testing.assert_allclose(np.asarray(out), np.asarray(ref),
                               rtol=2e-2, atol=2e-2)

    print("KERNEL_OK")
</pallas_src>

<mosaic_0001>
module attributes {stable_mosaic.version = 11 : i64} {
  func.func @_srcnn_kernel(%arg0: i32, %arg1: memref<1x24x24x4xf32, #tpu.memory_space<vmem>>, %arg2: memref<9x36x64xbf16, #tpu.memory_space<vmem>>, %arg3: memref<1x64xf32, #tpu.memory_space<vmem>>, %arg4: memref<64x32xbf16, #tpu.memory_space<vmem>>, %arg5: memref<1x32xf32, #tpu.memory_space<vmem>>, %arg6: memref<5x160x8xbf16, #tpu.memory_space<vmem>>, %arg7: memref<1x8xf32, #tpu.memory_space<vmem>>, %arg8: memref<1x8x256xf32, #tpu.memory_space<vmem>>, %arg9: memref<1x24x16x36xbf16, #tpu.memory_space<vmem>>, %arg10: memref<1x20x20x32xbf16, #tpu.memory_space<vmem>>, %arg11: memref<1x20x16x160xbf16, #tpu.memory_space<vmem>>) attributes {dimension_semantics = [#tpu.dimension_semantics<parallel>], iteration_bounds = array<i64: 2>, scalar_prefetch = 0 : i64, scratch_operands = 3 : i64, tpu.core_type = #tpu.core_type<tc>, window_params = [{transform_indices = @transform_0, window_bounds = array<i64: 1, 24, 24, 4>}, {pipeline_mode = #tpu.pipeline_mode<synchronous>, transform_indices = @transform_1, window_bounds = array<i64: 9, 36, 64>}, {pipeline_mode = #tpu.pipeline_mode<synchronous>, transform_indices = @transform_2, window_bounds = array<i64: 1, 64>}, {pipeline_mode = #tpu.pipeline_mode<synchronous>, transform_indices = @transform_3, window_bounds = array<i64: 64, 32>}, {pipeline_mode = #tpu.pipeline_mode<synchronous>, transform_indices = @transform_4, window_bounds = array<i64: 1, 32>}, {pipeline_mode = #tpu.pipeline_mode<synchronous>, transform_indices = @transform_5, window_bounds = array<i64: 5, 160, 8>}, {pipeline_mode = #tpu.pipeline_mode<synchronous>, transform_indices = @transform_6, window_bounds = array<i64: 1, 8>}, {transform_indices = @transform_7, window_bounds = array<i64: 1, 8, 256>}]} {
    %c0 = arith.constant 0 : index
    %c0_0 = arith.constant 0 : index
    %c0_1 = arith.constant 0 : index
    %c0_2 = arith.constant 0 : index
    %0 = vector.load %arg1[%c0, %c0_0, %c0_1, %c0_2] : memref<1x24x24x4xf32, #tpu.memory_space<vmem>>, vector<1x24x16x4xf32>
    %1 = arith.truncf %0 : vector<1x24x16x4xf32> to vector<1x24x16x4xbf16>
    %c0_3 = arith.constant 0 : index
    %c0_4 = arith.constant 0 : index
    %c0_5 = arith.constant 0 : index
    %c0_6 = arith.constant 0 : index
    %2 = vector.load %arg9[%c0_3, %c0_4, %c0_5, %c0_6] : memref<1x24x16x36xbf16, #tpu.memory_space<vmem>>, vector<1x24x16x4xbf16>
    tpu.vector_store %arg9[%c0_3, %c0_4, %c0_5, %c0_6], %1 {strides = array<i32>} : memref<1x24x16x36xbf16, #tpu.memory_space<vmem>>, vector<1x24x16x4xbf16>,
    %c0_7 = arith.constant 0 : index
    %c0_8 = arith.constant 0 : index
    %c1 = arith.constant 1 : index
    %c0_9 = arith.constant 0 : index
    %3 = vector.load %arg1[%c0_7, %c0_8, %c1, %c0_9] : memref<1x24x24x4xf32, #tpu.memory_space<vmem>>, vector<1x24x16x4xf32>
    %4 = arith.truncf %3 : vector<1x24x16x4xf32> to vector<1x24x16x4xbf16>
    %c0_10 = arith.constant 0 : index
    %c0_11 = arith.constant 0 : index
    %c0_12 = arith.constant 0 : index
    %c4 = arith.constant 4 : index
    %5 = vector.load %arg9[%c0_10, %c0_11, %c0_12, %c4] : memref<1x24x16x36xbf16, #tpu.memory_space<vmem>>, vector<1x24x16x4xbf16>
    tpu.vector_store %arg9[%c0_10, %c0_11, %c0_12, %c4], %4 {strides = array<i32>} : memref<1x24x16x36xbf16, #tpu.memory_space<vmem>>, vector<1x24x16x4xbf16>,
    %c0_13 = arith.constant 0 : index
    %c0_14 = arith.constant 0 : index
    %c2 = arith.constant 2 : index
    %c0_15 = arith.constant 0 : index
    %6 = vector.load %arg1[%c0_13, %c0_14, %c2, %c0_15] : memref<1x24x24x4xf32, #tpu.memory_space<vmem>>, vector<1x24x16x4xf32>
    %7 = arith.truncf %6 : vector<1x24x16x4xf32> to vector<1x24x16x4xbf16>
    %c0_16 = arith.constant 0 : index
    %c0_17 = arith.constant 0 : index
    %c0_18 = arith.constant 0 : index
    %c8 = arith.constant 8 : index
    %8 = vector.load %arg9[%c0_16, %c0_17, %c0_18, %c8] : memref<1x24x16x36xbf16, #tpu.memory_space<vmem>>, vector<1x24x16x4xbf16>
    tpu.vector_store %arg9[%c0_16, %c0_17, %c0_18, %c8], %7 {strides = array<i32>} : memref<1x24x16x36xbf16, #tpu.memory_space<vmem>>, vector<1x24x16x4xbf16>,
    %c0_19 = arith.constant 0 : index
    %c0_20 = arith.constant 0 : index
    %c3 = arith.constant 3 : index
    %c0_21 = arith.constant 0 : index
    %9 = vector.load %arg1[%c0_19, %c0_20, %c3, %c0_21] : memref<1x24x24x4xf32, #tpu.memory_space<vmem>>, vector<1x24x16x4xf32>
    %10 = arith.truncf %9 : vector<1x24x16x4xf32> to vector<1x24x16x4xbf16>
    %c0_22 = arith.constant 0 : index
    %c0_23 = arith.constant 0 : index
    %c0_24 = arith.constant 0 : index
    %c12 = arith.constant 12 : index
    %11 = vector.load %arg9[%c0_22, %c0_23, %c0_24, %c12] : memref<1x24x16x36xbf16, #tpu.memory_space<vmem>>, vector<1x24x16x4xbf16>
    tpu.vector_store %arg9[%c0_22, %c0_23, %c0_24, %c12], %10 {strides = array<i32>} : memref<1x24x16x36xbf16, #tpu.memory_space<vmem>>, vector<1x24x16x4xbf16>,
    %c0_25 = arith.constant 0 : index
    %c0_26 = arith.constant 0 : index
    %c4_27 = arith.constant 4 : index
    %c0_28 = arith.constant 0 : index
    %12 = vector.load %arg1[%c0_25, %c0_26, %c4_27, %c0_28] : memref<1x24x24x4xf32, #tpu.memory_space<vmem>>, vector<1x24x16x4xf32>
    %13 = arith.truncf %12 : vector<1x24x16x4xf32> to vector<1x24x16x4xbf16>
    %c0_29 = arith.constant 0 : index
    %c0_30 = arith.constant 0 : index
    %c0_31 = arith.constant 0 : index
    %c16 = arith.constant 16 : index
    %14 = vector.load %arg9[%c0_29, %c0_30, %c0_31, %c16] : memref<1x24x16x36xbf16, #tpu.memory_space<vmem>>, vector<1x24x16x4xbf16>
    tpu.vector_store %arg9[%c0_29, %c0_30, %c0_31, %c16], %13 {strides = array<i32>} : memref<1x24x16x36xbf16, #tpu.memory_space<vmem>>, vector<1x24x16x4xbf16>,
    %c0_32 = arith.constant 0 : index
    %c0_33 = arith.constant 0 : index
    %c5 = arith.constant 5 : index
    %c0_34 = arith.constant 0 : index
    %15 = vector.load %arg1[%c0_32, %c0_33, %c5, %c0_34] : memref<1x24x24x4xf32, #tpu.memory_space<vmem>>, vector<1x24x16x4xf32>
    %16 = arith.truncf %15 : vector<1x24x16x4xf32> to vector<1x24x16x4xbf16>
    %c0_35 = arith.constant 0 : index
    %c0_36 = arith.constant 0 : index
    %c0_37 = arith.constant 0 : index
    %c20 = arith.constant 20 : index
    %17 = vector.load %arg9[%c0_35, %c0_36, %c0_37, %c20] : memref<1x24x16x36xbf16, #tpu.memory_space<vmem>>, vector<1x24x16x4xbf16>
    tpu.vector_store %arg9[%c0_35, %c0_36, %c0_37, %c20], %16 {strides = array<i32>} : memref<1x24x16x36xbf16, #tpu.memory_space<vmem>>, vector<1x24x16x4xbf16>,
    %c0_38 = arith.constant 0 : index
    %c0_39 = arith.constant 0 : index
    %c6 = arith.constant 6 : index
    %c0_40 = arith.constant 0 : index
    %18 = vector.load %arg1[%c0_38, %c0_39, %c6, %c0_40] : memref<1x24x24x4xf32, #tpu.memory_space<vmem>>, vector<1x24x16x4xf32>
    %19 = arith.truncf %18 : vector<1x24x16x4xf32> to vector<1x24x16x4xbf16>
    %c0_41 = arith.constant 0 : index
    %c0_42 = arith.constant 0 : index
    %c0_43 = arith.constant 0 : index
    %c24 = arith.constant 24 : index
    %20 = vector.load %arg9[%c0_41, %c0_42, %c0_43, %c24] : memref<1x24x16x36xbf16, #tpu.memory_space<vmem>>, vector<1x24x16x4xbf16>
    tpu.vector_store %arg9[%c0_41, %c0_42, %c0_43, %c24], %19 {strides = array<i32>} : memref<1x24x16x36xbf16, #tpu.memory_space<vmem>>, vector<1x24x16x4xbf16>,
    %c0_44 = arith.constant 0 : index
    %c0_45 = arith.constant 0 : index
    %c7 = arith.constant 7 : index
    %c0_46 = arith.constant 0 : index
    %21 = vector.load %arg1[%c0_44, %c0_45, %c7, %c0_46] : memref<1x24x24x4xf32, #tpu.memory_space<vmem>>, vector<1x24x16x4xf32>
    %22 = arith.truncf %21 : vector<1x24x16x4xf32> to vector<1x24x16x4xbf16>
    %c0_47 = arith.constant 0 : index
    %c0_48 = arith.constant 0 : index
    %c0_49 = arith.constant 0 : index
    %c28 = arith.constant 28 : index
    %23 = vector.load %arg9[%c0_47, %c0_48, %c0_49, %c28] : memref<1x24x16x36xbf16, #tpu.memory_space<vmem>>, vector<1x24x16x4xbf16>
    tpu.vector_store %arg9[%c0_47, %c0_48, %c0_49, %c28], %22 {strides = array<i32>} : memref<1x24x16x36xbf16, #tpu.memory_space<vmem>>, vector<1x24x16x4xbf16>,
    %c0_50 = arith.constant 0 : index
    %c0_51 = arith.constant 0 : index
    %c8_52 = arith.constant 8 : index
    %c0_53 = arith.constant 0 : index
    %24 = vector.load %arg1[%c0_50, %c0_51, %c8_52, %c0_53] : memref<1x24x24x4xf32, #tpu.memory_space<vmem>>, vector<1x24x16x4xf32>
    %25 = arith.truncf %24 : vector<1x24x16x4xf32> to vector<1x24x16x4xbf16>
    %c0_54 = arith.constant 0 : index
    %c0_55 = arith.constant 0 : index
    %c0_56 = arith.constant 0 : index
    %c32 = arith.constant 32 : index
    %26 = vector.load %arg9[%c0_54, %c0_55, %c0_56, %c32] : memref<1x24x16x36xbf16, #tpu.memory_space<vmem>>, vector<1x24x16x4xbf16>
    tpu.vector_store %arg9[%c0_54, %c0_55, %c0_56, %c32], %25 {strides = array<i32>} : memref<1x24x16x36xbf16, #tpu.memory_space<vmem>>, vector<1x24x16x4xbf16>,
    %cst = arith.constant 0.000000e+00 : f32
    %27 = vector.broadcast %cst : f32 to vector<256x64xf32>
    %c0_57 = arith.constant 0 : index
    %c0_58 = arith.constant 0 : index
    %c0_59 = arith.constant 0 : index
    %c0_60 = arith.constant 0 : index
    %28 = vector.load %arg9[%c0_57, %c0_58, %c0_59, %c0_60] : memref<1x24x16x36xbf16, #tpu.memory_space<vmem>>, vector<1x16x16x36xbf16>
    %29 = vector.shape_cast %28 : vector<1x16x16x36xbf16> to vector<256x36xbf16>
    %c0_61 = arith.constant 0 : index
    %c0_62 = arith.constant 0 : index
    %c0_63 = arith.constant 0 : index
    %30 = vector.load %arg2[%c0_61, %c0_62, %c0_63] : memref<9x36x64xbf16, #tpu.memory_space<vmem>>, vector<1x36x64xbf16>
    %31 = vector.shape_cast %30 : vector<1x36x64xbf16> to vector<36x64xbf16>
    %cst_64 = arith.constant dense<0.000000e+00> : vector<256x64xf32>
    %32 = tpu.matmul %29, %31, %cst_64 {dimension_numbers = #tpu.dot_dimension_numbers<[1], [0], [0], [1], [0, 0, 1, 1], [], []>} : vector<256x36xbf16>, vector<36x64xbf16>, vector<256x64xf32> -> vector<256x64xf32>
    %33 = arith.addf %27, %32 : vector<256x64xf32>
    %c0_65 = arith.constant 0 : index
    %c1_66 = arith.constant 1 : index
    %c0_67 = arith.constant 0 : index
    %c0_68 = arith.constant 0 : index
    %34 = vector.load %arg9[%c0_65, %c1_66, %c0_67, %c0_68] : memref<1x24x16x36xbf16, #tpu.memory_space<vmem>>, vector<1x16x16x36xbf16>
    %35 = vector.shape_cast %34 : vector<1x16x16x36xbf16> to vector<256x36xbf16>
    %c1_69 = arith.constant 1 : index
    %c0_70 = arith.constant 0 : index
    %c0_71 = arith.constant 0 : index
    %36 = vector.load %arg2[%c1_69, %c0_70, %c0_71] : memref<9x36x64xbf16, #tpu.memory_space<vmem>>, vector<1x36x64xbf16>
    %37 = vector.shape_cast %36 : vector<1x36x64xbf16> to vector<36x64xbf16>
    %cst_72 = arith.constant dense<0.000000e+00> : vector<256x64xf32>
    %38 = tpu.matmul %35, %37, %cst_72 {dimension_numbers = #tpu.dot_dimension_numbers<[1], [0], [0], [1], [0, 0, 1, 1], [], []>} : vector<256x36xbf16>, vector<36x64xbf16>, vector<256x64xf32> -> vector<256x64xf32>
    %39 = arith.addf %33, %38 : vector<256x64xf32>
    %c0_73 = arith.constant 0 : index
    %c2_74 = arith.constant 2 : index
    %c0_75 = arith.constant 0 : index
    %c0_76 = arith.constant 0 : index
    %40 = vector.load %arg9[%c0_73, %c2_74, %c0_75, %c0_76] : memref<1x24x16x36xbf16, #tpu.memory_space<vmem>>, vector<1x16x16x36xbf16>
    %41 = vector.shape_cast %40 : vector<1x16x16x36xbf16> to vector<256x36xbf16>
    %c2_77 = arith.constant 2 : index
    %c0_78 = arith.constant 0 : index
    %c0_79 = arith.constant 0 : index
    %42 = vector.load %arg2[%c2_77, %c0_78, %c0_79] : memref<9x36x64xbf16, #tpu.memory_space<vmem>>, vector<1x36x64xbf16>
    %43 = vector.shape_cast %42 : vector<1x36x64xbf16> to vector<36x64xbf16>
    %cst_80 = arith.constant dense<0.000000e+00> : vector<256x64xf32>
    %44 = tpu.matmul %41, %43, %cst_80 {dimension_numbers = #tpu.dot_dimension_numbers<[1], [0], [0], [1], [0, 0, 1, 1], [], []>} : vector<256x36xbf16>, vector<36x64xbf16>, vector<256x64xf32> -> vector<256x64xf32>
    %45 = arith.addf %39, %44 : vector<256x64xf32>
    %c0_81 = arith.constant 0 : index
    %c3_82 = arith.constant 3 : index
    %c0_83 = arith.constant 0 : index
    %c0_84 = arith.constant 0 : index
    %46 = vector.load %arg9[%c0_81, %c3_82, %c0_83, %c0_84] : memref<1x24x16x36xbf16, #tpu.memory_space<vmem>>, vector<1x16x16x36xbf16>
    %47 = vector.shape_cast %46 : vector<1x16x16x36xbf16> to vector<256x36xbf16>
    %c3_85 = arith.constant 3 : index
    %c0_86 = arith.constant 0 : index
    %c0_87 = arith.constant 0 : index
    %48 = vector.load %arg2[%c3_85, %c0_86, %c0_87] : memref<9x36x64xbf16, #tpu.memory_space<vmem>>, vector<1x36x64xbf16>
    %49 = vector.shape_cast %48 : vector<1x36x64xbf16> to vector<36x64xbf16>
    %cst_88 = arith.constant dense<0.000000e+00> : vector<256x64xf32>
    %50 = tpu.matmul %47, %49, %cst_88 {dimension_numbers = #tpu.dot_dimension_numbers<[1], [0], [0], [1], [0, 0, 1, 1], [], []>} : vector<256x36xbf16>, vector<36x64xbf16>, vector<256x64xf32> -> vector<256x64xf32>
    %51 = arith.addf %45, %50 : vector<256x64xf32>
    %c0_89 = arith.constant 0 : index
    %c4_90 = arith.constant 4 : index
    %c0_91 = arith.constant 0 : index
    %c0_92 = arith.constant 0 : index
    %52 = vector.load %arg9[%c0_89, %c4_90, %c0_91, %c0_92] : memref<1x24x16x36xbf16, #tpu.memory_space<vmem>>, vector<1x16x16x36xbf16>
    %53 = vector.shape_cast %52 : vector<1x16x16x36xbf16> to vector<256x36xbf16>
    %c4_93 = arith.constant 4 : index
    %c0_94 = arith.constant 0 : index
    %c0_95 = arith.constant 0 : index
    %54 = vector.load %arg2[%c4_93, %c0_94, %c0_95] : memref<9x36x64xbf16, #tpu.memory_space<vmem>>, vector<1x36x64xbf16>
    %55 = vector.shape_cast %54 : vector<1x36x64xbf16> to vector<36x64xbf16>
    %cst_96 = arith.constant dense<0.000000e+00> : vector<256x64xf32>
    %56 = tpu.matmul %53, %55, %cst_96 {dimension_numbers = #tpu.dot_dimension_numbers<[1], [0], [0], [1], [0, 0, 1, 1], [], []>} : vector<256x36xbf16>, vector<36x64xbf16>, vector<256x64xf32> -> vector<256x64xf32>
    %57 = arith.addf %51, %56 : vector<256x64xf32>
    %c0_97 = arith.constant 0 : index
    %c5_98 = arith.constant 5 : index
    %c0_99 = arith.constant 0 : index
    %c0_100 = arith.constant 0 : index
    %58 = vector.load %arg9[%c0_97, %c5_98, %c0_99, %c0_100] : memref<1x24x16x36xbf16, #tpu.memory_space<vmem>>, vector<1x16x16x36xbf16>
    %59 = vector.shape_cast %58 : vector<1x16x16x36xbf16> to vector<256x36xbf16>
    %c5_101 = arith.constant 5 : index
    %c0_102 = arith.constant 0 : index
    %c0_103 = arith.constant 0 : index
    %60 = vector.load %arg2[%c5_101, %c0_102, %c0_103] : memref<9x36x64xbf16, #tpu.memory_space<vmem>>, vector<1x36x64xbf16>
    %61 = vector.shape_cast %60 : vector<1x36x64xbf16> to vector<36x64xbf16>
    %cst_104 = arith.constant dense<0.000000e+00> : vector<256x64xf32>
    %62 = tpu.matmul %59, %61, %cst_104 {dimension_numbers = #tpu.dot_dimension_numbers<[1], [0], [0], [1], [0, 0, 1, 1], [], []>} : vector<256x36xbf16>, vector<36x64xbf16>, vector<256x64xf32> -> vector<256x64xf32>
    %63 = arith.addf %57, %62 : vector<256x64xf32>
    %c0_105 = arith.constant 0 : index
    %c6_106 = arith.constant 6 : index
    %c0_107 = arith.constant 0 : index
    %c0_108 = arith.constant 0 : index
    %64 = vector.load %arg9[%c0_105, %c6_106, %c0_107, %c0_108] : memref<1x24x16x36xbf16, #tpu.memory_space<vmem>>, vector<1x16x16x36xbf16>
    %65 = vector.shape_cast %64 : vector<1x16x16x36xbf16> to vector<256x36xbf16>
    %c6_109 = arith.constant 6 : index
    %c0_110 = arith.constant 0 : index
    %c0_111 = arith.constant 0 : index
    %66 = vector.load %arg2[%c6_109, %c0_110, %c0_111] : memref<9x36x64xbf16, #tpu.memory_space<vmem>>, vector<1x36x64xbf16>
    %67 = vector.shape_cast %66 : vector<1x36x64xbf16> to vector<36x64xbf16>
    %cst_112 = arith.constant dense<0.000000e+00> : vector<256x64xf32>
    %68 = tpu.matmul %65, %67, %cst_112 {dimension_numbers = #tpu.dot_dimension_numbers<[1], [0], [0], [1], [0, 0, 1, 1], [], []>} : vector<256x36xbf16>, vector<36x64xbf16>, vector<256x64xf32> -> vector<256x64xf32>
    %69 = arith.addf %63, %68 : vector<256x64xf32>
    %c0_113 = arith.constant 0 : index
    %c7_114 = arith.constant 7 : index
    %c0_115 = arith.constant 0 : index
    %c0_116 = arith.constant 0 : index
    %70 = vector.load %arg9[%c0_113, %c7_114, %c0_115, %c0_116] : memref<1x24x16x36xbf16, #tpu.memory_space<vmem>>, vector<1x16x16x36xbf16>
    %71 = vector.shape_cast %70 : vector<1x16x16x36xbf16> to vector<256x36xbf16>
    %c7_117 = arith.constant 7 : index
    %c0_118 = arith.constant 0 : index
    %c0_119 = arith.constant 0 : index
    %72 = vector.load %arg2[%c7_117, %c0_118, %c0_119] : memref<9x36x64xbf16, #tpu.memory_space<vmem>>, vector<1x36x64xbf16>
    %73 = vector.shape_cast %72 : vector<1x36x64xbf16> to vector<36x64xbf16>
    %cst_120 = arith.constant dense<0.000000e+00> : vector<256x64xf32>
    %74 = tpu.matmul %71, %73, %cst_120 {dimension_numbers = #tpu.dot_dimension_numbers<[1], [0], [0], [1], [0, 0, 1, 1], [], []>} : vector<256x36xbf16>, vector<36x64xbf16>, vector<256x64xf32> -> vector<256x64xf32>
    %75 = arith.addf %69, %74 : vector<256x64xf32>
    %c0_121 = arith.constant 0 : index
    %c8_122 = arith.constant 8 : index
    %c0_123 = arith.constant 0 : index
    %c0_124 = arith.constant 0 : index
    %76 = vector.load %arg9[%c0_121, %c8_122, %c0_123, %c0_124] : memref<1x24x16x36xbf16, #tpu.memory_space<vmem>>, vector<1x16x16x36xbf16>
    %77 = vector.shape_cast %76 : vector<1x16x16x36xbf16> to vector<256x36xbf16>
    %c8_125 = arith.constant 8 : index
    %c0_126 = arith.constant 0 : index
    %c0_127 = arith.constant 0 : index
    %78 = vector.load %arg2[%c8_125, %c0_126, %c0_127] : memref<9x36x64xbf16, #tpu.memory_space<vmem>>, vector<1x36x64xbf16>
    %79 = vector.shape_cast %78 : vector<1x36x64xbf16> to vector<36x64xbf16>
    %cst_128 = arith.constant dense<0.000000e+00> : vector<256x64xf32>
    %80 = tpu.matmul %77, %79, %cst_128 {dimension_numbers = #tpu.dot_dimension_numbers<[1], [0], [0], [1], [0, 0, 1, 1], [], []>} : vector<256x36xbf16>, vector<36x64xbf16>, vector<256x64xf32> -> vector<256x64xf32>
    %81 = arith.addf %75, %80 : vector<256x64xf32>
    %c0_129 = arith.constant 0 : index
    %c0_130 = arith.constant 0 : index
    %82 = vector.load %arg3[%c0_129, %c0_130] : memref<1x64xf32, #tpu.memory_space<vmem>>, vector<1x64xf32>
    %83 = vector.broadcast %82 : vector<1x64xf32> to vector<256x64xf32>
    %84 = arith.addf %81, %83 : vector<256x64xf32>
    %cst_131 = arith.constant 0.000000e+00 : f32
    %85 = vector.broadcast %cst_131 : f32 to vector<256x64xf32>
    %86 = arith.maximumf %84, %85 : vector<256x64xf32>
    %87 = arith.truncf %86 : vector<256x64xf32> to vector<256x64xbf16>
    %c0_132 = arith.constant 0 : index
    %c0_133 = arith.constant 0 : index
    %88 = vector.load %arg4[%c0_132, %c0_133] : memref<64x32xbf16, #tpu.memory_space<vmem>>, vector<64x32xbf16>
    %cst_134 = arith.constant dense<0.000000e+00> : vector<256x32xf32>
    %89 = tpu.matmul %87, %88, %cst_134 {dimension_numbers = #tpu.dot_dimension_numbers<[1], [0], [0], [1], [0, 0, 1, 1], [], []>} : vector<256x64xbf16>, vector<64x32xbf16>, vector<256x32xf32> -> vector<256x32xf32>
    %c0_135 = arith.constant 0 : index
    %c0_136 = arith.constant 0 : index
    %90 = vector.load %arg5[%c0_135, %c0_136] : memref<1x32xf32, #tpu.memory_space<vmem>>, vector<1x32xf32>
    %91 = vector.broadcast %90 : vector<1x32xf32> to vector<256x32xf32>
    %92 = arith.addf %89, %91 : vector<256x32xf32>
    %cst_137 = arith.constant 0.000000e+00 : f32
    %93 = vector.broadcast %cst_137 : f32 to vector<256x32xf32>
    %94 = arith.maximumf %92, %93 : vector<256x32xf32>
    %cst_138 = arith.constant 0.000000e+00 : bf16
    %95 = vector.broadcast %cst_138 : bf16 to vector<1x2x20x32xbf16>
    %c0_139 = arith.constant 0 : index
    %c0_140 = arith.constant 0 : index
    %c0_141 = arith.constant 0 : index
    %c0_142 = arith.constant 0 : index
    %96 = vector.load %arg10[%c0_139, %c0_140, %c0_141, %c0_142] : memref<1x20x20x32xbf16, #tpu.memory_space<vmem>>, vector<1x2x20x32xbf16>
    tpu.vector_store %arg10[%c0_139, %c0_140, %c0_141, %c0_142], %95 {strides = array<i32>} : memref<1x20x20x32xbf16, #tpu.memory_space<vmem>>, vector<1x2x20x32xbf16>,
    %cst_143 = arith.constant 0.000000e+00 : bf16
    %97 = vector.broadcast %cst_143 : bf16 to vector<1x2x20x32xbf16>
    %c0_144 = arith.constant 0 : index
    %c18 = arith.constant 18 : index
    %c0_145 = arith.constant 0 : index
    %c0_146 = arith.constant 0 : index
    %98 = vector.load %arg10[%c0_144, %c18, %c0_145, %c0_146] : memref<1x20x20x32xbf16, #tpu.memory_space<vmem>>, vector<1x2x20x32xbf16>
    tpu.vector_store %arg10[%c0_144, %c18, %c0_145, %c0_146], %97 {strides = array<i32>} : memref<1x20x20x32xbf16, #tpu.memory_space<vmem>>, vector<1x2x20x32xbf16>,
    %cst_147 = arith.constant 0.000000e+00 : bf16
    %99 = vector.broadcast %cst_147 : bf16 to vector<1x16x2x32xbf16>
    %c0_148 = arith.constant 0 : index
    %c2_149 = arith.constant 2 : index
    %c0_150 = arith.constant 0 : index
    %c0_151 = arith.constant 0 : index
    %100 = vector.load %arg10[%c0_148, %c2_149, %c0_150, %c0_151] : memref<1x20x20x32xbf16, #tpu.memory_space<vmem>>, vector<1x16x2x32xbf16>
    tpu.vector_store %arg10[%c0_148, %c2_149, %c0_150, %c0_151], %99 {strides = array<i32>} : memref<1x20x20x32xbf16, #tpu.memory_space<vmem>>, vector<1x16x2x32xbf16>,
    %cst_152 = arith.constant 0.000000e+00 : bf16
    %101 = vector.broadcast %cst_152 : bf16 to vector<1x16x2x32xbf16>
    %c0_153 = arith.constant 0 : index
    %c2_154 = arith.constant 2 : index
    %c18_155 = arith.constant 18 : index
    %c0_156 = arith.constant 0 : index
    %102 = vector.load %arg10[%c0_153, %c2_154, %c18_155, %c0_156] : memref<1x20x20x32xbf16, #tpu.memory_space<vmem>>, vector<1x16x2x32xbf16>
    tpu.vector_store %arg10[%c0_153, %c2_154, %c18_155, %c0_156], %101 {strides = array<i32>} : memref<1x20x20x32xbf16, #tpu.memory_space<vmem>>, vector<1x16x2x32xbf16>,
    %103 = arith.truncf %94 : vector<256x32xf32> to vector<256x32xbf16>
    %104 = vector.shape_cast %103 : vector<256x32xbf16> to vector<1x16x16x32xbf16>
    %c0_157 = arith.constant 0 : index
    %c2_158 = arith.constant 2 : index
    %c2_159 = arith.constant 2 : index
    %c0_160 = arith.constant 0 : index
    %105 = vector.load %arg10[%c0_157, %c2_158, %c2_159, %c0_160] : memref<1x20x20x32xbf16, #tpu.memory_space<vmem>>, vector<1x16x16x32xbf16>
    tpu.vector_store %arg10[%c0_157, %c2_158, %c2_159, %c0_160], %104 {strides = array<i32>} : memref<1x20x20x32xbf16, #tpu.memory_space<vmem>>, vector<1x16x16x32xbf16>,
    %c0_161 = arith.constant 0 : index
    %c0_162 = arith.constant 0 : index
    %c0_163 = arith.constant 0 : index
    %c0_164 = arith.constant 0 : index
    %106 = vector.load %arg10[%c0_161, %c0_162, %c0_163, %c0_164] : memref<1x20x20x32xbf16, #tpu.memory_space<vmem>>, vector<1x20x16x32xbf16>
    %c0_165 = arith.constant 0 : index
    %c0_166 = arith.constant 0 : index
    %c0_167 = arith.constant 0 : index
    %c0_168 = arith.constant 0 : index
    %107 = vector.load %arg11[%c0_165, %c0_166, %c0_167, %c0_168] : memref<1x20x16x160xbf16, #tpu.memory_space<vmem>>, vector<1x20x16x32xbf16>
    tpu.vector_store %arg11[%c0_165, %c0_166, %c0_167, %c0_168], %106 {strides = array<i32>} : memref<1x20x16x160xbf16, #tpu.memory_space<vmem>>, vector<1x20x16x32xbf16>,
    %c0_169 = arith.constant 0 : index
    %c0_170 = arith.constant 0 : index
    %c1_171 = arith.constant 1 : index
    %c0_172 = arith.constant 0 : index
    %108 = vector.load %arg10[%c0_169, %c0_170, %c1_171, %c0_172] : memref<1x20x20x32xbf16, #tpu.memory_space<vmem>>, vector<1x20x16x32xbf16>
    %c0_173 = arith.constant 0 : index
    %c0_174 = arith.constant 0 : index
    %c0_175 = arith.constant 0 : index
    %c32_176 = arith.constant 32 : index
    %109 = vector.load %arg11[%c0_173, %c0_174, %c0_175, %c32_176] : memref<1x20x16x160xbf16, #tpu.memory_space<vmem>>, vector<1x20x16x32xbf16>
    tpu.vector_store %arg11[%c0_173, %c0_174, %c0_175, %c32_176], %108 {strides = array<i32>} : memref<1x20x16x160xbf16, #tpu.memory_space<vmem>>, vector<1x20x16x32xbf16>,
    %c0_177 = arith.constant 0 : index
    %c0_178 = arith.constant 0 : index
    %c2_179 = arith.constant 2 : index
    %c0_180 = arith.constant 0 : index
    %110 = vector.load %arg10[%c0_177, %c0_178, %c2_179, %c0_180] : memref<1x20x20x32xbf16, #tpu.memory_space<vmem>>, vector<1x20x16x32xbf16>
    %c0_181 = arith.constant 0 : index
    %c0_182 = arith.constant 0 : index
    %c0_183 = arith.constant 0 : index
    %c64 = arith.constant 64 : index
    %111 = vector.load %arg11[%c0_181, %c0_182, %c0_183, %c64] : memref<1x20x16x160xbf16, #tpu.memory_space<vmem>>, vector<1x20x16x32xbf16>
    tpu.vector_store %arg11[%c0_181, %c0_182, %c0_183, %c64], %110 {strides = array<i32>} : memref<1x20x16x160xbf16, #tpu.memory_space<vmem>>, vector<1x20x16x32xbf16>,
    %c0_184 = arith.constant 0 : index
    %c0_185 = arith.constant 0 : index
    %c3_186 = arith.constant 3 : index
    %c0_187 = arith.constant 0 : index
    %112 = vector.load %arg10[%c0_184, %c0_185, %c3_186, %c0_187] : memref<1x20x20x32xbf16, #tpu.memory_space<vmem>>, vector<1x20x16x32xbf16>
    %c0_188 = arith.constant 0 : index
    %c0_189 = arith.constant 0 : index
    %c0_190 = arith.constant 0 : index
    %c96 = arith.constant 96 : index
    %113 = vector.load %arg11[%c0_188, %c0_189, %c0_190, %c96] : memref<1x20x16x160xbf16, #tpu.memory_space<vmem>>, vector<1x20x16x32xbf16>
    tpu.vector_store %arg11[%c0_188, %c0_189, %c0_190, %c96], %112 {strides = array<i32>} : memref<1x20x16x160xbf16, #tpu.memory_space<vmem>>, vector<1x20x16x32xbf16>,
    %c0_191 = arith.constant 0 : index
    %c0_192 = arith.constant 0 : index
    %c4_193 = arith.constant 4 : index
    %c0_194 = arith.constant 0 : index
    %114 = vector.load %arg10[%c0_191, %c0_192, %c4_193, %c0_194] : memref<1x20x20x32xbf16, #tpu.memory_space<vmem>>, vector<1x20x16x32xbf16>
    %c0_195 = arith.constant 0 : index
    %c0_196 = arith.constant 0 : index
    %c0_197 = arith.constant 0 : index
    %c128 = arith.constant 128 : index
    %115 = vector.load %arg11[%c0_195, %c0_196, %c0_197, %c128] : memref<1x20x16x160xbf16, #tpu.memory_space<vmem>>, vector<1x20x16x32xbf16>
    tpu.vector_store %arg11[%c0_195, %c0_196, %c0_197, %c128], %114 {strides = array<i32>} : memref<1x20x16x160xbf16, #tpu.memory_space<vmem>>, vector<1x20x16x32xbf16>,
    %cst_198 = arith.constant 0.000000e+00 : f32
    %116 = vector.broadcast %cst_198 : f32 to vector<256x8xf32>
    %c0_199 = arith.constant 0 : index
    %c0_200 = arith.constant 0 : index
    %c0_201 = arith.constant 0 : index
    %c0_202 = arith.constant 0 : index
    %117 = vector.load %arg11[%c0_199, %c0_200, %c0_201, %c0_202] : memref<1x20x16x160xbf16, #tpu.memory_space<vmem>>, vector<1x16x16x160xbf16>
    %118 = vector.shape_cast %117 : vector<1x16x16x160xbf16> to vector<256x160xbf16>
    %c0_203 = arith.constant 0 : index
    %c0_204 = arith.constant 0 : index
    %c0_205 = arith.constant 0 : index
    %119 = vector.load %arg6[%c0_203, %c0_204, %c0_205] : memref<5x160x8xbf16, #tpu.memory_space<vmem>>, vector<1x160x8xbf16>
    %120 = vector.shape_cast %119 : vector<1x160x8xbf16> to vector<160x8xbf16>
    %cst_206 = arith.constant dense<0.000000e+00> : vector<256x8xf32>
    %121 = tpu.matmul %118, %120, %cst_206 {dimension_numbers = #tpu.dot_dimension_numbers<[1], [0], [0], [1], [0, 0, 1, 1], [], []>} : vector<256x160xbf16>, vector<160x8xbf16>, vector<256x8xf32> -> vector<256x8xf32>
    %122 = arith.addf %116, %121 : vector<256x8xf32>
    %c0_207 = arith.constant 0 : index
    %c1_208 = arith.constant 1 : index
    %c0_209 = arith.constant 0 : index
    %c0_210 = arith.constant 0 : index
    %123 = vector.load %arg11[%c0_207, %c1_208, %c0_209, %c0_210] : memref<1x20x16x160xbf16, #tpu.memory_space<vmem>>, vector<1x16x16x160xbf16>
    %124 = vector.shape_cast %123 : vector<1x16x16x160xbf16> to vector<256x160xbf16>
    %c1_211 = arith.constant 1 : index
    %c0_212 = arith.constant 0 : index
    %c0_213 = arith.constant 0 : index
    %125 = vector.load %arg6[%c1_211, %c0_212, %c0_213] : memref<5x160x8xbf16, #tpu.memory_space<vmem>>, vector<1x160x8xbf16>
    %126 = vector.shape_cast %125 : vector<1x160x8xbf16> to vector<160x8xbf16>
    %cst_214 = arith.constant dense<0.000000e+00> : vector<256x8xf32>
    %127 = tpu.matmul %124, %126, %cst_214 {dimension_numbers = #tpu.dot_dimension_numbers<[1], [0], [0], [1], [0, 0, 1, 1], [], []>} : vector<256x160xbf16>, vector<160x8xbf16>, vector<256x8xf32> -> vector<256x8xf32>
    %128 = arith.addf %122, %127 : vector<256x8xf32>
    %c0_215 = arith.constant 0 : index
    %c2_216 = arith.constant 2 : index
    %c0_217 = arith.constant 0 : index
    %c0_218 = arith.constant 0 : index
    %129 = vector.load %arg11[%c0_215, %c2_216, %c0_217, %c0_218] : memref<1x20x16x160xbf16, #tpu.memory_space<vmem>>, vector<1x16x16x160xbf16>
    %130 = vector.shape_cast %129 : vector<1x16x16x160xbf16> to vector<256x160xbf16>
    %c2_219 = arith.constant 2 : index
    %c0_220 = arith.constant 0 : index
    %c0_221 = arith.constant 0 : index
    %131 = vector.load %arg6[%c2_219, %c0_220, %c0_221] : memref<5x160x8xbf16, #tpu.memory_space<vmem>>, vector<1x160x8xbf16>
    %132 = vector.shape_cast %131 : vector<1x160x8xbf16> to vector<160x8xbf16>
    %cst_222 = arith.constant dense<0.000000e+00> : vector<256x8xf32>
    %133 = tpu.matmul %130, %132, %cst_222 {dimension_numbers = #tpu.dot_dimension_numbers<[1], [0], [0], [1], [0, 0, 1, 1], [], []>} : vector<256x160xbf16>, vector<160x8xbf16>, vector<256x8xf32> -> vector<256x8xf32>
    %134 = arith.addf %128, %133 : vector<256x8xf32>
    %c0_223 = arith.constant 0 : index
    %c3_224 = arith.constant 3 : index
    %c0_225 = arith.constant 0 : index
    %c0_226 = arith.constant 0 : index
    %135 = vector.load %arg11[%c0_223, %c3_224, %c0_225, %c0_226] : memref<1x20x16x160xbf16, #tpu.memory_space<vmem>>, vector<1x16x16x160xbf16>
    %136 = vector.shape_cast %135 : vector<1x16x16x160xbf16> to vector<256x160xbf16>
    %c3_227 = arith.constant 3 : index
    %c0_228 = arith.constant 0 : index
    %c0_229 = arith.constant 0 : index
    %137 = vector.load %arg6[%c3_227, %c0_228, %c0_229] : memref<5x160x8xbf16, #tpu.memory_space<vmem>>, vector<1x160x8xbf16>
    %138 = vector.shape_cast %137 : vector<1x160x8xbf16> to vector<160x8xbf16>
    %cst_230 = arith.constant dense<0.000000e+00> : vector<256x8xf32>
    %139 = tpu.matmul %136, %138, %cst_230 {dimension_numbers = #tpu.dot_dimension_numbers<[1], [0], [0], [1], [0, 0, 1, 1], [], []>} : vector<256x160xbf16>, vector<160x8xbf16>, vector<256x8xf32> -> vector<256x8xf32>
    %140 = arith.addf %134, %139 : vector<256x8xf32>
    %c0_231 = arith.constant 0 : index
    %c4_232 = arith.constant 4 : index
    %c0_233 = arith.constant 0 : index
    %c0_234 = arith.constant 0 : index
    %141 = vector.load %arg11[%c0_231, %c4_232, %c0_233, %c0_234] : memref<1x20x16x160xbf16, #tpu.memory_space<vmem>>, vector<1x16x16x160xbf16>
    %142 = vector.shape_cast %141 : vector<1x16x16x160xbf16> to vector<256x160xbf16>
    %c4_235 = arith.constant 4 : index
    %c0_236 = arith.constant 0 : index
    %c0_237 = arith.constant 0 : index
    %143 = vector.load %arg6[%c4_235, %c0_236, %c0_237] : memref<5x160x8xbf16, #tpu.memory_space<vmem>>, vector<1x160x8xbf16>
    %144 = vector.shape_cast %143 : vector<1x160x8xbf16> to vector<160x8xbf16>
    %cst_238 = arith.constant dense<0.000000e+00> : vector<256x8xf32>
    %145 = tpu.matmul %142, %144, %cst_238 {dimension_numbers = #tpu.dot_dimension_numbers<[1], [0], [0], [1], [0, 0, 1, 1], [], []>} : vector<256x160xbf16>, vector<160x8xbf16>, vector<256x8xf32> -> vector<256x8xf32>
    %146 = arith.addf %140, %145 : vector<256x8xf32>
    %c0_239 = arith.constant 0 : index
    %c0_240 = arith.constant 0 : index
    %147 = vector.load %arg7[%c0_239, %c0_240] : memref<1x8xf32, #tpu.memory_space<vmem>>, vector<1x8xf32>
    %148 = vector.broadcast %147 : vector<1x8xf32> to vector<256x8xf32>
    %149 = arith.addf %146, %148 : vector<256x8xf32>
    %cst_241 = arith.constant 0.000000e+00 : f32
    %150 = vector.broadcast %cst_241 : f32 to vector<256x8xf32>
    %151 = arith.maximumf %149, %150 : vector<256x8xf32>
    %152 = vector.shape_cast %151 : vector<256x8xf32> to vector<1x256x8xf32>
    %153 = vector.shape_cast %152 : vector<1x256x8xf32> to vector<256x8xf32>
    %154 = tpu.transpose %153, [1, 0] : vector<256x8xf32> -> vector<8x256xf32>
    %c0_242 = arith.constant 0 : index
    %c0_243 = arith.constant 0 : index
    %c0_244 = arith.constant 0 : index
    %155 = vector.load %arg8[%c0_242, %c0_243, %c0_244] : memref<1x8x256xf32, #tpu.memory_space<vmem>>, vector<1x8x256xf32>
    %156 = vector.shape_cast %155 : vector<1x8x256xf32> to vector<8x256xf32>
    %157 = vector.shape_cast %154 : vector<8x256xf32> to vector<1x8x256xf32>
    tpu.vector_store %arg8[%c0_242, %c0_243, %c0_244], %157 {strides = array<i32>} : memref<1x8x256xf32, #tpu.memory_space<vmem>>, vector<1x8x256xf32>,
    return
  }
  func.func @transform_0(%arg0: i32) -> (i32, i32, i32, i32) {
    %c0_i32 = arith.constant 0 : i32
    %c0_i32_0 = arith.constant 0 : i32
    %c0_i32_1 = arith.constant 0 : i32
    %c0_i32_2 = arith.constant 0 : i32
    return %arg0, %c0_i32, %c0_i32_0, %c0_i32_1 : i32, i32, i32, i32
  }
  func.func @transform_1(%arg0: i32) -> (i32, i32, i32) {
    %c0_i32 = arith.constant 0 : i32
    %c0_i32_0 = arith.constant 0 : i32
    %c0_i32_1 = arith.constant 0 : i32
    %c0_i32_2 = arith.constant 0 : i32
    return %c0_i32, %c0_i32_0, %c0_i32_1 : i32, i32, i32
  }
  func.func @transform_2(%arg0: i32) -> (i32, i32) {
    %c0_i32 = arith.constant 0 : i32
    %c0_i32_0 = arith.constant 0 : i32
    %c0_i32_1 = arith.constant 0 : i32
    return %c0_i32, %c0_i32_0 : i32, i32
  }
  func.func @transform_3(%arg0: i32) -> (i32, i32) {
    %c0_i32 = arith.constant 0 : i32
    %c0_i32_0 = arith.constant 0 : i32
    %c0_i32_1 = arith.constant 0 : i32
    return %c0_i32, %c0_i32_0 : i32, i32
  }
  func.func @transform_4(%arg0: i32) -> (i32, i32) {
    %c0_i32 = arith.constant 0 : i32
    %c0_i32_0 = arith.constant 0 : i32
    %c0_i32_1 = arith.constant 0 : i32
    return %c0_i32, %c0_i32_0 : i32, i32
  }
  func.func @transform_5(%arg0: i32) -> (i32, i32, i32) {
    %c0_i32 = arith.constant 0 : i32
    %c0_i32_0 = arith.constant 0 : i32
    %c0_i32_1 = arith.constant 0 : i32
    %c0_i32_2 = arith.constant 0 : i32
    return %c0_i32, %c0_i32_0, %c0_i32_1 : i32, i32, i32
  }
  func.func @transform_6(%arg0: i32) -> (i32, i32) {
    %c0_i32 = arith.constant 0 : i32
    %c0_i32_0 = arith.constant 0 : i32
    %c0_i32_1 = arith.constant 0 : i32
    return %c0_i32, %c0_i32_0 : i32, i32
  }
  func.func @transform_7(%arg0: i32) -> (i32, i32, i32) {
    %c0_i32 = arith.constant 0 : i32
    %c0_i32_0 = arith.constant 0 : i32
    %c0_i32_1 = arith.constant 0 : i32
    return %arg0, %c0_i32, %c0_i32_0 : i32, i32, i32
  }
}

</mosaic_0001>

<llo_original>
// kernel: _srcnn_forward_impl.1
$region0: #{_srcnn_forward_impl.1}
  #allocation0 [shape = 'u32[]', space=smem, size = 0x4, offset = 0x4, fixed_abs, tag = 'smem constant byte address 0x4 - core index']
  #allocation1 [shape = 'u32[72,128]{1,0:T(1,128)}', space=vmem, size = 0x9000, scoped, tag = 'internal scratch']
  #allocation2 [shape = 'bf16[1,24,16,36]{3,2,1,0:T(8,128)(2,1)}', space=vmem, size = 0x18000, scoped, tag = 'scratch operand']
  #allocation3 [shape = 'bf16[1,20,20,32]{3,2,1,0:T(8,128)(2,1)}', space=vmem, size = 0x1e000, scoped, tag = 'scratch operand']
  #allocation4 [shape = 'bf16[1,20,16,160]{3,2,1,0:T(8,128)(2,1)}', space=vmem, size = 0x28000, scoped, tag = 'scratch operand']
  %s0 = inlined_call_operand.vmem [shape: f32[2,24,24,4], index: 0, kind: input, shape index: {}]
  %s1 = inlined_call_operand.vmem [shape: bf16[9,36,64], index: 1, kind: input, shape index: {}]
  %s2 = inlined_call_operand.vmem [shape: f32[1,64], index: 2, kind: input, shape index: {}]
  %s3 = inlined_call_operand.vmem [shape: bf16[64,32], index: 3, kind: input, shape index: {}]
  %s4 = inlined_call_operand.vmem [shape: f32[1,32], index: 4, kind: input, shape index: {}]
  %s5 = inlined_call_operand.vmem [shape: bf16[5,160,8], index: 5, kind: input, shape index: {}]
  %s6 = inlined_call_operand.vmem [shape: f32[1,8], index: 6, kind: input, shape index: {}]
  %s7 = inlined_call_operand.vmem [shape: f32[2,8,256], index: 7, kind: output, shape index: {}]
  %s8 = sld [smem:[#allocation0]]
  $region61: #{_srcnn_forward_impl.1} parent=0
    _
  %s10 = ssub.s32 1, %s8
  %s11 = scalar_select 0, %s10, %s8
  loop: start=0, step=1, limit=4
  $region2: #{_srcnn_forward_impl.1} parent=0 // loop_pre_header
    _
  $region3: #{_srcnn_forward_impl.1} parent=0 // loop_header
    %s13 = sphi 0, %s17
    %p14 = scmp.ge.s32.totalorder %s13, 4
    %s23 = sphi 0, %s25
    %s26 = sphi 0, %s23
    %s27 = sphi 0, %s26
    %s43 = sphi 0, %s27
    %s47 = sphi 0, %s47
    %s49 = sphi 0, %s47
    %s50 = sphi 0, %s49
    %s64 = sphi 0, %s50
    %s68 = sphi 0, %s68
    %s70 = sphi 0, %s68
    %s71 = sphi 0, %s70
    %s85 = sphi 0, %s71
    %s89 = sphi 0, %s89
    %s91 = sphi 0, %s89
    %s92 = sphi 0, %s91
    %s106 = sphi 0, %s92
    %s110 = sphi 0, %s110
    %s112 = sphi 0, %s110
    %s113 = sphi 0, %s112
    %s127 = sphi 0, %s113
    %s131 = sphi 0, %s131
    %s133 = sphi 0, %s131
    %s134 = sphi 0, %s133
    %s148 = sphi 0, %s134
    %s152 = sphi 0, %s152
    %s154 = sphi 0, %s152
    %s155 = sphi 0, %s154
    %s169 = sphi 0, %s155
    %s175 = sphi 0, %s177
    %s178 = sphi 0, %s175
    %s179 = sphi 0, %s178
    %s195 = sphi 0, %s179
  $region4: #{_srcnn_forward_impl.1} parent=0 // loop_header_branch
    %16 = sbr.rel (%p14) target = $region8
  $region5: #{_srcnn_forward_impl.1} parent=0 // loop_body
    %s18 = ssub.s32 %s13, 1
    %s19 = ssub.s32 %s13, 2
    %s20 = sadd.s32 %s13, 1
    %s21 = ssub.s32 %s13, %s20
    %p22 = scmp.eq.s32.totalorder %s21, 0
    %s24 = sadd.s32 %s23, 1
    %s25 = scalar_select %p22, %s23, %s24
    %p28 = pneg %p22
    %p29 = scmp.eq.s32.totalorder %s13, 1
    %p30 = por %p28, %p29
    %p31 = scmp.ne.s32.totalorder %s23, %s26
    %p32 = scmp.eq.s32.totalorder %s13, 0
    %p33 = por %p31, %p32
    %p34 = scmp.ne.s32.totalorder %s23, %s26
    %p35 = scmp.eq.s32.totalorder %s18, 1
    %p36 = por %p34, %p35
    %p37 = scmp.ne.s32.totalorder %s26, %s27
    %p38 = scmp.eq.s32.totalorder %s18, 0
    %p39 = por %p37, %p38
    %p40 = scmp.ne.s32.totalorder %s26, %s27
    %p41 = scmp.eq.s32.totalorder %s19, 1
    %p42 = por %p40, %p41
    %p44 = scmp.ne.s32.totalorder %s27, %s43
    %p45 = scmp.eq.s32.totalorder %s19, 0
    %p46 = por %p44, %p45
    %s48 = sadd.s32 %s47, 1
    %p51 = scmp.eq.s32.totalorder %s13, 1
    %p52 = scmp.ne.s32.totalorder %s47, %s49
    %p53 = scmp.eq.s32.totalorder %s13, 0
    %p54 = por %p52, %p53
    %p55 = scmp.ne.s32.totalorder %s47, %s49
    %p56 = scmp.eq.s32.totalorder %s18, 1
    %p57 = por %p55, %p56
    %p58 = scmp.ne.s32.totalorder %s49, %s50
    %p59 = scmp.eq.s32.totalorder %s18, 0
    %p60 = por %p58, %p59
    %p61 = scmp.ne.s32.totalorder %s49, %s50
    %p62 = scmp.eq.s32.totalorder %s19, 1
    %p63 = por %p61, %p62
    %p65 = scmp.ne.s32.totalorder %s50, %s64
    %p66 = scmp.eq.s32.totalorder %s19, 0
    %p67 = por %p65, %p66
    %s69 = sadd.s32 %s68, 1
    %p72 = scmp.eq.s32.totalorder %s13, 1
    %p73 = scmp.ne.s32.totalorder %s68, %s70
    %p74 = scmp.eq.s32.totalorder %s13, 0
    %p75 = por %p73, %p74
    %p76 = scmp.ne.s32.totalorder %s68, %s70
    %p77 = scmp.eq.s32.totalorder %s18, 1
    %p78 = por %p76, %p77
    %p79 = scmp.ne.s32.totalorder %s70, %s71
    %p80 = scmp.eq.s32.totalorder %s18, 0
    %p81 = por %p79, %p80
    %p82 = scmp.ne.s32.totalorder %s70, %s71
    %p83 = scmp.eq.s32.totalorder %s19, 1
    %p84 = por %p82, %p83
    %p86 = scmp.ne.s32.totalorder %s71, %s85
    %p87 = scmp.eq.s32.totalorder %s19, 0
    %p88 = por %p86, %p87
    %s90 = sadd.s32 %s89, 1
    %p93 = scmp.eq.s32.totalorder %s13, 1
    %p94 = scmp.ne.s32.totalorder %s89, %s91
    %p95 = scmp.eq.s32.totalorder %s13, 0
    %p96 = por %p94, %p95
    %p97 = scmp.ne.s32.totalorder %s89, %s91
    %p98 = scmp.eq.s32.totalorder %s18, 1
    %p99 = por %p97, %p98
    %p100 = scmp.ne.s32.totalorder %s91, %s92
    %p101 = scmp.eq.s32.totalorder %s18, 0
    %p102 = por %p100, %p101
    %p103 = scmp.ne.s32.totalorder %s91, %s92
    %p104 = scmp.eq.s32.totalorder %s19, 1
    %p105 = por %p103, %p104
    %p107 = scmp.ne.s32.totalorder %s92, %s106
    %p108 = scmp.eq.s32.totalorder %s19, 0
    %p109 = por %p107, %p108
    %s111 = sadd.s32 %s110, 1
    %p114 = scmp.eq.s32.totalorder %s13, 1
    %p115 = scmp.ne.s32.totalorder %s110, %s112
    %p116 = scmp.eq.s32.totalorder %s13, 0
    %p117 = por %p115, %p116
    %p118 = scmp.ne.s32.totalorder %s110, %s112
    %p119 = scmp.eq.s32.totalorder %s18, 1
    %p120 = por %p118, %p119
    %p121 = scmp.ne.s32.totalorder %s112, %s113
    %p122 = scmp.eq.s32.totalorder %s18, 0
    %p123 = por %p121, %p122
    %p124 = scmp.ne.s32.totalorder %s112, %s113
    %p125 = scmp.eq.s32.totalorder %s19, 1
    %p126 = por %p124, %p125
    %p128 = scmp.ne.s32.totalorder %s113, %s127
    %p129 = scmp.eq.s32.totalorder %s19, 0
    %p130 = por %p128, %p129
    %s132 = sadd.s32 %s131, 1
    %p135 = scmp.eq.s32.totalorder %s13, 1
    %p136 = scmp.ne.s32.totalorder %s131, %s133
    %p137 = scmp.eq.s32.totalorder %s13, 0
    %p138 = por %p136, %p137
    %p139 = scmp.ne.s32.totalorder %s131, %s133
    %p140 = scmp.eq.s32.totalorder %s18, 1
    %p141 = por %p139, %p140
    %p142 = scmp.ne.s32.totalorder %s133, %s134
    %p143 = scmp.eq.s32.totalorder %s18, 0
    %p144 = por %p142, %p143
    %p145 = scmp.ne.s32.totalorder %s133, %s134
    %p146 = scmp.eq.s32.totalorder %s19, 1
    %p147 = por %p145, %p146
    %p149 = scmp.ne.s32.totalorder %s134, %s148
    %p150 = scmp.eq.s32.totalorder %s19, 0
    %p151 = por %p149, %p150
    %s153 = sadd.s32 %s152, 1
    %p156 = scmp.eq.s32.totalorder %s13, 1
    %p157 = scmp.ne.s32.totalorder %s152, %s154
    %p158 = scmp.eq.s32.totalorder %s13, 0
    %p159 = por %p157, %p158
    %p160 = scmp.ne.s32.totalorder %s152, %s154
    %p161 = scmp.eq.s32.totalorder %s18, 1
    %p162 = por %p160, %p161
    %p163 = scmp.ne.s32.totalorder %s154, %s155
    %p164 = scmp.eq.s32.totalorder %s18, 0
    %p165 = por %p163, %p164
    %p166 = scmp.ne.s32.totalorder %s154, %s155
    %p167 = scmp.eq.s32.totalorder %s19, 1
    %p168 = por %p166, %p167
    %p170 = scmp.ne.s32.totalorder %s155, %s169
    %p171 = scmp.eq.s32.totalorder %s19, 0
    %p172 = por %p170, %p171
    %s173 = ssub.s32 %s13, %s20
    %p174 = scmp.eq.s32.totalorder %s173, 0
    %s176 = sadd.s32 %s175, 1
    %s177 = scalar_select %p174, %s175, %s176
    %p180 = pneg %p174
    %p181 = scmp.eq.s32.totalorder %s13, 1
    %p182 = por %p180, %p181
    %p183 = scmp.ne.s32.totalorder %s175, %s178
    %p184 = scmp.eq.s32.totalorder %s13, 0
    %p185 = por %p183, %p184
    %p186 = scmp.ne.s32.totalorder %s175, %s178
    %p187 = scmp.eq.s32.totalorder %s18, 1
    %p188 = por %p186, %p187
    %p189 = scmp.ne.s32.totalorder %s178, %s179
    %p190 = scmp.eq.s32.totalorder %s18, 0
    %p191 = por %p189, %p190
    %p192 = scmp.ne.s32.totalorder %s178, %s179
    %p193 = scmp.eq.s32.totalorder %s19, 1
    %p194 = por %p192, %p193
    %p196 = scmp.ne.s32.totalorder %s179, %s195
    %p197 = scmp.eq.s32.totalorder %s19, 0
    %p198 = por %p196, %p197
    %p199 = scmp.le.s32.totalorder 1, %s13
    %p200 = scmp.lt.s32.totalorder %s13, 3
    %p201 = pnand %p199, %p200
    %p202 = pneg %p201
    // Predicated region
    $region9: #{_srcnn_forward_impl.1} parent=5 // pred_check
      _
    $region10: #{_srcnn_forward_impl.1} parent=5 // pred_check_branch
      %204 = sbr.rel (%p201) target = $region12
    $region11: #{_srcnn_forward_impl.1} parent=5 // pred_region
      %s205 = ssub.s32 %s13, 1
      // Predicated region
      $region13: #{_srcnn_forward_impl.1} parent=11 // pred_check
        %p206 = pneg %p60
      $region14: #{_srcnn_forward_impl.1} parent=11 // pred_check_branch
        %208 = sbr.rel (%p206) target = $region16
      $region15: #{_srcnn_forward_impl.1} parent=11 // pred_region
        _
      $region16: #{_srcnn_forward_impl.1} parent=11 // pred_fallthru
        _
      // Predicated region
      $region17: #{_srcnn_forward_impl.1} parent=11 // pred_check
        %p209 = pneg %p81
      $region18: #{_srcnn_forward_impl.1} parent=11 // pred_check_branch
        %211 = sbr.rel (%p209) target = $region20
      $region19: #{_srcnn_forward_impl.1} parent=11 // pred_region
        _
      $region20: #{_srcnn_forward_impl.1} parent=11 // pred_fallthru
        _
      // Predicated region
      $region21: #{_srcnn_forward_impl.1} parent=11 // pred_check
        %p212 = pneg %p102
      $region22: #{_srcnn_forward_impl.1} parent=11 // pred_check_branch
        %214 = sbr.rel (%p212) target = $region24
      $region23: #{_srcnn_forward_impl.1} parent=11 // pred_region
        _
      $region24: #{_srcnn_forward_impl.1} parent=11 // pred_fallthru
        _
      // Predicated region
      $region25: #{_srcnn_forward_impl.1} parent=11 // pred_check
        %p215 = pneg %p123
      $region26: #{_srcnn_forward_impl.1} parent=11 // pred_check_branch
        %217 = sbr.rel (%p215) target = $region28
      $region27: #{_srcnn_forward_impl.1} parent=11 // pred_region
        _
      $region28: #{_srcnn_forward_impl.1} parent=11 // pred_fallthru
        _
      // Predicated region
      $region29: #{_srcnn_forward_impl.1} parent=11 // pred_check
        %p218 = pneg %p144
      $region30: #{_srcnn_forward_impl.1} parent=11 // pred_check_branch
        %220 = sbr.rel (%p218) target = $region32
      $region31: #{_srcnn_forward_impl.1} parent=11 // pred_region
        _
      $region32: #{_srcnn_forward_impl.1} parent=11 // pred_fallthru
        _
      // Predicated region
      $region33: #{_srcnn_forward_impl.1} parent=11 // pred_check
        %p221 = pneg %p165
      $region34: #{_srcnn_forward_impl.1} parent=11 // pred_check_branch
        %223 = sbr.rel (%p221) target = $region36
      $region35: #{_srcnn_forward_impl.1} parent=11 // pred_region
        _
      $region36: #{_srcnn_forward_impl.1} parent=11 // pred_fallthru
        _
    $region12: #{_srcnn_forward_impl.1} parent=5 // pred_fallthru
      _
    %p224 = scmp.lt.s32.totalorder %s13, 2
    // Predicated region
    $region37: #{_srcnn_forward_impl.1} parent=5 // pred_check
      %p225 = pneg %p224
    $region38: #{_srcnn_forward_impl.1} parent=5 // pred_check_branch
      %227 = sbr.rel (%p225) target = $region40
    $region39: #{_srcnn_forward_impl.1} parent=5 // pred_region
      // Predicated region
      $region41: #{_srcnn_forward_impl.1} parent=39 // pred_check
        %p228 = pneg %p33
      $region42: #{_srcnn_forward_impl.1} parent=39 // pred_check_branch
        %230 = sbr.rel (%p228) target = $region44
      $region43: #{_srcnn_forward_impl.1} parent=39 // pred_region
        %p231 = scmp.lt.s32.totalorder %s13, 1
        %s232 = scalar_select %p231, %s13, 1
        %s233 = smul.addr %s232, 72
        %s234 = smul.addr %s233, 8
        %s235 = scalar_lea.vmem %s0, %s234
      $region44: #{_srcnn_forward_impl.1} parent=39 // pred_fallthru
        _
    $region40: #{_srcnn_forward_impl.1} parent=5 // pred_fallthru
      _
    %p236 = scmp.le.s32.totalorder 1, %s13
    %p237 = scmp.lt.s32.totalorder %s13, 3
    %p238 = pnand %p236, %p237
    %p239 = pneg %p238
    // Predicated region
    $region45: #{_srcnn_forward_impl.1} parent=5 // pred_check
      _
    $region46: #{_srcnn_forward_impl.1} parent=5 // pred_check_branch
      %241 = sbr.rel (%p238) target = $region48
    $region47: #{_srcnn_forward_impl.1} parent=5 // pred_region
      %s242 = ssub.s32 %s13, 1
      %p243 = scmp.lt.s32.totalorder %s18, 1
      %s244 = scalar_select %p243, %s18, 1
      %s245 = smul.addr %s244, 72
      %s246 = smul.addr %s245, 8
      %s247 = scalar_lea.vmem %s0, %s246
      %p248 = pneg %p39
      %p249 = pneg %p36
      %p250 = pneg %p60
      %p251 = pneg %p57
      %p252 = pneg %p81
      %p253 = pneg %p78
      %p254 = pneg %p102
      %p255 = pneg %p99
      %p256 = pneg %p123
      %p257 = pneg %p120
      %p258 = pneg %p144
      %p259 = pneg %p141
      %p260 = pneg %p165
      %p261 = pneg %p162
      %p262 = pneg %p191
      %p263 = pneg %p188
      %p264 = scmp.lt.s32.totalorder %s18, 1
      %s265 = scalar_select %p264, %s18, 1
      %s266 = smul.addr %s265, 2
      %s267 = smul.addr %s266, 8
      %s268 = scalar_lea.vmem %s7, %s267
      %p269 = scmp.lt.s32.totalorder %s18, 1
      %s270 = scalar_select %p269, %s18, 1
      %s271 = smul.addr %s270, 72
      %s272 = smul.addr %s271, 8
      %s273 = scalar_lea.vmem %s0, %s272
      %p274 = scmp.lt.s32.totalorder %s18, 1
      %s275 = scalar_select %p274, %s18, 1
      %s276 = smul.addr %s275, 2
      %s277 = smul.addr %s276, 8
      %s278 = scalar_lea.vmem %s7, %s277
      %v280 = vld [vmem:[%s273] sm:$0xff]
      %v281 = vld [vmem:[%s273 + $0x8] sm:$0xff]
      %v282 = vld [vmem:[%s273 + $0x18] sm:$0xff]
      %v283 = vld [vmem:[%s273 + $0x20] sm:$0xff]
      %v284 = vld [vmem:[%s273 + $0x30] sm:$0xff]
      %v285 = vld [vmem:[%s273 + $0x38] sm:$0xff]
      %v286 = vld [vmem:[%s273 + $0x48] sm:$0xff]
      %v287 = vld [vmem:[%s273 + $0x50] sm:$0xff]
      %v288 = vld [vmem:[%s273 + $0x60] sm:$0xff]
      %v289 = vld [vmem:[%s273 + $0x68] sm:$0xff]
      %v290 = vld [vmem:[%s273 + $0x78] sm:$0xff]
      %v291 = vld [vmem:[%s273 + $0x80] sm:$0xff]
      %v292 = vld [vmem:[%s273 + $0x90] sm:$0xff]
      %v293 = vld [vmem:[%s273 + $0x98] sm:$0xff]
      %v294 = vld [vmem:[%s273 + $0xa8] sm:$0xff]
      %v295 = vld [vmem:[%s273 + $0xb0] sm:$0xff]
      %v296 = vld [vmem:[%s273 + $0xc0] sm:$0xff]
      %v297 = vld [vmem:[%s273 + $0xc8] sm:$0xff]
      %v298 = vld [vmem:[%s273 + $0xd8] sm:$0xff]
      %v299 = vld [vmem:[%s273 + $0xe0] sm:$0xff]
      %v300 = vld [vmem:[%s273 + $0xf0] sm:$0xff]
      %v301 = vld [vmem:[%s273 + $0xf8] sm:$0xff]
      %v302 = vld [vmem:[%s273 + $0x108] sm:$0xff]
      %v303 = vld [vmem:[%s273 + $0x110] sm:$0xff]
      %v304 = vld [vmem:[%s273 + $0x120] sm:$0xff]
      %v305 = vld [vmem:[%s273 + $0x128] sm:$0xff]
      %v306 = vld [vmem:[%s273 + $0x138] sm:$0xff]
      %v307 = vld [vmem:[%s273 + $0x140] sm:$0xff]
      %v308 = vld [vmem:[%s273 + $0x150] sm:$0xff]
      %v309 = vld [vmem:[%s273 + $0x158] sm:$0xff]
      %v310 = vld [vmem:[%s273 + $0x168] sm:$0xff]
      %v311 = vld [vmem:[%s273 + $0x170] sm:$0xff]
      %v312 = vld [vmem:[%s273 + $0x180] sm:$0xff]
      %v313 = vld [vmem:[%s273 + $0x188] sm:$0xff]
      %v314 = vld [vmem:[%s273 + $0x198] sm:$0xff]
      %v315 = vld [vmem:[%s273 + $0x1a0] sm:$0xff]
      %v316 = vld [vmem:[%s273 + $0x1b0] sm:$0xff]
      %v317 = vld [vmem:[%s273 + $0x1b8] sm:$0xff]
      %v318 = vld [vmem:[%s273 + $0x1c8] sm:$0xff]
      %v319 = vld [vmem:[%s273 + $0x1d0] sm:$0xff]
      %v320 = vld [vmem:[%s273 + $0x1e0] sm:$0xff]
      %v321 = vld [vmem:[%s273 + $0x1e8] sm:$0xff]
      %v322 = vld [vmem:[%s273 + $0x1f8] sm:$0xff]
      %v323 = vld [vmem:[%s273 + $0x200] sm:$0xff]
      %v324 = vld [vmem:[%s273 + $0x210] sm:$0xff]
      %v325 = vld [vmem:[%s273 + $0x218] sm:$0xff]
      %v326 = vld [vmem:[%s273 + $0x228] sm:$0xff]
      %v327 = vld [vmem:[%s273 + $0x230] sm:$0xff]
      %v328 = vpack.c.bf16 %v280, %v280
      %v329 = vpack.c.bf16 %v281, %v281
      %v330 = vpack.c.bf16 %v282, %v282
      %v331 = vpack.c.bf16 %v283, %v283
      %v332 = vpack.c.bf16 %v284, %v284
      %v333 = vpack.c.bf16 %v285, %v285
      %v334 = vpack.c.bf16 %v286, %v286
      %v335 = vpack.c.bf16 %v287, %v287
      %v336 = vpack.c.bf16 %v288, %v288
      %v337 = vpack.c.bf16 %v289, %v289
      %v338 = vpack.c.bf16 %v290, %v290
      %v339 = vpack.c.bf16 %v291, %v291
      %v340 = vpack.c.bf16 %v292, %v292
      %v341 = vpack.c.bf16 %v293, %v293
      %v342 = vpack.c.bf16 %v294, %v294
      %v343 = vpack.c.bf16 %v295, %v295
      %v344 = vpack.c.bf16 %v296, %v296
      %v345 = vpack.c.bf16 %v297, %v297
      %v346 = vpack.c.bf16 %v298, %v298
      %v347 = vpack.c.bf16 %v299, %v299
      %v348 = vpack.c.bf16 %v300, %v300
      %v349 = vpack.c.bf16 %v301, %v301
      %v350 = vpack.c.bf16 %v302, %v302
      %v351 = vpack.c.bf16 %v303, %v303
      %v352 = vpack.c.bf16 %v304, %v304
      %v353 = vpack.c.bf16 %v305, %v305
      %v354 = vpack.c.bf16 %v306, %v306
      %v355 = vpack.c.bf16 %v307, %v307
      %v356 = vpack.c.bf16 %v308, %v308
      %v357 = vpack.c.bf16 %v309, %v309
      %v358 = vpack.c.bf16 %v310, %v310
      %v359 = vpack.c.bf16 %v311, %v311
      %v360 = vpack.c.bf16 %v312, %v312
      %v361 = vpack.c.bf16 %v313, %v313
      %v362 = vpack.c.bf16 %v314, %v314
      %v363 = vpack.c.bf16 %v315, %v315
      %v364 = vpack.c.bf16 %v316, %v316
      %v365 = vpack.c.bf16 %v317, %v317
      %v366 = vpack.c.bf16 %v318, %v318
      %v367 = vpack.c.bf16 %v319, %v319
      %v368 = vpack.c.bf16 %v320, %v320
      %v369 = vpack.c.bf16 %v321, %v321
      %v370 = vpack.c.bf16 %v322, %v322
      %v371 = vpack.c.bf16 %v323, %v323
      %v372 = vpack.c.bf16 %v324, %v324
      %v373 = vpack.c.bf16 %v325, %v325
      %v374 = vpack.c.bf16 %v326, %v326
      %v375 = vpack.c.bf16 %v327, %v327
      %vm376 = vcmask 27648
      %377 = vst.msk [vmem:[#allocation2] sm:$0xf] %vm376, %v328
      %378 = vst.msk [vmem:[#allocation2 + $0x4] sm:$0xf] %vm376, %v329
      %379 = vst.msk [vmem:[#allocation2 + $0x8] sm:$0xf] %vm376, %v330
      %380 = vst.msk [vmem:[#allocation2 + $0xc] sm:$0xf] %vm376, %v331
      %381 = vst.msk [vmem:[#allocation2 + $0x10] sm:$0xf] %vm376, %v332
      %382 = vst.msk [vmem:[#allocation2 + $0x14] sm:$0xf] %vm376, %v333
      %383 = vst.msk [vmem:[#allocation2 + $0x18] sm:$0xf] %vm376, %v334
      %384 = vst.msk [vmem:[#allocation2 + $0x1c] sm:$0xf] %vm376, %v335
      %385 = vst.msk [vmem:[#allocation2 + $0x20] sm:$0xf] %vm376, %v336
      %386 = vst.msk [vmem:[#allocation2 + $0x24] sm:$0xf] %vm376, %v337
      %387 = vst.msk [vmem:[#allocation2 + $0x28] sm:$0xf] %vm376, %v338
      %388 = vst.msk [vmem:[#allocation2 + $0x2c] sm:$0xf] %vm376, %v339
      %389 = vst.msk [vmem:[#allocation2 + $0x30] sm:$0xf] %vm376, %v340
      %390 = vst.msk [vmem:[#allocation2 + $0x34] sm:$0xf] %vm376, %v341
      %391 = vst.msk [vmem:[#allocation2 + $0x38] sm:$0xf] %vm376, %v342
      %392 = vst.msk [vmem:[#allocation2 + $0x3c] sm:$0xf] %vm376, %v343
      %393 = vst.msk [vmem:[#allocation2 + $0x40] sm:$0xf] %vm376, %v344
      %394 = vst.msk [vmem:[#allocation2 + $0x44] sm:$0xf] %vm376, %v345
      %395 = vst.msk [vmem:[#allocation2 + $0x48] sm:$0xf] %vm376, %v346
      %396 = vst.msk [vmem:[#allocation2 + $0x4c] sm:$0xf] %vm376, %v347
      %397 = vst.msk [vmem:[#allocation2 + $0x50] sm:$0xf] %vm376, %v348
      %398 = vst.msk [vmem:[#allocation2 + $0x54] sm:$0xf] %vm376, %v349
      %399 = vst.msk [vmem:[#allocation2 + $0x58] sm:$0xf] %vm376, %v350
      %400 = vst.msk [vmem:[#allocation2 + $0x5c] sm:$0xf] %vm376, %v351
      %401 = vst.msk [vmem:[#allocation2 + $0x60] sm:$0xf] %vm376, %v352
      %402 = vst.msk [vmem:[#allocation2 + $0x64] sm:$0xf] %vm376, %v353
      %403 = vst.msk [vmem:[#allocation2 + $0x68] sm:$0xf] %vm376, %v354
      %404 = vst.msk [vmem:[#allocation2 + $0x6c] sm:$0xf] %vm376, %v355
      %405 = vst.msk [vmem:[#allocation2 + $0x70] sm:$0xf] %vm376, %v356
      %406 = vst.msk [vmem:[#allocation2 + $0x74] sm:$0xf] %vm376, %v357
      %407 = vst.msk [vmem:[#allocation2 + $0x78] sm:$0xf] %vm376, %v358
      %408 = vst.msk [vmem:[#allocation2 + $0x7c] sm:$0xf] %vm376, %v359
      %409 = vst.msk [vmem:[#allocation2 + $0x80] sm:$0xf] %vm376, %v360
      %410 = vst.msk [vmem:[#allocation2 + $0x84] sm:$0xf] %vm376, %v361
      %411 = vst.msk [vmem:[#allocation2 + $0x88] sm:$0xf] %vm376, %v362
      %412 = vst.msk [vmem:[#allocation2 + $0x8c] sm:$0xf] %vm376, %v363
      %413 = vst.msk [vmem:[#allocation2 + $0x90] sm:$0xf] %vm376, %v364
      %414 = vst.msk [vmem:[#allocation2 + $0x94] sm:$0xf] %vm376, %v365
      %415 = vst.msk [vmem:[#allocation2 + $0x98] sm:$0xf] %vm376, %v366
      %416 = vst.msk [vmem:[#allocation2 + $0x9c] sm:$0xf] %vm376, %v367
      %417 = vst.msk [vmem:[#allocation2 + $0xa0] sm:$0xf] %vm376, %v368
      %418 = vst.msk [vmem:[#allocation2 + $0xa4] sm:$0xf] %vm376, %v369
      %419 = vst.msk [vmem:[#allocation2 + $0xa8] sm:$0xf] %vm376, %v370
      %420 = vst.msk [vmem:[#allocation2 + $0xac] sm:$0xf] %vm376, %v371
      %421 = vst.msk [vmem:[#allocation2 + $0xb0] sm:$0xf] %vm376, %v372
      %422 = vst.msk [vmem:[#allocation2 + $0xb4] sm:$0xf] %vm376, %v373
      %423 = vst.msk [vmem:[#allocation2 + $0xb8] sm:$0xf] %vm376, %v374
      %424 = vst.msk [vmem:[#allocation2 + $0xbc] sm:$0xf] %vm376, %v375
      %v425 = vld [vmem:[%s273 + $0x1] sm:$0xff]
      %v426 = vld [vmem:[%s273 + $0x9] sm:$0xff]
      %v427 = vld [vmem:[%s273 + $0x19] sm:$0xff]
      %v428 = vld [vmem:[%s273 + $0x21] sm:$0xff]
      %v429 = vld [vmem:[%s273 + $0x31] sm:$0xff]
      %v430 = vld [vmem:[%s273 + $0x39] sm:$0xff]
      %v431 = vld [vmem:[%s273 + $0x49] sm:$0xff]
      %v432 = vld [vmem:[%s273 + $0x51] sm:$0xff]
      %v433 = vld [vmem:[%s273 + $0x61] sm:$0xff]
      %v434 = vld [vmem:[%s273 + $0x69] sm:$0xff]
      %v435 = vld [vmem:[%s273 + $0x79] sm:$0xff]
      %v436 = vld [vmem:[%s273 + $0x81] sm:$0xff]
      %v437 = vld [vmem:[%s273 + $0x91] sm:$0xff]
      %v438 = vld [vmem:[%s273 + $0x99] sm:$0xff]
      %v439 = vld [vmem:[%s273 + $0xa9] sm:$0xff]
      %v440 = vld [vmem:[%s273 + $0xb1] sm:$0xff]
      %v441 = vld [vmem:[%s273 + $0xc1] sm:$0xff]
      %v442 = vld [vmem:[%s273 + $0xc9] sm:$0xff]
      %v443 = vld [vmem:[%s273 + $0xd9] sm:$0xff]
      %v444 = vld [vmem:[%s273 + $0xe1] sm:$0xff]
      %v445 = vld [vmem:[%s273 + $0xf1] sm:$0xff]
      %v446 = vld [vmem:[%s273 + $0xf9] sm:$0xff]
      %v447 = vld [vmem:[%s273 + $0x109] sm:$0xff]
      %v448 = vld [vmem:[%s273 + $0x111] sm:$0xff]
      %v449 = vld [vmem:[%s273 + $0x121] sm:$0xff]
      %v450 = vld [vmem:[%s273 + $0x129] sm:$0xff]
      %v451 = vld [vmem:[%s273 + $0x139] sm:$0xff]
      %v452 = vld [vmem:[%s273 + $0x141] sm:$0xff]
      %v453 = vld [vmem:[%s273 + $0x151] sm:$0xff]
      %v454 = vld [vmem:[%s273 + $0x159] sm:$0xff]
      %v455 = vld [vmem:[%s273 + $0x169] sm:$0xff]
      %v456 = vld [vmem:[%s273 + $0x171] sm:$0xff]
      %v457 = vld [vmem:[%s273 + $0x181] sm:$0xff]
      %v458 = vld [vmem:[%s273 + $0x189] sm:$0xff]
      %v459 = vld [vmem:[%s273 + $0x199] sm:$0xff]
      %v460 = vld [vmem:[%s273 + $0x1a1] sm:$0xff]
      %v461 = vld [vmem:[%s273 + $0x1b1] sm:$0xff]
      %v462 = vld [vmem:[%s273 + $0x1b9] sm:$0xff]
      %v463 = vld [vmem:[%s273 + $0x1c9] sm:$0xff]
      %v464 = vld [vmem:[%s273 + $0x1d1] sm:$0xff]
      %v465 = vld [vmem:[%s273 + $0x1e1] sm:$0xff]
      %v466 = vld [vmem:[%s273 + $0x1e9] sm:$0xff]
      %v467 = vld [vmem:[%s273 + $0x1f9] sm:$0xff]
      %v468 = vld [vmem:[%s273 + $0x201] sm:$0xff]
      %v469 = vld [vmem:[%s273 + $0x211] sm:$0xff]
      %v470 = vld [vmem:[%s273 + $0x219] sm:$0xff]
      %v471 = vld [vmem:[%s273 + $0x229] sm:$0xff]
      %v472 = vld [vmem:[%s273 + $0x231] sm:$0xff]
      %v473 = vpack.c.bf16 %v425, %v425
      %v474 = vpack.c.bf16 %v426, %v426
      %v475 = vpack.c.bf16 %v427, %v427
      %v476 = vpack.c.bf16 %v428, %v428
      %v477 = vpack.c.bf16 %v429, %v429
      %v478 = vpack.c.bf16 %v430, %v430
      %v479 = vpack.c.bf16 %v431, %v431
      %v480 = vpack.c.bf16 %v432, %v432
      %v481 = vpack.c.bf16 %v433, %v433
      %v482 = vpack.c.bf16 %v434, %v434
      %v483 = vpack.c.bf16 %v435, %v435
      %v484 = vpack.c.bf16 %v436, %v436
      %v485 = vpack.c.bf16 %v437, %v437
      %v486 = vpack.c.bf16 %v438, %v438
      %v487 = vpack.c.bf16 %v439, %v439
      %v488 = vpack.c.bf16 %v440, %v440
      %v489 = vpack.c.bf16 %v441, %v441
      %v490 = vpack.c.bf16 %v442, %v442
      %v491 = vpack.c.bf16 %v443, %v443
      %v492 = vpack.c.bf16 %v444, %v444
      %v493 = vpack.c.bf16 %v445, %v445
      %v494 = vpack.c.bf16 %v446, %v446
      %v495 = vpack.c.bf16 %v447, %v447
      %v496 = vpack.c.bf16 %v448, %v448
      %v497 = vpack.c.bf16 %v449, %v449
      %v498 = vpack.c.bf16 %v450, %v450
      %v499 = vpack.c.bf16 %v451, %v451
      %v500 = vpack.c.bf16 %v452, %v452
      %v501 = vpack.c.bf16 %v453, %v453
      %v502 = vpack.c.bf16 %v454, %v454
      %v503 = vpack.c.bf16 %v455, %v455
      %v504 = vpack.c.bf16 %v456, %v456
      %v505 = vpack.c.bf16 %v457, %v457
      %v506 = vpack.c.bf16 %v458, %v458
      %v507 = vpack.c.bf16 %v459, %v459
      %v508 = vpack.c.bf16 %v460, %v460
      %v509 = vpack.c.bf16 %v461, %v461
      %v510 = vpack.c.bf16 %v462, %v462
      %v511 = vpack.c.bf16 %v463, %v463
      %v512 = vpack.c.bf16 %v464, %v464
      %v513 = vpack.c.bf16 %v465, %v465
      %v514 = vpack.c.bf16 %v466, %v466
      %v515 = vpack.c.bf16 %v467, %v467
      %v516 = vpack.c.bf16 %v468, %v468
      %v517 = vpack.c.bf16 %v469, %v469
      %v518 = vpack.c.bf16 %v470, %v470
      %v519 = vpack.c.bf16 %v471, %v471
      %v520 = vpack.c.bf16 %v472, %v472
      %569 = vrot.lane.b32.xlu0 %v473, 4
      %v570 = vpop.permute.xlu0 %569
      %571 = vrot.lane.b32.xlu0 %v474, 4
      %v572 = vpop.permute.xlu0 %571
      %573 = vrot.lane.b32.xlu0 %v475, 4
      %v574 = vpop.permute.xlu0 %573
      %575 = vrot.lane.b32.xlu0 %v476, 4
      %v576 = vpop.permute.xlu0 %575
      %577 = vrot.lane.b32.xlu0 %v477, 4
      %v578 = vpop.permute.xlu0 %577
      %579 = vrot.lane.b32.xlu0 %v478, 4
      %v580 = vpop.permute.xlu0 %579
      %581 = vrot.lane.b32.xlu0 %v479, 4
      %v582 = vpop.permute.xlu0 %581
      %583 = vrot.lane.b32.xlu0 %v480, 4
      %v584 = vpop.permute.xlu0 %583
      %585 = vrot.lane.b32.xlu0 %v481, 4
      %v586 = vpop.permute.xlu0 %585
      %587 = vrot.lane.b32.xlu0 %v482, 4
      %v588 = vpop.permute.xlu0 %587
      %589 = vrot.lane.b32.xlu0 %v483, 4
      %v590 = vpop.permute.xlu0 %589
      %591 = vrot.lane.b32.xlu0 %v484, 4
      %v592 = vpop.permute.xlu0 %591
      %593 = vrot.lane.b32.xlu0 %v485, 4
      %v594 = vpop.permute.xlu0 %593
      %595 = vrot.lane.b32.xlu0 %v486, 4
      %v596 = vpop.permute.xlu0 %595
      %597 = vrot.lane.b32.xlu0 %v487, 4
      %v598 = vpop.permute.xlu0 %597
      %599 = vrot.lane.b32.xlu0 %v488, 4
      %v600 = vpop.permute.xlu0 %599
      %601 = vrot.lane.b32.xlu0 %v489, 4
      %v602 = vpop.permute.xlu0 %601
      %603 = vrot.lane.b32.xlu0 %v490, 4
      %v604 = vpop.permute.xlu0 %603
      %605 = vrot.lane.b32.xlu0 %v491, 4
      %v606 = vpop.permute.xlu0 %605
      %607 = vrot.lane.b32.xlu0 %v492, 4
      %v608 = vpop.permute.xlu0 %607
      %609 = vrot.lane.b32.xlu0 %v493, 4
      %v610 = vpop.permute.xlu0 %609
      %611 = vrot.lane.b32.xlu0 %v494, 4
      %v612 = vpop.permute.xlu0 %611
      %613 = vrot.lane.b32.xlu0 %v495, 4
      %v614 = vpop.permute.xlu0 %613
      %615 = vrot.lane.b32.xlu0 %v496, 4
      %v616 = vpop.permute.xlu0 %615
      %617 = vrot.lane.b32.xlu0 %v497, 4
      %v618 = vpop.permute.xlu0 %617
      %619 = vrot.lane.b32.xlu0 %v498, 4
      %v620 = vpop.permute.xlu0 %619
      %621 = vrot.lane.b32.xlu0 %v499, 4
      %v622 = vpop.permute.xlu0 %621
      %623 = vrot.lane.b32.xlu0 %v500, 4
      %v624 = vpop.permute.xlu0 %623
      %625 = vrot.lane.b32.xlu0 %v501, 4
      %v626 = vpop.permute.xlu0 %625
      %627 = vrot.lane.b32.xlu0 %v502, 4
      %v628 = vpop.permute.xlu0 %627
      %629 = vrot.lane.b32.xlu0 %v503, 4
      %v630 = vpop.permute.xlu0 %629
      %631 = vrot.lane.b32.xlu0 %v504, 4
      %v632 = vpop.permute.xlu0 %631
      %633 = vrot.lane.b32.xlu0 %v505, 4
      %v634 = vpop.permute.xlu0 %633
      %635 = vrot.lane.b32.xlu0 %v506, 4
      %v636 = vpop.permute.xlu0 %635
      %637 = vrot.lane.b32.xlu0 %v507, 4
      %v638 = vpop.permute.xlu0 %637
      %639 = vrot.lane.b32.xlu0 %v508, 4
      %v640 = vpop.permute.xlu0 %639
      %641 = vrot.lane.b32.xlu0 %v509, 4
      %v642 = vpop.permute.xlu0 %641
      %643 = vrot.lane.b32.xlu0 %v510, 4
      %v644 = vpop.permute.xlu0 %643
      %645 = vrot.lane.b32.xlu0 %v511, 4
      %v646 = vpop.permute.xlu0 %645
      %647 = vrot.lane.b32.xlu0 %v512, 4
      %v648 = vpop.permute.xlu0 %647
      %649 = vrot.lane.b32.xlu0 %v513, 4
      %v650 = vpop.permute.xlu0 %649
      %651 = vrot.lane.b32.xlu0 %v514, 4
      %v652 = vpop.permute.xlu0 %651
      %653 = vrot.lane.b32.xlu0 %v515, 4
      %v654 = vpop.permute.xlu0 %653
      %655 = vrot.lane.b32.xlu0 %v516, 4
      %v656 = vpop.permute.xlu0 %655
      %657 = vrot.lane.b32.xlu0 %v517, 4
      %v658 = vpop.permute.xlu0 %657
      %659 = vrot.lane.b32.xlu0 %v518, 4
      %v660 = vpop.permute.xlu0 %659
      %661 = vrot.lane.b32.xlu0 %v519, 4
      %v662 = vpop.permute.xlu0 %661
      %663 = vrot.lane.b32.xlu0 %v520, 4
      %v664 = vpop.permute.xlu0 %663
      %vm713 = vcmask 60448
      %714 = vst.msk [vmem:[#allocation2] sm:$0xf] %vm713, %v570
      %715 = vst.msk [vmem:[#allocation2 + $0x4] sm:$0xf] %vm713, %v572
      %716 = vst.msk [vmem:[#allocation2 + $0x8] sm:$0xf] %vm713, %v574
      %717 = vst.msk [vmem:[#allocation2 + $0xc] sm:$0xf] %vm713, %v576
      %718 = vst.msk [vmem:[#allocation2 + $0x10] sm:$0xf] %vm713, %v578
      %719 = vst.msk [vmem:[#allocation2 + $0x14] sm:$0xf] %vm713, %v580
      %720 = vst.msk [vmem:[#allocation2 + $0x18] sm:$0xf] %vm713, %v582
      %721 = vst.msk [vmem:[#allocation2 + $0x1c] sm:$0xf] %vm713, %v584
      %722 = vst.msk [vmem:[#allocation2 + $0x20] sm:$0xf] %vm713, %v586
      %723 = vst.msk [vmem:[#allocation2 + $0x24] sm:$0xf] %vm713, %v588
      %724 = vst.msk [vmem:[#allocation2 + $0x28] sm:$0xf] %vm713, %v590
      %725 = vst.msk [vmem:[#allocation2 + $0x2c] sm:$0xf] %vm713, %v592
      %726 = vst.msk [vmem:[#allocation2 + $0x30] sm:$0xf] %vm713, %v594
      %727 = vst.msk [vmem:[#allocation2 + $0x34] sm:$0xf] %vm713, %v596
      %728 = vst.msk [vmem:[#allocation2 + $0x38] sm:$0xf] %vm713, %v598
      %729 = vst.msk [vmem:[#allocation2 + $0x3c] sm:$0xf] %vm713, %v600
      %730 = vst.msk [vmem:[#allocation2 + $0x40] sm:$0xf] %vm713, %v602
      %731 = vst.msk [vmem:[#allocation2 + $0x44] sm:$0xf] %vm713, %v604
      %732 = vst.msk [vmem:[#allocation2 + $0x48] sm:$0xf] %vm713, %v606
      %733 = vst.msk [vmem:[#allocation2 + $0x4c] sm:$0xf] %vm713, %v608
      %734 = vst.msk [vmem:[#allocation2 + $0x50] sm:$0xf] %vm713, %v610
      %735 = vst.msk [vmem:[#allocation2 + $0x54] sm:$0xf] %vm713, %v612
      %736 = vst.msk [vmem:[#allocation2 + $0x58] sm:$0xf] %vm713, %v614
      %737 = vst.msk [vmem:[#allocation2 + $0x5c] sm:$0xf] %vm713, %v616
      %738 = vst.msk [vmem:[#allocation2 + $0x60] sm:$0xf] %vm713, %v618
      %739 = vst.msk [vmem:[#allocation2 + $0x64] sm:$0xf] %vm713, %v620
      %740 = vst.msk [vmem:[#allocation2 + $0x68] sm:$0xf] %vm713, %v622
      %741 = vst.msk [vmem:[#allocation2 + $0x6c] sm:$0xf] %vm713, %v624
      %742 = vst.msk [vmem:[#allocation2 + $0x70] sm:$0xf] %vm713, %v626
      %743 = vst.msk [vmem:[#allocation2 + $0x74] sm:$0xf] %vm713, %v628
      %744 = vst.msk [vmem:[#allocation2 + $0x78] sm:$0xf] %vm713, %v630
      %745 = vst.msk [vmem:[#allocation2 + $0x7c] sm:$0xf] %vm713, %v632
      %746 = vst.msk [vmem:[#allocation2 + $0x80] sm:$0xf] %vm713, %v634
      %747 = vst.msk [vmem:[#allocation2 + $0x84] sm:$0xf] %vm713, %v636
      %748 = vst.msk [vmem:[#allocation2 + $0x88] sm:$0xf] %vm713, %v638
      %749 = vst.msk [vmem:[#allocation2 + $0x8c] sm:$0xf] %vm713, %v640
      %750 = vst.msk [vmem:[#allocation2 + $0x90] sm:$0xf] %vm713, %v642
      %751 = vst.msk [vmem:[#allocation2 + $0x94] sm:$0xf] %vm713, %v644
      %752 = vst.msk [vmem:[#allocation2 + $0x98] sm:$0xf] %vm713, %v646
      %753 = vst.msk [vmem:[#allocation2 + $0x9c] sm:$0xf] %vm713, %v648
      %754 = vst.msk [vmem:[#allocation2 + $0xa0] sm:$0xf] %vm713, %v650
      %755 = vst.msk [vmem:[#allocation2 + $0xa4] sm:$0xf] %vm713, %v652
      %756 = vst.msk [vmem:[#allocation2 + $0xa8] sm:$0xf] %vm713, %v654
      %757 = vst.msk [vmem:[#allocation2 + $0xac] sm:$0xf] %vm713, %v656
      %758 = vst.msk [vmem:[#allocation2 + $0xb0] sm:$0xf] %vm713, %v658
      %759 = vst.msk [vmem:[#allocation2 + $0xb4] sm:$0xf] %vm713, %v660
      %760 = vst.msk [vmem:[#allocation2 + $0xb8] sm:$0xf] %vm713, %v662
      %761 = vst.msk [vmem:[#allocation2 + $0xbc] sm:$0xf] %vm713, %v664
      %v762 = vld [vmem:[%s273 + $0x2] sm:$0xff]
      %v763 = vld [vmem:[%s273 + $0xa] sm:$0xff]
      %v764 = vld [vmem:[%s273 + $0x1a] sm:$0xff]
      %v765 = vld [vmem:[%s273 + $0x22] sm:$0xff]
      %v766 = vld [vmem:[%s273 + $0x32] sm:$0xff]
      %v767 = vld [vmem:[%s273 + $0x3a] sm:$0xff]
      %v768 = vld [vmem:[%s273 + $0x4a] sm:$0xff]
      %v769 = vld [vmem:[%s273 + $0x52] sm:$0xff]
      %v770 = vld [vmem:[%s273 + $0x62] sm:$0xff]
      %v771 = vld [vmem:[%s273 + $0x6a] sm:$0xff]
      %v772 = vld [vmem:[%s273 + $0x7a] sm:$0xff]
      %v773 = vld [vmem:[%s273 + $0x82] sm:$0xff]
      %v774 = vld [vmem:[%s273 + $0x92] sm:$0xff]
      %v775 = vld [vmem:[%s273 + $0x9a] sm:$0xff]
      %v776 = vld [vmem:[%s273 + $0xaa] sm:$0xff]
      %v777 = vld [vmem:[%s273 + $0xb2] sm:$0xff]
      %v778 = vld [vmem:[%s273 + $0xc2] sm:$0xff]
      %v779 = vld [vmem:[%s273 + $0xca] sm:$0xff]
      %v780 = vld [vmem:[%s273 + $0xda] sm:$0xff]
      %v781 = vld [vmem:[%s273 + $0xe2] sm:$0xff]
      %v782 = vld [vmem:[%s273 + $0xf2] sm:$0xff]
      %v783 = vld [vmem:[%s273 + $0xfa] sm:$0xff]
      %v784 = vld [vmem:[%s273 + $0x10a] sm:$0xff]
      %v785 = vld [vmem:[%s273 + $0x112] sm:$0xff]
      %v786 = vld [vmem:[%s273 + $0x122] sm:$0xff]
      %v787 = vld [vmem:[%s273 + $0x12a] sm:$0xff]
      %v788 = vld [vmem:[%s273 + $0x13a] sm:$0xff]
      %v789 = vld [vmem:[%s273 + $0x142] sm:$0xff]
      %v790 = vld [vmem:[%s273 + $0x152] sm:$0xff]
      %v791 = vld [vmem:[%s273 + $0x15a] sm:$0xff]
      %v792 = vld [vmem:[%s273 + $0x16a] sm:$0xff]
      %v793 = vld [vmem:[%s273 + $0x172] sm:$0xff]
      %v794 = vld [vmem:[%s273 + $0x182] sm:$0xff]
      %v795 = vld [vmem:[%s273 + $0x18a] sm:$0xff]
      %v796 = vld [vmem:[%s273 + $0x19a] sm:$0xff]
      %v797 = vld [vmem:[%s273 + $0x1a2] sm:$0xff]
      %v798 = vld [vmem:[%s273 + $0x1b2] sm:$0xff]
      %v799 = vld [vmem:[%s273 + $0x1ba] sm:$0xff]
      %v800 = vld [vmem:[%s273 + $0x1ca] sm:$0xff]
      %v801 = vld [vmem:[%s273 + $0x1d2] sm:$0xff]
      %v802 = vld [vmem:[%s273 + $0x1e2] sm:$0xff]
      %v803 = vld [vmem:[%s273 + $0x1ea] sm:$0xff]
      %v804 = vld [vmem:[%s273 + $0x1fa] sm:$0xff]
      %v805 = vld [vmem:[%s273 + $0x202] sm:$0xff]
      %v806 = vld [vmem:[%s273 + $0x212] sm:$0xff]
      %v807 = vld [vmem:[%s273 + $0x21a] sm:$0xff]
      %v808 = vld [vmem:[%s273 + $0x22a] sm:$0xff]
      %v809 = vld [vmem:[%s273 + $0x232] sm:$0xff]
      %v810 = vpack.c.bf16 %v762, %v762
      %v811 = vpack.c.bf16 %v763, %v763
      %v812 = vpack.c.bf16 %v764, %v764
      %v813 = vpack.c.bf16 %v765, %v765
      %v814 = vpack.c.bf16 %v766, %v766
      %v815 = vpack.c.bf16 %v767, %v767
      %v816 = vpack.c.bf16 %v768, %v768
      %v817 = vpack.c.bf16 %v769, %v769
      %v818 = vpack.c.bf16 %v770, %v770
      %v819 = vpack.c.bf16 %v771, %v771
      %v820 = vpack.c.bf16 %v772, %v772
      %v821 = vpack.c.bf16 %v773, %v773
      %v822 = vpack.c.bf16 %v774, %v774
      %v823 = vpack.c.bf16 %v775, %v775
      %v824 = vpack.c.bf16 %v776, %v776
      %v825 = vpack.c.bf16 %v777, %v777
      %v826 = vpack.c.bf16 %v778, %v778
      %v827 = vpack.c.bf16 %v779, %v779
      %v828 = vpack.c.bf16 %v780, %v780
      %v829 = vpack.c.bf16 %v781, %v781
      %v830 = vpack.c.bf16 %v782, %v782
      %v831 = vpack.c.bf16 %v783, %v783
      %v832 = vpack.c.bf16 %v784, %v784
      %v833 = vpack.c.bf16 %v785, %v785
      %v834 = vpack.c.bf16 %v786, %v786
      %v835 = vpack.c.bf16 %v787, %v787
      %v836 = vpack.c.bf16 %v788, %v788
      %v837 = vpack.c.bf16 %v789, %v789
      %v838 = vpack.c.bf16 %v790, %v790
      %v839 = vpack.c.bf16 %v791, %v791
      %v840 = vpack.c.bf16 %v792, %v792
      %v841 = vpack.c.bf16 %v793, %v793
      %v842 = vpack.c.bf16 %v794, %v794
      %v843 = vpack.c.bf16 %v795, %v795
      %v844 = vpack.c.bf16 %v796, %v796
      %v845 = vpack.c.bf16 %v797, %v797
      %v846 = vpack.c.bf16 %v798, %v798
      %v847 = vpack.c.bf16 %v799, %v799
      %v848 = vpack.c.bf16 %v800, %v800
      %v849 = vpack.c.bf16 %v801, %v801
      %v850 = vpack.c.bf16 %v802, %v802
      %v851 = vpack.c.bf16 %v803, %v803
      %v852 = vpack.c.bf16 %v804, %v804
      %v853 = vpack.c.bf16 %v805, %v805
      %v854 = vpack.c.bf16 %v806, %v806
      %v855 = vpack.c.bf16 %v807, %v807
      %v856 = vpack.c.bf16 %v808, %v808
      %v857 = vpack.c.bf16 %v809, %v809
      %906 = vrot.lane.b32.xlu0 %v810, 8
      %v907 = vpop.permute.xlu0 %906
      %908 = vrot.lane.b32.xlu0 %v811, 8
      %v909 = vpop.permute.xlu0 %908
      %910 = vrot.lane.b32.xlu0 %v812, 8
      %v911 = vpop.permute.xlu0 %910
      %912 = vrot.lane.b32.xlu0 %v813, 8
      %v913 = vpop.permute.xlu0 %912
      %914 = vrot.lane.b32.xlu0 %v814, 8
      %v915 = vpop.permute.xlu0 %914
      %916 = vrot.lane.b32.xlu0 %v815, 8
      %v917 = vpop.permute.xlu0 %916
      %918 = vrot.lane.b32.xlu0 %v816, 8
      %v919 = vpop.permute.xlu0 %918
      %920 = vrot.lane.b32.xlu0 %v817, 8
      %v921 = vpop.permute.xlu0 %920
      %922 = vrot.lane.b32.xlu0 %v818, 8
      %v923 = vpop.permute.xlu0 %922
      %924 = vrot.lane.b32.xlu0 %v819, 8
      %v925 = vpop.permute.xlu0 %924
      %926 = vrot.lane.b32.xlu0 %v820, 8
      %v927 = vpop.permute.xlu0 %926
      %928 = vrot.lane.b32.xlu0 %v821, 8
      %v929 = vpop.permute.xlu0 %928
      %930 = vrot.lane.b32.xlu0 %v822, 8
      %v931 = vpop.permute.xlu0 %930
      %932 = vrot.lane.b32.xlu0 %v823, 8
      %v933 = vpop.permute.xlu0 %932
      %934 = vrot.lane.b32.xlu0 %v824, 8
      %v935 = vpop.permute.xlu0 %934
      %936 = vrot.lane.b32.xlu0 %v825, 8
      %v937 = vpop.permute.xlu0 %936
      %938 = vrot.lane.b32.xlu0 %v826, 8
      %v939 = vpop.permute.xlu0 %938
      %940 = vrot.lane.b32.xlu0 %v827, 8
      %v941 = vpop.permute.xlu0 %940
      %942 = vrot.lane.b32.xlu0 %v828, 8
      %v943 = vpop.permute.xlu0 %942
      %944 = vrot.lane.b32.xlu0 %v829, 8
      %v945 = vpop.permute.xlu0 %944
      %946 = vrot.lane.b32.xlu0 %v830, 8
      %v947 = vpop.permute.xlu0 %946
      %948 = vrot.lane.b32.xlu0 %v831, 8
      %v949 = vpop.permute.xlu0 %948
      %950 = vrot.lane.b32.xlu0 %v832, 8
      %v951 = vpop.permute.xlu0 %950
      %952 = vrot.lane.b32.xlu0 %v833, 8
      %v953 = vpop.permute.xlu0 %952
      %954 = vrot.lane.b32.xlu0 %v834, 8
      %v955 = vpop.permute.xlu0 %954
      %956 = vrot.lane.b32.xlu0 %v835, 8
      %v957 = vpop.permute.xlu0 %956
      %958 = vrot.lane.b32.xlu0 %v836, 8
      %v959 = vpop.permute.xlu0 %958
      %960 = vrot.lane.b32.xlu0 %v837, 8
      %v961 = vpop.permute.xlu0 %960
      %962 = vrot.lane.b32.xlu0 %v838, 8
      %v963 = vpop.permute.xlu0 %962
      %964 = vrot.lane.b32.xlu0 %v839, 8
      %v965 = vpop.permute.xlu0 %964
      %966 = vrot.lane.b32.xlu0 %v840, 8
      %v967 = vpop.permute.xlu0 %966
      %968 = vrot.lane.b32.xlu0 %v841, 8
      %v969 = vpop.permute.xlu0 %968
      %970 = vrot.lane.b32.xlu0 %v842, 8
      %v971 = vpop.permute.xlu0 %970
      %972 = vrot.lane.b32.xlu0 %v843, 8
      %v973 = vpop.permute.xlu0 %972
      %974 = vrot.lane.b32.xlu0 %v844, 8
      %v975 = vpop.permute.xlu0 %974
      %976 = vrot.lane.b32.xlu0 %v845, 8
      %v977 = vpop.permute.xlu0 %976
      %978 = vrot.lane.b32.xlu0 %v846, 8
      %v979 = vpop.permute.xlu0 %978
      %980 = vrot.lane.b32.xlu0 %v847, 8
      %v981 = vpop.permute.xlu0 %980
      %982 = vrot.lane.b32.xlu0 %v848, 8
      %v983 = vpop.permute.xlu0 %982
      %984 = vrot.lane.b32.xlu0 %v849, 8
      %v985 = vpop.permute.xlu0 %984
      %986 = vrot.lane.b32.xlu0 %v850, 8
      %v987 = vpop.permute.xlu0 %986
      %988 = vrot.lane.b32.xlu0 %v851, 8
      %v989 = vpop.permute.xlu0 %988
      %990 = vrot.lane.b32.xlu0 %v852, 8
      %v991 = vpop.permute.xlu0 %990
      %992 = vrot.lane.b32.xlu0 %v853, 8
      %v993 = vpop.permute.xlu0 %992
      %994 = vrot.lane.b32.xlu0 %v854, 8
      %v995 = vpop.permute.xlu0 %994
      %996 = vrot.lane.b32.xlu0 %v855, 8
      %v997 = vpop.permute.xlu0 %996
      %998 = vrot.lane.b32.xlu0 %v856, 8
      %v999 = vpop.permute.xlu0 %998
      %1000 = vrot.lane.b32.xlu0 %v857, 8
      %v1001 = vpop.permute.xlu0 %1000
      %vm1050 = vcmask 93248
      %1051 = vst.msk [vmem:[#allocation2] sm:$0xf] %vm1050, %v907
      %1052 = vst.msk [vmem:[#allocation2 + $0x4] sm:$0xf] %vm1050, %v909
      %1053 = vst.msk [vmem:[#allocation2 + $0x8] sm:$0xf] %vm1050, %v911
      %1054 = vst.msk [vmem:[#allocation2 + $0xc] sm:$0xf] %vm1050, %v913
      %1055 = vst.msk [vmem:[#allocation2 + $0x10] sm:$0xf] %vm1050, %v915
      %1056 = vst.msk [vmem:[#allocation2 + $0x14] sm:$0xf] %vm1050, %v917
      %1057 = vst.msk [vmem:[#allocation2 + $0x18] sm:$0xf] %vm1050, %v919
      %1058 = vst.msk [vmem:[#allocation2 + $0x1c] sm:$0xf] %vm1050, %v921
      %1059 = vst.msk [vmem:[#allocation2 + $0x20] sm:$0xf] %vm1050, %v923
      %1060 = vst.msk [vmem:[#allocation2 + $0x24] sm:$0xf] %vm1050, %v925
      %1061 = vst.msk [vmem:[#allocation2 + $0x28] sm:$0xf] %vm1050, %v927
      %1062 = vst.msk [vmem:[#allocation2 + $0x2c] sm:$0xf] %vm1050, %v929
      %1063 = vst.msk [vmem:[#allocation2 + $0x30] sm:$0xf] %vm1050, %v931
      %1064 = vst.msk [vmem:[#allocation2 + $0x34] sm:$0xf] %vm1050, %v933
      %1065 = vst.msk [vmem:[#allocation2 + $0x38] sm:$0xf] %vm1050, %v935
      %1066 = vst.msk [vmem:[#allocation2 + $0x3c] sm:$0xf] %vm1050, %v937
      %1067 = vst.msk [vmem:[#allocation2 + $0x40] sm:$0xf] %vm1050, %v939
      %1068 = vst.msk [vmem:[#allocation2 + $0x44] sm:$0xf] %vm1050, %v941
      %1069 = vst.msk [vmem:[#allocation2 + $0x48] sm:$0xf] %vm1050, %v943
      %1070 = vst.msk [vmem:[#allocation2 + $0x4c] sm:$0xf] %vm1050, %v945
      %1071 = vst.msk [vmem:[#allocation2 + $0x50] sm:$0xf] %vm1050, %v947
      %1072 = vst.msk [vmem:[#allocation2 + $0x54] sm:$0xf] %vm1050, %v949
      %1073 = vst.msk [vmem:[#allocation2 + $0x58] sm:$0xf] %vm1050, %v951
      %1074 = vst.msk [vmem:[#allocation2 + $0x5c] sm:$0xf] %vm1050, %v953
      %1075 = vst.msk [vmem:[#allocation2 + $0x60] sm:$0xf] %vm1050, %v955
      %1076 = vst.msk [vmem:[#allocation2 + $0x64] sm:$0xf] %vm1050, %v957
      %1077 = vst.msk [vmem:[#allocation2 + $0x68] sm:$0xf] %vm1050, %v959
      %1078 = vst.msk [vmem:[#allocation2 + $0x6c] sm:$0xf] %vm1050, %v961
      %1079 = vst.msk [vmem:[#allocation2 + $0x70] sm:$0xf] %vm1050, %v963
      %1080 = vst.msk [vmem:[#allocation2 + $0x74] sm:$0xf] %vm1050, %v965
      %1081 = vst.msk [vmem:[#allocation2 + $0x78] sm:$0xf] %vm1050, %v967
      %1082 = vst.msk [vmem:[#allocation2 + $0x7c] sm:$0xf] %vm1050, %v969
      %1083 = vst.msk [vmem:[#allocation2 + $0x80] sm:$0xf] %vm1050, %v971
      %1084 = vst.msk [vmem:[#allocation2 + $0x84] sm:$0xf] %vm1050, %v973
      %1085 = vst.msk [vmem:[#allocation2 + $0x88] sm:$0xf] %vm1050, %v975
      %1086 = vst.msk [vmem:[#allocation2 + $0x8c] sm:$0xf] %vm1050, %v977
      %1087 = vst.msk [vmem:[#allocation2 + $0x90] sm:$0xf] %vm1050, %v979
      %1088 = vst.msk [vmem:[#allocation2 + $0x94] sm:$0xf] %vm1050, %v981
      %1089 = vst.msk [vmem:[#allocation2 + $0x98] sm:$0xf] %vm1050, %v983
      %1090 = vst.msk [vmem:[#allocation2 + $0x9c] sm:$0xf] %vm1050, %v985
      %1091 = vst.msk [vmem:[#allocation2 + $0xa0] sm:$0xf] %vm1050, %v987
      %1092 = vst.msk [vmem:[#allocation2 + $0xa4] sm:$0xf] %vm1050, %v989
      %1093 = vst.msk [vmem:[#allocation2 + $0xa8] sm:$0xf] %vm1050, %v991
      %1094 = vst.msk [vmem:[#allocation2 + $0xac] sm:$0xf] %vm1050, %v993
      %1095 = vst.msk [vmem:[#allocation2 + $0xb0] sm:$0xf] %vm1050, %v995
      %1096 = vst.msk [vmem:[#allocation2 + $0xb4] sm:$0xf] %vm1050, %v997
      %1097 = vst.msk [vmem:[#allocation2 + $0xb8] sm:$0xf] %vm1050, %v999
      %1098 = vst.msk [vmem:[#allocation2 + $0xbc] sm:$0xf] %vm1050, %v1001
      %v1099 = vld [vmem:[%s273 + $0x3] sm:$0xff]
      %v1100 = vld [vmem:[%s273 + $0xb] sm:$0xff]
      %v1101 = vld [vmem:[%s273 + $0x1b] sm:$0xff]
      %v1102 = vld [vmem:[%s273 + $0x23] sm:$0xff]
      %v1103 = vld [vmem:[%s273 + $0x33] sm:$0xff]
      %v1104 = vld [vmem:[%s273 + $0x3b] sm:$0xff]
      %v1105 = vld [vmem:[%s273 + $0x4b] sm:$0xff]
      %v1106 = vld [vmem:[%s273 + $0x53] sm:$0xff]
      %v1107 = vld [vmem:[%s273 + $0x63] sm:$0xff]
      %v1108 = vld [vmem:[%s273 + $0x6b] sm:$0xff]
      %v1109 = vld [vmem:[%s273 + $0x7b] sm:$0xff]
      %v1110 = vld [vmem:[%s273 + $0x83] sm:$0xff]
      %v1111 = vld [vmem:[%s273 + $0x93] sm:$0xff]
      %v1112 = vld [vmem:[%s273 + $0x9b] sm:$0xff]
      %v1113 = vld [vmem:[%s273 + $0xab] sm:$0xff]
      %v1114 = vld [vmem:[%s273 + $0xb3] sm:$0xff]
      %v1115 = vld [vmem:[%s273 + $0xc3] sm:$0xff]
      %v1116 = vld [vmem:[%s273 + $0xcb] sm:$0xff]
      %v1117 = vld [vmem:[%s273 + $0xdb] sm:$0xff]
      %v1118 = vld [vmem:[%s273 + $0xe3] sm:$0xff]
      %v1119 = vld [vmem:[%s273 + $0xf3] sm:$0xff]
      %v1120 = vld [vmem:[%s273 + $0xfb] sm:$0xff]
      %v1121 = vld [vmem:[%s273 + $0x10b] sm:$0xff]
      %v1122 = vld [vmem:[%s273 + $0x113] sm:$0xff]
      %v1123 = vld [vmem:[%s273 + $0x123] sm:$0xff]
      %v1124 = vld [vmem:[%s273 + $0x12b] sm:$0xff]
      %v1125 = vld [vmem:[%s273 + $0x13b] sm:$0xff]
      %v1126 = vld [vmem:[%s273 + $0x143] sm:$0xff]
      %v1127 = vld [vmem:[%s273 + $0x153] sm:$0xff]
      %v1128 = vld [vmem:[%s273 + $0x15b] sm:$0xff]
      %v1129 = vld [vmem:[%s273 + $0x16b] sm:$0xff]
      %v1130 = vld [vmem:[%s273 + $0x173] sm:$0xff]
      %v1131 = vld [vmem:[%s273 + $0x183] sm:$0xff]
      %v1132 = vld [vmem:[%s273 + $0x18b] sm:$0xff]
      %v1133 = vld [vmem:[%s273 + $0x19b] sm:$0xff]
      %v1134 = vld [vmem:[%s273 + $0x1a3] sm:$0xff]
      %v1135 = vld [vmem:[%s273 + $0x1b3] sm:$0xff]
      %v1136 = vld [vmem:[%s273 + $0x1bb] sm:$0xff]
      %v1137 = vld [vmem:[%s273 + $0x1cb] sm:$0xff]
      %v1138 = vld [vmem:[%s273 + $0x1d3] sm:$0xff]
      %v1139 = vld [vmem:[%s273 + $0x1e3] sm:$0xff]
      %v1140 = vld [vmem:[%s273 + $0x1eb] sm:$0xff]
      %v1141 = vld [vmem:[%s273 + $0x1fb] sm:$0xff]
      %v1142 = vld [vmem:[%s273 + $0x203] sm:$0xff]
      %v1143 = vld [vmem:[%s273 + $0x213] sm:$0xff]
      %v1144 = vld [vmem:[%s273 + $0x21b] sm:$0xff]
      %v1145 = vld [vmem:[%s273 + $0x22b] sm:$0xff]
      %v1146 = vld [vmem:[%s273 + $0x233] sm:$0xff]
      %v1147 = vpack.c.bf16 %v1099, %v1099
      %v1148 = vpack.c.bf16 %v1100, %v1100
      %v1149 = vpack.c.bf16 %v1101, %v1101
      %v1150 = vpack.c.bf16 %v1102, %v1102
      %v1151 = vpack.c.bf16 %v1103, %v1103
      %v1152 = vpack.c.bf16 %v1104, %v1104
      %v1153 = vpack.c.bf16 %v1105, %v1105
      %v1154 = vpack.c.bf16 %v1106, %v1106
      %v1155 = vpack.c.bf16 %v1107, %v1107
      %v1156 = vpack.c.bf16 %v1108, %v1108
      %v1157 = vpack.c.bf16 %v1109, %v1109
      %v1158 = vpack.c.bf16 %v1110, %v1110
      %v1159 = vpack.c.bf16 %v1111, %v1111
      %v1160 = vpack.c.bf16 %v1112, %v1112
      %v1161 = vpack.c.bf16 %v1113, %v1113
      %v1162 = vpack.c.bf16 %v1114, %v1114
      %v1163 = vpack.c.bf16 %v1115, %v1115
      %v1164 = vpack.c.bf16 %v1116, %v1116
      %v1165 = vpack.c.bf16 %v1117, %v1117
      %v1166 = vpack.c.bf16 %v1118, %v1118
      %v1167 = vpack.c.bf16 %v1119, %v1119
      %v1168 = vpack.c.bf16 %v1120, %v1120
      %v1169 = vpack.c.bf16 %v1121, %v1121
      %v1170 = vpack.c.bf16 %v1122, %v1122
      %v1171 = vpack.c.bf16 %v1123, %v1123
      %v1172 = vpack.c.bf16 %v1124, %v1124
      %v1173 = vpack.c.bf16 %v1125, %v1125
      %v1174 = vpack.c.bf16 %v1126, %v1126
      %v1175 = vpack.c.bf16 %v1127, %v1127
      %v1176 = vpack.c.bf16 %v1128, %v1128
      %v1177 = vpack.c.bf16 %v1129, %v1129
      %v1178 = vpack.c.bf16 %v1130, %v1130
      %v1179 = vpack.c.bf16 %v1131, %v1131
      %v1180 = vpack.c.bf16 %v1132, %v1132
      %v1181 = vpack.c.bf16 %v1133, %v1133
      %v1182 = vpack.c.bf16 %v1134, %v1134
      %v1183 = vpack.c.bf16 %v1135, %v1135
      %v1184 = vpack.c.bf16 %v1136, %v1136
      %v1185 = vpack.c.bf16 %v1137, %v1137
      %v1186 = vpack.c.bf16 %v1138, %v1138
      %v1187 = vpack.c.bf16 %v1139, %v1139
      %v1188 = vpack.c.bf16 %v1140, %v1140
      %v1189 = vpack.c.bf16 %v1141, %v1141
      %v1190 = vpack.c.bf16 %v1142, %v1142
      %v1191 = vpack.c.bf16 %v1143, %v1143
      %v1192 = vpack.c.bf16 %v1144, %v1144
      %v1193 = vpack.c.bf16 %v1145, %v1145
      %v1194 = vpack.c.bf16 %v1146, %v1146
      %1243 = vrot.lane.b32.xlu0 %v1147, 12
      %v1244 = vpop.permute.xlu0 %1243
      %1245 = vrot.lane.b32.xlu0 %v1148, 12
      %v1246 = vpop.permute.xlu0 %1245
      %1247 = vrot.lane.b32.xlu0 %v1149, 12
      %v1248 = vpop.permute.xlu0 %1247
      %1249 = vrot.lane.b32.xlu0 %v1150, 12
      %v1250 = vpop.permute.xlu0 %1249
      %1251 = vrot.lane.b32.xlu0 %v1151, 12
      %v1252 = vpop.permute.xlu0 %1251
      %1253 = vrot.lane.b32.xlu0 %v1152, 12
      %v1254 = vpop.permute.xlu0 %1253
      %1255 = vrot.lane.b32.xlu0 %v1153, 12
      %v1256 = vpop.permute.xlu0 %1255
      %1257 = vrot.lane.b32.xlu0 %v1154, 12
      %v1258 = vpop.permute.xlu0 %1257
      %1259 = vrot.lane.b32.xlu0 %v1155, 12
      %v1260 = vpop.permute.xlu0 %1259
      %1261 = vrot.lane.b32.xlu0 %v1156, 12
      %v1262 = vpop.permute.xlu0 %1261
      %1263 = vrot.lane.b32.xlu0 %v1157, 12
      %v1264 = vpop.permute.xlu0 %1263
      %1265 = vrot.lane.b32.xlu0 %v1158, 12
      %v1266 = vpop.permute.xlu0 %1265
      %1267 = vrot.lane.b32.xlu0 %v1159, 12
      %v1268 = vpop.permute.xlu0 %1267
      %1269 = vrot.lane.b32.xlu0 %v1160, 12
      %v1270 = vpop.permute.xlu0 %1269
      %1271 = vrot.lane.b32.xlu0 %v1161, 12
      %v1272 = vpop.permute.xlu0 %1271
      %1273 = vrot.lane.b32.xlu0 %v1162, 12
      %v1274 = vpop.permute.xlu0 %1273
      %1275 = vrot.lane.b32.xlu0 %v1163, 12
      %v1276 = vpop.permute.xlu0 %1275
      %1277 = vrot.lane.b32.xlu0 %v1164, 12
      %v1278 = vpop.permute.xlu0 %1277
      %1279 = vrot.lane.b32.xlu0 %v1165, 12
      %v1280 = vpop.permute.xlu0 %1279
      %1281 = vrot.lane.b32.xlu0 %v1166, 12
      %v1282 = vpop.permute.xlu0 %1281
      %1283 = vrot.lane.b32.xlu0 %v1167, 12
      %v1284 = vpop.permute.xlu0 %1283
      %1285 = vrot.lane.b32.xlu0 %v1168, 12
      %v1286 = vpop.permute.xlu0 %1285
      %1287 = vrot.lane.b32.xlu0 %v1169, 12
      %v1288 = vpop.permute.xlu0 %1287
      %1289 = vrot.lane.b32.xlu0 %v1170, 12
      %v1290 = vpop.permute.xlu0 %1289
      %1291 = vrot.lane.b32.xlu0 %v1171, 12
      %v1292 = vpop.permute.xlu0 %1291
      %1293 = vrot.lane.b32.xlu0 %v1172, 12
      %v1294 = vpop.permute.xlu0 %1293
      %1295 = vrot.lane.b32.xlu0 %v1173, 12
      %v1296 = vpop.permute.xlu0 %1295
      %1297 = vrot.lane.b32.xlu0 %v1174, 12
      %v1298 = vpop.permute.xlu0 %1297
      %1299 = vrot.lane.b32.xlu0 %v1175, 12
      %v1300 = vpop.permute.xlu0 %1299
      %1301 = vrot.lane.b32.xlu0 %v1176, 12
      %v1302 = vpop.permute.xlu0 %1301
      %1303 = vrot.lane.b32.xlu0 %v1177, 12
      %v1304 = vpop.permute.xlu0 %1303
      %1305 = vrot.lane.b32.xlu0 %v1178, 12
      %v1306 = vpop.permute.xlu0 %1305
      %1307 = vrot.lane.b32.xlu0 %v1179, 12
      %v1308 = vpop.permute.xlu0 %1307
      %1309 = vrot.lane.b32.xlu0 %v1180, 12
      %v1310 = vpop.permute.xlu0 %1309
      %1311 = vrot.lane.b32.xlu0 %v1181, 12
      %v1312 = vpop.permute.xlu0 %1311
      %1313 = vrot.lane.b32.xlu0 %v1182, 12
      %v1314 = vpop.permute.xlu0 %1313
      %1315 = vrot.lane.b32.xlu0 %v1183, 12
      %v1316 = vpop.permute.xlu0 %1315
      %1317 = vrot.lane.b32.xlu0 %v1184, 12
      %v1318 = vpop.permute.xlu0 %1317
      %1319 = vrot.lane.b32.xlu0 %v1185, 12
      %v1320 = vpop.permute.xlu0 %1319
      %1321 = vrot.lane.b32.xlu0 %v1186, 12
      %v1322 = vpop.permute.xlu0 %1321
      %1323 = vrot.lane.b32.xlu0 %v1187, 12
      %v1324 = vpop.permute.xlu0 %1323
      %1325 = vrot.lane.b32.xlu0 %v1188, 12
      %v1326 = vpop.permute.xlu0 %1325
      %1327 = vrot.lane.b32.xlu0 %v1189, 12
      %v1328 = vpop.permute.xlu0 %1327
      %1329 = vrot.lane.b32.xlu0 %v1190, 12
      %v1330 = vpop.permute.xlu0 %1329
      %1331 = vrot.lane.b32.xlu0 %v1191, 12
      %v1332 = vpop.permute.xlu0 %1331
      %1333 = vrot.lane.b32.xlu0 %v1192, 12
      %v1334 = vpop.permute.xlu0 %1333
      %1335 = vrot.lane.b32.xlu0 %v1193, 12
      %v1336 = vpop.permute.xlu0 %1335
      %1337 = vrot.lane.b32.xlu0 %v1194, 12
      %v1338 = vpop.permute.xlu0 %1337
      %vm1387 = vcmask 126048
      %1388 = vst.msk [vmem:[#allocation2] sm:$0xf] %vm1387, %v1244
      %1389 = vst.msk [vmem:[#allocation2 + $0x4] sm:$0xf] %vm1387, %v1246
      %1390 = vst.msk [vmem:[#allocation2 + $0x8] sm:$0xf] %vm1387, %v1248
      %1391 = vst.msk [vmem:[#allocation2 + $0xc] sm:$0xf] %vm1387, %v1250
      %1392 = vst.msk [vmem:[#allocation2 + $0x10] sm:$0xf] %vm1387, %v1252
      %1393 = vst.msk [vmem:[#allocation2 + $0x14] sm:$0xf] %vm1387, %v1254
      %1394 = vst.msk [vmem:[#allocation2 + $0x18] sm:$0xf] %vm1387, %v1256
      %1395 = vst.msk [vmem:[#allocation2 + $0x1c] sm:$0xf] %vm1387, %v1258
      %1396 = vst.msk [vmem:[#allocation2 + $0x20] sm:$0xf] %vm1387, %v1260
      %1397 = vst.msk [vmem:[#allocation2 + $0x24] sm:$0xf] %vm1387, %v1262
      %1398 = vst.msk [vmem:[#allocation2 + $0x28] sm:$0xf] %vm1387, %v1264
      %1399 = vst.msk [vmem:[#allocation2 + $0x2c] sm:$0xf] %vm1387, %v1266
      %1400 = vst.msk [vmem:[#allocation2 + $0x30] sm:$0xf] %vm1387, %v1268
      %1401 = vst.msk [vmem:[#allocation2 + $0x34] sm:$0xf] %vm1387, %v1270
      %1402 = vst.msk [vmem:[#allocation2 + $0x38] sm:$0xf] %vm1387, %v1272
      %1403 = vst.msk [vmem:[#allocation2 + $0x3c] sm:$0xf] %vm1387, %v1274
      %1404 = vst.msk [vmem:[#allocation2 + $0x40] sm:$0xf] %vm1387, %v1276
      %1405 = vst.msk [vmem:[#allocation2 + $0x44] sm:$0xf] %vm1387, %v1278
      %1406 = vst.msk [vmem:[#allocation2 + $0x48] sm:$0xf] %vm1387, %v1280
      %1407 = vst.msk [vmem:[#allocation2 + $0x4c] sm:$0xf] %vm1387, %v1282
      %1408 = vst.msk [vmem:[#allocation2 + $0x50] sm:$0xf] %vm1387, %v1284
      %1409 = vst.msk [vmem:[#allocation2 + $0x54] sm:$0xf] %vm1387, %v1286
      %1410 = vst.msk [vmem:[#allocation2 + $0x58] sm:$0xf] %vm1387, %v1288
      %1411 = vst.msk [vmem:[#allocation2 + $0x5c] sm:$0xf] %vm1387, %v1290
      %1412 = vst.msk [vmem:[#allocation2 + $0x60] sm:$0xf] %vm1387, %v1292
      %1413 = vst.msk [vmem:[#allocation2 + $0x64] sm:$0xf] %vm1387, %v1294
      %1414 = vst.msk [vmem:[#allocation2 + $0x68] sm:$0xf] %vm1387, %v1296
      %1415 = vst.msk [vmem:[#allocation2 + $0x6c] sm:$0xf] %vm1387, %v1298
      %1416 = vst.msk [vmem:[#allocation2 + $0x70] sm:$0xf] %vm1387, %v1300
      %1417 = vst.msk [vmem:[#allocation2 + $0x74] sm:$0xf] %vm1387, %v1302
      %1418 = vst.msk [vmem:[#allocation2 + $0x78] sm:$0xf] %vm1387, %v1304
      %1419 = vst.msk [vmem:[#allocation2 + $0x7c] sm:$0xf] %vm1387, %v1306
      %1420 = vst.msk [vmem:[#allocation2 + $0x80] sm:$0xf] %vm1387, %v1308
      %1421 = vst.msk [vmem:[#allocation2 + $0x84] sm:$0xf] %vm1387, %v1310
      %1422 = vst.msk [vmem:[#allocation2 + $0x88] sm:$0xf] %vm1387, %v1312
      %1423 = vst.msk [vmem:[#allocation2 + $0x8c] sm:$0xf] %vm1387, %v1314
      %1424 = vst.msk [vmem:[#allocation2 + $0x90] sm:$0xf] %vm1387, %v1316
      %1425 = vst.msk [vmem:[#allocation2 + $0x94] sm:$0xf] %vm1387, %v1318
      %1426 = vst.msk [vmem:[#allocation2 + $0x98] sm:$0xf] %vm1387, %v1320
      %1427 = vst.msk [vmem:[#allocation2 + $0x9c] sm:$0xf] %vm1387, %v1322
      %1428 = vst.msk [vmem:[#allocation2 + $0xa0] sm:$0xf] %vm1387, %v1324
      %1429 = vst.msk [vmem:[#allocation2 + $0xa4] sm:$0xf] %vm1387, %v1326
      %1430 = vst.msk [vmem:[#allocation2 + $0xa8] sm:$0xf] %vm1387, %v1328
      %1431 = vst.msk [vmem:[#allocation2 + $0xac] sm:$0xf] %vm1387, %v1330
      %1432 = vst.msk [vmem:[#allocation2 + $0xb0] sm:$0xf] %vm1387, %v1332
      %1433 = vst.msk [vmem:[#allocation2 + $0xb4] sm:$0xf] %vm1387, %v1334
      %1434 = vst.msk [vmem:[#allocation2 + $0xb8] sm:$0xf] %vm1387, %v1336
      %1435 = vst.msk [vmem:[#allocation2 + $0xbc] sm:$0xf] %vm1387, %v1338
      %v1436 = vld [vmem:[%s273 + $0x4] sm:$0xff]
      %v1437 = vld [vmem:[%s273 + $0xc] sm:$0xff]
      %v1438 = vld [vmem:[%s273 + $0x1c] sm:$0xff]
      %v1439 = vld [vmem:[%s273 + $0x24] sm:$0xff]
      %v1440 = vld [vmem:[%s273 + $0x34] sm:$0xff]
      %v1441 = vld [vmem:[%s273 + $0x3c] sm:$0xff]
      %v1442 = vld [vmem:[%s273 + $0x4c] sm:$0xff]
      %v1443 = vld [vmem:[%s273 + $0x54] sm:$0xff]
      %v1444 = vld [vmem:[%s273 + $0x64] sm:$0xff]
      %v1445 = vld [vmem:[%s273 + $0x6c] sm:$0xff]
      %v1446 = vld [vmem:[%s273 + $0x7c] sm:$0xff]
      %v1447 = vld [vmem:[%s273 + $0x84] sm:$0xff]
      %v1448 = vld [vmem:[%s273 + $0x94] sm:$0xff]
      %v1449 = vld [vmem:[%s273 + $0x9c] sm:$0xff]
      %v1450 = vld [vmem:[%s273 + $0xac] sm:$0xff]
      %v1451 = vld [vmem:[%s273 + $0xb4] sm:$0xff]
      %v1452 = vld [vmem:[%s273 + $0xc4] sm:$0xff]
      %v1453 = vld [vmem:[%s273 + $0xcc] sm:$0xff]
      %v1454 = vld [vmem:[%s273 + $0xdc] sm:$0xff]
      %v1455 = vld [vmem:[%s273 + $0xe4] sm:$0xff]
      %v1456 = vld [vmem:[%s273 + $0xf4] sm:$0xff]
      %v1457 = vld [vmem:[%s273 + $0xfc] sm:$0xff]
      %v1458 = vld [vmem:[%s273 + $0x10c] sm:$0xff]
      %v1459 = vld [vmem:[%s273 + $0x114] sm:$0xff]
      %v1460 = vld [vmem:[%s273 + $0x124] sm:$0xff]
      %v1461 = vld [vmem:[%s273 + $0x12c] sm:$0xff]
      %v1462 = vld [vmem:[%s273 + $0x13c] sm:$0xff]
      %v1463 = vld [vmem:[%s273 + $0x144] sm:$0xff]
      %v1464 = vld [vmem:[%s273 + $0x154] sm:$0xff]
      %v1465 = vld [vmem:[%s273 + $0x15c] sm:$0xff]
      %v1466 = vld [vmem:[%s273 + $0x16c] sm:$0xff]
      %v1467 = vld [vmem:[%s273 + $0x174] sm:$0xff]
      %v1468 = vld [vmem:[%s273 + $0x184] sm:$0xff]
      %v1469 = vld [vmem:[%s273 + $0x18c] sm:$0xff]
      %v1470 = vld [vmem:[%s273 + $0x19c] sm:$0xff]
      %v1471 = vld [vmem:[%s273 + $0x1a4] sm:$0xff]
      %v1472 = vld [vmem:[%s273 + $0x1b4] sm:$0xff]
      %v1473 = vld [vmem:[%s273 + $0x1bc] sm:$0xff]
      %v1474 = vld [vmem:[%s273 + $0x1cc] sm:$0xff]
      %v1475 = vld [vmem:[%s273 + $0x1d4] sm:$0xff]
      %v1476 = vld [vmem:[%s273 + $0x1e4] sm:$0xff]
      %v1477 = vld [vmem:[%s273 + $0x1ec] sm:$0xff]
      %v1478 = vld [vmem:[%s273 + $0x1fc] sm:$0xff]
      %v1479 = vld [vmem:[%s273 + $0x204] sm:$0xff]
      %v1480 = vld [vmem:[%s273 + $0x214] sm:$0xff]
      %v1481 = vld [vmem:[%s273 + $0x21c] sm:$0xff]
      %v1482 = vld [vmem:[%s273 + $0x22c] sm:$0xff]
      %v1483 = vld [vmem:[%s273 + $0x234] sm:$0xff]
      %v1484 = vpack.c.bf16 %v1436, %v1436
      %v1485 = vpack.c.bf16 %v1437, %v1437
      %v1486 = vpack.c.bf16 %v1438, %v1438
      %v1487 = vpack.c.bf16 %v1439, %v1439
      %v1488 = vpack.c.bf16 %v1440, %v1440
      %v1489 = vpack.c.bf16 %v1441, %v1441
      %v1490 = vpack.c.bf16 %v1442, %v1442
      %v1491 = vpack.c.bf16 %v1443, %v1443
      %v1492 = vpack.c.bf16 %v1444, %v1444
      %v1493 = vpack.c.bf16 %v1445, %v1445
      %v1494 = vpack.c.bf16 %v1446, %v1446
      %v1495 = vpack.c.bf16 %v1447, %v1447
      %v1496 = vpack.c.bf16 %v1448, %v1448
      %v1497 = vpack.c.bf16 %v1449, %v1449
      %v1498 = vpack.c.bf16 %v1450, %v1450
      %v1499 = vpack.c.bf16 %v1451, %v1451
      %v1500 = vpack.c.bf16 %v1452, %v1452
      %v1501 = vpack.c.bf16 %v1453, %v1453
      %v1502 = vpack.c.bf16 %v1454, %v1454
      %v1503 = vpack.c.bf16 %v1455, %v1455
      %v1504 = vpack.c.bf16 %v1456, %v1456
      %v1505 = vpack.c.bf16 %v1457, %v1457
      %v1506 = vpack.c.bf16 %v1458, %v1458
      %v1507 = vpack.c.bf16 %v1459, %v1459
      %v1508 = vpack.c.bf16 %v1460, %v1460
      %v1509 = vpack.c.bf16 %v1461, %v1461
      %v1510 = vpack.c.bf16 %v1462, %v1462
      %v1511 = vpack.c.bf16 %v1463, %v1463
      %v1512 = vpack.c.bf16 %v1464, %v1464
      %v1513 = vpack.c.bf16 %v1465, %v1465
      %v1514 = vpack.c.bf16 %v1466, %v1466
      %v1515 = vpack.c.bf16 %v1467, %v1467
      %v1516 = vpack.c.bf16 %v1468, %v1468
      %v1517 = vpack.c.bf16 %v1469, %v1469
      %v1518 = vpack.c.bf16 %v1470, %v1470
      %v1519 = vpack.c.bf16 %v1471, %v1471
      %v1520 = vpack.c.bf16 %v1472, %v1472
      %v1521 = vpack.c.bf16 %v1473, %v1473
      %v1522 = vpack.c.bf16 %v1474, %v1474
      %v1523 = vpack.c.bf16 %v1475, %v1475
      %v1524 = vpack.c.bf16 %v1476, %v1476
      %v1525 = vpack.c.bf16 %v1477, %v1477
      %v1526 = vpack.c.bf16 %v1478, %v1478
      %v1527 = vpack.c.bf16 %v1479, %v1479
      %v1528 = vpack.c.bf16 %v1480, %v1480
      %v1529 = vpack.c.bf16 %v1481, %v1481
      %v1530 = vpack.c.bf16 %v1482, %v1482
      %v1531 = vpack.c.bf16 %v1483, %v1483
      %1580 = vrot.lane.b32.xlu0 %v1484, 16
      %v1581 = vpop.permute.xlu0 %1580
      %1582 = vrot.lane.b32.xlu0 %v1485, 16
      %v1583 = vpop.permute.xlu0 %1582
      %1584 = vrot.lane.b32.xlu0 %v1486, 16
      %v1585 = vpop.permute.xlu0 %1584
      %1586 = vrot.lane.b32.xlu0 %v1487, 16
      %v1587 = vpop.permute.xlu0 %1586
      %1588 = vrot.lane.b32.xlu0 %v1488, 16
      %v1589 = vpop.permute.xlu0 %1588
      %1590 = vrot.lane.b32.xlu0 %v1489, 16
      %v1591 = vpop.permute.xlu0 %1590
      %1592 = vrot.lane.b32.xlu0 %v1490, 16
      %v1593 = vpop.permute.xlu0 %1592
      %1594 = vrot.lane.b32.xlu0 %v1491, 16
      %v1595 = vpop.permute.xlu0 %1594
      %1596 = vrot.lane.b32.xlu0 %v1492, 16
      %v1597 = vpop.permute.xlu0 %1596
      %1598 = vrot.lane.b32.xlu0 %v1493, 16
      %v1599 = vpop.permute.xlu0 %1598
      %1600 = vrot.lane.b32.xlu0 %v1494, 16
      %v1601 = vpop.permute.xlu0 %1600
      %1602 = vrot.lane.b32.xlu0 %v1495, 16
      %v1603 = vpop.permute.xlu0 %1602
      %1604 = vrot.lane.b32.xlu0 %v1496, 16
      %v1605 = vpop.permute.xlu0 %1604
      %1606 = vrot.lane.b32.xlu0 %v1497, 16
      %v1607 = vpop.permute.xlu0 %1606
      %1608 = vrot.lane.b32.xlu0 %v1498, 16
      %v1609 = vpop.permute.xlu0 %1608
      %1610 = vrot.lane.b32.xlu0 %v1499, 16
      %v1611 = vpop.permute.xlu0 %1610
      %1612 = vrot.lane.b32.xlu0 %v1500, 16
      %v1613 = vpop.permute.xlu0 %1612
      %1614 = vrot.lane.b32.xlu0 %v1501, 16
      %v1615 = vpop.permute.xlu0 %1614
      %1616 = vrot.lane.b32.xlu0 %v1502, 16
      %v1617 = vpop.permute.xlu0 %1616
      %1618 = vrot.lane.b32.xlu0 %v1503, 16
      %v1619 = vpop.permute.xlu0 %1618
      %1620 = vrot.lane.b32.xlu0 %v1504, 16
      %v1621 = vpop.permute.xlu0 %1620
      %1622 = vrot.lane.b32.xlu0 %v1505, 16
      %v1623 = vpop.permute.xlu0 %1622
      %1624 = vrot.lane.b32.xlu0 %v1506, 16
      %v1625 = vpop.permute.xlu0 %1624
      %1626 = vrot.lane.b32.xlu0 %v1507, 16
      %v1627 = vpop.permute.xlu0 %1626
      %1628 = vrot.lane.b32.xlu0 %v1508, 16
      %v1629 = vpop.permute.xlu0 %1628
      %1630 = vrot.lane.b32.xlu0 %v1509, 16
      %v1631 = vpop.permute.xlu0 %1630
      %1632 = vrot.lane.b32.xlu0 %v1510, 16
      %v1633 = vpop.permute.xlu0 %1632
      %1634 = vrot.lane.b32.xlu0 %v1511, 16
      %v1635 = vpop.permute.xlu0 %1634
      %1636 = vrot.lane.b32.xlu0 %v1512, 16
      %v1637 = vpop.permute.xlu0 %1636
      %1638 = vrot.lane.b32.xlu0 %v1513, 16
      %v1639 = vpop.permute.xlu0 %1638
      %1640 = vrot.lane.b32.xlu0 %v1514, 16
      %v1641 = vpop.permute.xlu0 %1640
      %1642 = vrot.lane.b32.xlu0 %v1515, 16
      %v1643 = vpop.permute.xlu0 %1642
      %1644 = vrot.lane.b32.xlu0 %v1516, 16
      %v1645 = vpop.permute.xlu0 %1644
      %1646 = vrot.lane.b32.xlu0 %v1517, 16
      %v1647 = vpop.permute.xlu0 %1646
      %1648 = vrot.lane.b32.xlu0 %v1518, 16
      %v1649 = vpop.permute.xlu0 %1648
      %1650 = vrot.lane.b32.xlu0 %v1519, 16
      %v1651 = vpop.permute.xlu0 %1650
      %1652 = vrot.lane.b32.xlu0 %v1520, 16
      %v1653 = vpop.permute.xlu0 %1652
      %1654 = vrot.lane.b32.xlu0 %v1521, 16
      %v1655 = vpop.permute.xlu0 %1654
      %1656 = vrot.lane.b32.xlu0 %v1522, 16
      %v1657 = vpop.permute.xlu0 %1656
      %1658 = vrot.lane.b32.xlu0 %v1523, 16
      %v1659 = vpop.permute.xlu0 %1658
      %1660 = vrot.lane.b32.xlu0 %v1524, 16
      %v1661 = vpop.permute.xlu0 %1660
      %1662 = vrot.lane.b32.xlu0 %v1525, 16
      %v1663 = vpop.permute.xlu0 %1662
      %1664 = vrot.lane.b32.xlu0 %v1526, 16
      %v1665 = vpop.permute.xlu0 %1664
      %1666 = vrot.lane.b32.xlu0 %v1527, 16
      %v1667 = vpop.permute.xlu0 %1666
      %1668 = vrot.lane.b32.xlu0 %v1528, 16
      %v1669 = vpop.permute.xlu0 %1668
      %1670 = vrot.lane.b32.xlu0 %v1529, 16
      %v1671 = vpop.permute.xlu0 %1670
      %1672 = vrot.lane.b32.xlu0 %v1530, 16
      %v1673 = vpop.permute.xlu0 %1672
      %1674 = vrot.lane.b32.xlu0 %v1531, 16
      %v1675 = vpop.permute.xlu0 %1674
      %vm1724 = vcmask 158848
      %1725 = vst.msk [vmem:[#allocation2] sm:$0xf] %vm1724, %v1581
      %1726 = vst.msk [vmem:[#allocation2 + $0x4] sm:$0xf] %vm1724, %v1583
      %1727 = vst.msk [vmem:[#allocation2 + $0x8] sm:$0xf] %vm1724, %v1585
      %1728 = vst.msk [vmem:[#allocation2 + $0xc] sm:$0xf] %vm1724, %v1587
      %1729 = vst.msk [vmem:[#allocation2 + $0x10] sm:$0xf] %vm1724, %v1589
      %1730 = vst.msk [vmem:[#allocation2 + $0x14] sm:$0xf] %vm1724, %v1591
      %1731 = vst.msk [vmem:[#allocation2 + $0x18] sm:$0xf] %vm1724, %v1593
      %1732 = vst.msk [vmem:[#allocation2 + $0x1c] sm:$0xf] %vm1724, %v1595
      %1733 = vst.msk [vmem:[#allocation2 + $0x20] sm:$0xf] %vm1724, %v1597
      %1734 = vst.msk [vmem:[#allocation2 + $0x24] sm:$0xf] %vm1724, %v1599
      %1735 = vst.msk [vmem:[#allocation2 + $0x28] sm:$0xf] %vm1724, %v1601
      %1736 = vst.msk [vmem:[#allocation2 + $0x2c] sm:$0xf] %vm1724, %v1603
      %1737 = vst.msk [vmem:[#allocation2 + $0x30] sm:$0xf] %vm1724, %v1605
      %1738 = vst.msk [vmem:[#allocation2 + $0x34] sm:$0xf] %vm1724, %v1607
      %1739 = vst.msk [vmem:[#allocation2 + $0x38] sm:$0xf] %vm1724, %v1609
      %1740 = vst.msk [vmem:[#allocation2 + $0x3c] sm:$0xf] %vm1724, %v1611
      %1741 = vst.msk [vmem:[#allocation2 + $0x40] sm:$0xf] %vm1724, %v1613
      %1742 = vst.msk [vmem:[#allocation2 + $0x44] sm:$0xf] %vm1724, %v1615
      %1743 = vst.msk [vmem:[#allocation2 + $0x48] sm:$0xf] %vm1724, %v1617
      %1744 = vst.msk [vmem:[#allocation2 + $0x4c] sm:$0xf] %vm1724, %v1619
      %1745 = vst.msk [vmem:[#allocation2 + $0x50] sm:$0xf] %vm1724, %v1621
      %1746 = vst.msk [vmem:[#allocation2 + $0x54] sm:$0xf] %vm1724, %v1623
      %1747 = vst.msk [vmem:[#allocation2 + $0x58] sm:$0xf] %vm1724, %v1625
      %1748 = vst.msk [vmem:[#allocation2 + $0x5c] sm:$0xf] %vm1724, %v1627
      %1749 = vst.msk [vmem:[#allocation2 + $0x60] sm:$0xf] %vm1724, %v1629
      %1750 = vst.msk [vmem:[#allocation2 + $0x64] sm:$0xf] %vm1724, %v1631
      %1751 = vst.msk [vmem:[#allocation2 + $0x68] sm:$0xf] %vm1724, %v1633
      %1752 = vst.msk [vmem:[#allocation2 + $0x6c] sm:$0xf] %vm1724, %v1635
      %1753 = vst.msk [vmem:[#allocation2 + $0x70] sm:$0xf] %vm1724, %v1637
      %1754 = vst.msk [vmem:[#allocation2 + $0x74] sm:$0xf] %vm1724, %v1639
      %1755 = vst.msk [vmem:[#allocation2 + $0x78] sm:$0xf] %vm1724, %v1641
      %1756 = vst.msk [vmem:[#allocation2 + $0x7c] sm:$0xf] %vm1724, %v1643
      %1757 = vst.msk [vmem:[#allocation2 + $0x80] sm:$0xf] %vm1724, %v1645
      %1758 = vst.msk [vmem:[#allocation2 + $0x84] sm:$0xf] %vm1724, %v1647
      %1759 = vst.msk [vmem:[#allocation2 + $0x88] sm:$0xf] %vm1724, %v1649
      %1760 = vst.msk [vmem:[#allocation2 + $0x8c] sm:$0xf] %vm1724, %v1651
      %1761 = vst.msk [vmem:[#allocation2 + $0x90] sm:$0xf] %vm1724, %v1653
      %1762 = vst.msk [vmem:[#allocation2 + $0x94] sm:$0xf] %vm1724, %v1655
      %1763 = vst.msk [vmem:[#allocation2 + $0x98] sm:$0xf] %vm1724, %v1657
      %1764 = vst.msk [vmem:[#allocation2 + $0x9c] sm:$0xf] %vm1724, %v1659
      %1765 = vst.msk [vmem:[#allocation2 + $0xa0] sm:$0xf] %vm1724, %v1661
      %1766 = vst.msk [vmem:[#allocation2 + $0xa4] sm:$0xf] %vm1724, %v1663
      %1767 = vst.msk [vmem:[#allocation2 + $0xa8] sm:$0xf] %vm1724, %v1665
      %1768 = vst.msk [vmem:[#allocation2 + $0xac] sm:$0xf] %vm1724, %v1667
      %1769 = vst.msk [vmem:[#allocation2 + $0xb0] sm:$0xf] %vm1724, %v1669
      %1770 = vst.msk [vmem:[#allocation2 + $0xb4] sm:$0xf] %vm1724, %v1671
      %1771 = vst.msk [vmem:[#allocation2 + $0xb8] sm:$0xf] %vm1724, %v1673
      %1772 = vst.msk [vmem:[#allocation2 + $0xbc] sm:$0xf] %vm1724, %v1675
      %v1773 = vld [vmem:[%s273 + $0x5] sm:$0xff]
      %v1774 = vld [vmem:[%s273 + $0xd] sm:$0xff]
      %v1775 = vld [vmem:[%s273 + $0x1d] sm:$0xff]
      %v1776 = vld [vmem:[%s273 + $0x25] sm:$0xff]
      %v1777 = vld [vmem:[%s273 + $0x35] sm:$0xff]
      %v1778 = vld [vmem:[%s273 + $0x3d] sm:$0xff]
      %v1779 = vld [vmem:[%s273 + $0x4d] sm:$0xff]
      %v1780 = vld [vmem:[%s273 + $0x55] sm:$0xff]
      %v1781 = vld [vmem:[%s273 + $0x65] sm:$0xff]
      %v1782 = vld [vmem:[%s273 + $0x6d] sm:$0xff]
      %v1783 = vld [vmem:[%s273 + $0x7d] sm:$0xff]
      %v1784 = vld [vmem:[%s273 + $0x85] sm:$0xff]
      %v1785 = vld [vmem:[%s273 + $0x95] sm:$0xff]
      %v1786 = vld [vmem:[%s273 + $0x9d] sm:$0xff]
      %v1787 = vld [vmem:[%s273 + $0xad] sm:$0xff]
      %v1788 = vld [vmem:[%s273 + $0xb5] sm:$0xff]
      %v1789 = vld [vmem:[%s273 + $0xc5] sm:$0xff]
      %v1790 = vld [vmem:[%s273 + $0xcd] sm:$0xff]
      %v1791 = vld [vmem:[%s273 + $0xdd] sm:$0xff]
      %v1792 = vld [vmem:[%s273 + $0xe5] sm:$0xff]
      %v1793 = vld [vmem:[%s273 + $0xf5] sm:$0xff]
      %v1794 = vld [vmem:[%s273 + $0xfd] sm:$0xff]
      %v1795 = vld [vmem:[%s273 + $0x10d] sm:$0xff]
      %v1796 = vld [vmem:[%s273 + $0x115] sm:$0xff]
      %v1797 = vld [vmem:[%s273 + $0x125] sm:$0xff]
      %v1798 = vld [vmem:[%s273 + $0x12d] sm:$0xff]
      %v1799 = vld [vmem:[%s273 + $0x13d] sm:$0xff]
      %v1800 = vld [vmem:[%s273 + $0x145] sm:$0xff]
      %v1801 = vld [vmem:[%s273 + $0x155] sm:$0xff]
      %v1802 = vld [vmem:[%s273 + $0x15d] sm:$0xff]
      %v1803 = vld [vmem:[%s273 + $0x16d] sm:$0xff]
      %v1804 = vld [vmem:[%s273 + $0x175] sm:$0xff]
      %v1805 = vld [vmem:[%s273 + $0x185] sm:$0xff]
      %v1806 = vld [vmem:[%s273 + $0x18d] sm:$0xff]
      %v1807 = vld [vmem:[%s273 + $0x19d] sm:$0xff]
      %v1808 = vld [vmem:[%s273 + $0x1a5] sm:$0xff]
      %v1809 = vld [vmem:[%s273 + $0x1b5] sm:$0xff]
      %v1810 = vld [vmem:[%s273 + $0x1bd] sm:$0xff]
      %v1811 = vld [vmem:[%s273 + $0x1cd] sm:$0xff]
      %v1812 = vld [vmem:[%s273 + $0x1d5] sm:$0xff]
      %v1813 = vld [vmem:[%s273 + $0x1e5] sm:$0xff]
      %v1814 = vld [vmem:[%s273 + $0x1ed] sm:$0xff]
      %v1815 = vld [vmem:[%s273 + $0x1fd] sm:$0xff]
      %v1816 = vld [vmem:[%s273 + $0x205] sm:$0xff]
      %v1817 = vld [vmem:[%s273 + $0x215] sm:$0xff]
      %v1818 = vld [vmem:[%s273 + $0x21d] sm:$0xff]
      %v1819 = vld [vmem:[%s273 + $0x22d] sm:$0xff]
      %v1820 = vld [vmem:[%s273 + $0x235] sm:$0xff]
      %v1821 = vpack.c.bf16 %v1773, %v1773
      %v1822 = vpack.c.bf16 %v1774, %v1774
      %v1823 = vpack.c.bf16 %v1775, %v1775
      %v1824 = vpack.c.bf16 %v1776, %v1776
      %v1825 = vpack.c.bf16 %v1777, %v1777
      %v1826 = vpack.c.bf16 %v1778, %v1778
      %v1827 = vpack.c.bf16 %v1779, %v1779
      %v1828 = vpack.c.bf16 %v1780, %v1780
      %v1829 = vpack.c.bf16 %v1781, %v1781
      %v1830 = vpack.c.bf16 %v1782, %v1782
      %v1831 = vpack.c.bf16 %v1783, %v1783
      %v1832 = vpack.c.bf16 %v1784, %v1784
      %v1833 = vpack.c.bf16 %v1785, %v1785
      %v1834 = vpack.c.bf16 %v1786, %v1786
      %v1835 = vpack.c.bf16 %v1787, %v1787
      %v1836 = vpack.c.bf16 %v1788, %v1788
      %v1837 = vpack.c.bf16 %v1789, %v1789
      %v1838 = vpack.c.bf16 %v1790, %v1790
      %v1839 = vpack.c.bf16 %v1791, %v1791
      %v1840 = vpack.c.bf16 %v1792, %v1792
      %v1841 = vpack.c.bf16 %v1793, %v1793
      %v1842 = vpack.c.bf16 %v1794, %v1794
      %v1843 = vpack.c.bf16 %v1795, %v1795
      %v1844 = vpack.c.bf16 %v1796, %v1796
      %v1845 = vpack.c.bf16 %v1797, %v1797
      %v1846 = vpack.c.bf16 %v1798, %v1798
      %v1847 = vpack.c.bf16 %v1799, %v1799
      %v1848 = vpack.c.bf16 %v1800, %v1800
      %v1849 = vpack.c.bf16 %v1801, %v1801
      %v1850 = vpack.c.bf16 %v1802, %v1802
      %v1851 = vpack.c.bf16 %v1803, %v1803
      %v1852 = vpack.c.bf16 %v1804, %v1804
      %v1853 = vpack.c.bf16 %v1805, %v1805
      %v1854 = vpack.c.bf16 %v1806, %v1806
      %v1855 = vpack.c.bf16 %v1807, %v1807
      %v1856 = vpack.c.bf16 %v1808, %v1808
      %v1857 = vpack.c.bf16 %v1809, %v1809
      %v1858 = vpack.c.bf16 %v1810, %v1810
      %v1859 = vpack.c.bf16 %v1811, %v1811
      %v1860 = vpack.c.bf16 %v1812, %v1812
      %v1861 = vpack.c.bf16 %v1813, %v1813
      %v1862 = vpack.c.bf16 %v1814, %v1814
      %v1863 = vpack.c.bf16 %v1815, %v1815
      %v1864 = vpack.c.bf16 %v1816, %v1816
      %v1865 = vpack.c.bf16 %v1817, %v1817
      %v1866 = vpack.c.bf16 %v1818, %v1818
      %v1867 = vpack.c.bf16 %v1819, %v1819
      %v1868 = vpack.c.bf16 %v1820, %v1820
      %1917 = vrot.lane.b32.xlu0 %v1821, 20
      %v1918 = vpop.permute.xlu0 %1917
      %1919 = vrot.lane.b32.xlu0 %v1822, 20
      %v1920 = vpop.permute.xlu0 %1919
      %1921 = vrot.lane.b32.xlu0 %v1823, 20
      %v1922 = vpop.permute.xlu0 %1921
      %1923 = vrot.lane.b32.xlu0 %v1824, 20
      %v1924 = vpop.permute.xlu0 %1923
      %1925 = vrot.lane.b32.xlu0 %v1825, 20
      %v1926 = vpop.permute.xlu0 %1925
      %1927 = vrot.lane.b32.xlu0 %v1826, 20
      %v1928 = vpop.permute.xlu0 %1927
      %1929 = vrot.lane.b32.xlu0 %v1827, 20
      %v1930 = vpop.permute.xlu0 %1929
      %1931 = vrot.lane.b32.xlu0 %v1828, 20
      %v1932 = vpop.permute.xlu0 %1931
      %1933 = vrot.lane.b32.xlu0 %v1829, 20
      %v1934 = vpop.permute.xlu0 %1933
      %1935 = vrot.lane.b32.xlu0 %v1830, 20
      %v1936 = vpop.permute.xlu0 %1935
      %1937 = vrot.lane.b32.xlu0 %v1831, 20
      %v1938 = vpop.permute.xlu0 %1937
      %1939 = vrot.lane.b32.xlu0 %v1832, 20
      %v1940 = vpop.permute.xlu0 %1939
      %1941 = vrot.lane.b32.xlu0 %v1833, 20
      %v1942 = vpop.permute.xlu0 %1941
      %1943 = vrot.lane.b32.xlu0 %v1834, 20
      %v1944 = vpop.permute.xlu0 %1943
      %1945 = vrot.lane.b32.xlu0 %v1835, 20
      %v1946 = vpop.permute.xlu0 %1945
      %1947 = vrot.lane.b32.xlu0 %v1836, 20
      %v1948 = vpop.permute.xlu0 %1947
      %1949 = vrot.lane.b32.xlu0 %v1837, 20
      %v1950 = vpop.permute.xlu0 %1949
      %1951 = vrot.lane.b32.xlu0 %v1838, 20
      %v1952 = vpop.permute.xlu0 %1951
      %1953 = vrot.lane.b32.xlu0 %v1839, 20
      %v1954 = vpop.permute.xlu0 %1953
      %1955 = vrot.lane.b32.xlu0 %v1840, 20
      %v1956 = vpop.permute.xlu0 %1955
      %1957 = vrot.lane.b32.xlu0 %v1841, 20
      %v1958 = vpop.permute.xlu0 %1957
      %1959 = vrot.lane.b32.xlu0 %v1842, 20
      %v1960 = vpop.permute.xlu0 %1959
      %1961 = vrot.lane.b32.xlu0 %v1843, 20
      %v1962 = vpop.permute.xlu0 %1961
      %1963 = vrot.lane.b32.xlu0 %v1844, 20
      %v1964 = vpop.permute.xlu0 %1963
      %1965 = vrot.lane.b32.xlu0 %v1845, 20
      %v1966 = vpop.permute.xlu0 %1965
      %1967 = vrot.lane.b32.xlu0 %v1846, 20
      %v1968 = vpop.permute.xlu0 %1967
      %1969 = vrot.lane.b32.xlu0 %v1847, 20
      %v1970 = vpop.permute.xlu0 %1969
      %1971 = vrot.lane.b32.xlu0 %v1848, 20
      %v1972 = vpop.permute.xlu0 %1971
      %1973 = vrot.lane.b32.xlu0 %v1849, 20
      %v1974 = vpop.permute.xlu0 %1973
      %1975 = vrot.lane.b32.xlu0 %v1850, 20
      %v1976 = vpop.permute.xlu0 %1975
      %1977 = vrot.lane.b32.xlu0 %v1851, 20
      %v1978 = vpop.permute.xlu0 %1977
      %1979 = vrot.lane.b32.xlu0 %v1852, 20
      %v1980 = vpop.permute.xlu0 %1979
      %1981 = vrot.lane.b32.xlu0 %v1853, 20
      %v1982 = vpop.permute.xlu0 %1981
      %1983 = vrot.lane.b32.xlu0 %v1854, 20
      %v1984 = vpop.permute.xlu0 %1983
      %1985 = vrot.lane.b32.xlu0 %v1855, 20
      %v1986 = vpop.permute.xlu0 %1985
      %1987 = vrot.lane.b32.xlu0 %v1856, 20
      %v1988 = vpop.permute.xlu0 %1987
      %1989 = vrot.lane.b32.xlu0 %v1857, 20
      %v1990 = vpop.permute.xlu0 %1989
      %1991 = vrot.lane.b32.xlu0 %v1858, 20
      %v1992 = vpop.permute.xlu0 %1991
      %1993 = vrot.lane.b32.xlu0 %v1859, 20
      %v1994 = vpop.permute.xlu0 %1993
      %1995 = vrot.lane.b32.xlu0 %v1860, 20
      %v1996 = vpop.permute.xlu0 %1995
      %1997 = vrot.lane.b32.xlu0 %v1861, 20
      %v1998 = vpop.permute.xlu0 %1997
      %1999 = vrot.lane.b32.xlu0 %v1862, 20
      %v2000 = vpop.permute.xlu0 %1999
      %2001 = vrot.lane.b32.xlu0 %v1863, 20
      %v2002 = vpop.permute.xlu0 %2001
      %2003 = vrot.lane.b32.xlu0 %v1864, 20
      %v2004 = vpop.permute.xlu0 %2003
      %2005 = vrot.lane.b32.xlu0 %v1865, 20
      %v2006 = vpop.permute.xlu0 %2005
      %2007 = vrot.lane.b32.xlu0 %v1866, 20
      %v2008 = vpop.permute.xlu0 %2007
      %2009 = vrot.lane.b32.xlu0 %v1867, 20
      %v2010 = vpop.permute.xlu0 %2009
      %2011 = vrot.lane.b32.xlu0 %v1868, 20
      %v2012 = vpop.permute.xlu0 %2011
      %vm2061 = vcmask 191648
      %2062 = vst.msk [vmem:[#allocation2] sm:$0xf] %vm2061, %v1918
      %2063 = vst.msk [vmem:[#allocation2 + $0x4] sm:$0xf] %vm2061, %v1920
      %2064 = vst.msk [vmem:[#allocation2 + $0x8] sm:$0xf] %vm2061, %v1922
      %2065 = vst.msk [vmem:[#allocation2 + $0xc] sm:$0xf] %vm2061, %v1924
      %2066 = vst.msk [vmem:[#allocation2 + $0x10] sm:$0xf] %vm2061, %v1926
      %2067 = vst.msk [vmem:[#allocation2 + $0x14] sm:$0xf] %vm2061, %v1928
      %2068 = vst.msk [vmem:[#allocation2 + $0x18] sm:$0xf] %vm2061, %v1930
      %2069 = vst.msk [vmem:[#allocation2 + $0x1c] sm:$0xf] %vm2061, %v1932
      %2070 = vst.msk [vmem:[#allocation2 + $0x20] sm:$0xf] %vm2061, %v1934
      %2071 = vst.msk [vmem:[#allocation2 + $0x24] sm:$0xf] %vm2061, %v1936
      %2072 = vst.msk [vmem:[#allocation2 + $0x28] sm:$0xf] %vm2061, %v1938
      %2073 = vst.msk [vmem:[#allocation2 + $0x2c] sm:$0xf] %vm2061, %v1940
      %2074 = vst.msk [vmem:[#allocation2 + $0x30] sm:$0xf] %vm2061, %v1942
      %2075 = vst.msk [vmem:[#allocation2 + $0x34] sm:$0xf] %vm2061, %v1944
      %2076 = vst.msk [vmem:[#allocation2 + $0x38] sm:$0xf] %vm2061, %v1946
      %2077 = vst.msk [vmem:[#allocation2 + $0x3c] sm:$0xf] %vm2061, %v1948
      %2078 = vst.msk [vmem:[#allocation2 + $0x40] sm:$0xf] %vm2061, %v1950
      %2079 = vst.msk [vmem:[#allocation2 + $0x44] sm:$0xf] %vm2061, %v1952
      %2080 = vst.msk [vmem:[#allocation2 + $0x48] sm:$0xf] %vm2061, %v1954
      %2081 = vst.msk [vmem:[#allocation2 + $0x4c] sm:$0xf] %vm2061, %v1956
      %2082 = vst.msk [vmem:[#allocation2 + $0x50] sm:$0xf] %vm2061, %v1958
      %2083 = vst.msk [vmem:[#allocation2 + $0x54] sm:$0xf] %vm2061, %v1960
      %2084 = vst.msk [vmem:[#allocation2 + $0x58] sm:$0xf] %vm2061, %v1962
      %2085 = vst.msk [vmem:[#allocation2 + $0x5c] sm:$0xf] %vm2061, %v1964
      %2086 = vst.msk [vmem:[#allocation2 + $0x60] sm:$0xf] %vm2061, %v1966
      %2087 = vst.msk [vmem:[#allocation2 + $0x64] sm:$0xf] %vm2061, %v1968
      %2088 = vst.msk [vmem:[#allocation2 + $0x68] sm:$0xf] %vm2061, %v1970
      %2089 = vst.msk [vmem:[#allocation2 + $0x6c] sm:$0xf] %vm2061, %v1972
      %2090 = vst.msk [vmem:[#allocation2 + $0x70] sm:$0xf] %vm2061, %v1974
      %2091 = vst.msk [vmem:[#allocation2 + $0x74] sm:$0xf] %vm2061, %v1976
      %2092 = vst.msk [vmem:[#allocation2 + $0x78] sm:$0xf] %vm2061, %v1978
      %2093 = vst.msk [vmem:[#allocation2 + $0x7c] sm:$0xf] %vm2061, %v1980
      %2094 = vst.msk [vmem:[#allocation2 + $0x80] sm:$0xf] %vm2061, %v1982
      %2095 = vst.msk [vmem:[#allocation2 + $0x84] sm:$0xf] %vm2061, %v1984
      %2096 = vst.msk [vmem:[#allocation2 + $0x88] sm:$0xf] %vm2061, %v1986
      %2097 = vst.msk [vmem:[#allocation2 + $0x8c] sm:$0xf] %vm2061, %v1988
      %2098 = vst.msk [vmem:[#allocation2 + $0x90] sm:$0xf] %vm2061, %v1990
      %2099 = vst.msk [vmem:[#allocation2 + $0x94] sm:$0xf] %vm2061, %v1992
      %2100 = vst.msk [vmem:[#allocation2 + $0x98] sm:$0xf] %vm2061, %v1994
      %2101 = vst.msk [vmem:[#allocation2 + $0x9c] sm:$0xf] %vm2061, %v1996
      %2102 = vst.msk [vmem:[#allocation2 + $0xa0] sm:$0xf] %vm2061, %v1998
      %2103 = vst.msk [vmem:[#allocation2 + $0xa4] sm:$0xf] %vm2061, %v2000
      %2104 = vst.msk [vmem:[#allocation2 + $0xa8] sm:$0xf] %vm2061, %v2002
      %2105 = vst.msk [vmem:[#allocation2 + $0xac] sm:$0xf] %vm2061, %v2004
      %2106 = vst.msk [vmem:[#allocation2 + $0xb0] sm:$0xf] %vm2061, %v2006
      %2107 = vst.msk [vmem:[#allocation2 + $0xb4] sm:$0xf] %vm2061, %v2008
      %2108 = vst.msk [vmem:[#allocation2 + $0xb8] sm:$0xf] %vm2061, %v2010
      %2109 = vst.msk [vmem:[#allocation2 + $0xbc] sm:$0xf] %vm2061, %v2012
      %v2110 = vld [vmem:[%s273 + $0x6] sm:$0xff]
      %v2111 = vld [vmem:[%s273 + $0xe] sm:$0xff]
      %v2112 = vld [vmem:[%s273 + $0x1e] sm:$0xff]
      %v2113 = vld [vmem:[%s273 + $0x26] sm:$0xff]
      %v2114 = vld [vmem:[%s273 + $0x36] sm:$0xff]
      %v2115 = vld [vmem:[%s273 + $0x3e] sm:$0xff]
      %v2116 = vld [vmem:[%s273 + $0x4e] sm:$0xff]
      %v2117 = vld [vmem:[%s273 + $0x56] sm:$0xff]
      %v2118 = vld [vmem:[%s273 + $0x66] sm:$0xff]
      %v2119 = vld [vmem:[%s273 + $0x6e] sm:$0xff]
      %v2120 = vld [vmem:[%s273 + $0x7e] sm:$0xff]
      %v2121 = vld [vmem:[%s273 + $0x86] sm:$0xff]
      %v2122 = vld [vmem:[%s273 + $0x96] sm:$0xff]
      %v2123 = vld [vmem:[%s273 + $0x9e] sm:$0xff]
      %v2124 = vld [vmem:[%s273 + $0xae] sm:$0xff]
      %v2125 = vld [vmem:[%s273 + $0xb6] sm:$0xff]
      %v2126 = vld [vmem:[%s273 + $0xc6] sm:$0xff]
      %v2127 = vld [vmem:[%s273 + $0xce] sm:$0xff]
      %v2128 = vld [vmem:[%s273 + $0xde] sm:$0xff]
      %v2129 = vld [vmem:[%s273 + $0xe6] sm:$0xff]
      %v2130 = vld [vmem:[%s273 + $0xf6] sm:$0xff]
      %v2131 = vld [vmem:[%s273 + $0xfe] sm:$0xff]
      %v2132 = vld [vmem:[%s273 + $0x10e] sm:$0xff]
      %v2133 = vld [vmem:[%s273 + $0x116] sm:$0xff]
      %v2134 = vld [vmem:[%s273 + $0x126] sm:$0xff]
      %v2135 = vld [vmem:[%s273 + $0x12e] sm:$0xff]
      %v2136 = vld [vmem:[%s273 + $0x13e] sm:$0xff]
      %v2137 = vld [vmem:[%s273 + $0x146] sm:$0xff]
      %v2138 = vld [vmem:[%s273 + $0x156] sm:$0xff]
      %v2139 = vld [vmem:[%s273 + $0x15e] sm:$0xff]
      %v2140 = vld [vmem:[%s273 + $0x16e] sm:$0xff]
      %v2141 = vld [vmem:[%s273 + $0x176] sm:$0xff]
      %v2142 = vld [vmem:[%s273 + $0x186] sm:$0xff]
      %v2143 = vld [vmem:[%s273 + $0x18e] sm:$0xff]
      %v2144 = vld [vmem:[%s273 + $0x19e] sm:$0xff]
      %v2145 = vld [vmem:[%s273 + $0x1a6] sm:$0xff]
      %v2146 = vld [vmem:[%s273 + $0x1b6] sm:$0xff]
      %v2147 = vld [vmem:[%s273 + $0x1be] sm:$0xff]
      %v2148 = vld [vmem:[%s273 + $0x1ce] sm:$0xff]
      %v2149 = vld [vmem:[%s273 + $0x1d6] sm:$0xff]
      %v2150 = vld [vmem:[%s273 + $0x1e6] sm:$0xff]
      %v2151 = vld [vmem:[%s273 + $0x1ee] sm:$0xff]
      %v2152 = vld [vmem:[%s273 + $0x1fe] sm:$0xff]
      %v2153 = vld [vmem:[%s273 + $0x206] sm:$0xff]
      %v2154 = vld [vmem:[%s273 + $0x216] sm:$0xff]
      %v2155 = vld [vmem:[%s273 + $0x21e] sm:$0xff]
      %v2156 = vld [vmem:[%s273 + $0x22e] sm:$0xff]
      %v2157 = vld [vmem:[%s273 + $0x236] sm:$0xff]
      %v2158 = vpack.c.bf16 %v2110, %v2110
      %v2159 = vpack.c.bf16 %v2111, %v2111
      %v2160 = vpack.c.bf16 %v2112, %v2112
      %v2161 = vpack.c.bf16 %v2113, %v2113
      %v2162 = vpack.c.bf16 %v2114, %v2114
      %v2163 = vpack.c.bf16 %v2115, %v2115
      %v2164 = vpack.c.bf16 %v2116, %v2116
      %v2165 = vpack.c.bf16 %v2117, %v2117
      %v2166 = vpack.c.bf16 %v2118, %v2118
      %v2167 = vpack.c.bf16 %v2119, %v2119
      %v2168 = vpack.c.bf16 %v2120, %v2120
      %v2169 = vpack.c.bf16 %v2121, %v2121
      %v2170 = vpack.c.bf16 %v2122, %v2122
      %v2171 = vpack.c.bf16 %v2123, %v2123
      %v2172 = vpack.c.bf16 %v2124, %v2124
      %v2173 = vpack.c.bf16 %v2125, %v2125
      %v2174 = vpack.c.bf16 %v2126, %v2126
      %v2175 = vpack.c.bf16 %v2127, %v2127
      %v2176 = vpack.c.bf16 %v2128, %v2128
      %v2177 = vpack.c.bf16 %v2129, %v2129
      %v2178 = vpack.c.bf16 %v2130, %v2130
      %v2179 = vpack.c.bf16 %v2131, %v2131
      %v2180 = vpack.c.bf16 %v2132, %v2132
      %v2181 = vpack.c.bf16 %v2133, %v2133
      %v2182 = vpack.c.bf16 %v2134, %v2134
      %v2183 = vpack.c.bf16 %v2135, %v2135
      %v2184 = vpack.c.bf16 %v2136, %v2136
      %v2185 = vpack.c.bf16 %v2137, %v2137
      %v2186 = vpack.c.bf16 %v2138, %v2138
      %v2187 = vpack.c.bf16 %v2139, %v2139
      %v2188 = vpack.c.bf16 %v2140, %v2140
      %v2189 = vpack.c.bf16 %v2141, %v2141
      %v2190 = vpack.c.bf16 %v2142, %v2142
      %v2191 = vpack.c.bf16 %v2143, %v2143
      %v2192 = vpack.c.bf16 %v2144, %v2144
      %v2193 = vpack.c.bf16 %v2145, %v2145
      %v2194 = vpack.c.bf16 %v2146, %v2146
      %v2195 = vpack.c.bf16 %v2147, %v2147
      %v2196 = vpack.c.bf16 %v2148, %v2148
      %v2197 = vpack.c.bf16 %v2149, %v2149
      %v2198 = vpack.c.bf16 %v2150, %v2150
      %v2199 = vpack.c.bf16 %v2151, %v2151
      %v2200 = vpack.c.bf16 %v2152, %v2152
      %v2201 = vpack.c.bf16 %v2153, %v2153
      %v2202 = vpack.c.bf16 %v2154, %v2154
      %v2203 = vpack.c.bf16 %v2155, %v2155
      %v2204 = vpack.c.bf16 %v2156, %v2156
      %v2205 = vpack.c.bf16 %v2157, %v2157
      %2254 = vrot.lane.b32.xlu0 %v2158, 24
      %v2255 = vpop.permute.xlu0 %2254
      %2256 = vrot.lane.b32.xlu0 %v2159, 24
      %v2257 = vpop.permute.xlu0 %2256
      %2258 = vrot.lane.b32.xlu0 %v2160, 24
      %v2259 = vpop.permute.xlu0 %2258
      %2260 = vrot.lane.b32.xlu0 %v2161, 24
      %v2261 = vpop.permute.xlu0 %2260
      %2262 = vrot.lane.b32.xlu0 %v2162, 24
      %v2263 = vpop.permute.xlu0 %2262
      %2264 = vrot.lane.b32.xlu0 %v2163, 24
      %v2265 = vpop.permute.xlu0 %2264
      %2266 = vrot.lane.b32.xlu0 %v2164, 24
      %v2267 = vpop.permute.xlu0 %2266
      %2268 = vrot.lane.b32.xlu0 %v2165, 24
      %v2269 = vpop.permute.xlu0 %2268
      %2270 = vrot.lane.b32.xlu0 %v2166, 24
      %v2271 = vpop.permute.xlu0 %2270
      %2272 = vrot.lane.b32.xlu0 %v2167, 24
      %v2273 = vpop.permute.xlu0 %2272
      %2274 = vrot.lane.b32.xlu0 %v2168, 24
      %v2275 = vpop.permute.xlu0 %2274
      %2276 = vrot.lane.b32.xlu0 %v2169, 24
      %v2277 = vpop.permute.xlu0 %2276
      %2278 = vrot.lane.b32.xlu0 %v2170, 24
      %v2279 = vpop.permute.xlu0 %2278
      %2280 = vrot.lane.b32.xlu0 %v2171, 24
      %v2281 = vpop.permute.xlu0 %2280
      %2282 = vrot.lane.b32.xlu0 %v2172, 24
      %v2283 = vpop.permute.xlu0 %2282
      %2284 = vrot.lane.b32.xlu0 %v2173, 24
      %v2285 = vpop.permute.xlu0 %2284
      %2286 = vrot.lane.b32.xlu0 %v2174, 24
      %v2287 = vpop.permute.xlu0 %2286
      %2288 = vrot.lane.b32.xlu0 %v2175, 24
      %v2289 = vpop.permute.xlu0 %2288
      %2290 = vrot.lane.b32.xlu0 %v2176, 24
      %v2291 = vpop.permute.xlu0 %2290
      %2292 = vrot.lane.b32.xlu0 %v2177, 24
      %v2293 = vpop.permute.xlu0 %2292
      %2294 = vrot.lane.b32.xlu0 %v2178, 24
      %v2295 = vpop.permute.xlu0 %2294
      %2296 = vrot.lane.b32.xlu0 %v2179, 24
      %v2297 = vpop.permute.xlu0 %2296
      %2298 = vrot.lane.b32.xlu0 %v2180, 24
      %v2299 = vpop.permute.xlu0 %2298
      %2300 = vrot.lane.b32.xlu0 %v2181, 24
      %v2301 = vpop.permute.xlu0 %2300
      %2302 = vrot.lane.b32.xlu0 %v2182, 24
      %v2303 = vpop.permute.xlu0 %2302
      %2304 = vrot.lane.b32.xlu0 %v2183, 24
      %v2305 = vpop.permute.xlu0 %2304
      %2306 = vrot.lane.b32.xlu0 %v2184, 24
      %v2307 = vpop.permute.xlu0 %2306
      %2308 = vrot.lane.b32.xlu0 %v2185, 24
      %v2309 = vpop.permute.xlu0 %2308
      %2310 = vrot.lane.b32.xlu0 %v2186, 24
      %v2311 = vpop.permute.xlu0 %2310
      %2312 = vrot.lane.b32.xlu0 %v2187, 24
      %v2313 = vpop.permute.xlu0 %2312
      %2314 = vrot.lane.b32.xlu0 %v2188, 24
      %v2315 = vpop.permute.xlu0 %2314
      %2316 = vrot.lane.b32.xlu0 %v2189, 24
      %v2317 = vpop.permute.xlu0 %2316
      %2318 = vrot.lane.b32.xlu0 %v2190, 24
      %v2319 = vpop.permute.xlu0 %2318
      %2320 = vrot.lane.b32.xlu0 %v2191, 24
      %v2321 = vpop.permute.xlu0 %2320
      %2322 = vrot.lane.b32.xlu0 %v2192, 24
      %v2323 = vpop.permute.xlu0 %2322
      %2324 = vrot.lane.b32.xlu0 %v2193, 24
      %v2325 = vpop.permute.xlu0 %2324
      %2326 = vrot.lane.b32.xlu0 %v2194, 24
      %v2327 = vpop.permute.xlu0 %2326
      %2328 = vrot.lane.b32.xlu0 %v2195, 24
      %v2329 = vpop.permute.xlu0 %2328
      %2330 = vrot.lane.b32.xlu0 %v2196, 24
      %v2331 = vpop.permute.xlu0 %2330
      %2332 = vrot.lane.b32.xlu0 %v2197, 24
      %v2333 = vpop.permute.xlu0 %2332
      %2334 = vrot.lane.b32.xlu0 %v2198, 24
      %v2335 = vpop.permute.xlu0 %2334
      %2336 = vrot.lane.b32.xlu0 %v2199, 24
      %v2337 = vpop.permute.xlu0 %2336
      %2338 = vrot.lane.b32.xlu0 %v2200, 24
      %v2339 = vpop.permute.xlu0 %2338
      %2340 = vrot.lane.b32.xlu0 %v2201, 24
      %v2341 = vpop.permute.xlu0 %2340
      %2342 = vrot.lane.b32.xlu0 %v2202, 24
      %v2343 = vpop.permute.xlu0 %2342
      %2344 = vrot.lane.b32.xlu0 %v2203, 24
      %v2345 = vpop.permute.xlu0 %2344
      %2346 = vrot.lane.b32.xlu0 %v2204, 24
      %v2347 = vpop.permute.xlu0 %2346
      %2348 = vrot.lane.b32.xlu0 %v2205, 24
      %v2349 = vpop.permute.xlu0 %2348
      %vm2398 = vcmask 224448
      %2399 = vst.msk [vmem:[#allocation2] sm:$0xf] %vm2398, %v2255
      %2400 = vst.msk [vmem:[#allocation2 + $0x4] sm:$0xf] %vm2398, %v2257
      %2401 = vst.msk [vmem:[#allocation2 + $0x8] sm:$0xf] %vm2398, %v2259
      %2402 = vst.msk [vmem:[#allocation2 + $0xc] sm:$0xf] %vm2398, %v2261
      %2403 = vst.msk [vmem:[#allocation2 + $0x10] sm:$0xf] %vm2398, %v2263
      %2404 = vst.msk [vmem:[#allocation2 + $0x14] sm:$0xf] %vm2398, %v2265
      %2405 = vst.msk [vmem:[#allocation2 + $0x18] sm:$0xf] %vm2398, %v2267
      %2406 = vst.msk [vmem:[#allocation2 + $0x1c] sm:$0xf] %vm2398, %v2269
      %2407 = vst.msk [vmem:[#allocation2 + $0x20] sm:$0xf] %vm2398, %v2271
      %2408 = vst.msk [vmem:[#allocation2 + $0x24] sm:$0xf] %vm2398, %v2273
      %2409 = vst.msk [vmem:[#allocation2 + $0x28] sm:$0xf] %vm2398, %v2275
      %2410 = vst.msk [vmem:[#allocation2 + $0x2c] sm:$0xf] %vm2398, %v2277
      %2411 = vst.msk [vmem:[#allocation2 + $0x30] sm:$0xf] %vm2398, %v2279
      %2412 = vst.msk [vmem:[#allocation2 + $0x34] sm:$0xf] %vm2398, %v2281
      %2413 = vst.msk [vmem:[#allocation2 + $0x38] sm:$0xf] %vm2398, %v2283
      %2414 = vst.msk [vmem:[#allocation2 + $0x3c] sm:$0xf] %vm2398, %v2285
      %2415 = vst.msk [vmem:[#allocation2 + $0x40] sm:$0xf] %vm2398, %v2287
      %2416 = vst.msk [vmem:[#allocation2 + $0x44] sm:$0xf] %vm2398, %v2289
      %2417 = vst.msk [vmem:[#allocation2 + $0x48] sm:$0xf] %vm2398, %v2291
      %2418 = vst.msk [vmem:[#allocation2 + $0x4c] sm:$0xf] %vm2398, %v2293
      %2419 = vst.msk [vmem:[#allocation2 + $0x50] sm:$0xf] %vm2398, %v2295
      %2420 = vst.msk [vmem:[#allocation2 + $0x54] sm:$0xf] %vm2398, %v2297
      %2421 = vst.msk [vmem:[#allocation2 + $0x58] sm:$0xf] %vm2398, %v2299
      %2422 = vst.msk [vmem:[#allocation2 + $0x5c] sm:$0xf] %vm2398, %v2301
      %2423 = vst.msk [vmem:[#allocation2 + $0x60] sm:$0xf] %vm2398, %v2303
      %2424 = vst.msk [vmem:[#allocation2 + $0x64] sm:$0xf] %vm2398, %v2305
      %2425 = vst.msk [vmem:[#allocation2 + $0x68] sm:$0xf] %vm2398, %v2307
      %2426 = vst.msk [vmem:[#allocation2 + $0x6c] sm:$0xf] %vm2398, %v2309
      %2427 = vst.msk [vmem:[#allocation2 + $0x70] sm:$0xf] %vm2398, %v2311
      %2428 = vst.msk [vmem:[#allocation2 + $0x74] sm:$0xf] %vm2398, %v2313
      %2429 = vst.msk [vmem:[#allocation2 + $0x78] sm:$0xf] %vm2398, %v2315
      %2430 = vst.msk [vmem:[#allocation2 + $0x7c] sm:$0xf] %vm2398, %v2317
      %2431 = vst.msk [vmem:[#allocation2 + $0x80] sm:$0xf] %vm2398, %v2319
      %2432 = vst.msk [vmem:[#allocation2 + $0x84] sm:$0xf] %vm2398, %v2321
      %2433 = vst.msk [vmem:[#allocation2 + $0x88] sm:$0xf] %vm2398, %v2323
      %2434 = vst.msk [vmem:[#allocation2 + $0x8c] sm:$0xf] %vm2398, %v2325
      %2435 = vst.msk [vmem:[#allocation2 + $0x90] sm:$0xf] %vm2398, %v2327
      %2436 = vst.msk [vmem:[#allocation2 + $0x94] sm:$0xf] %vm2398, %v2329
      %2437 = vst.msk [vmem:[#allocation2 + $0x98] sm:$0xf] %vm2398, %v2331
      %2438 = vst.msk [vmem:[#allocation2 + $0x9c] sm:$0xf] %vm2398, %v2333
      %2439 = vst.msk [vmem:[#allocation2 + $0xa0] sm:$0xf] %vm2398, %v2335
      %2440 = vst.msk [vmem:[#allocation2 + $0xa4] sm:$0xf] %vm2398, %v2337
      %2441 = vst.msk [vmem:[#allocation2 + $0xa8] sm:$0xf] %vm2398, %v2339
      %2442 = vst.msk [vmem:[#allocation2 + $0xac] sm:$0xf] %vm2398, %v2341
      %2443 = vst.msk [vmem:[#allocation2 + $0xb0] sm:$0xf] %vm2398, %v2343
      %2444 = vst.msk [vmem:[#allocation2 + $0xb4] sm:$0xf] %vm2398, %v2345
      %2445 = vst.msk [vmem:[#allocation2 + $0xb8] sm:$0xf] %vm2398, %v2347
      %2446 = vst.msk [vmem:[#allocation2 + $0xbc] sm:$0xf] %vm2398, %v2349
      %v2447 = vld [vmem:[%s273 + $0x7] sm:$0xff]
      %v2448 = vld [vmem:[%s273 + $0xf] sm:$0xff]
      %v2449 = vld [vmem:[%s273 + $0x1f] sm:$0xff]
      %v2450 = vld [vmem:[%s273 + $0x27] sm:$0xff]
      %v2451 = vld [vmem:[%s273 + $0x37] sm:$0xff]
      %v2452 = vld [vmem:[%s273 + $0x3f] sm:$0xff]
      %v2453 = vld [vmem:[%s273 + $0x4f] sm:$0xff]
      %v2454 = vld [vmem:[%s273 + $0x57] sm:$0xff]
      %v2455 = vld [vmem:[%s273 + $0x67] sm:$0xff]
      %v2456 = vld [vmem:[%s273 + $0x6f] sm:$0xff]
      %v2457 = vld [vmem:[%s273 + $0x7f] sm:$0xff]
      %v2458 = vld [vmem:[%s273 + $0x87] sm:$0xff]
      %v2459 = vld [vmem:[%s273 + $0x97] sm:$0xff]
      %v2460 = vld [vmem:[%s273 + $0x9f] sm:$0xff]
      %v2461 = vld [vmem:[%s273 + $0xaf] sm:$0xff]
      %v2462 = vld [vmem:[%s273 + $0xb7] sm:$0xff]
      %v2463 = vld [vmem:[%s273 + $0xc7] sm:$0xff]
      %v2464 = vld [vmem:[%s273 + $0xcf] sm:$0xff]
      %v2465 = vld [vmem:[%s273 + $0xdf] sm:$0xff]
      %v2466 = vld [vmem:[%s273 + $0xe7] sm:$0xff]
      %v2467 = vld [vmem:[%s273 + $0xf7] sm:$0xff]
      %v2468 = vld [vmem:[%s273 + $0xff] sm:$0xff]
      %v2469 = vld [vmem:[%s273 + $0x10f] sm:$0xff]
      %v2470 = vld [vmem:[%s273 + $0x117] sm:$0xff]
      %v2471 = vld [vmem:[%s273 + $0x127] sm:$0xff]
      %v2472 = vld [vmem:[%s273 + $0x12f] sm:$0xff]
      %v2473 = vld [vmem:[%s273 + $0x13f] sm:$0xff]
      %v2474 = vld [vmem:[%s273 + $0x147] sm:$0xff]
      %v2475 = vld [vmem:[%s273 + $0x157] sm:$0xff]
      %v2476 = vld [vmem:[%s273 + $0x15f] sm:$0xff]
      %v2477 = vld [vmem:[%s273 + $0x16f] sm:$0xff]
      %v2478 = vld [vmem:[%s273 + $0x177] sm:$0xff]
      %v2479 = vld [vmem:[%s273 + $0x187] sm:$0xff]
      %v2480 = vld [vmem:[%s273 + $0x18f] sm:$0xff]
      %v2481 = vld [vmem:[%s273 + $0x19f] sm:$0xff]
      %v2482 = vld [vmem:[%s273 + $0x1a7] sm:$0xff]
      %v2483 = vld [vmem:[%s273 + $0x1b7] sm:$0xff]
      %v2484 = vld [vmem:[%s273 + $0x1bf] sm:$0xff]
      %v2485 = vld [vmem:[%s273 + $0x1cf] sm:$0xff]
      %v2486 = vld [vmem:[%s273 + $0x1d7] sm:$0xff]
      %v2487 = vld [vmem:[%s273 + $0x1e7] sm:$0xff]
      %v2488 = vld [vmem:[%s273 + $0x1ef] sm:$0xff]
      %v2489 = vld [vmem:[%s273 + $0x1ff] sm:$0xff]
      %v2490 = vld [vmem:[%s273 + $0x207] sm:$0xff]
      %v2491 = vld [vmem:[%s273 + $0x217] sm:$0xff]
      %v2492 = vld [vmem:[%s273 + $0x21f] sm:$0xff]
      %v2493 = vld [vmem:[%s273 + $0x22f] sm:$0xff]
      %v2494 = vld [vmem:[%s273 + $0x237] sm:$0xff]
      %v2495 = vpack.c.bf16 %v2447, %v2447
      %v2496 = vpack.c.bf16 %v2448, %v2448
      %v2497 = vpack.c.bf16 %v2449, %v2449
      %v2498 = vpack.c.bf16 %v2450, %v2450
      %v2499 = vpack.c.bf16 %v2451, %v2451
      %v2500 = vpack.c.bf16 %v2452, %v2452
      %v2501 = vpack.c.bf16 %v2453, %v2453
      %v2502 = vpack.c.bf16 %v2454, %v2454
      %v2503 = vpack.c.bf16 %v2455, %v2455
      %v2504 = vpack.c.bf16 %v2456, %v2456
      %v2505 = vpack.c.bf16 %v2457, %v2457
      %v2506 = vpack.c.bf16 %v2458, %v2458
      %v2507 = vpack.c.bf16 %v2459, %v2459
      %v2508 = vpack.c.bf16 %v2460, %v2460
      %v2509 = vpack.c.bf16 %v2461, %v2461
      %v2510 = vpack.c.bf16 %v2462, %v2462
      %v2511 = vpack.c.bf16 %v2463, %v2463
      %v2512 = vpack.c.bf16 %v2464, %v2464
      %v2513 = vpack.c.bf16 %v2465, %v2465
      %v2514 = vpack.c.bf16 %v2466, %v2466
      %v2515 = vpack.c.bf16 %v2467, %v2467
      %v2516 = vpack.c.bf16 %v2468, %v2468
      %v2517 = vpack.c.bf16 %v2469, %v2469
      %v2518 = vpack.c.bf16 %v2470, %v2470
      %v2519 = vpack.c.bf16 %v2471, %v2471
      %v2520 = vpack.c.bf16 %v2472, %v2472
      %v2521 = vpack.c.bf16 %v2473, %v2473
      %v2522 = vpack.c.bf16 %v2474, %v2474
      %v2523 = vpack.c.bf16 %v2475, %v2475
      %v2524 = vpack.c.bf16 %v2476, %v2476
      %v2525 = vpack.c.bf16 %v2477, %v2477
      %v2526 = vpack.c.bf16 %v2478, %v2478
      %v2527 = vpack.c.bf16 %v2479, %v2479
      %v2528 = vpack.c.bf16 %v2480, %v2480
      %v2529 = vpack.c.bf16 %v2481, %v2481
      %v2530 = vpack.c.bf16 %v2482, %v2482
      %v2531 = vpack.c.bf16 %v2483, %v2483
      %v2532 = vpack.c.bf16 %v2484, %v2484
      %v2533 = vpack.c.bf16 %v2485, %v2485
      %v2534 = vpack.c.bf16 %v2486, %v2486
      %v2535 = vpack.c.bf16 %v2487, %v2487
      %v2536 = vpack.c.bf16 %v2488, %v2488
      %v2537 = vpack.c.bf16 %v2489, %v2489
      %v2538 = vpack.c.bf16 %v2490, %v2490
      %v2539 = vpack.c.bf16 %v2491, %v2491
      %v2540 = vpack.c.bf16 %v2492, %v2492
      %v2541 = vpack.c.bf16 %v2493, %v2493
      %v2542 = vpack.c.bf16 %v2494, %v2494
      %2591 = vrot.lane.b32.xlu0 %v2495, 28
      %v2592 = vpop.permute.xlu0 %2591
      %2593 = vrot.lane.b32.xlu0 %v2496, 28
      %v2594 = vpop.permute.xlu0 %2593
      %2595 = vrot.lane.b32.xlu0 %v2497, 28
      %v2596 = vpop.permute.xlu0 %2595
      %2597 = vrot.lane.b32.xlu0 %v2498, 28
      %v2598 = vpop.permute.xlu0 %2597
      %2599 = vrot.lane.b32.xlu0 %v2499, 28
      %v2600 = vpop.permute.xlu0 %2599
      %2601 = vrot.lane.b32.xlu0 %v2500, 28
      %v2602 = vpop.permute.xlu0 %2601
      %2603 = vrot.lane.b32.xlu0 %v2501, 28
      %v2604 = vpop.permute.xlu0 %2603
      %2605 = vrot.lane.b32.xlu0 %v2502, 28
      %v2606 = vpop.permute.xlu0 %2605
      %2607 = vrot.lane.b32.xlu0 %v2503, 28
      %v2608 = vpop.permute.xlu0 %2607
      %2609 = vrot.lane.b32.xlu0 %v2504, 28
      %v2610 = vpop.permute.xlu0 %2609
      %2611 = vrot.lane.b32.xlu0 %v2505, 28
      %v2612 = vpop.permute.xlu0 %2611
      %2613 = vrot.lane.b32.xlu0 %v2506, 28
      %v2614 = vpop.permute.xlu0 %2613
      %2615 = vrot.lane.b32.xlu0 %v2507, 28
      %v2616 = vpop.permute.xlu0 %2615
      %2617 = vrot.lane.b32.xlu0 %v2508, 28
      %v2618 = vpop.permute.xlu0 %2617
      %2619 = vrot.lane.b32.xlu0 %v2509, 28
      %v2620 = vpop.permute.xlu0 %2619
      %2621 = vrot.lane.b32.xlu0 %v2510, 28
      %v2622 = vpop.permute.xlu0 %2621
      %2623 = vrot.lane.b32.xlu0 %v2511, 28
      %v2624 = vpop.permute.xlu0 %2623
      %2625 = vrot.lane.b32.xlu0 %v2512, 28
      %v2626 = vpop.permute.xlu0 %2625
      %2627 = vrot.lane.b32.xlu0 %v2513, 28
      %v2628 = vpop.permute.xlu0 %2627
      %2629 = vrot.lane.b32.xlu0 %v2514, 28
      %v2630 = vpop.permute.xlu0 %2629
      %2631 = vrot.lane.b32.xlu0 %v2515, 28
      %v2632 = vpop.permute.xlu0 %2631
      %2633 = vrot.lane.b32.xlu0 %v2516, 28
      %v2634 = vpop.permute.xlu0 %2633
      %2635 = vrot.lane.b32.xlu0 %v2517, 28
      %v2636 = vpop.permute.xlu0 %2635
      %2637 = vrot.lane.b32.xlu0 %v2518, 28
      %v2638 = vpop.permute.xlu0 %2637
      %2639 = vrot.lane.b32.xlu0 %v2519, 28
      %v2640 = vpop.permute.xlu0 %2639
      %2641 = vrot.lane.b32.xlu0 %v2520, 28
      %v2642 = vpop.permute.xlu0 %2641
      %2643 = vrot.lane.b32.xlu0 %v2521, 28
      %v2644 = vpop.permute.xlu0 %2643
      %2645 = vrot.lane.b32.xlu0 %v2522, 28
      %v2646 = vpop.permute.xlu0 %2645
      %2647 = vrot.lane.b32.xlu0 %v2523, 28
      %v2648 = vpop.permute.xlu0 %2647
      %2649 = vrot.lane.b32.xlu0 %v2524, 28
      %v2650 = vpop.permute.xlu0 %2649
      %2651 = vrot.lane.b32.xlu0 %v2525, 28
      %v2652 = vpop.permute.xlu0 %2651
      %2653 = vrot.lane.b32.xlu0 %v2526, 28
      %v2654 = vpop.permute.xlu0 %2653
      %2655 = vrot.lane.b32.xlu0 %v2527, 28
      %v2656 = vpop.permute.xlu0 %2655
      %2657 = vrot.lane.b32.xlu0 %v2528, 28
      %v2658 = vpop.permute.xlu0 %2657
      %2659 = vrot.lane.b32.xlu0 %v2529, 28
      %v2660 = vpop.permute.xlu0 %2659
      %2661 = vrot.lane.b32.xlu0 %v2530, 28
      %v2662 = vpop.permute.xlu0 %2661
      %2663 = vrot.lane.b32.xlu0 %v2531, 28
      %v2664 = vpop.permute.xlu0 %2663
      %2665 = vrot.lane.b32.xlu0 %v2532, 28
      %v2666 = vpop.permute.xlu0 %2665
      %2667 = vrot.lane.b32.xlu0 %v2533, 28
      %v2668 = vpop.permute.xlu0 %2667
      %2669 = vrot.lane.b32.xlu0 %v2534, 28
      %v2670 = vpop.permute.xlu0 %2669
      %2671 = vrot.lane.b32.xlu0 %v2535, 28
      %v2672 = vpop.permute.xlu0 %2671
      %2673 = vrot.lane.b32.xlu0 %v2536, 28
      %v2674 = vpop.permute.xlu0 %2673
      %2675 = vrot.lane.b32.xlu0 %v2537, 28
      %v2676 = vpop.permute.xlu0 %2675
      %2677 = vrot.lane.b32.xlu0 %v2538, 28
      %v2678 = vpop.permute.xlu0 %2677
      %2679 = vrot.lane.b32.xlu0 %v2539, 28
      %v2680 = vpop.permute.xlu0 %2679
      %2681 = vrot.lane.b32.xlu0 %v2540, 28
      %v2682 = vpop.permute.xlu0 %2681
      %2683 = vrot.lane.b32.xlu0 %v2541, 28
      %v2684 = vpop.permute.xlu0 %2683
      %2685 = vrot.lane.b32.xlu0 %v2542, 28
      %v2686 = vpop.permute.xlu0 %2685
      %vm2735 = vcmask 257248
      %2736 = vst.msk [vmem:[#allocation2] sm:$0xf] %vm2735, %v2592
      %2737 = vst.msk [vmem:[#allocation2 + $0x4] sm:$0xf] %vm2735, %v2594
      %2738 = vst.msk [vmem:[#allocation2 + $0x8] sm:$0xf] %vm2735, %v2596
      %2739 = vst.msk [vmem:[#allocation2 + $0xc] sm:$0xf] %vm2735, %v2598
      %2740 = vst.msk [vmem:[#allocation2 + $0x10] sm:$0xf] %vm2735, %v2600
      %2741 = vst.msk [vmem:[#allocation2 + $0x14] sm:$0xf] %vm2735, %v2602
      %2742 = vst.msk [vmem:[#allocation2 + $0x18] sm:$0xf] %vm2735, %v2604
      %2743 = vst.msk [vmem:[#allocation2 + $0x1c] sm:$0xf] %vm2735, %v2606
      %2744 = vst.msk [vmem:[#allocation2 + $0x20] sm:$0xf] %vm2735, %v2608
      %2745 = vst.msk [vmem:[#allocation2 + $0x24] sm:$0xf] %vm2735, %v2610
      %2746 = vst.msk [vmem:[#allocation2 + $0x28] sm:$0xf] %vm2735, %v2612
      %2747 = vst.msk [vmem:[#allocation2 + $0x2c] sm:$0xf] %vm2735, %v2614
      %2748 = vst.msk [vmem:[#allocation2 + $0x30] sm:$0xf] %vm2735, %v2616
      %2749 = vst.msk [vmem:[#allocation2 + $0x34] sm:$0xf] %vm2735, %v2618
      %2750 = vst.msk [vmem:[#allocation2 + $0x38] sm:$0xf] %vm2735, %v2620
      %2751 = vst.msk [vmem:[#allocation2 + $0x3c] sm:$0xf] %vm2735, %v2622
      %2752 = vst.msk [vmem:[#allocation2 + $0x40] sm:$0xf] %vm2735, %v2624
      %2753 = vst.msk [vmem:[#allocation2 + $0x44] sm:$0xf] %vm2735, %v2626
      %2754 = vst.msk [vmem:[#allocation2 + $0x48] sm:$0xf] %vm2735, %v2628
      %2755 = vst.msk [vmem:[#allocation2 + $0x4c] sm:$0xf] %vm2735, %v2630
      %2756 = vst.msk [vmem:[#allocation2 + $0x50] sm:$0xf] %vm2735, %v2632
      %2757 = vst.msk [vmem:[#allocation2 + $0x54] sm:$0xf] %vm2735, %v2634
      %2758 = vst.msk [vmem:[#allocation2 + $0x58] sm:$0xf] %vm2735, %v2636
      %2759 = vst.msk [vmem:[#allocation2 + $0x5c] sm:$0xf] %vm2735, %v2638
      %2760 = vst.msk [vmem:[#allocation2 + $0x60] sm:$0xf] %vm2735, %v2640
      %2761 = vst.msk [vmem:[#allocation2 + $0x64] sm:$0xf] %vm2735, %v2642
      %2762 = vst.msk [vmem:[#allocation2 + $0x68] sm:$0xf] %vm2735, %v2644
      %2763 = vst.msk [vmem:[#allocation2 + $0x6c] sm:$0xf] %vm2735, %v2646
      %2764 = vst.msk [vmem:[#allocation2 + $0x70] sm:$0xf] %vm2735, %v2648
      %2765 = vst.msk [vmem:[#allocation2 + $0x74] sm:$0xf] %vm2735, %v2650
      %2766 = vst.msk [vmem:[#allocation2 + $0x78] sm:$0xf] %vm2735, %v2652
      %2767 = vst.msk [vmem:[#allocation2 + $0x7c] sm:$0xf] %vm2735, %v2654
      %2768 = vst.msk [vmem:[#allocation2 + $0x80] sm:$0xf] %vm2735, %v2656
      %2769 = vst.msk [vmem:[#allocation2 + $0x84] sm:$0xf] %vm2735, %v2658
      %2770 = vst.msk [vmem:[#allocation2 + $0x88] sm:$0xf] %vm2735, %v2660
      %2771 = vst.msk [vmem:[#allocation2 + $0x8c] sm:$0xf] %vm2735, %v2662
      %2772 = vst.msk [vmem:[#allocation2 + $0x90] sm:$0xf] %vm2735, %v2664
      %2773 = vst.msk [vmem:[#allocation2 + $0x94] sm:$0xf] %vm2735, %v2666
      %2774 = vst.msk [vmem:[#allocation2 + $0x98] sm:$0xf] %vm2735, %v2668
      %2775 = vst.msk [vmem:[#allocation2 + $0x9c] sm:$0xf] %vm2735, %v2670
      %2776 = vst.msk [vmem:[#allocation2 + $0xa0] sm:$0xf] %vm2735, %v2672
      %2777 = vst.msk [vmem:[#allocation2 + $0xa4] sm:$0xf] %vm2735, %v2674
      %2778 = vst.msk [vmem:[#allocation2 + $0xa8] sm:$0xf] %vm2735, %v2676
      %2779 = vst.msk [vmem:[#allocation2 + $0xac] sm:$0xf] %vm2735, %v2678
      %2780 = vst.msk [vmem:[#allocation2 + $0xb0] sm:$0xf] %vm2735, %v2680
      %2781 = vst.msk [vmem:[#allocation2 + $0xb4] sm:$0xf] %vm2735, %v2682
      %2782 = vst.msk [vmem:[#allocation2 + $0xb8] sm:$0xf] %vm2735, %v2684
      %2783 = vst.msk [vmem:[#allocation2 + $0xbc] sm:$0xf] %vm2735, %v2686
      %v2784 = vld [vmem:[%s273 + $0x8] sm:$0xff]
      %v2785 = vld [vmem:[%s273 + $0x10] sm:$0xff]
      %v2786 = vld [vmem:[%s273 + $0x20] sm:$0xff]
      %v2787 = vld [vmem:[%s273 + $0x28] sm:$0xff]
      %v2788 = vld [vmem:[%s273 + $0x38] sm:$0xff]
      %v2789 = vld [vmem:[%s273 + $0x40] sm:$0xff]
      %v2790 = vld [vmem:[%s273 + $0x50] sm:$0xff]
      %v2791 = vld [vmem:[%s273 + $0x58] sm:$0xff]
      %v2792 = vld [vmem:[%s273 + $0x68] sm:$0xff]
      %v2793 = vld [vmem:[%s273 + $0x70] sm:$0xff]
      %v2794 = vld [vmem:[%s273 + $0x80] sm:$0xff]
      %v2795 = vld [vmem:[%s273 + $0x88] sm:$0xff]
      %v2796 = vld [vmem:[%s273 + $0x98] sm:$0xff]
      %v2797 = vld [vmem:[%s273 + $0xa0] sm:$0xff]
      %v2798 = vld [vmem:[%s273 + $0xb0] sm:$0xff]
      %v2799 = vld [vmem:[%s273 + $0xb8] sm:$0xff]
      %v2800 = vld [vmem:[%s273 + $0xc8] sm:$0xff]
      %v2801 = vld [vmem:[%s273 + $0xd0] sm:$0xff]
      %v2802 = vld [vmem:[%s273 + $0xe0] sm:$0xff]
      %v2803 = vld [vmem:[%s273 + $0xe8] sm:$0xff]
      %v2804 = vld [vmem:[%s273 + $0xf8] sm:$0xff]
      %v2805 = vld [vmem:[%s273 + $0x100] sm:$0xff]
      %v2806 = vld [vmem:[%s273 + $0x110] sm:$0xff]
      %v2807 = vld [vmem:[%s273 + $0x118] sm:$0xff]
      %v2808 = vld [vmem:[%s273 + $0x128] sm:$0xff]
      %v2809 = vld [vmem:[%s273 + $0x130] sm:$0xff]
      %v2810 = vld [vmem:[%s273 + $0x140] sm:$0xff]
      %v2811 = vld [vmem:[%s273 + $0x148] sm:$0xff]
      %v2812 = vld [vmem:[%s273 + $0x158] sm:$0xff]
      %v2813 = vld [vmem:[%s273 + $0x160] sm:$0xff]
      %v2814 = vld [vmem:[%s273 + $0x170] sm:$0xff]
      %v2815 = vld [vmem:[%s273 + $0x178] sm:$0xff]
      %v2816 = vld [vmem:[%s273 + $0x188] sm:$0xff]
      %v2817 = vld [vmem:[%s273 + $0x190] sm:$0xff]
      %v2818 = vld [vmem:[%s273 + $0x1a0] sm:$0xff]
      %v2819 = vld [vmem:[%s273 + $0x1a8] sm:$0xff]
      %v2820 = vld [vmem:[%s273 + $0x1b8] sm:$0xff]
      %v2821 = vld [vmem:[%s273 + $0x1c0] sm:$0xff]
      %v2822 = vld [vmem:[%s273 + $0x1d0] sm:$0xff]
      %v2823 = vld [vmem:[%s273 + $0x1d8] sm:$0xff]
      %v2824 = vld [vmem:[%s273 + $0x1e8] sm:$0xff]
      %v2825 = vld [vmem:[%s273 + $0x1f0] sm:$0xff]
      %v2826 = vld [vmem:[%s273 + $0x200] sm:$0xff]
      %v2827 = vld [vmem:[%s273 + $0x208] sm:$0xff]
      %v2828 = vld [vmem:[%s273 + $0x218] sm:$0xff]
      %v2829 = vld [vmem:[%s273 + $0x220] sm:$0xff]
      %v2830 = vld [vmem:[%s273 + $0x230] sm:$0xff]
      %v2831 = vld [vmem:[%s273 + $0x238] sm:$0xff]
      %v2832 = vpack.c.bf16 %v2784, %v2784
      %v2833 = vpack.c.bf16 %v2785, %v2785
      %v2834 = vpack.c.bf16 %v2786, %v2786
      %v2835 = vpack.c.bf16 %v2787, %v2787
      %v2836 = vpack.c.bf16 %v2788, %v2788
      %v2837 = vpack.c.bf16 %v2789, %v2789
      %v2838 = vpack.c.bf16 %v2790, %v2790
      %v2839 = vpack.c.bf16 %v2791, %v2791
      %v2840 = vpack.c.bf16 %v2792, %v2792
      %v2841 = vpack.c.bf16 %v2793, %v2793
      %v2842 = vpack.c.bf16 %v2794, %v2794
      %v2843 = vpack.c.bf16 %v2795, %v2795
      %v2844 = vpack.c.bf16 %v2796, %v2796
      %v2845 = vpack.c.bf16 %v2797, %v2797
      %v2846 = vpack.c.bf16 %v2798, %v2798
      %v2847 = vpack.c.bf16 %v2799, %v2799
      %v2848 = vpack.c.bf16 %v2800, %v2800
      %v2849 = vpack.c.bf16 %v2801, %v2801
      %v2850 = vpack.c.bf16 %v2802, %v2802
      %v2851 = vpack.c.bf16 %v2803, %v2803
      %v2852 = vpack.c.bf16 %v2804, %v2804
      %v2853 = vpack.c.bf16 %v2805, %v2805
      %v2854 = vpack.c.bf16 %v2806, %v2806
      %v2855 = vpack.c.bf16 %v2807, %v2807
      %v2856 = vpack.c.bf16 %v2808, %v2808
      %v2857 = vpack.c.bf16 %v2809, %v2809
      %v2858 = vpack.c.bf16 %v2810, %v2810
      %v2859 = vpack.c.bf16 %v2811, %v2811
      %v2860 = vpack.c.bf16 %v2812, %v2812
      %v2861 = vpack.c.bf16 %v2813, %v2813
      %v2862 = vpack.c.bf16 %v2814, %v2814
      %v2863 = vpack.c.bf16 %v2815, %v2815
      %v2864 = vpack.c.bf16 %v2816, %v2816
      %v2865 = vpack.c.bf16 %v2817, %v2817
      %v2866 = vpack.c.bf16 %v2818, %v2818
      %v2867 = vpack.c.bf16 %v2819, %v2819
      %v2868 = vpack.c.bf16 %v2820, %v2820
      %v2869 = vpack.c.bf16 %v2821, %v2821
      %v2870 = vpack.c.bf16 %v2822, %v2822
      %v2871 = vpack.c.bf16 %v2823, %v2823
      %v2872 = vpack.c.bf16 %v2824, %v2824
      %v2873 = vpack.c.bf16 %v2825, %v2825
      %v2874 = vpack.c.bf16 %v2826, %v2826
      %v2875 = vpack.c.bf16 %v2827, %v2827
      %v2876 = vpack.c.bf16 %v2828, %v2828
      %v2877 = vpack.c.bf16 %v2829, %v2829
      %v2878 = vpack.c.bf16 %v2830, %v2830
      %v2879 = vpack.c.bf16 %v2831, %v2831
      %2928 = vrot.lane.b32.xlu0 %v2832, 32
      %v2929 = vpop.permute.xlu0 %2928
      %2930 = vrot.lane.b32.xlu0 %v2833, 32
      %v2931 = vpop.permute.xlu0 %2930
      %2932 = vrot.lane.b32.xlu0 %v2834, 32
      %v2933 = vpop.permute.xlu0 %2932
      %2934 = vrot.lane.b32.xlu0 %v2835, 32
      %v2935 = vpop.permute.xlu0 %2934
      %2936 = vrot.lane.b32.xlu0 %v2836, 32
      %v2937 = vpop.permute.xlu0 %2936
      %2938 = vrot.lane.b32.xlu0 %v2837, 32
      %v2939 = vpop.permute.xlu0 %2938
      %2940 = vrot.lane.b32.xlu0 %v2838, 32
      %v2941 = vpop.permute.xlu0 %2940
      %2942 = vrot.lane.b32.xlu0 %v2839, 32
      %v2943 = vpop.permute.xlu0 %2942
      %2944 = vrot.lane.b32.xlu0 %v2840, 32
      %v2945 = vpop.permute.xlu0 %2944
      %2946 = vrot.lane.b32.xlu0 %v2841, 32
      %v2947 = vpop.permute.xlu0 %2946
      %2948 = vrot.lane.b32.xlu0 %v2842, 32
      %v2949 = vpop.permute.xlu0 %2948
      %2950 = vrot.lane.b32.xlu0 %v2843, 32
      %v2951 = vpop.permute.xlu0 %2950
      %2952 = vrot.lane.b32.xlu0 %v2844, 32
      %v2953 = vpop.permute.xlu0 %2952
      %2954 = vrot.lane.b32.xlu0 %v2845, 32
      %v2955 = vpop.permute.xlu0 %2954
      %2956 = vrot.lane.b32.xlu0 %v2846, 32
      %v2957 = vpop.permute.xlu0 %2956
      %2958 = vrot.lane.b32.xlu0 %v2847, 32
      %v2959 = vpop.permute.xlu0 %2958
      %2960 = vrot.lane.b32.xlu0 %v2848, 32
      %v2961 = vpop.permute.xlu0 %2960
      %2962 = vrot.lane.b32.xlu0 %v2849, 32
      %v2963 = vpop.permute.xlu0 %2962
      %2964 = vrot.lane.b32.xlu0 %v2850, 32
      %v2965 = vpop.permute.xlu0 %2964
      %2966 = vrot.lane.b32.xlu0 %v2851, 32
      %v2967 = vpop.permute.xlu0 %2966
      %2968 = vrot.lane.b32.xlu0 %v2852, 32
      %v2969 = vpop.permute.xlu0 %2968
      %2970 = vrot.lane.b32.xlu0 %v2853, 32
      %v2971 = vpop.permute.xlu0 %2970
      %2972 = vrot.lane.b32.xlu0 %v2854, 32
      %v2973 = vpop.permute.xlu0 %2972
      %2974 = vrot.lane.b32.xlu0 %v2855, 32
      %v2975 = vpop.permute.xlu0 %2974
      %2976 = vrot.lane.b32.xlu0 %v2856, 32
      %v2977 = vpop.permute.xlu0 %2976
      %2978 = vrot.lane.b32.xlu0 %v2857, 32
      %v2979 = vpop.permute.xlu0 %2978
      %2980 = vrot.lane.b32.xlu0 %v2858, 32
      %v2981 = vpop.permute.xlu0 %2980
      %2982 = vrot.lane.b32.xlu0 %v2859, 32
      %v2983 = vpop.permute.xlu0 %2982
      %2984 = vrot.lane.b32.xlu0 %v2860, 32
      %v2985 = vpop.permute.xlu0 %2984
      %2986 = vrot.lane.b32.xlu0 %v2861, 32
      %v2987 = vpop.permute.xlu0 %2986
      %2988 = vrot.lane.b32.xlu0 %v2862, 32
      %v2989 = vpop.permute.xlu0 %2988
      %2990 = vrot.lane.b32.xlu0 %v2863, 32
      %v2991 = vpop.permute.xlu0 %2990
      %2992 = vrot.lane.b32.xlu0 %v2864, 32
      %v2993 = vpop.permute.xlu0 %2992
      %2994 = vrot.lane.b32.xlu0 %v2865, 32
      %v2995 = vpop.permute.xlu0 %2994
      %2996 = vrot.lane.b32.xlu0 %v2866, 32
      %v2997 = vpop.permute.xlu0 %2996
      %2998 = vrot.lane.b32.xlu0 %v2867, 32
      %v2999 = vpop.permute.xlu0 %2998
      %3000 = vrot.lane.b32.xlu0 %v2868, 32
      %v3001 = vpop.permute.xlu0 %3000
      %3002 = vrot.lane.b32.xlu0 %v2869, 32
      %v3003 = vpop.permute.xlu0 %3002
      %3004 = vrot.lane.b32.xlu0 %v2870, 32
      %v3005 = vpop.permute.xlu0 %3004
      %3006 = vrot.lane.b32.xlu0 %v2871, 32
      %v3007 = vpop.permute.xlu0 %3006
      %3008 = vrot.lane.b32.xlu0 %v2872, 32
      %v3009 = vpop.permute.xlu0 %3008
      %3010 = vrot.lane.b32.xlu0 %v2873, 32
      %v3011 = vpop.permute.xlu0 %3010
      %3012 = vrot.lane.b32.xlu0 %v2874, 32
      %v3013 = vpop.permute.xlu0 %3012
      %3014 = vrot.lane.b32.xlu0 %v2875, 32
      %v3015 = vpop.permute.xlu0 %3014
      %3016 = vrot.lane.b32.xlu0 %v2876, 32
      %v3017 = vpop.permute.xlu0 %3016
      %3018 = vrot.lane.b32.xlu0 %v2877, 32
      %v3019 = vpop.permute.xlu0 %3018
      %3020 = vrot.lane.b32.xlu0 %v2878, 32
      %v3021 = vpop.permute.xlu0 %3020
      %3022 = vrot.lane.b32.xlu0 %v2879, 32
      %v3023 = vpop.permute.xlu0 %3022
      %vm3072 = vcmask 290048
      %3073 = vst.msk [vmem:[#allocation2] sm:$0xf] %vm3072, %v2929
      %3074 = vst.msk [vmem:[#allocation2 + $0x4] sm:$0xf] %vm3072, %v2931
      %3075 = vst.msk [vmem:[#allocation2 + $0x8] sm:$0xf] %vm3072, %v2933
      %3076 = vst.msk [vmem:[#allocation2 + $0xc] sm:$0xf] %vm3072, %v2935
      %3077 = vst.msk [vmem:[#allocation2 + $0x10] sm:$0xf] %vm3072, %v2937
      %3078 = vst.msk [vmem:[#allocation2 + $0x14] sm:$0xf] %vm3072, %v2939
      %3079 = vst.msk [vmem:[#allocation2 + $0x18] sm:$0xf] %vm3072, %v2941
      %3080 = vst.msk [vmem:[#allocation2 + $0x1c] sm:$0xf] %vm3072, %v2943
      %3081 = vst.msk [vmem:[#allocation2 + $0x20] sm:$0xf] %vm3072, %v2945
      %3082 = vst.msk [vmem:[#allocation2 + $0x24] sm:$0xf] %vm3072, %v2947
      %3083 = vst.msk [vmem:[#allocation2 + $0x28] sm:$0xf] %vm3072, %v2949
      %3084 = vst.msk [vmem:[#allocation2 + $0x2c] sm:$0xf] %vm3072, %v2951
      %3085 = vst.msk [vmem:[#allocation2 + $0x30] sm:$0xf] %vm3072, %v2953
      %3086 = vst.msk [vmem:[#allocation2 + $0x34] sm:$0xf] %vm3072, %v2955
      %3087 = vst.msk [vmem:[#allocation2 + $0x38] sm:$0xf] %vm3072, %v2957
      %3088 = vst.msk [vmem:[#allocation2 + $0x3c] sm:$0xf] %vm3072, %v2959
      %3089 = vst.msk [vmem:[#allocation2 + $0x40] sm:$0xf] %vm3072, %v2961
      %3090 = vst.msk [vmem:[#allocation2 + $0x44] sm:$0xf] %vm3072, %v2963
      %3091 = vst.msk [vmem:[#allocation2 + $0x48] sm:$0xf] %vm3072, %v2965
      %3092 = vst.msk [vmem:[#allocation2 + $0x4c] sm:$0xf] %vm3072, %v2967
      %3093 = vst.msk [vmem:[#allocation2 + $0x50] sm:$0xf] %vm3072, %v2969
      %3094 = vst.msk [vmem:[#allocation2 + $0x54] sm:$0xf] %vm3072, %v2971
      %3095 = vst.msk [vmem:[#allocation2 + $0x58] sm:$0xf] %vm3072, %v2973
      %3096 = vst.msk [vmem:[#allocation2 + $0x5c] sm:$0xf] %vm3072, %v2975
      %3097 = vst.msk [vmem:[#allocation2 + $0x60] sm:$0xf] %vm3072, %v2977
      %3098 = vst.msk [vmem:[#allocation2 + $0x64] sm:$0xf] %vm3072, %v2979
      %3099 = vst.msk [vmem:[#allocation2 + $0x68] sm:$0xf] %vm3072, %v2981
      %3100 = vst.msk [vmem:[#allocation2 + $0x6c] sm:$0xf] %vm3072, %v2983
      %3101 = vst.msk [vmem:[#allocation2 + $0x70] sm:$0xf] %vm3072, %v2985
      %3102 = vst.msk [vmem:[#allocation2 + $0x74] sm:$0xf] %vm3072, %v2987
      %3103 = vst.msk [vmem:[#allocation2 + $0x78] sm:$0xf] %vm3072, %v2989
      %3104 = vst.msk [vmem:[#allocation2 + $0x7c] sm:$0xf] %vm3072, %v2991
      %3105 = vst.msk [vmem:[#allocation2 + $0x80] sm:$0xf] %vm3072, %v2993
      %3106 = vst.msk [vmem:[#allocation2 + $0x84] sm:$0xf] %vm3072, %v2995
      %3107 = vst.msk [vmem:[#allocation2 + $0x88] sm:$0xf] %vm3072, %v2997
      %3108 = vst.msk [vmem:[#allocation2 + $0x8c] sm:$0xf] %vm3072, %v2999
      %3109 = vst.msk [vmem:[#allocation2 + $0x90] sm:$0xf] %vm3072, %v3001
      %3110 = vst.msk [vmem:[#allocation2 + $0x94] sm:$0xf] %vm3072, %v3003
      %3111 = vst.msk [vmem:[#allocation2 + $0x98] sm:$0xf] %vm3072, %v3005
      %3112 = vst.msk [vmem:[#allocation2 + $0x9c] sm:$0xf] %vm3072, %v3007
      %3113 = vst.msk [vmem:[#allocation2 + $0xa0] sm:$0xf] %vm3072, %v3009
      %3114 = vst.msk [vmem:[#allocation2 + $0xa4] sm:$0xf] %vm3072, %v3011
      %3115 = vst.msk [vmem:[#allocation2 + $0xa8] sm:$0xf] %vm3072, %v3013
      %3116 = vst.msk [vmem:[#allocation2 + $0xac] sm:$0xf] %vm3072, %v3015
      %3117 = vst.msk [vmem:[#allocation2 + $0xb0] sm:$0xf] %vm3072, %v3017
      %3118 = vst.msk [vmem:[#allocation2 + $0xb4] sm:$0xf] %vm3072, %v3019
      %3119 = vst.msk [vmem:[#allocation2 + $0xb8] sm:$0xf] %vm3072, %v3021
      %3120 = vst.msk [vmem:[#allocation2 + $0xbc] sm:$0xf] %vm3072, %v3023
      %v3121 = vld [vmem:[#allocation2] sm:$0xf]
      %v3122 = vld [vmem:[#allocation2 + $0x4] sm:$0xf]
      %v3123 = vld [vmem:[#allocation2 + $0x8] sm:$0xf]
      %v3124 = vld [vmem:[#allocation2 + $0xc] sm:$0xf]
      %v3125 = vld [vmem:[#allocation2 + $0x10] sm:$0xf]
      %v3126 = vld [vmem:[#allocation2 + $0x14] sm:$0xf]
      %v3127 = vld [vmem:[#allocation2 + $0x18] sm:$0xf]
      %v3128 = vld [vmem:[#allocation2 + $0x1c] sm:$0xf]
      %v3129 = vld [vmem:[#allocation2 + $0x20] sm:$0xf]
      %v3130 = vld [vmem:[#allocation2 + $0x24] sm:$0xf]
      %v3131 = vld [vmem:[#allocation2 + $0x28] sm:$0xf]
      %v3132 = vld [vmem:[#allocation2 + $0x2c] sm:$0xf]
      %v3133 = vld [vmem:[#allocation2 + $0x30] sm:$0xf]
      %v3134 = vld [vmem:[#allocation2 + $0x34] sm:$0xf]
      %v3135 = vld [vmem:[#allocation2 + $0x38] sm:$0xf]
      %v3136 = vld [vmem:[#allocation2 + $0x3c] sm:$0xf]
      %v3137 = vld [vmem:[#allocation2 + $0x40] sm:$0xf]
      %v3138 = vld [vmem:[#allocation2 + $0x44] sm:$0xf]
      %v3139 = vld [vmem:[#allocation2 + $0x48] sm:$0xf]
      %v3140 = vld [vmem:[#allocation2 + $0x4c] sm:$0xf]
      %v3141 = vld [vmem:[#allocation2 + $0x50] sm:$0xf]
      %v3142 = vld [vmem:[#allocation2 + $0x54] sm:$0xf]
      %v3143 = vld [vmem:[#allocation2 + $0x58] sm:$0xf]
      %v3144 = vld [vmem:[#allocation2 + $0x5c] sm:$0xf]
      %v3145 = vld [vmem:[#allocation2 + $0x60] sm:$0xf]
      %v3146 = vld [vmem:[#allocation2 + $0x64] sm:$0xf]
      %v3147 = vld [vmem:[#allocation2 + $0x68] sm:$0xf]
      %v3148 = vld [vmem:[#allocation2 + $0x6c] sm:$0xf]
      %v3149 = vld [vmem:[#allocation2 + $0x70] sm:$0xf]
      %v3150 = vld [vmem:[#allocation2 + $0x74] sm:$0xf]
      %v3151 = vld [vmem:[#allocation2 + $0x78] sm:$0xf]
      %v3152 = vld [vmem:[#allocation2 + $0x7c] sm:$0xf]
      %v3153 = vld [vmem:[%s1] sm:$0xf]
      %v3154 = vld [vmem:[%s1 + $0x4] sm:$0xf]
      %v3155 = vld [vmem:[%s1 + $0x8] sm:$0xf]
      %v3156 = vld [vmem:[%s1 + $0xc] sm:$0xf]
      %v3157 = vld [vmem:[%s1 + $0x10] sm:$0x3]
      %s3158 = scalar_lea.vmem [#allocation2], 8
      %v3159 = vld [vmem:[%s3158] sm:$0xf]
      %v3160 = vld [vmem:[%s3158 + $0x4] sm:$0xf]
      %v3161 = vld [vmem:[%s3158 + $0x8] sm:$0xf]
      %v3162 = vld [vmem:[%s3158 + $0xc] sm:$0xf]
      %v3163 = vld [vmem:[%s3158 + $0x10] sm:$0xf]
      %v3164 = vld [vmem:[%s3158 + $0x14] sm:$0xf]
      %v3165 = vld [vmem:[%s3158 + $0x18] sm:$0xf]
      %v3166 = vld [vmem:[%s3158 + $0x1c] sm:$0xf]
      %v3167 = vld [vmem:[%s3158 + $0x20] sm:$0xf]
      %v3168 = vld [vmem:[%s3158 + $0x24] sm:$0xf]
      %v3169 = vld [vmem:[%s3158 + $0x28] sm:$0xf]
      %v3170 = vld [vmem:[%s3158 + $0x2c] sm:$0xf]
      %v3171 = vld [vmem:[%s3158 + $0x30] sm:$0xf]
      %v3172 = vld [vmem:[%s3158 + $0x34] sm:$0xf]
      %v3173 = vld [vmem:[%s3158 + $0x38] sm:$0xf]
      %v3174 = vld [vmem:[%s3158 + $0x3c] sm:$0xf]
      %v3175 = vld [vmem:[%s3158 + $0x40] sm:$0xf]
      %v3176 = vld [vmem:[%s3158 + $0x44] sm:$0xf]
      %v3177 = vld [vmem:[%s3158 + $0x48] sm:$0xf]
      %v3178 = vld [vmem:[%s3158 + $0x4c] sm:$0xf]
      %v3179 = vld [vmem:[%s3158 + $0x50] sm:$0xf]
      %v3180 = vld [vmem:[%s3158 + $0x54] sm:$0xf]
      %v3181 = vld [vmem:[%s3158 + $0x58] sm:$0xf]
      %v3182 = vld [vmem:[%s3158 + $0x5c] sm:$0xf]
      %v3183 = vld [vmem:[%s3158 + $0x60] sm:$0xf]
      %v3184 = vld [vmem:[%s3158 + $0x64] sm:$0xf]
      %v3185 = vld [vmem:[%s3158 + $0x68] sm:$0xf]
      %v3186 = vld [vmem:[%s3158 + $0x6c] sm:$0xf]
      %v3187 = vld [vmem:[%s3158 + $0x70] sm:$0xf]
      %v3188 = vld [vmem:[%s3158 + $0x74] sm:$0xf]
      %v3189 = vld [vmem:[%s3158 + $0x78] sm:$0xf]
      %v3190 = vld [vmem:[%s3158 + $0x7c] sm:$0xf]
      %s3191 = scalar_lea.vmem %s1, 20
      %v3192 = vld [vmem:[%s3191] sm:$0xf]
      %v3193 = vld [vmem:[%s3191 + $0x4] sm:$0xf]
      %v3194 = vld [vmem:[%s3191 + $0x8] sm:$0xf]
      %v3195 = vld [vmem:[%s3191 + $0xc] sm:$0xf]
      %v3196 = vld [vmem:[%s3191 + $0x10] sm:$0x3]
      %v3229 = vunpack.c.l.b16 %v3159
      %v3230 = vunpack.c.l.b16 %v3160
      %v3231 = vunpack.c.l.b16 %v3161
      %v3232 = vunpack.c.l.b16 %v3162
      %v3233 = vunpack.c.l.b16 %v3163
      %v3234 = vunpack.c.l.b16 %v3164
      %v3235 = vunpack.c.l.b16 %v3165
      %v3236 = vunpack.c.l.b16 %v3166
      %v3237 = vunpack.c.l.b16 %v3167
      %v3238 = vunpack.c.l.b16 %v3168
      %v3239 = vunpack.c.l.b16 %v3169
      %v3240 = vunpack.c.l.b16 %v3170
      %v3241 = vunpack.c.l.b16 %v3171
      %v3242 = vunpack.c.l.b16 %v3172
      %v3243 = vunpack.c.l.b16 %v3173
      %v3244 = vunpack.c.l.b16 %v3174
      %v3245 = vunpack.c.l.b16 %v3175
      %v3246 = vunpack.c.l.b16 %v3176
      %v3247 = vunpack.c.l.b16 %v3177
      %v3248 = vunpack.c.l.b16 %v3178
      %v3249 = vunpack.c.l.b16 %v3179
      %v3250 = vunpack.c.l.b16 %v3180
      %v3251 = vunpack.c.l.b16 %v3181
      %v3252 = vunpack.c.l.b16 %v3182
      %v3253 = vunpack.c.l.b16 %v3183
      %v3254 = vunpack.c.l.b16 %v3184
      %v3255 = vunpack.c.l.b16 %v3185
      %v3256 = vunpack.c.l.b16 %v3186
      %v3257 = vunpack.c.l.b16 %v3187
      %v3258 = vunpack.c.l.b16 %v3188
      %v3259 = vunpack.c.l.b16 %v3189
      %v3260 = vunpack.c.l.b16 %v3190
      %v3261 = vpack.c.b16 %v3230, %v3229
      %v3262 = vpack.c.b16 %v3232, %v3231
      %v3263 = vpack.c.b16 %v3234, %v3233
      %v3264 = vpack.c.b16 %v3236, %v3235
      %v3265 = vpack.c.b16 %v3238, %v3237
      %v3266 = vpack.c.b16 %v3240, %v3239
      %v3267 = vpack.c.b16 %v3242, %v3241
      %v3268 = vpack.c.b16 %v3244, %v3243
      %v3269 = vpack.c.b16 %v3246, %v3245
      %v3270 = vpack.c.b16 %v3248, %v3247
      %v3271 = vpack.c.b16 %v3250, %v3249
      %v3272 = vpack.c.b16 %v3252, %v3251
      %v3273 = vpack.c.b16 %v3254, %v3253
      %v3274 = vpack.c.b16 %v3256, %v3255
      %v3275 = vpack.c.b16 %v3258, %v3257
      %v3276 = vpack.c.b16 %v3260, %v3259
      %v3282 = vunpack.c.l.b16 %v3192
      %v3283 = vunpack.c.l.b16 %v3193
      %v3284 = vunpack.c.l.b16 %v3194
      %v3285 = vunpack.c.l.b16 %v3195
      %v3286 = vunpack.c.l.b16 %v3196
      %v3287 = vpack.c.b16 %v3283, %v3282
      %v3288 = vpack.c.b16 %v3285, %v3284
      %v3289 = vpack.c.b16 %v3286, %v3286
      %vm3292 = vcmask 293888
      %v3294 = vsel %vm3292, %v3261, 0
      %v3297 = vsel %vm3292, %v3262, 0
      %v3300 = vsel %vm3292, %v3263, 0
      %v3303 = vsel %vm3292, %v3264, 0
      %v3306 = vsel %vm3292, %v3265, 0
      %v3309 = vsel %vm3292, %v3266, 0
      %v3312 = vsel %vm3292, %v3267, 0
      %v3315 = vsel %vm3292, %v3268, 0
      %v3318 = vsel %vm3292, %v3269, 0
      %v3321 = vsel %vm3292, %v3270, 0
      %v3324 = vsel %vm3292, %v3271, 0
      %v3327 = vsel %vm3292, %v3272, 0
      %v3330 = vsel %vm3292, %v3273, 0
      %v3333 = vsel %vm3292, %v3274, 0
      %v3336 = vsel %vm3292, %v3275, 0
      %v3339 = vsel %vm3292, %v3276, 0
      %vm3341 = vcmask 1041408
      %v3343 = vsel %vm3341, %v3289, 0
      %3345 = vmatpush.bf16.msra.mxu0 0
      %3346 = vmatpush.bf16.msra.mxu0 0
      %3347 = vmatpush.bf16.msra.mxu0 0
      %3348 = vmatpush.bf16.msra.mxu0 0
      %3349 = vmatpush.bf16.msra.mxu0 0
      %3350 = vmatpush.bf16.msra.mxu0 %v3343
      %3351 = vmatpush.bf16.msra.mxu0 %v3288
      %3352 = vmatpush.bf16.msra.mxu0 %v3287
      %3353 = vmatmul.bf16.gmra.mxu0 %v3294
      %v3354 = vpop.f32.mrf.mxu0
      %v3355 = vadd.f32 0.0, %v3354
      %v3356 = vpop.f32.mrf.mxu0
      %v3357 = vadd.f32 0.0, %v3356
      %3358 = vmatmul.bf16.gmra.mxu0 %v3297
      %v3359 = vpop.f32.mrf.mxu0
      %v3360 = vadd.f32 0.0, %v3359
      %v3361 = vpop.f32.mrf.mxu0
      %v3362 = vadd.f32 0.0, %v3361
      %3363 = vmatmul.bf16.gmra.mxu0 %v3300
      %v3364 = vpop.f32.mrf.mxu0
      %v3365 = vadd.f32 0.0, %v3364
      %v3366 = vpop.f32.mrf.mxu0
      %v3367 = vadd.f32 0.0, %v3366
      %3368 = vmatmul.bf16.gmra.mxu0 %v3303
      %v3369 = vpop.f32.mrf.mxu0
      %v3370 = vadd.f32 0.0, %v3369
      %v3371 = vpop.f32.mrf.mxu0
      %v3372 = vadd.f32 0.0, %v3371
      %3373 = vmatmul.bf16.gmra.mxu0 %v3306
      %v3374 = vpop.f32.mrf.mxu0
      %v3375 = vadd.f32 0.0, %v3374
      %v3376 = vpop.f32.mrf.mxu0
      %v3377 = vadd.f32 0.0, %v3376
      %3378 = vmatmul.bf16.gmra.mxu0 %v3309
      %v3379 = vpop.f32.mrf.mxu0
      %v3380 = vadd.f32 0.0, %v3379
      %v3381 = vpop.f32.mrf.mxu0
      %v3382 = vadd.f32 0.0, %v3381
      %3383 = vmatmul.bf16.gmra.mxu0 %v3312
      %v3384 = vpop.f32.mrf.mxu0
      %v3385 = vadd.f32 0.0, %v3384
      %v3386 = vpop.f32.mrf.mxu0
      %v3387 = vadd.f32 0.0, %v3386
      %3388 = vmatmul.bf16.gmra.mxu0 %v3315
      %v3389 = vpop.f32.mrf.mxu0
      %v3390 = vadd.f32 0.0, %v3389
      %v3391 = vpop.f32.mrf.mxu0
      %v3392 = vadd.f32 0.0, %v3391
      %3393 = vmatmul.bf16.gmra.mxu0 %v3318
      %v3394 = vpop.f32.mrf.mxu0
      %v3395 = vadd.f32 0.0, %v3394
      %v3396 = vpop.f32.mrf.mxu0
      %v3397 = vadd.f32 0.0, %v3396
      %3398 = vmatmul.bf16.gmra.mxu0 %v3321
      %v3399 = vpop.f32.mrf.mxu0
      %v3400 = vadd.f32 0.0, %v3399
      %v3401 = vpop.f32.mrf.mxu0
      %v3402 = vadd.f32 0.0, %v3401
      %3403 = vmatmul.bf16.gmra.mxu0 %v3324
      %v3404 = vpop.f32.mrf.mxu0
      %v3405 = vadd.f32 0.0, %v3404
      %v3406 = vpop.f32.mrf.mxu0
      %v3407 = vadd.f32 0.0, %v3406
      %3408 = vmatmul.bf16.gmra.mxu0 %v3327
      %v3409 = vpop.f32.mrf.mxu0
      %v3410 = vadd.f32 0.0, %v3409
      %v3411 = vpop.f32.mrf.mxu0
      %v3412 = vadd.f32 0.0, %v3411
      %3413 = vmatmul.bf16.gmra.mxu0 %v3330
      %v3414 = vpop.f32.mrf.mxu0
      %v3415 = vadd.f32 0.0, %v3414
      %v3416 = vpop.f32.mrf.mxu0
      %v3417 = vadd.f32 0.0, %v3416
      %3418 = vmatmul.bf16.gmra.mxu0 %v3333
      %v3419 = vpop.f32.mrf.mxu0
      %v3420 = vadd.f32 0.0, %v3419
      %v3421 = vpop.f32.mrf.mxu0
      %v3422 = vadd.f32 0.0, %v3421
      %3423 = vmatmul.bf16.gmra.mxu0 %v3336
      %v3424 = vpop.f32.mrf.mxu0
      %v3425 = vadd.f32 0.0, %v3424
      %v3426 = vpop.f32.mrf.mxu0
      %v3427 = vadd.f32 0.0, %v3426
      %3428 = vmatmul.bf16.gmra.mxu0 %v3339
      %v3429 = vpop.f32.mrf.mxu0
      %v3430 = vadd.f32 0.0, %v3429
      %v3431 = vpop.f32.mrf.mxu0
      %v3432 = vadd.f32 0.0, %v3431
      %3433 = vdwg.mxu0
      %v3466 = vunpack.c.l.b16 %v3121
      %v3467 = vunpack.c.l.b16 %v3122
      %v3468 = vunpack.c.l.b16 %v3123
      %v3469 = vunpack.c.l.b16 %v3124
      %v3470 = vunpack.c.l.b16 %v3125
      %v3471 = vunpack.c.l.b16 %v3126
      %v3472 = vunpack.c.l.b16 %v3127
      %v3473 = vunpack.c.l.b16 %v3128
      %v3474 = vunpack.c.l.b16 %v3129
      %v3475 = vunpack.c.l.b16 %v3130
      %v3476 = vunpack.c.l.b16 %v3131
      %v3477 = vunpack.c.l.b16 %v3132
      %v3478 = vunpack.c.l.b16 %v3133
      %v3479 = vunpack.c.l.b16 %v3134
      %v3480 = vunpack.c.l.b16 %v3135
      %v3481 = vunpack.c.l.b16 %v3136
      %v3482 = vunpack.c.l.b16 %v3137
      %v3483 = vunpack.c.l.b16 %v3138
      %v3484 = vunpack.c.l.b16 %v3139
      %v3485 = vunpack.c.l.b16 %v3140
      %v3486 = vunpack.c.l.b16 %v3141
      %v3487 = vunpack.c.l.b16 %v3142
      %v3488 = vunpack.c.l.b16 %v3143
      %v3489 = vunpack.c.l.b16 %v3144
      %v3490 = vunpack.c.l.b16 %v3145
      %v3491 = vunpack.c.l.b16 %v3146
      %v3492 = vunpack.c.l.b16 %v3147
      %v3493 = vunpack.c.l.b16 %v3148
      %v3494 = vunpack.c.l.b16 %v3149
      %v3495 = vunpack.c.l.b16 %v3150
      %v3496 = vunpack.c.l.b16 %v3151
      %v3497 = vunpack.c.l.b16 %v3152
      %v3498 = vpack.c.b16 %v3467, %v3466
      %v3499 = vpack.c.b16 %v3469, %v3468
      %v3500 = vpack.c.b16 %v3471, %v3470
      %v3501 = vpack.c.b16 %v3473, %v3472
      %v3502 = vpack.c.b16 %v3475, %v3474
      %v3503 = vpack.c.b16 %v3477, %v3476
      %v3504 = vpack.c.b16 %v3479, %v3478
      %v3505 = vpack.c.b16 %v3481, %v3480
      %v3506 = vpack.c.b16 %v3483, %v3482
      %v3507 = vpack.c.b16 %v3485, %v3484
      %v3508 = vpack.c.b16 %v3487, %v3486
      %v3509 = vpack.c.b16 %v3489, %v3488
      %v3510 = vpack.c.b16 %v3491, %v3490
      %v3511 = vpack.c.b16 %v3493, %v3492
      %v3512 = vpack.c.b16 %v3495, %v3494
      %v3513 = vpack.c.b16 %v3497, %v3496
      %v3519 = vunpack.c.l.b16 %v3153
      %v3520 = vunpack.c.l.b16 %v3154
      %v3521 = vunpack.c.l.b16 %v3155
      %v3522 = vunpack.c.l.b16 %v3156
      %v3523 = vunpack.c.l.b16 %v3157
      %v3524 = vpack.c.b16 %v3520, %v3519
      %v3525 = vpack.c.b16 %v3522, %v3521
      %v3526 = vpack.c.b16 %v3523, %v3523
      %v3530 = vsel %vm3292, %v3498, 0
      %v3533 = vsel %vm3292, %v3499, 0
      %v3536 = vsel %vm3292, %v3500, 0
      %v3539 = vsel %vm3292, %v3501, 0
      %v3542 = vsel %vm3292, %v3502, 0
      %v3545 = vsel %vm3292, %v3503, 0
      %v3548 = vsel %vm3292, %v3504, 0
      %v3551 = vsel %vm3292, %v3505, 0
      %v3554 = vsel %vm3292, %v3506, 0
      %v3557 = vsel %vm3292, %v3507, 0
      %v3560 = vsel %vm3292, %v3508, 0
      %v3563 = vsel %vm3292, %v3509, 0
      %v3566 = vsel %vm3292, %v3510, 0
      %v3569 = vsel %vm3292, %v3511, 0
      %v3572 = vsel %vm3292, %v3512, 0
      %v3575 = vsel %vm3292, %v3513, 0
      %v3578 = vsel %vm3341, %v3526, 0
      %3580 = vmatpush.bf16.msra.mxu0 0
      %3581 = vmatpush.bf16.msra.mxu0 0
      %3582 = vmatpush.bf16.msra.mxu0 0
      %3583 = vmatpush.bf16.msra.mxu0 0
      %3584 = vmatpush.bf16.msra.mxu0 0
      %3585 = vmatpush.bf16.msra.mxu0 %v3578
      %3586 = vmatpush.bf16.msra.mxu0 %v3525
      %3587 = vmatpush.bf16.msra.mxu0 %v3524
      %3588 = vmatmul.bf16.gmra.mxu0 %v3530
      %v3589 = vpop.f32.mrf.mxu0
      %v3590 = vadd.f32 %v3355, %v3589
      %v3591 = vpop.f32.mrf.mxu0
      %v3592 = vadd.f32 %v3357, %v3591
      %3593 = vmatmul.bf16.gmra.mxu0 %v3533
      %v3594 = vpop.f32.mrf.mxu0
      %v3595 = vadd.f32 %v3360, %v3594
      %v3596 = vpop.f32.mrf.mxu0
      %v3597 = vadd.f32 %v3362, %v3596
      %3598 = vmatmul.bf16.gmra.mxu0 %v3536
      %v3599 = vpop.f32.mrf.mxu0
      %v3600 = vadd.f32 %v3365, %v3599
      %v3601 = vpop.f32.mrf.mxu0
      %v3602 = vadd.f32 %v3367, %v3601
      %3603 = vmatmul.bf16.gmra.mxu0 %v3539
      %v3604 = vpop.f32.mrf.mxu0
      %v3605 = vadd.f32 %v3370, %v3604
      %v3606 = vpop.f32.mrf.mxu0
      %v3607 = vadd.f32 %v3372, %v3606
      %3608 = vmatmul.bf16.gmra.mxu0 %v3542
      %v3609 = vpop.f32.mrf.mxu0
      %v3610 = vadd.f32 %v3375, %v3609
      %v3611 = vpop.f32.mrf.mxu0
      %v3612 = vadd.f32 %v3377, %v3611
      %3613 = vmatmul.bf16.gmra.mxu0 %v3545
      %v3614 = vpop.f32.mrf.mxu0
      %v3615 = vadd.f32 %v3380, %v3614
      %v3616 = vpop.f32.mrf.mxu0
      %v3617 = vadd.f32 %v3382, %v3616
      %3618 = vmatmul.bf16.gmra.mxu0 %v3548
      %v3619 = vpop.f32.mrf.mxu0
      %v3620 = vadd.f32 %v3385, %v3619
      %v3621 = vpop.f32.mrf.mxu0
      %v3622 = vadd.f32 %v3387, %v3621
      %3623 = vmatmul.bf16.gmra.mxu0 %v3551
      %v3624 = vpop.f32.mrf.mxu0
      %v3625 = vadd.f32 %v3390, %v3624
      %v3626 = vpop.f32.mrf.mxu0
      %v3627 = vadd.f32 %v3392, %v3626
      %3628 = vmatmul.bf16.gmra.mxu0 %v3554
      %v3629 = vpop.f32.mrf.mxu0
      %v3630 = vadd.f32 %v3395, %v3629
      %v3631 = vpop.f32.mrf.mxu0
      %v3632 = vadd.f32 %v3397, %v3631
      %3633 = vmatmul.bf16.gmra.mxu0 %v3557
      %v3634 = vpop.f32.mrf.mxu0
      %v3635 = vadd.f32 %v3400, %v3634
      %v3636 = vpop.f32.mrf.mxu0
      %v3637 = vadd.f32 %v3402, %v3636
      %3638 = vmatmul.bf16.gmra.mxu0 %v3560
      %v3639 = vpop.f32.mrf.mxu0
      %v3640 = vadd.f32 %v3405, %v3639
      %v3641 = vpop.f32.mrf.mxu0
      %v3642 = vadd.f32 %v3407, %v3641
      %3643 = vmatmul.bf16.gmra.mxu0 %v3563
      %v3644 = vpop.f32.mrf.mxu0
      %v3645 = vadd.f32 %v3410, %v3644
      %v3646 = vpop.f32.mrf.mxu0
      %v3647 = vadd.f32 %v3412, %v3646
      %3648 = vmatmul.bf16.gmra.mxu0 %v3566
      %v3649 = vpop.f32.mrf.mxu0
      %v3650 = vadd.f32 %v3415, %v3649
      %v3651 = vpop.f32.mrf.mxu0
      %v3652 = vadd.f32 %v3417, %v3651
      %3653 = vmatmul.bf16.gmra.mxu0 %v3569
      %v3654 = vpop.f32.mrf.mxu0
      %v3655 = vadd.f32 %v3420, %v3654
      %v3656 = vpop.f32.mrf.mxu0
      %v3657 = vadd.f32 %v3422, %v3656
      %3658 = vmatmul.bf16.gmra.mxu0 %v3572
      %v3659 = vpop.f32.mrf.mxu0
      %v3660 = vadd.f32 %v3425, %v3659
      %v3661 = vpop.f32.mrf.mxu0
      %v3662 = vadd.f32 %v3427, %v3661
      %3663 = vmatmul.bf16.gmra.mxu0 %v3575
      %v3664 = vpop.f32.mrf.mxu0
      %v3665 = vadd.f32 %v3430, %v3664
      %v3666 = vpop.f32.mrf.mxu0
      %v3667 = vadd.f32 %v3432, %v3666
      %3668 = vdwg.mxu0
      %s3669 = scalar_lea.vmem [#allocation2], 16
      %v3670 = vld [vmem:[%s3669] sm:$0xf]
      %v3671 = vld [vmem:[%s3669 + $0x4] sm:$0xf]
      %v3672 = vld [vmem:[%s3669 + $0x8] sm:$0xf]
      %v3673 = vld [vmem:[%s3669 + $0xc] sm:$0xf]
      %v3674 = vld [vmem:[%s3669 + $0x10] sm:$0xf]
      %v3675 = vld [vmem:[%s3669 + $0x14] sm:$0xf]
      %v3676 = vld [vmem:[%s3669 + $0x18] sm:$0xf]
      %v3677 = vld [vmem:[%s3669 + $0x1c] sm:$0xf]
      %v3678 = vld [vmem:[%s3669 + $0x20] sm:$0xf]
      %v3679 = vld [vmem:[%s3669 + $0x24] sm:$0xf]
      %v3680 = vld [vmem:[%s3669 + $0x28] sm:$0xf]
      %v3681 = vld [vmem:[%s3669 + $0x2c] sm:$0xf]
      %v3682 = vld [vmem:[%s3669 + $0x30] sm:$0xf]
      %v3683 = vld [vmem:[%s3669 + $0x34] sm:$0xf]
      %v3684 = vld [vmem:[%s3669 + $0x38] sm:$0xf]
      %v3685 = vld [vmem:[%s3669 + $0x3c] sm:$0xf]
      %v3686 = vld [vmem:[%s3669 + $0x40] sm:$0xf]
      %v3687 = vld [vmem:[%s3669 + $0x44] sm:$0xf]
      %v3688 = vld [vmem:[%s3669 + $0x48] sm:$0xf]
      %v3689 = vld [vmem:[%s3669 + $0x4c] sm:$0xf]
      %v3690 = vld [vmem:[%s3669 + $0x50] sm:$0xf]
      %v3691 = vld [vmem:[%s3669 + $0x54] sm:$0xf]
      %v3692 = vld [vmem:[%s3669 + $0x58] sm:$0xf]
      %v3693 = vld [vmem:[%s3669 + $0x5c] sm:$0xf]
      %v3694 = vld [vmem:[%s3669 + $0x60] sm:$0xf]
      %v3695 = vld [vmem:[%s3669 + $0x64] sm:$0xf]
      %v3696 = vld [vmem:[%s3669 + $0x68] sm:$0xf]
      %v3697 = vld [vmem:[%s3669 + $0x6c] sm:$0xf]
      %v3698 = vld [vmem:[%s3669 + $0x70] sm:$0xf]
      %v3699 = vld [vmem:[%s3669 + $0x74] sm:$0xf]
      %v3700 = vld [vmem:[%s3669 + $0x78] sm:$0xf]
      %v3701 = vld [vmem:[%s3669 + $0x7c] sm:$0xf]
      %s3702 = scalar_lea.vmem %s1, 40
      %v3703 = vld [vmem:[%s3702] sm:$0xf]
      %v3704 = vld [vmem:[%s3702 + $0x4] sm:$0xf]
      %v3705 = vld [vmem:[%s3702 + $0x8] sm:$0xf]
      %v3706 = vld [vmem:[%s3702 + $0xc] sm:$0xf]
      %v3707 = vld [vmem:[%s3702 + $0x10] sm:$0x3]
      %v3740 = vunpack.c.l.b16 %v3670
      %v3741 = vunpack.c.l.b16 %v3671
      %v3742 = vunpack.c.l.b16 %v3672
      %v3743 = vunpack.c.l.b16 %v3673
      %v3744 = vunpack.c.l.b16 %v3674
      %v3745 = vunpack.c.l.b16 %v3675
      %v3746 = vunpack.c.l.b16 %v3676
      %v3747 = vunpack.c.l.b16 %v3677
      %v3748 = vunpack.c.l.b16 %v3678
      %v3749 = vunpack.c.l.b16 %v3679
      %v3750 = vunpack.c.l.b16 %v3680
      %v3751 = vunpack.c.l.b16 %v3681
      %v3752 = vunpack.c.l.b16 %v3682
      %v3753 = vunpack.c.l.b16 %v3683
      %v3754 = vunpack.c.l.b16 %v3684
      %v3755 = vunpack.c.l.b16 %v3685
      %v3756 = vunpack.c.l.b16 %v3686
      %v3757 = vunpack.c.l.b16 %v3687
      %v3758 = vunpack.c.l.b16 %v3688
      %v3759 = vunpack.c.l.b16 %v3689
      %v3760 = vunpack.c.l.b16 %v3690
      %v3761 = vunpack.c.l.b16 %v3691
      %v3762 = vunpack.c.l.b16 %v3692
      %v3763 = vunpack.c.l.b16 %v3693
      %v3764 = vunpack.c.l.b16 %v3694
      %v3765 = vunpack.c.l.b16 %v3695
      %v3766 = vunpack.c.l.b16 %v3696
      %v3767 = vunpack.c.l.b16 %v3697
      %v3768 = vunpack.c.l.b16 %v3698
      %v3769 = vunpack.c.l.b16 %v3699
      %v3770 = vunpack.c.l.b16 %v3700
      %v3771 = vunpack.c.l.b16 %v3701
      %v3772 = vpack.c.b16 %v3741, %v3740
      %v3773 = vpack.c.b16 %v3743, %v3742
      %v3774 = vpack.c.b16 %v3745, %v3744
      %v3775 = vpack.c.b16 %v3747, %v3746
      %v3776 = vpack.c.b16 %v3749, %v3748
      %v3777 = vpack.c.b16 %v3751, %v3750
      %v3778 = vpack.c.b16 %v3753, %v3752
      %v3779 = vpack.c.b16 %v3755, %v3754
      %v3780 = vpack.c.b16 %v3757, %v3756
      %v3781 = vpack.c.b16 %v3759, %v3758
      %v3782 = vpack.c.b16 %v3761, %v3760
      %v3783 = vpack.c.b16 %v3763, %v3762
      %v3784 = vpack.c.b16 %v3765, %v3764
      %v3785 = vpack.c.b16 %v3767, %v3766
      %v3786 = vpack.c.b16 %v3769, %v3768
      %v3787 = vpack.c.b16 %v3771, %v3770
      %v3793 = vunpack.c.l.b16 %v3703
      %v3794 = vunpack.c.l.b16 %v3704
      %v3795 = vunpack.c.l.b16 %v3705
      %v3796 = vunpack.c.l.b16 %v3706
      %v3797 = vunpack.c.l.b16 %v3707
      %v3798 = vpack.c.b16 %v3794, %v3793
      %v3799 = vpack.c.b16 %v3796, %v3795
      %v3800 = vpack.c.b16 %v3797, %v3797
      %v3804 = vsel %vm3292, %v3772, 0
      %v3807 = vsel %vm3292, %v3773, 0
      %v3810 = vsel %vm3292, %v3774, 0
      %v3813 = vsel %vm3292, %v3775, 0
      %v3816 = vsel %vm3292, %v3776, 0
      %v3819 = vsel %vm3292, %v3777, 0
      %v3822 = vsel %vm3292, %v3778, 0
      %v3825 = vsel %vm3292, %v3779, 0
      %v3828 = vsel %vm3292, %v3780, 0
      %v3831 = vsel %vm3292, %v3781, 0
      %v3834 = vsel %vm3292, %v3782, 0
      %v3837 = vsel %vm3292, %v3783, 0
      %v3840 = vsel %vm3292, %v3784, 0
      %v3843 = vsel %vm3292, %v3785, 0
      %v3846 = vsel %vm3292, %v3786, 0
      %v3849 = vsel %vm3292, %v3787, 0
      %v3852 = vsel %vm3341, %v3800, 0
      %3854 = vmatpush.bf16.msra.mxu0 0
      %3855 = vmatpush.bf16.msra.mxu0 0
      %3856 = vmatpush.bf16.msra.mxu0 0
      %3857 = vmatpush.bf16.msra.mxu0 0
      %3858 = vmatpush.bf16.msra.mxu0 0
      %3859 = vmatpush.bf16.msra.mxu0 %v3852
      %3860 = vmatpush.bf16.msra.mxu0 %v3799
      %3861 = vmatpush.bf16.msra.mxu0 %v3798
      %3862 = vmatmul.bf16.gmra.mxu0 %v3804
      %v3863 = vpop.f32.mrf.mxu0
      %v3864 = vadd.f32 0.0, %v3863
      %v3865 = vpop.f32.mrf.mxu0
      %v3866 = vadd.f32 0.0, %v3865
      %3867 = vmatmul.bf16.gmra.mxu0 %v3807
      %v3868 = vpop.f32.mrf.mxu0
      %v3869 = vadd.f32 0.0, %v3868
      %v3870 = vpop.f32.mrf.mxu0
      %v3871 = vadd.f32 0.0, %v3870
      %3872 = vmatmul.bf16.gmra.mxu0 %v3810
      %v3873 = vpop.f32.mrf.mxu0
      %v3874 = vadd.f32 0.0, %v3873
      %v3875 = vpop.f32.mrf.mxu0
      %v3876 = vadd.f32 0.0, %v3875
      %3877 = vmatmul.bf16.gmra.mxu0 %v3813
      %v3878 = vpop.f32.mrf.mxu0
      %v3879 = vadd.f32 0.0, %v3878
      %v3880 = vpop.f32.mrf.mxu0
      %v3881 = vadd.f32 0.0, %v3880
      %3882 = vmatmul.bf16.gmra.mxu0 %v3816
      %v3883 = vpop.f32.mrf.mxu0
      %v3884 = vadd.f32 0.0, %v3883
      %v3885 = vpop.f32.mrf.mxu0
      %v3886 = vadd.f32 0.0, %v3885
      %3887 = vmatmul.bf16.gmra.mxu0 %v3819
      %v3888 = vpop.f32.mrf.mxu0
      %v3889 = vadd.f32 0.0, %v3888
      %v3890 = vpop.f32.mrf.mxu0
      %v3891 = vadd.f32 0.0, %v3890
      %3892 = vmatmul.bf16.gmra.mxu0 %v3822
      %v3893 = vpop.f32.mrf.mxu0
      %v3894 = vadd.f32 0.0, %v3893
      %v3895 = vpop.f32.mrf.mxu0
      %v3896 = vadd.f32 0.0, %v3895
      %3897 = vmatmul.bf16.gmra.mxu0 %v3825
      %v3898 = vpop.f32.mrf.mxu0
      %v3899 = vadd.f32 0.0, %v3898
      %v3900 = vpop.f32.mrf.mxu0
      %v3901 = vadd.f32 0.0, %v3900
      %3902 = vmatmul.bf16.gmra.mxu0 %v3828
      %v3903 = vpop.f32.mrf.mxu0
      %v3904 = vadd.f32 0.0, %v3903
      %v3905 = vpop.f32.mrf.mxu0
      %v3906 = vadd.f32 0.0, %v3905
      %3907 = vmatmul.bf16.gmra.mxu0 %v3831
      %v3908 = vpop.f32.mrf.mxu0
      %v3909 = vadd.f32 0.0, %v3908
      %v3910 = vpop.f32.mrf.mxu0
      %v3911 = vadd.f32 0.0, %v3910
      %3912 = vmatmul.bf16.gmra.mxu0 %v3834
      %v3913 = vpop.f32.mrf.mxu0
      %v3914 = vadd.f32 0.0, %v3913
      %v3915 = vpop.f32.mrf.mxu0
      %v3916 = vadd.f32 0.0, %v3915
      %3917 = vmatmul.bf16.gmra.mxu0 %v3837
      %v3918 = vpop.f32.mrf.mxu0
      %v3919 = vadd.f32 0.0, %v3918
      %v3920 = vpop.f32.mrf.mxu0
      %v3921 = vadd.f32 0.0, %v3920
      %3922 = vmatmul.bf16.gmra.mxu0 %v3840
      %v3923 = vpop.f32.mrf.mxu0
      %v3924 = vadd.f32 0.0, %v3923
      %v3925 = vpop.f32.mrf.mxu0
      %v3926 = vadd.f32 0.0, %v3925
      %3927 = vmatmul.bf16.gmra.mxu0 %v3843
      %v3928 = vpop.f32.mrf.mxu0
      %v3929 = vadd.f32 0.0, %v3928
      %v3930 = vpop.f32.mrf.mxu0
      %v3931 = vadd.f32 0.0, %v3930
      %3932 = vmatmul.bf16.gmra.mxu0 %v3846
      %v3933 = vpop.f32.mrf.mxu0
      %v3934 = vadd.f32 0.0, %v3933
      %v3935 = vpop.f32.mrf.mxu0
      %v3936 = vadd.f32 0.0, %v3935
      %3937 = vmatmul.bf16.gmra.mxu0 %v3849
      %v3938 = vpop.f32.mrf.mxu0
      %v3939 = vadd.f32 0.0, %v3938
      %v3940 = vpop.f32.mrf.mxu0
      %v3941 = vadd.f32 0.0, %v3940
      %3942 = vdwg.mxu0
      %v3943 = vadd.f32 %v3590, %v3864
      %v3944 = vadd.f32 %v3592, %v3866
      %v3945 = vadd.f32 %v3595, %v3869
      %v3946 = vadd.f32 %v3597, %v3871
      %v3947 = vadd.f32 %v3600, %v3874
      %v3948 = vadd.f32 %v3602, %v3876
      %v3949 = vadd.f32 %v3605, %v3879
      %v3950 = vadd.f32 %v3607, %v3881
      %v3951 = vadd.f32 %v3610, %v3884
      %v3952 = vadd.f32 %v3612, %v3886
      %v3953 = vadd.f32 %v3615, %v3889
      %v3954 = vadd.f32 %v3617, %v3891
      %v3955 = vadd.f32 %v3620, %v3894
      %v3956 = vadd.f32 %v3622, %v3896
      %v3957 = vadd.f32 %v3625, %v3899
      %v3958 = vadd.f32 %v3627, %v3901
      %v3959 = vadd.f32 %v3630, %v3904
      %v3960 = vadd.f32 %v3632, %v3906
      %v3961 = vadd.f32 %v3635, %v3909
      %v3962 = vadd.f32 %v3637, %v3911
      %v3963 = vadd.f32 %v3640, %v3914
      %v3964 = vadd.f32 %v3642, %v3916
      %v3965 = vadd.f32 %v3645, %v3919
      %v3966 = vadd.f32 %v3647, %v3921
      %v3967 = vadd.f32 %v3650, %v3924
      %v3968 = vadd.f32 %v3652, %v3926
      %v3969 = vadd.f32 %v3655, %v3929
      %v3970 = vadd.f32 %v3657, %v3931
      %v3971 = vadd.f32 %v3660, %v3934
      %v3972 = vadd.f32 %v3662, %v3936
      %v3973 = vadd.f32 %v3665, %v3939
      %v3974 = vadd.f32 %v3667, %v3941
      %s3975 = scalar_lea.vmem [#allocation2], 24
      %v3976 = vld [vmem:[%s3975] sm:$0xf]
      %v3977 = vld [vmem:[%s3975 + $0x4] sm:$0xf]
      %v3978 = vld [vmem:[%s3975 + $0x8] sm:$0xf]
      %v3979 = vld [vmem:[%s3975 + $0xc] sm:$0xf]
      %v3980 = vld [vmem:[%s3975 + $0x10] sm:$0xf]
      %v3981 = vld [vmem:[%s3975 + $0x14] sm:$0xf]
      %v3982 = vld [vmem:[%s3975 + $0x18] sm:$0xf]
      %v3983 = vld [vmem:[%s3975 + $0x1c] sm:$0xf]
      %v3984 = vld [vmem:[%s3975 + $0x20] sm:$0xf]
      %v3985 = vld [vmem:[%s3975 + $0x24] sm:$0xf]
      %v3986 = vld [vmem:[%s3975 + $0x28] sm:$0xf]
      %v3987 = vld [vmem:[%s3975 + $0x2c] sm:$0xf]
      %v3988 = vld [vmem:[%s3975 + $0x30] sm:$0xf]
      %v3989 = vld [vmem:[%s3975 + $0x34] sm:$0xf]
      %v3990 = vld [vmem:[%s3975 + $0x38] sm:$0xf]
      %v3991 = vld [vmem:[%s3975 + $0x3c] sm:$0xf]
      %v3992 = vld [vmem:[%s3975 + $0x40] sm:$0xf]
      %v3993 = vld [vmem:[%s3975 + $0x44] sm:$0xf]
      %v3994 = vld [vmem:[%s3975 + $0x48] sm:$0xf]
      %v3995 = vld [vmem:[%s3975 + $0x4c] sm:$0xf]
      %v3996 = vld [vmem:[%s3975 + $0x50] sm:$0xf]
      %v3997 = vld [vmem:[%s3975 + $0x54] sm:$0xf]
      %v3998 = vld [vmem:[%s3975 + $0x58] sm:$0xf]
      %v3999 = vld [vmem:[%s3975 + $0x5c] sm:$0xf]
      %v4000 = vld [vmem:[%s3975 + $0x60] sm:$0xf]
      %v4001 = vld [vmem:[%s3975 + $0x64] sm:$0xf]
      %v4002 = vld [vmem:[%s3975 + $0x68] sm:$0xf]
      %v4003 = vld [vmem:[%s3975 + $0x6c] sm:$0xf]
      %v4004 = vld [vmem:[%s3975 + $0x70] sm:$0xf]
      %v4005 = vld [vmem:[%s3975 + $0x74] sm:$0xf]
      %v4006 = vld [vmem:[%s3975 + $0x78] sm:$0xf]
      %v4007 = vld [vmem:[%s3975 + $0x7c] sm:$0xf]
      %s4008 = scalar_lea.vmem %s1, 60
      %v4009 = vld [vmem:[%s4008] sm:$0xf]
      %v4010 = vld [vmem:[%s4008 + $0x4] sm:$0xf]
      %v4011 = vld [vmem:[%s4008 + $0x8] sm:$0xf]
      %v4012 = vld [vmem:[%s4008 + $0xc] sm:$0xf]
      %v4013 = vld [vmem:[%s4008 + $0x10] sm:$0x3]
      %v4046 = vunpack.c.l.b16 %v3976
      %v4047 = vunpack.c.l.b16 %v3977
      %v4048 = vunpack.c.l.b16 %v3978
      %v4049 = vunpack.c.l.b16 %v3979
      %v4050 = vunpack.c.l.b16 %v3980
      %v4051 = vunpack.c.l.b16 %v3981
      %v4052 = vunpack.c.l.b16 %v3982
      %v4053 = vunpack.c.l.b16 %v3983
      %v4054 = vunpack.c.l.b16 %v3984
      %v4055 = vunpack.c.l.b16 %v3985
      %v4056 = vunpack.c.l.b16 %v3986
      %v4057 = vunpack.c.l.b16 %v3987
      %v4058 = vunpack.c.l.b16 %v3988
      %v4059 = vunpack.c.l.b16 %v3989
      %v4060 = vunpack.c.l.b16 %v3990
      %v4061 = vunpack.c.l.b16 %v3991
      %v4062 = vunpack.c.l.b16 %v3992
      %v4063 = vunpack.c.l.b16 %v3993
      %v4064 = vunpack.c.l.b16 %v3994
      %v4065 = vunpack.c.l.b16 %v3995
      %v4066 = vunpack.c.l.b16 %v3996
      %v4067 = vunpack.c.l.b16 %v3997
      %v4068 = vunpack.c.l.b16 %v3998
      %v4069 = vunpack.c.l.b16 %v3999
      %v4070 = vunpack.c.l.b16 %v4000
      %v4071 = vunpack.c.l.b16 %v4001
      %v4072 = vunpack.c.l.b16 %v4002
      %v4073 = vunpack.c.l.b16 %v4003
      %v4074 = vunpack.c.l.b16 %v4004
      %v4075 = vunpack.c.l.b16 %v4005
      %v4076 = vunpack.c.l.b16 %v4006
      %v4077 = vunpack.c.l.b16 %v4007
      %v4078 = vpack.c.b16 %v4047, %v4046
      %v4079 = vpack.c.b16 %v4049, %v4048
      %v4080 = vpack.c.b16 %v4051, %v4050
      %v4081 = vpack.c.b16 %v4053, %v4052
      %v4082 = vpack.c.b16 %v4055, %v4054
      %v4083 = vpack.c.b16 %v4057, %v4056
      %v4084 = vpack.c.b16 %v4059, %v4058
      %v4085 = vpack.c.b16 %v4061, %v4060
      %v4086 = vpack.c.b16 %v4063, %v4062
      %v4087 = vpack.c.b16 %v4065, %v4064
      %v4088 = vpack.c.b16 %v4067, %v4066
      %v4089 = vpack.c.b16 %v4069, %v4068
      %v4090 = vpack.c.b16 %v4071, %v4070
      %v4091 = vpack.c.b16 %v4073, %v4072
      %v4092 = vpack.c.b16 %v4075, %v4074
      %v4093 = vpack.c.b16 %v4077, %v4076
      %v4099 = vunpack.c.l.b16 %v4009
      %v4100 = vunpack.c.l.b16 %v4010
      %v4101 = vunpack.c.l.b16 %v4011
      %v4102 = vunpack.c.l.b16 %v4012
      %v4103 = vunpack.c.l.b16 %v4013
      %v4104 = vpack.c.b16 %v4100, %v4099
      %v4105 = vpack.c.b16 %v4102, %v4101
      %v4106 = vpack.c.b16 %v4103, %v4103
      %v4110 = vsel %vm3292, %v4078, 0
      %v4113 = vsel %vm3292, %v4079, 0
      %v4116 = vsel %vm3292, %v4080, 0
      %v4119 = vsel %vm3292, %v4081, 0
      %v4122 = vsel %vm3292, %v4082, 0
      %v4125 = vsel %vm3292, %v4083, 0
      %v4128 = vsel %vm3292, %v4084, 0
      %v4131 = vsel %vm3292, %v4085, 0
      %v4134 = vsel %vm3292, %v4086, 0
      %v4137 = vsel %vm3292, %v4087, 0
      %v4140 = vsel %vm3292, %v4088, 0
      %v4143 = vsel %vm3292, %v4089, 0
      %v4146 = vsel %vm3292, %v4090, 0
      %v4149 = vsel %vm3292, %v4091, 0
      %v4152 = vsel %vm3292, %v4092, 0
      %v4155 = vsel %vm3292, %v4093, 0
      %v4158 = vsel %vm3341, %v4106, 0
      %4160 = vmatpush.bf16.msra.mxu0 0
      %4161 = vmatpush.bf16.msra.mxu0 0
      %4162 = vmatpush.bf16.msra.mxu0 0
      %4163 = vmatpush.bf16.msra.mxu0 0
      %4164 = vmatpush.bf16.msra.mxu0 0
      %4165 = vmatpush.bf16.msra.mxu0 %v4158
      %4166 = vmatpush.bf16.msra.mxu0 %v4105
      %4167 = vmatpush.bf16.msra.mxu0 %v4104
      %4168 = vmatmul.bf16.gmra.mxu0 %v4110
      %v4169 = vpop.f32.mrf.mxu0
      %v4170 = vadd.f32 0.0, %v4169
      %v4171 = vpop.f32.mrf.mxu0
      %v4172 = vadd.f32 0.0, %v4171
      %4173 = vmatmul.bf16.gmra.mxu0 %v4113
      %v4174 = vpop.f32.mrf.mxu0
      %v4175 = vadd.f32 0.0, %v4174
      %v4176 = vpop.f32.mrf.mxu0
      %v4177 = vadd.f32 0.0, %v4176
      %4178 = vmatmul.bf16.gmra.mxu0 %v4116
      %v4179 = vpop.f32.mrf.mxu0
      %v4180 = vadd.f32 0.0, %v4179
      %v4181 = vpop.f32.mrf.mxu0
      %v4182 = vadd.f32 0.0, %v4181
      %4183 = vmatmul.bf16.gmra.mxu0 %v4119
      %v4184 = vpop.f32.mrf.mxu0
      %v4185 = vadd.f32 0.0, %v4184
      %v4186 = vpop.f32.mrf.mxu0
      %v4187 = vadd.f32 0.0, %v4186
      %4188 = vmatmul.bf16.gmra.mxu0 %v4122
      %v4189 = vpop.f32.mrf.mxu0
      %v4190 = vadd.f32 0.0, %v4189
      %v4191 = vpop.f32.mrf.mxu0
      %v4192 = vadd.f32 0.0, %v4191
      %4193 = vmatmul.bf16.gmra.mxu0 %v4125
      %v4194 = vpop.f32.mrf.mxu0
      %v4195 = vadd.f32 0.0, %v4194
      %v4196 = vpop.f32.mrf.mxu0
      %v4197 = vadd.f32 0.0, %v4196
      %4198 = vmatmul.bf16.gmra.mxu0 %v4128
      %v4199 = vpop.f32.mrf.mxu0
      %v4200 = vadd.f32 0.0, %v4199
      %v4201 = vpop.f32.mrf.mxu0
      %v4202 = vadd.f32 0.0, %v4201
      %4203 = vmatmul.bf16.gmra.mxu0 %v4131
      %v4204 = vpop.f32.mrf.mxu0
      %v4205 = vadd.f32 0.0, %v4204
      %v4206 = vpop.f32.mrf.mxu0
      %v4207 = vadd.f32 0.0, %v4206
      %4208 = vmatmul.bf16.gmra.mxu0 %v4134
      %v4209 = vpop.f32.mrf.mxu0
      %v4210 = vadd.f32 0.0, %v4209
      %v4211 = vpop.f32.mrf.mxu0
      %v4212 = vadd.f32 0.0, %v4211
      %4213 = vmatmul.bf16.gmra.mxu0 %v4137
      %v4214 = vpop.f32.mrf.mxu0
      %v4215 = vadd.f32 0.0, %v4214
      %v4216 = vpop.f32.mrf.mxu0
      %v4217 = vadd.f32 0.0, %v4216
      %4218 = vmatmul.bf16.gmra.mxu0 %v4140
      %v4219 = vpop.f32.mrf.mxu0
      %v4220 = vadd.f32 0.0, %v4219
      %v4221 = vpop.f32.mrf.mxu0
      %v4222 = vadd.f32 0.0, %v4221
      %4223 = vmatmul.bf16.gmra.mxu0 %v4143
      %v4224 = vpop.f32.mrf.mxu0
      %v4225 = vadd.f32 0.0, %v4224
      %v4226 = vpop.f32.mrf.mxu0
      %v4227 = vadd.f32 0.0, %v4226
      %4228 = vmatmul.bf16.gmra.mxu0 %v4146
      %v4229 = vpop.f32.mrf.mxu0
      %v4230 = vadd.f32 0.0, %v4229
      %v4231 = vpop.f32.mrf.mxu0
      %v4232 = vadd.f32 0.0, %v4231
      %4233 = vmatmul.bf16.gmra.mxu0 %v4149
      %v4234 = vpop.f32.mrf.mxu0
      %v4235 = vadd.f32 0.0, %v4234
      %v4236 = vpop.f32.mrf.mxu0
      %v4237 = vadd.f32 0.0, %v4236
      %4238 = vmatmul.bf16.gmra.mxu0 %v4152
      %v4239 = vpop.f32.mrf.mxu0
      %v4240 = vadd.f32 0.0, %v4239
      %v4241 = vpop.f32.mrf.mxu0
      %v4242 = vadd.f32 0.0, %v4241
      %4243 = vmatmul.bf16.gmra.mxu0 %v4155
      %v4244 = vpop.f32.mrf.mxu0
      %v4245 = vadd.f32 0.0, %v4244
      %v4246 = vpop.f32.mrf.mxu0
      %v4247 = vadd.f32 0.0, %v4246
      %4248 = vdwg.mxu0
      %v4249 = vadd.f32 %v3943, %v4170
      %v4250 = vadd.f32 %v3944, %v4172
      %v4251 = vadd.f32 %v3945, %v4175
      %v4252 = vadd.f32 %v3946, %v4177
      %v4253 = vadd.f32 %v3947, %v4180
      %v4254 = vadd.f32 %v3948, %v4182
      %v4255 = vadd.f32 %v3949, %v4185
      %v4256 = vadd.f32 %v3950, %v4187
      %v4257 = vadd.f32 %v3951, %v4190
      %v4258 = vadd.f32 %v3952, %v4192
      %v4259 = vadd.f32 %v3953, %v4195
      %v4260 = vadd.f32 %v3954, %v4197
      %v4261 = vadd.f32 %v3955, %v4200
      %v4262 = vadd.f32 %v3956, %v4202
      %v4263 = vadd.f32 %v3957, %v4205
      %v4264 = vadd.f32 %v3958, %v4207
      %v4265 = vadd.f32 %v3959, %v4210
      %v4266 = vadd.f32 %v3960, %v4212
      %v4267 = vadd.f32 %v3961, %v4215
      %v4268 = vadd.f32 %v3962, %v4217
      %v4269 = vadd.f32 %v3963, %v4220
      %v4270 = vadd.f32 %v3964, %v4222
      %v4271 = vadd.f32 %v3965, %v4225
      %v4272 = vadd.f32 %v3966, %v4227
      %v4273 = vadd.f32 %v3967, %v4230
      %v4274 = vadd.f32 %v3968, %v4232
      %v4275 = vadd.f32 %v3969, %v4235
      %v4276 = vadd.f32 %v3970, %v4237
      %v4277 = vadd.f32 %v3971, %v4240
      %v4278 = vadd.f32 %v3972, %v4242
      %v4279 = vadd.f32 %v3973, %v4245
      %v4280 = vadd.f32 %v3974, %v4247
      %s4281 = scalar_lea.vmem [#allocation2], 32
      %v4282 = vld [vmem:[%s4281] sm:$0xf]
      %v4283 = vld [vmem:[%s4281 + $0x4] sm:$0xf]
      %v4284 = vld [vmem:[%s4281 + $0x8] sm:$0xf]
      %v4285 = vld [vmem:[%s4281 + $0xc] sm:$0xf]
      %v4286 = vld [vmem:[%s4281 + $0x10] sm:$0xf]
      %v4287 = vld [vmem:[%s4281 + $0x14] sm:$0xf]
      %v4288 = vld [vmem:[%s4281 + $0x18] sm:$0xf]
      %v4289 = vld [vmem:[%s4281 + $0x1c] sm:$0xf]
      %v4290 = vld [vmem:[%s4281 + $0x20] sm:$0xf]
      %v4291 = vld [vmem:[%s4281 + $0x24] sm:$0xf]
      %v4292 = vld [vmem:[%s4281 + $0x28] sm:$0xf]
      %v4293 = vld [vmem:[%s4281 + $0x2c] sm:$0xf]
      %v4294 = vld [vmem:[%s4281 + $0x30] sm:$0xf]
      %v4295 = vld [vmem:[%s4281 + $0x34] sm:$0xf]
      %v4296 = vld [vmem:[%s4281 + $0x38] sm:$0xf]
      %v4297 = vld [vmem:[%s4281 + $0x3c] sm:$0xf]
      %v4298 = vld [vmem:[%s4281 + $0x40] sm:$0xf]
      %v4299 = vld [vmem:[%s4281 + $0x44] sm:$0xf]
      %v4300 = vld [vmem:[%s4281 + $0x48] sm:$0xf]
      %v4301 = vld [vmem:[%s4281 + $0x4c] sm:$0xf]
      %v4302 = vld [vmem:[%s4281 + $0x50] sm:$0xf]
      %v4303 = vld [vmem:[%s4281 + $0x54] sm:$0xf]
      %v4304 = vld [vmem:[%s4281 + $0x58] sm:$0xf]
      %v4305 = vld [vmem:[%s4281 + $0x5c] sm:$0xf]
      %v4306 = vld [vmem:[%s4281 + $0x60] sm:$0xf]
      %v4307 = vld [vmem:[%s4281 + $0x64] sm:$0xf]
      %v4308 = vld [vmem:[%s4281 + $0x68] sm:$0xf]
      %v4309 = vld [vmem:[%s4281 + $0x6c] sm:$0xf]
      %v4310 = vld [vmem:[%s4281 + $0x70] sm:$0xf]
      %v4311 = vld [vmem:[%s4281 + $0x74] sm:$0xf]
      %v4312 = vld [vmem:[%s4281 + $0x78] sm:$0xf]
      %v4313 = vld [vmem:[%s4281 + $0x7c] sm:$0xf]
      %s4314 = scalar_lea.vmem %s1, 80
      %v4315 = vld [vmem:[%s4314] sm:$0xf]
      %v4316 = vld [vmem:[%s4314 + $0x4] sm:$0xf]
      %v4317 = vld [vmem:[%s4314 + $0x8] sm:$0xf]
      %v4318 = vld [vmem:[%s4314 + $0xc] sm:$0xf]
      %v4319 = vld [vmem:[%s4314 + $0x10] sm:$0x3]
      %v4352 = vunpack.c.l.b16 %v4282
      %v4353 = vunpack.c.l.b16 %v4283
      %v4354 = vunpack.c.l.b16 %v4284
      %v4355 = vunpack.c.l.b16 %v4285
      %v4356 = vunpack.c.l.b16 %v4286
      %v4357 = vunpack.c.l.b16 %v4287
      %v4358 = vunpack.c.l.b16 %v4288
      %v4359 = vunpack.c.l.b16 %v4289
      %v4360 = vunpack.c.l.b16 %v4290
      %v4361 = vunpack.c.l.b16 %v4291
      %v4362 = vunpack.c.l.b16 %v4292
      %v4363 = vunpack.c.l.b16 %v4293
      %v4364 = vunpack.c.l.b16 %v4294
      %v4365 = vunpack.c.l.b16 %v4295
      %v4366 = vunpack.c.l.b16 %v4296
      %v4367 = vunpack.c.l.b16 %v4297
      %v4368 = vunpack.c.l.b16 %v4298
      %v4369 = vunpack.c.l.b16 %v4299
      %v4370 = vunpack.c.l.b16 %v4300
      %v4371 = vunpack.c.l.b16 %v4301
      %v4372 = vunpack.c.l.b16 %v4302
      %v4373 = vunpack.c.l.b16 %v4303
      %v4374 = vunpack.c.l.b16 %v4304
      %v4375 = vunpack.c.l.b16 %v4305
      %v4376 = vunpack.c.l.b16 %v4306
      %v4377 = vunpack.c.l.b16 %v4307
      %v4378 = vunpack.c.l.b16 %v4308
      %v4379 = vunpack.c.l.b16 %v4309
      %v4380 = vunpack.c.l.b16 %v4310
      %v4381 = vunpack.c.l.b16 %v4311
      %v4382 = vunpack.c.l.b16 %v4312
      %v4383 = vunpack.c.l.b16 %v4313
      %v4384 = vpack.c.b16 %v4353, %v4352
      %v4385 = vpack.c.b16 %v4355, %v4354
      %v4386 = vpack.c.b16 %v4357, %v4356
      %v4387 = vpack.c.b16 %v4359, %v4358
      %v4388 = vpack.c.b16 %v4361, %v4360
      %v4389 = vpack.c.b16 %v4363, %v4362
      %v4390 = vpack.c.b16 %v4365, %v4364
      %v4391 = vpack.c.b16 %v4367, %v4366
      %v4392 = vpack.c.b16 %v4369, %v4368
      %v4393 = vpack.c.b16 %v4371, %v4370
      %v4394 = vpack.c.b16 %v4373, %v4372
      %v4395 = vpack.c.b16 %v4375, %v4374
      %v4396 = vpack.c.b16 %v4377, %v4376
      %v4397 = vpack.c.b16 %v4379, %v4378
      %v4398 = vpack.c.b16 %v4381, %v4380
      %v4399 = vpack.c.b16 %v4383, %v4382
      %v4405 = vunpack.c.l.b16 %v4315
      %v4406 = vunpack.c.l.b16 %v4316
      %v4407 = vunpack.c.l.b16 %v4317
      %v4408 = vunpack.c.l.b16 %v4318
      %v4409 = vunpack.c.l.b16 %v4319
      %v4410 = vpack.c.b16 %v4406, %v4405
      %v4411 = vpack.c.b16 %v4408, %v4407
      %v4412 = vpack.c.b16 %v4409, %v4409
      %v4416 = vsel %vm3292, %v4384, 0
      %v4419 = vsel %vm3292, %v4385, 0
      %v4422 = vsel %vm3292, %v4386, 0
      %v4425 = vsel %vm3292, %v4387, 0
      %v4428 = vsel %vm3292, %v4388, 0
      %v4431 = vsel %vm3292, %v4389, 0
      %v4434 = vsel %vm3292, %v4390, 0
      %v4437 = vsel %vm3292, %v4391, 0
      %v4440 = vsel %vm3292, %v4392, 0
      %v4443 = vsel %vm3292, %v4393, 0
      %v4446 = vsel %vm3292, %v4394, 0
      %v4449 = vsel %vm3292, %v4395, 0
      %v4452 = vsel %vm3292, %v4396, 0
      %v4455 = vsel %vm3292, %v4397, 0
      %v4458 = vsel %vm3292, %v4398, 0
      %v4461 = vsel %vm3292, %v4399, 0
      %v4464 = vsel %vm3341, %v4412, 0
      %4466 = vmatpush.bf16.msra.mxu0 0
      %4467 = vmatpush.bf16.msra.mxu0 0
      %4468 = vmatpush.bf16.msra.mxu0 0
      %4469 = vmatpush.bf16.msra.mxu0 0
      %4470 = vmatpush.bf16.msra.mxu0 0
      %4471 = vmatpush.bf16.msra.mxu0 %v4464
      %4472 = vmatpush.bf16.msra.mxu0 %v4411
      %4473 = vmatpush.bf16.msra.mxu0 %v4410
      %4474 = vmatmul.bf16.gmra.mxu0 %v4416
      %v4475 = vpop.f32.mrf.mxu0
      %v4476 = vadd.f32 0.0, %v4475
      %v4477 = vpop.f32.mrf.mxu0
      %v4478 = vadd.f32 0.0, %v4477
      %4479 = vmatmul.bf16.gmra.mxu0 %v4419
      %v4480 = vpop.f32.mrf.mxu0
      %v4481 = vadd.f32 0.0, %v4480
      %v4482 = vpop.f32.mrf.mxu0
      %v4483 = vadd.f32 0.0, %v4482
      %4484 = vmatmul.bf16.gmra.mxu0 %v4422
      %v4485 = vpop.f32.mrf.mxu0
      %v4486 = vadd.f32 0.0, %v4485
      %v4487 = vpop.f32.mrf.mxu0
      %v4488 = vadd.f32 0.0, %v4487
      %4489 = vmatmul.bf16.gmra.mxu0 %v4425
      %v4490 = vpop.f32.mrf.mxu0
      %v4491 = vadd.f32 0.0, %v4490
      %v4492 = vpop.f32.mrf.mxu0
      %v4493 = vadd.f32 0.0, %v4492
      %4494 = vmatmul.bf16.gmra.mxu0 %v4428
      %v4495 = vpop.f32.mrf.mxu0
      %v4496 = vadd.f32 0.0, %v4495
      %v4497 = vpop.f32.mrf.mxu0
      %v4498 = vadd.f32 0.0, %v4497
      %4499 = vmatmul.bf16.gmra.mxu0 %v4431
      %v4500 = vpop.f32.mrf.mxu0
      %v4501 = vadd.f32 0.0, %v4500
      %v4502 = vpop.f32.mrf.mxu0
      %v4503 = vadd.f32 0.0, %v4502
      %4504 = vmatmul.bf16.gmra.mxu0 %v4434
      %v4505 = vpop.f32.mrf.mxu0
      %v4506 = vadd.f32 0.0, %v4505
      %v4507 = vpop.f32.mrf.mxu0
      %v4508 = vadd.f32 0.0, %v4507
      %4509 = vmatmul.bf16.gmra.mxu0 %v4437
      %v4510 = vpop.f32.mrf.mxu0
      %v4511 = vadd.f32 0.0, %v4510
      %v4512 = vpop.f32.mrf.mxu0
      %v4513 = vadd.f32 0.0, %v4512
      %4514 = vmatmul.bf16.gmra.mxu0 %v4440
      %v4515 = vpop.f32.mrf.mxu0
      %v4516 = vadd.f32 0.0, %v4515
      %v4517 = vpop.f32.mrf.mxu0
      %v4518 = vadd.f32 0.0, %v4517
      %4519 = vmatmul.bf16.gmra.mxu0 %v4443
      %v4520 = vpop.f32.mrf.mxu0
      %v4521 = vadd.f32 0.0, %v4520
      %v4522 = vpop.f32.mrf.mxu0
      %v4523 = vadd.f32 0.0, %v4522
      %4524 = vmatmul.bf16.gmra.mxu0 %v4446
      %v4525 = vpop.f32.mrf.mxu0
      %v4526 = vadd.f32 0.0, %v4525
      %v4527 = vpop.f32.mrf.mxu0
      %v4528 = vadd.f32 0.0, %v4527
      %4529 = vmatmul.bf16.gmra.mxu0 %v4449
      %v4530 = vpop.f32.mrf.mxu0
      %v4531 = vadd.f32 0.0, %v4530
      %v4532 = vpop.f32.mrf.mxu0
      %v4533 = vadd.f32 0.0, %v4532
      %4534 = vmatmul.bf16.gmra.mxu0 %v4452
      %v4535 = vpop.f32.mrf.mxu0
      %v4536 = vadd.f32 0.0, %v4535
      %v4537 = vpop.f32.mrf.mxu0
      %v4538 = vadd.f32 0.0, %v4537
      %4539 = vmatmul.bf16.gmra.mxu0 %v4455
      %v4540 = vpop.f32.mrf.mxu0
      %v4541 = vadd.f32 0.0, %v4540
      %v4542 = vpop.f32.mrf.mxu0
      %v4543 = vadd.f32 0.0, %v4542
      %4544 = vmatmul.bf16.gmra.mxu0 %v4458
      %v4545 = vpop.f32.mrf.mxu0
      %v4546 = vadd.f32 0.0, %v4545
      %v4547 = vpop.f32.mrf.mxu0
      %v4548 = vadd.f32 0.0, %v4547
      %4549 = vmatmul.bf16.gmra.mxu0 %v4461
      %v4550 = vpop.f32.mrf.mxu0
      %v4551 = vadd.f32 0.0, %v4550
      %v4552 = vpop.f32.mrf.mxu0
      %v4553 = vadd.f32 0.0, %v4552
      %4554 = vdwg.mxu0
      %v4555 = vadd.f32 %v4249, %v4476
      %v4556 = vadd.f32 %v4250, %v4478
      %v4557 = vadd.f32 %v4251, %v4481
      %v4558 = vadd.f32 %v4252, %v4483
      %v4559 = vadd.f32 %v4253, %v4486
      %v4560 = vadd.f32 %v4254, %v4488
      %v4561 = vadd.f32 %v4255, %v4491
      %v4562 = vadd.f32 %v4256, %v4493
      %v4563 = vadd.f32 %v4257, %v4496
      %v4564 = vadd.f32 %v4258, %v4498
      %v4565 = vadd.f32 %v4259, %v4501
      %v4566 = vadd.f32 %v4260, %v4503
      %v4567 = vadd.f32 %v4261, %v4506
      %v4568 = vadd.f32 %v4262, %v4508
      %v4569 = vadd.f32 %v4263, %v4511
      %v4570 = vadd.f32 %v4264, %v4513
      %v4571 = vadd.f32 %v4265, %v4516
      %v4572 = vadd.f32 %v4266, %v4518
      %v4573 = vadd.f32 %v4267, %v4521
      %v4574 = vadd.f32 %v4268, %v4523
      %v4575 = vadd.f32 %v4269, %v4526
      %v4576 = vadd.f32 %v4270, %v4528
      %v4577 = vadd.f32 %v4271, %v4531
      %v4578 = vadd.f32 %v4272, %v4533
      %v4579 = vadd.f32 %v4273, %v4536
      %v4580 = vadd.f32 %v4274, %v4538
      %v4581 = vadd.f32 %v4275, %v4541
      %v4582 = vadd.f32 %v4276, %v4543
      %v4583 = vadd.f32 %v4277, %v4546
      %v4584 = vadd.f32 %v4278, %v4548
      %v4585 = vadd.f32 %v4279, %v4551
      %v4586 = vadd.f32 %v4280, %v4553
      %s4587 = scalar_lea.vmem [#allocation2], 40
      %v4588 = vld [vmem:[%s4587] sm:$0xf]
      %v4589 = vld [vmem:[%s4587 + $0x4] sm:$0xf]
      %v4590 = vld [vmem:[%s4587 + $0x8] sm:$0xf]
      %v4591 = vld [vmem:[%s4587 + $0xc] sm:$0xf]
      %v4592 = vld [vmem:[%s4587 + $0x10] sm:$0xf]
      %v4593 = vld [vmem:[%s4587 + $0x14] sm:$0xf]
      %v4594 = vld [vmem:[%s4587 + $0x18] sm:$0xf]
      %v4595 = vld [vmem:[%s4587 + $0x1c] sm:$0xf]
      %v4596 = vld [vmem:[%s4587 + $0x20] sm:$0xf]
      %v4597 = vld [vmem:[%s4587 + $0x24] sm:$0xf]
      %v4598 = vld [vmem:[%s4587 + $0x28] sm:$0xf]
      %v4599 = vld [vmem:[%s4587 + $0x2c] sm:$0xf]
      %v4600 = vld [vmem:[%s4587 + $0x30] sm:$0xf]
      %v4601 = vld [vmem:[%s4587 + $0x34] sm:$0xf]
      %v4602 = vld [vmem:[%s4587 + $0x38] sm:$0xf]
      %v4603 = vld [vmem:[%s4587 + $0x3c] sm:$0xf]
      %v4604 = vld [vmem:[%s4587 + $0x40] sm:$0xf]
      %v4605 = vld [vmem:[%s4587 + $0x44] sm:$0xf]
      %v4606 = vld [vmem:[%s4587 + $0x48] sm:$0xf]
      %v4607 = vld [vmem:[%s4587 + $0x4c] sm:$0xf]
      %v4608 = vld [vmem:[%s4587 + $0x50] sm:$0xf]
      %v4609 = vld [vmem:[%s4587 + $0x54] sm:$0xf]
      %v4610 = vld [vmem:[%s4587 + $0x58] sm:$0xf]
      %v4611 = vld [vmem:[%s4587 + $0x5c] sm:$0xf]
      %v4612 = vld [vmem:[%s4587 + $0x60] sm:$0xf]
      %v4613 = vld [vmem:[%s4587 + $0x64] sm:$0xf]
      %v4614 = vld [vmem:[%s4587 + $0x68] sm:$0xf]
      %v4615 = vld [vmem:[%s4587 + $0x6c] sm:$0xf]
      %v4616 = vld [vmem:[%s4587 + $0x70] sm:$0xf]
      %v4617 = vld [vmem:[%s4587 + $0x74] sm:$0xf]
      %v4618 = vld [vmem:[%s4587 + $0x78] sm:$0xf]
      %v4619 = vld [vmem:[%s4587 + $0x7c] sm:$0xf]
      %s4620 = scalar_lea.vmem %s1, 100
      %v4621 = vld [vmem:[%s4620] sm:$0xf]
      %v4622 = vld [vmem:[%s4620 + $0x4] sm:$0xf]
      %v4623 = vld [vmem:[%s4620 + $0x8] sm:$0xf]
      %v4624 = vld [vmem:[%s4620 + $0xc] sm:$0xf]
      %v4625 = vld [vmem:[%s4620 + $0x10] sm:$0x3]
      %v4658 = vunpack.c.l.b16 %v4588
      %v4659 = vunpack.c.l.b16 %v4589
      %v4660 = vunpack.c.l.b16 %v4590
      %v4661 = vunpack.c.l.b16 %v4591
      %v4662 = vunpack.c.l.b16 %v4592
      %v4663 = vunpack.c.l.b16 %v4593
      %v4664 = vunpack.c.l.b16 %v4594
      %v4665 = vunpack.c.l.b16 %v4595
      %v4666 = vunpack.c.l.b16 %v4596
      %v4667 = vunpack.c.l.b16 %v4597
      %v4668 = vunpack.c.l.b16 %v4598
      %v4669 = vunpack.c.l.b16 %v4599
      %v4670 = vunpack.c.l.b16 %v4600
      %v4671 = vunpack.c.l.b16 %v4601
      %v4672 = vunpack.c.l.b16 %v4602
      %v4673 = vunpack.c.l.b16 %v4603
      %v4674 = vunpack.c.l.b16 %v4604
      %v4675 = vunpack.c.l.b16 %v4605
      %v4676 = vunpack.c.l.b16 %v4606
      %v4677 = vunpack.c.l.b16 %v4607
      %v4678 = vunpack.c.l.b16 %v4608
      %v4679 = vunpack.c.l.b16 %v4609
      %v4680 = vunpack.c.l.b16 %v4610
      %v4681 = vunpack.c.l.b16 %v4611
      %v4682 = vunpack.c.l.b16 %v4612
      %v4683 = vunpack.c.l.b16 %v4613
      %v4684 = vunpack.c.l.b16 %v4614
      %v4685 = vunpack.c.l.b16 %v4615
      %v4686 = vunpack.c.l.b16 %v4616
      %v4687 = vunpack.c.l.b16 %v4617
      %v4688 = vunpack.c.l.b16 %v4618
      %v4689 = vunpack.c.l.b16 %v4619
      %v4690 = vpack.c.b16 %v4659, %v4658
      %v4691 = vpack.c.b16 %v4661, %v4660
      %v4692 = vpack.c.b16 %v4663, %v4662
      %v4693 = vpack.c.b16 %v4665, %v4664
      %v4694 = vpack.c.b16 %v4667, %v4666
      %v4695 = vpack.c.b16 %v4669, %v4668
      %v4696 = vpack.c.b16 %v4671, %v4670
      %v4697 = vpack.c.b16 %v4673, %v4672
      %v4698 = vpack.c.b16 %v4675, %v4674
      %v4699 = vpack.c.b16 %v4677, %v4676
      %v4700 = vpack.c.b16 %v4679, %v4678
      %v4701 = vpack.c.b16 %v4681, %v4680
      %v4702 = vpack.c.b16 %v4683, %v4682
      %v4703 = vpack.c.b16 %v4685, %v4684
      %v4704 = vpack.c.b16 %v4687, %v4686
      %v4705 = vpack.c.b16 %v4689, %v4688
      %v4711 = vunpack.c.l.b16 %v4621
      %v4712 = vunpack.c.l.b16 %v4622
      %v4713 = vunpack.c.l.b16 %v4623
      %v4714 = vunpack.c.l.b16 %v4624
      %v4715 = vunpack.c.l.b16 %v4625
      %v4716 = vpack.c.b16 %v4712, %v4711
      %v4717 = vpack.c.b16 %v4714, %v4713
      %v4718 = vpack.c.b16 %v4715, %v4715
      %v4722 = vsel %vm3292, %v4690, 0
      %v4725 = vsel %vm3292, %v4691, 0
      %v4728 = vsel %vm3292, %v4692, 0
      %v4731 = vsel %vm3292, %v4693, 0
      %v4734 = vsel %vm3292, %v4694, 0
      %v4737 = vsel %vm3292, %v4695, 0
      %v4740 = vsel %vm3292, %v4696, 0
      %v4743 = vsel %vm3292, %v4697, 0
      %v4746 = vsel %vm3292, %v4698, 0
      %v4749 = vsel %vm3292, %v4699, 0
      %v4752 = vsel %vm3292, %v4700, 0
      %v4755 = vsel %vm3292, %v4701, 0
      %v4758 = vsel %vm3292, %v4702, 0
      %v4761 = vsel %vm3292, %v4703, 0
      %v4764 = vsel %vm3292, %v4704, 0
      %v4767 = vsel %vm3292, %v4705, 0
      %v4770 = vsel %vm3341, %v4718, 0
      %4772 = vmatpush.bf16.msra.mxu0 0
      %4773 = vmatpush.bf16.msra.mxu0 0
      %4774 = vmatpush.bf16.msra.mxu0 0
      %4775 = vmatpush.bf16.msra.mxu0 0
      %4776 = vmatpush.bf16.msra.mxu0 0
      %4777 = vmatpush.bf16.msra.mxu0 %v4770
      %4778 = vmatpush.bf16.msra.mxu0 %v4717
      %4779 = vmatpush.bf16.msra.mxu0 %v4716
      %4780 = vmatmul.bf16.gmra.mxu0 %v4722
      %v4781 = vpop.f32.mrf.mxu0
      %v4782 = vadd.f32 0.0, %v4781
      %v4783 = vpop.f32.mrf.mxu0
      %v4784 = vadd.f32 0.0, %v4783
      %4785 = vmatmul.bf16.gmra.mxu0 %v4725
      %v4786 = vpop.f32.mrf.mxu0
      %v4787 = vadd.f32 0.0, %v4786
      %v4788 = vpop.f32.mrf.mxu0
      %v4789 = vadd.f32 0.0, %v4788
      %4790 = vmatmul.bf16.gmra.mxu0 %v4728
      %v4791 = vpop.f32.mrf.mxu0
      %v4792 = vadd.f32 0.0, %v4791
      %v4793 = vpop.f32.mrf.mxu0
      %v4794 = vadd.f32 0.0, %v4793
      %4795 = vmatmul.bf16.gmra.mxu0 %v4731
      %v4796 = vpop.f32.mrf.mxu0
      %v4797 = vadd.f32 0.0, %v4796
      %v4798 = vpop.f32.mrf.mxu0
      %v4799 = vadd.f32 0.0, %v4798
      %4800 = vmatmul.bf16.gmra.mxu0 %v4734
      %v4801 = vpop.f32.mrf.mxu0
      %v4802 = vadd.f32 0.0, %v4801
      %v4803 = vpop.f32.mrf.mxu0
      %v4804 = vadd.f32 0.0, %v4803
      %4805 = vmatmul.bf16.gmra.mxu0 %v4737
      %v4806 = vpop.f32.mrf.mxu0
      %v4807 = vadd.f32 0.0, %v4806
      %v4808 = vpop.f32.mrf.mxu0
      %v4809 = vadd.f32 0.0, %v4808
      %4810 = vmatmul.bf16.gmra.mxu0 %v4740
      %v4811 = vpop.f32.mrf.mxu0
      %v4812 = vadd.f32 0.0, %v4811
      %v4813 = vpop.f32.mrf.mxu0
      %v4814 = vadd.f32 0.0, %v4813
      %4815 = vmatmul.bf16.gmra.mxu0 %v4743
      %v4816 = vpop.f32.mrf.mxu0
      %v4817 = vadd.f32 0.0, %v4816
      %v4818 = vpop.f32.mrf.mxu0
      %v4819 = vadd.f32 0.0, %v4818
      %4820 = vmatmul.bf16.gmra.mxu0 %v4746
      %v4821 = vpop.f32.mrf.mxu0
      %v4822 = vadd.f32 0.0, %v4821
      %v4823 = vpop.f32.mrf.mxu0
      %v4824 = vadd.f32 0.0, %v4823
      %4825 = vmatmul.bf16.gmra.mxu0 %v4749
      %v4826 = vpop.f32.mrf.mxu0
      %v4827 = vadd.f32 0.0, %v4826
      %v4828 = vpop.f32.mrf.mxu0
      %v4829 = vadd.f32 0.0, %v4828
      %4830 = vmatmul.bf16.gmra.mxu0 %v4752
      %v4831 = vpop.f32.mrf.mxu0
      %v4832 = vadd.f32 0.0, %v4831
      %v4833 = vpop.f32.mrf.mxu0
      %v4834 = vadd.f32 0.0, %v4833
      %4835 = vmatmul.bf16.gmra.mxu0 %v4755
      %v4836 = vpop.f32.mrf.mxu0
      %v4837 = vadd.f32 0.0, %v4836
      %v4838 = vpop.f32.mrf.mxu0
      %v4839 = vadd.f32 0.0, %v4838
      %4840 = vmatmul.bf16.gmra.mxu0 %v4758
      %v4841 = vpop.f32.mrf.mxu0
      %v4842 = vadd.f32 0.0, %v4841
      %v4843 = vpop.f32.mrf.mxu0
      %v4844 = vadd.f32 0.0, %v4843
      %4845 = vmatmul.bf16.gmra.mxu0 %v4761
      %v4846 = vpop.f32.mrf.mxu0
      %v4847 = vadd.f32 0.0, %v4846
      %v4848 = vpop.f32.mrf.mxu0
      %v4849 = vadd.f32 0.0, %v4848
      %4850 = vmatmul.bf16.gmra.mxu0 %v4764
      %v4851 = vpop.f32.mrf.mxu0
      %v4852 = vadd.f32 0.0, %v4851
      %v4853 = vpop.f32.mrf.mxu0
      %v4854 = vadd.f32 0.0, %v4853
      %4855 = vmatmul.bf16.gmra.mxu0 %v4767
      %v4856 = vpop.f32.mrf.mxu0
      %v4857 = vadd.f32 0.0, %v4856
      %v4858 = vpop.f32.mrf.mxu0
      %v4859 = vadd.f32 0.0, %v4858
      %4860 = vdwg.mxu0
      %v4861 = vadd.f32 %v4555, %v4782
      %v4862 = vadd.f32 %v4556, %v4784
      %v4863 = vadd.f32 %v4557, %v4787
      %v4864 = vadd.f32 %v4558, %v4789
      %v4865 = vadd.f32 %v4559, %v4792
      %v4866 = vadd.f32 %v4560, %v4794
      %v4867 = vadd.f32 %v4561, %v4797
      %v4868 = vadd.f32 %v4562, %v4799
      %v4869 = vadd.f32 %v4563, %v4802
      %v4870 = vadd.f32 %v4564, %v4804
      %v4871 = vadd.f32 %v4565, %v4807
      %v4872 = vadd.f32 %v4566, %v4809
      %v4873 = vadd.f32 %v4567, %v4812
      %v4874 = vadd.f32 %v4568, %v4814
      %v4875 = vadd.f32 %v4569, %v4817
      %v4876 = vadd.f32 %v4570, %v4819
      %v4877 = vadd.f32 %v4571, %v4822
      %v4878 = vadd.f32 %v4572, %v4824
      %v4879 = vadd.f32 %v4573, %v4827
      %v4880 = vadd.f32 %v4574, %v4829
      %v4881 = vadd.f32 %v4575, %v4832
      %v4882 = vadd.f32 %v4576, %v4834
      %v4883 = vadd.f32 %v4577, %v4837
      %v4884 = vadd.f32 %v4578, %v4839
      %v4885 = vadd.f32 %v4579, %v4842
      %v4886 = vadd.f32 %v4580, %v4844
      %v4887 = vadd.f32 %v4581, %v4847
      %v4888 = vadd.f32 %v4582, %v4849
      %v4889 = vadd.f32 %v4583, %v4852
      %v4890 = vadd.f32 %v4584, %v4854
      %v4891 = vadd.f32 %v4585, %v4857
      %v4892 = vadd.f32 %v4586, %v4859
      %s4893 = scalar_lea.vmem [#allocation2], 48
      %v4894 = vld [vmem:[%s4893] sm:$0xf]
      %v4895 = vld [vmem:[%s4893 + $0x4] sm:$0xf]
      %v4896 = vld [vmem:[%s4893 + $0x8] sm:$0xf]
      %v4897 = vld [vmem:[%s4893 + $0xc] sm:$0xf]
      %v4898 = vld [vmem:[%s4893 + $0x10] sm:$0xf]
      %v4899 = vld [vmem:[%s4893 + $0x14] sm:$0xf]
      %v4900 = vld [vmem:[%s4893 + $0x18] sm:$0xf]
      %v4901 = vld [vmem:[%s4893 + $0x1c] sm:$0xf]
      %v4902 = vld [vmem:[%s4893 + $0x20] sm:$0xf]
      %v4903 = vld [vmem:[%s4893 + $0x24] sm:$0xf]
      %v4904 = vld [vmem:[%s4893 + $0x28] sm:$0xf]
      %v4905 = vld [vmem:[%s4893 + $0x2c] sm:$0xf]
      %v4906 = vld [vmem:[%s4893 + $0x30] sm:$0xf]
      %v4907 = vld [vmem:[%s4893 + $0x34] sm:$0xf]
      %v4908 = vld [vmem:[%s4893 + $0x38] sm:$0xf]
      %v4909 = vld [vmem:[%s4893 + $0x3c] sm:$0xf]
      %v4910 = vld [vmem:[%s4893 + $0x40] sm:$0xf]
      %v4911 = vld [vmem:[%s4893 + $0x44] sm:$0xf]
      %v4912 = vld [vmem:[%s4893 + $0x48] sm:$0xf]
      %v4913 = vld [vmem:[%s4893 + $0x4c] sm:$0xf]
      %v4914 = vld [vmem:[%s4893 + $0x50] sm:$0xf]
      %v4915 = vld [vmem:[%s4893 + $0x54] sm:$0xf]
      %v4916 = vld [vmem:[%s4893 + $0x58] sm:$0xf]
      %v4917 = vld [vmem:[%s4893 + $0x5c] sm:$0xf]
      %v4918 = vld [vmem:[%s4893 + $0x60] sm:$0xf]
      %v4919 = vld [vmem:[%s4893 + $0x64] sm:$0xf]
      %v4920 = vld [vmem:[%s4893 + $0x68] sm:$0xf]
      %v4921 = vld [vmem:[%s4893 + $0x6c] sm:$0xf]
      %v4922 = vld [vmem:[%s4893 + $0x70] sm:$0xf]
      %v4923 = vld [vmem:[%s4893 + $0x74] sm:$0xf]
      %v4924 = vld [vmem:[%s4893 + $0x78] sm:$0xf]
      %v4925 = vld [vmem:[%s4893 + $0x7c] sm:$0xf]
      %s4926 = scalar_lea.vmem %s1, 120
      %v4927 = vld [vmem:[%s4926] sm:$0xf]
      %v4928 = vld [vmem:[%s4926 + $0x4] sm:$0xf]
      %v4929 = vld [vmem:[%s4926 + $0x8] sm:$0xf]
      %v4930 = vld [vmem:[%s4926 + $0xc] sm:$0xf]
      %v4931 = vld [vmem:[%s4926 + $0x10] sm:$0x3]
      %v4964 = vunpack.c.l.b16 %v4894
      %v4965 = vunpack.c.l.b16 %v4895
      %v4966 = vunpack.c.l.b16 %v4896
      %v4967 = vunpack.c.l.b16 %v4897
      %v4968 = vunpack.c.l.b16 %v4898
      %v4969 = vunpack.c.l.b16 %v4899
      %v4970 = vunpack.c.l.b16 %v4900
      %v4971 = vunpack.c.l.b16 %v4901
      %v4972 = vunpack.c.l.b16 %v4902
      %v4973 = vunpack.c.l.b16 %v4903
      %v4974 = vunpack.c.l.b16 %v4904
      %v4975 = vunpack.c.l.b16 %v4905
      %v4976 = vunpack.c.l.b16 %v4906
      %v4977 = vunpack.c.l.b16 %v4907
      %v4978 = vunpack.c.l.b16 %v4908
      %v4979 = vunpack.c.l.b16 %v4909
      %v4980 = vunpack.c.l.b16 %v4910
      %v4981 = vunpack.c.l.b16 %v4911
      %v4982 = vunpack.c.l.b16 %v4912
      %v4983 = vunpack.c.l.b16 %v4913
      %v4984 = vunpack.c.l.b16 %v4914
      %v4985 = vunpack.c.l.b16 %v4915
      %v4986 = vunpack.c.l.b16 %v4916
      %v4987 = vunpack.c.l.b16 %v4917
      %v4988 = vunpack.c.l.b16 %v4918
      %v4989 = vunpack.c.l.b16 %v4919
      %v4990 = vunpack.c.l.b16 %v4920
      %v4991 = vunpack.c.l.b16 %v4921
      %v4992 = vunpack.c.l.b16 %v4922
      %v4993 = vunpack.c.l.b16 %v4923
      %v4994 = vunpack.c.l.b16 %v4924
      %v4995 = vunpack.c.l.b16 %v4925
      %v4996 = vpack.c.b16 %v4965, %v4964
      %v4997 = vpack.c.b16 %v4967, %v4966
      %v4998 = vpack.c.b16 %v4969, %v4968
      %v4999 = vpack.c.b16 %v4971, %v4970
      %v5000 = vpack.c.b16 %v4973, %v4972
      %v5001 = vpack.c.b16 %v4975, %v4974
      %v5002 = vpack.c.b16 %v4977, %v4976
      %v5003 = vpack.c.b16 %v4979, %v4978
      %v5004 = vpack.c.b16 %v4981, %v4980
      %v5005 = vpack.c.b16 %v4983, %v4982
      %v5006 = vpack.c.b16 %v4985, %v4984
      %v5007 = vpack.c.b16 %v4987, %v4986
      %v5008 = vpack.c.b16 %v4989, %v4988
      %v5009 = vpack.c.b16 %v4991, %v4990
      %v5010 = vpack.c.b16 %v4993, %v4992
      %v5011 = vpack.c.b16 %v4995, %v4994
      %v5017 = vunpack.c.l.b16 %v4927
      %v5018 = vunpack.c.l.b16 %v4928
      %v5019 = vunpack.c.l.b16 %v4929
      %v5020 = vunpack.c.l.b16 %v4930
      %v5021 = vunpack.c.l.b16 %v4931
      %v5022 = vpack.c.b16 %v5018, %v5017
      %v5023 = vpack.c.b16 %v5020, %v5019
      %v5024 = vpack.c.b16 %v5021, %v5021
      %v5028 = vsel %vm3292, %v4996, 0
      %v5031 = vsel %vm3292, %v4997, 0
      %v5034 = vsel %vm3292, %v4998, 0
      %v5037 = vsel %vm3292, %v4999, 0
      %v5040 = vsel %vm3292, %v5000, 0
      %v5043 = vsel %vm3292, %v5001, 0
      %v5046 = vsel %vm3292, %v5002, 0
      %v5049 = vsel %vm3292, %v5003, 0
      %v5052 = vsel %vm3292, %v5004, 0
      %v5055 = vsel %vm3292, %v5005, 0
      %v5058 = vsel %vm3292, %v5006, 0
      %v5061 = vsel %vm3292, %v5007, 0
      %v5064 = vsel %vm3292, %v5008, 0
      %v5067 = vsel %vm3292, %v5009, 0
      %v5070 = vsel %vm3292, %v5010, 0
      %v5073 = vsel %vm3292, %v5011, 0
      %v5076 = vsel %vm3341, %v5024, 0
      %5078 = vmatpush.bf16.msra.mxu0 0
      %5079 = vmatpush.bf16.msra.mxu0 0
      %5080 = vmatpush.bf16.msra.mxu0 0
      %5081 = vmatpush.bf16.msra.mxu0 0
      %5082 = vmatpush.bf16.msra.mxu0 0
      %5083 = vmatpush.bf16.msra.mxu0 %v5076
      %5084 = vmatpush.bf16.msra.mxu0 %v5023
      %5085 = vmatpush.bf16.msra.mxu0 %v5022
      %5086 = vmatmul.bf16.gmra.mxu0 %v5028
      %v5087 = vpop.f32.mrf.mxu0
      %v5088 = vadd.f32 0.0, %v5087
      %v5089 = vpop.f32.mrf.mxu0
      %v5090 = vadd.f32 0.0, %v5089
      %5091 = vmatmul.bf16.gmra.mxu0 %v5031
      %v5092 = vpop.f32.mrf.mxu0
      %v5093 = vadd.f32 0.0, %v5092
      %v5094 = vpop.f32.mrf.mxu0
      %v5095 = vadd.f32 0.0, %v5094
      %5096 = vmatmul.bf16.gmra.mxu0 %v5034
      %v5097 = vpop.f32.mrf.mxu0
      %v5098 = vadd.f32 0.0, %v5097
      %v5099 = vpop.f32.mrf.mxu0
      %v5100 = vadd.f32 0.0, %v5099
      %5101 = vmatmul.bf16.gmra.mxu0 %v5037
      %v5102 = vpop.f32.mrf.mxu0
      %v5103 = vadd.f32 0.0, %v5102
      %v5104 = vpop.f32.mrf.mxu0
      %v5105 = vadd.f32 0.0, %v5104
      %5106 = vmatmul.bf16.gmra.mxu0 %v5040
      %v5107 = vpop.f32.mrf.mxu0
      %v5108 = vadd.f32 0.0, %v5107
      %v5109 = vpop.f32.mrf.mxu0
      %v5110 = vadd.f32 0.0, %v5109
      %5111 = vmatmul.bf16.gmra.mxu0 %v5043
      %v5112 = vpop.f32.mrf.mxu0
      %v5113 = vadd.f32 0.0, %v5112
      %v5114 = vpop.f32.mrf.mxu0
      %v5115 = vadd.f32 0.0, %v5114
      %5116 = vmatmul.bf16.gmra.mxu0 %v5046
      %v5117 = vpop.f32.mrf.mxu0
      %v5118 = vadd.f32 0.0, %v5117
      %v5119 = vpop.f32.mrf.mxu0
      %v5120 = vadd.f32 0.0, %v5119
      %5121 = vmatmul.bf16.gmra.mxu0 %v5049
      %v5122 = vpop.f32.mrf.mxu0
      %v5123 = vadd.f32 0.0, %v5122
      %v5124 = vpop.f32.mrf.mxu0
      %v5125 = vadd.f32 0.0, %v5124
      %5126 = vmatmul.bf16.gmra.mxu0 %v5052
      %v5127 = vpop.f32.mrf.mxu0
      %v5128 = vadd.f32 0.0, %v5127
      %v5129 = vpop.f32.mrf.mxu0
      %v5130 = vadd.f32 0.0, %v5129
      %5131 = vmatmul.bf16.gmra.mxu0 %v5055
      %v5132 = vpop.f32.mrf.mxu0
      %v5133 = vadd.f32 0.0, %v5132
      %v5134 = vpop.f32.mrf.mxu0
      %v5135 = vadd.f32 0.0, %v5134
      %5136 = vmatmul.bf16.gmra.mxu0 %v5058
      %v5137 = vpop.f32.mrf.mxu0
      %v5138 = vadd.f32 0.0, %v5137
      %v5139 = vpop.f32.mrf.mxu0
      %v5140 = vadd.f32 0.0, %v5139
      %5141 = vmatmul.bf16.gmra.mxu0 %v5061
      %v5142 = vpop.f32.mrf.mxu0
      %v5143 = vadd.f32 0.0, %v5142
      %v5144 = vpop.f32.mrf.mxu0
      %v5145 = vadd.f32 0.0, %v5144
      %5146 = vmatmul.bf16.gmra.mxu0 %v5064
      %v5147 = vpop.f32.mrf.mxu0
      %v5148 = vadd.f32 0.0, %v5147
      %v5149 = vpop.f32.mrf.mxu0
      %v5150 = vadd.f32 0.0, %v5149
      %5151 = vmatmul.bf16.gmra.mxu0 %v5067
      %v5152 = vpop.f32.mrf.mxu0
      %v5153 = vadd.f32 0.0, %v5152
      %v5154 = vpop.f32.mrf.mxu0
      %v5155 = vadd.f32 0.0, %v5154
      %5156 = vmatmul.bf16.gmra.mxu0 %v5070
      %v5157 = vpop.f32.mrf.mxu0
      %v5158 = vadd.f32 0.0, %v5157
      %v5159 = vpop.f32.mrf.mxu0
      %v5160 = vadd.f32 0.0, %v5159
      %5161 = vmatmul.bf16.gmra.mxu0 %v5073
      %v5162 = vpop.f32.mrf.mxu0
      %v5163 = vadd.f32 0.0, %v5162
      %v5164 = vpop.f32.mrf.mxu0
      %v5165 = vadd.f32 0.0, %v5164
      %5166 = vdwg.mxu0
      %v5167 = vadd.f32 %v4861, %v5088
      %v5168 = vadd.f32 %v4862, %v5090
      %v5169 = vadd.f32 %v4863, %v5093
      %v5170 = vadd.f32 %v4864, %v5095
      %v5171 = vadd.f32 %v4865, %v5098
      %v5172 = vadd.f32 %v4866, %v5100
      %v5173 = vadd.f32 %v4867, %v5103
      %v5174 = vadd.f32 %v4868, %v5105
      %v5175 = vadd.f32 %v4869, %v5108
      %v5176 = vadd.f32 %v4870, %v5110
      %v5177 = vadd.f32 %v4871, %v5113
      %v5178 = vadd.f32 %v4872, %v5115
      %v5179 = vadd.f32 %v4873, %v5118
      %v5180 = vadd.f32 %v4874, %v5120
      %v5181 = vadd.f32 %v4875, %v5123
      %v5182 = vadd.f32 %v4876, %v5125
      %v5183 = vadd.f32 %v4877, %v5128
      %v5184 = vadd.f32 %v4878, %v5130
      %v5185 = vadd.f32 %v4879, %v5133
      %v5186 = vadd.f32 %v4880, %v5135
      %v5187 = vadd.f32 %v4881, %v5138
      %v5188 = vadd.f32 %v4882, %v5140
      %v5189 = vadd.f32 %v4883, %v5143
      %v5190 = vadd.f32 %v4884, %v5145
      %v5191 = vadd.f32 %v4885, %v5148
      %v5192 = vadd.f32 %v4886, %v5150
      %v5193 = vadd.f32 %v4887, %v5153
      %v5194 = vadd.f32 %v4888, %v5155
      %v5195 = vadd.f32 %v4889, %v5158
      %v5196 = vadd.f32 %v4890, %v5160
      %v5197 = vadd.f32 %v4891, %v5163
      %v5198 = vadd.f32 %v4892, %v5165
      %s5199 = scalar_lea.vmem [#allocation2], 56
      %v5200 = vld [vmem:[%s5199] sm:$0xf]
      %v5201 = vld [vmem:[%s5199 + $0x4] sm:$0xf]
      %v5202 = vld [vmem:[%s5199 + $0x8] sm:$0xf]
      %v5203 = vld [vmem:[%s5199 + $0xc] sm:$0xf]
      %v5204 = vld [vmem:[%s5199 + $0x10] sm:$0xf]
      %v5205 = vld [vmem:[%s5199 + $0x14] sm:$0xf]
      %v5206 = vld [vmem:[%s5199 + $0x18] sm:$0xf]
      %v5207 = vld [vmem:[%s5199 + $0x1c] sm:$0xf]
      %v5208 = vld [vmem:[%s5199 + $0x20] sm:$0xf]
      %v5209 = vld [vmem:[%s5199 + $0x24] sm:$0xf]
      %v5210 = vld [vmem:[%s5199 + $0x28] sm:$0xf]
      %v5211 = vld [vmem:[%s5199 + $0x2c] sm:$0xf]
      %v5212 = vld [vmem:[%s5199 + $0x30] sm:$0xf]
      %v5213 = vld [vmem:[%s5199 + $0x34] sm:$0xf]
      %v5214 = vld [vmem:[%s5199 + $0x38] sm:$0xf]
      %v5215 = vld [vmem:[%s5199 + $0x3c] sm:$0xf]
      %v5216 = vld [vmem:[%s5199 + $0x40] sm:$0xf]
      %v5217 = vld [vmem:[%s5199 + $0x44] sm:$0xf]
      %v5218 = vld [vmem:[%s5199 + $0x48] sm:$0xf]
      %v5219 = vld [vmem:[%s5199 + $0x4c] sm:$0xf]
      %v5220 = vld [vmem:[%s5199 + $0x50] sm:$0xf]
      %v5221 = vld [vmem:[%s5199 + $0x54] sm:$0xf]
      %v5222 = vld [vmem:[%s5199 + $0x58] sm:$0xf]
      %v5223 = vld [vmem:[%s5199 + $0x5c] sm:$0xf]
      %v5224 = vld [vmem:[%s5199 + $0x60] sm:$0xf]
      %v5225 = vld [vmem:[%s5199 + $0x64] sm:$0xf]
      %v5226 = vld [vmem:[%s5199 + $0x68] sm:$0xf]
      %v5227 = vld [vmem:[%s5199 + $0x6c] sm:$0xf]
      %v5228 = vld [vmem:[%s5199 + $0x70] sm:$0xf]
      %v5229 = vld [vmem:[%s5199 + $0x74] sm:$0xf]
      %v5230 = vld [vmem:[%s5199 + $0x78] sm:$0xf]
      %v5231 = vld [vmem:[%s5199 + $0x7c] sm:$0xf]
      %s5232 = scalar_lea.vmem %s1, 140
      %v5233 = vld [vmem:[%s5232] sm:$0xf]
      %v5234 = vld [vmem:[%s5232 + $0x4] sm:$0xf]
      %v5235 = vld [vmem:[%s5232 + $0x8] sm:$0xf]
      %v5236 = vld [vmem:[%s5232 + $0xc] sm:$0xf]
      %v5237 = vld [vmem:[%s5232 + $0x10] sm:$0x3]
      %v5270 = vunpack.c.l.b16 %v5200
      %v5271 = vunpack.c.l.b16 %v5201
      %v5272 = vunpack.c.l.b16 %v5202
      %v5273 = vunpack.c.l.b16 %v5203
      %v5274 = vunpack.c.l.b16 %v5204
      %v5275 = vunpack.c.l.b16 %v5205
      %v5276 = vunpack.c.l.b16 %v5206
      %v5277 = vunpack.c.l.b16 %v5207
      %v5278 = vunpack.c.l.b16 %v5208
      %v5279 = vunpack.c.l.b16 %v5209
      %v5280 = vunpack.c.l.b16 %v5210
      %v5281 = vunpack.c.l.b16 %v5211
      %v5282 = vunpack.c.l.b16 %v5212
      %v5283 = vunpack.c.l.b16 %v5213
      %v5284 = vunpack.c.l.b16 %v5214
      %v5285 = vunpack.c.l.b16 %v5215
      %v5286 = vunpack.c.l.b16 %v5216
      %v5287 = vunpack.c.l.b16 %v5217
      %v5288 = vunpack.c.l.b16 %v5218
      %v5289 = vunpack.c.l.b16 %v5219
      %v5290 = vunpack.c.l.b16 %v5220
      %v5291 = vunpack.c.l.b16 %v5221
      %v5292 = vunpack.c.l.b16 %v5222
      %v5293 = vunpack.c.l.b16 %v5223
      %v5294 = vunpack.c.l.b16 %v5224
      %v5295 = vunpack.c.l.b16 %v5225
      %v5296 = vunpack.c.l.b16 %v5226
      %v5297 = vunpack.c.l.b16 %v5227
      %v5298 = vunpack.c.l.b16 %v5228
      %v5299 = vunpack.c.l.b16 %v5229
      %v5300 = vunpack.c.l.b16 %v5230
      %v5301 = vunpack.c.l.b16 %v5231
      %v5302 = vpack.c.b16 %v5271, %v5270
      %v5303 = vpack.c.b16 %v5273, %v5272
      %v5304 = vpack.c.b16 %v5275, %v5274
      %v5305 = vpack.c.b16 %v5277, %v5276
      %v5306 = vpack.c.b16 %v5279, %v5278
      %v5307 = vpack.c.b16 %v5281, %v5280
      %v5308 = vpack.c.b16 %v5283, %v5282
      %v5309 = vpack.c.b16 %v5285, %v5284
      %v5310 = vpack.c.b16 %v5287, %v5286
      %v5311 = vpack.c.b16 %v5289, %v5288
      %v5312 = vpack.c.b16 %v5291, %v5290
      %v5313 = vpack.c.b16 %v5293, %v5292
      %v5314 = vpack.c.b16 %v5295, %v5294
      %v5315 = vpack.c.b16 %v5297, %v5296
      %v5316 = vpack.c.b16 %v5299, %v5298
      %v5317 = vpack.c.b16 %v5301, %v5300
      %v5323 = vunpack.c.l.b16 %v5233
      %v5324 = vunpack.c.l.b16 %v5234
      %v5325 = vunpack.c.l.b16 %v5235
      %v5326 = vunpack.c.l.b16 %v5236
      %v5327 = vunpack.c.l.b16 %v5237
      %v5328 = vpack.c.b16 %v5324, %v5323
      %v5329 = vpack.c.b16 %v5326, %v5325
      %v5330 = vpack.c.b16 %v5327, %v5327
      %v5334 = vsel %vm3292, %v5302, 0
      %v5337 = vsel %vm3292, %v5303, 0
      %v5340 = vsel %vm3292, %v5304, 0
      %v5343 = vsel %vm3292, %v5305, 0
      %v5346 = vsel %vm3292, %v5306, 0
      %v5349 = vsel %vm3292, %v5307, 0
      %v5352 = vsel %vm3292, %v5308, 0
      %v5355 = vsel %vm3292, %v5309, 0
      %v5358 = vsel %vm3292, %v5310, 0
      %v5361 = vsel %vm3292, %v5311, 0
      %v5364 = vsel %vm3292, %v5312, 0
      %v5367 = vsel %vm3292, %v5313, 0
      %v5370 = vsel %vm3292, %v5314, 0
      %v5373 = vsel %vm3292, %v5315, 0
      %v5376 = vsel %vm3292, %v5316, 0
      %v5379 = vsel %vm3292, %v5317, 0
      %v5382 = vsel %vm3341, %v5330, 0
      %5384 = vmatpush.bf16.msra.mxu0 0
      %5385 = vmatpush.bf16.msra.mxu0 0
      %5386 = vmatpush.bf16.msra.mxu0 0
      %5387 = vmatpush.bf16.msra.mxu0 0
      %5388 = vmatpush.bf16.msra.mxu0 0
      %5389 = vmatpush.bf16.msra.mxu0 %v5382
      %5390 = vmatpush.bf16.msra.mxu0 %v5329
      %5391 = vmatpush.bf16.msra.mxu0 %v5328
      %5392 = vmatmul.bf16.gmra.mxu0 %v5334
      %v5393 = vpop.f32.mrf.mxu0
      %v5394 = vadd.f32 0.0, %v5393
      %v5395 = vpop.f32.mrf.mxu0
      %v5396 = vadd.f32 0.0, %v5395
      %5397 = vmatmul.bf16.gmra.mxu0 %v5337
      %v5398 = vpop.f32.mrf.mxu0
      %v5399 = vadd.f32 0.0, %v5398
      %v5400 = vpop.f32.mrf.mxu0
      %v5401 = vadd.f32 0.0, %v5400
      %5402 = vmatmul.bf16.gmra.mxu0 %v5340
      %v5403 = vpop.f32.mrf.mxu0
      %v5404 = vadd.f32 0.0, %v5403
      %v5405 = vpop.f32.mrf.mxu0
      %v5406 = vadd.f32 0.0, %v5405
      %5407 = vmatmul.bf16.gmra.mxu0 %v5343
      %v5408 = vpop.f32.mrf.mxu0
      %v5409 = vadd.f32 0.0, %v5408
      %v5410 = vpop.f32.mrf.mxu0
      %v5411 = vadd.f32 0.0, %v5410
      %5412 = vmatmul.bf16.gmra.mxu0 %v5346
      %v5413 = vpop.f32.mrf.mxu0
      %v5414 = vadd.f32 0.0, %v5413
      %v5415 = vpop.f32.mrf.mxu0
      %v5416 = vadd.f32 0.0, %v5415
      %5417 = vmatmul.bf16.gmra.mxu0 %v5349
      %v5418 = vpop.f32.mrf.mxu0
      %v5419 = vadd.f32 0.0, %v5418
      %v5420 = vpop.f32.mrf.mxu0
      %v5421 = vadd.f32 0.0, %v5420
      %5422 = vmatmul.bf16.gmra.mxu0 %v5352
      %v5423 = vpop.f32.mrf.mxu0
      %v5424 = vadd.f32 0.0, %v5423
      %v5425 = vpop.f32.mrf.mxu0
      %v5426 = vadd.f32 0.0, %v5425
      %5427 = vmatmul.bf16.gmra.mxu0 %v5355
      %v5428 = vpop.f32.mrf.mxu0
      %v5429 = vadd.f32 0.0, %v5428
      %v5430 = vpop.f32.mrf.mxu0
      %v5431 = vadd.f32 0.0, %v5430
      %5432 = vmatmul.bf16.gmra.mxu0 %v5358
      %v5433 = vpop.f32.mrf.mxu0
      %v5434 = vadd.f32 0.0, %v5433
      %v5435 = vpop.f32.mrf.mxu0
      %v5436 = vadd.f32 0.0, %v5435
      %5437 = vmatmul.bf16.gmra.mxu0 %v5361
      %v5438 = vpop.f32.mrf.mxu0
      %v5439 = vadd.f32 0.0, %v5438
      %v5440 = vpop.f32.mrf.mxu0
      %v5441 = vadd.f32 0.0, %v5440
      %5442 = vmatmul.bf16.gmra.mxu0 %v5364
      %v5443 = vpop.f32.mrf.mxu0
      %v5444 = vadd.f32 0.0, %v5443
      %v5445 = vpop.f32.mrf.mxu0
      %v5446 = vadd.f32 0.0, %v5445
      %5447 = vmatmul.bf16.gmra.mxu0 %v5367
      %v5448 = vpop.f32.mrf.mxu0
      %v5449 = vadd.f32 0.0, %v5448
      %v5450 = vpop.f32.mrf.mxu0
      %v5451 = vadd.f32 0.0, %v5450
      %5452 = vmatmul.bf16.gmra.mxu0 %v5370
      %v5453 = vpop.f32.mrf.mxu0
      %v5454 = vadd.f32 0.0, %v5453
      %v5455 = vpop.f32.mrf.mxu0
      %v5456 = vadd.f32 0.0, %v5455
      %5457 = vmatmul.bf16.gmra.mxu0 %v5373
      %v5458 = vpop.f32.mrf.mxu0
      %v5459 = vadd.f32 0.0, %v5458
      %v5460 = vpop.f32.mrf.mxu0
      %v5461 = vadd.f32 0.0, %v5460
      %5462 = vmatmul.bf16.gmra.mxu0 %v5376
      %v5463 = vpop.f32.mrf.mxu0
      %v5464 = vadd.f32 0.0, %v5463
      %v5465 = vpop.f32.mrf.mxu0
      %v5466 = vadd.f32 0.0, %v5465
      %5467 = vmatmul.bf16.gmra.mxu0 %v5379
      %v5468 = vpop.f32.mrf.mxu0
      %v5469 = vadd.f32 0.0, %v5468
      %v5470 = vpop.f32.mrf.mxu0
      %v5471 = vadd.f32 0.0, %v5470
      %5472 = vdwg.mxu0
      %v5473 = vadd.f32 %v5167, %v5394
      %v5474 = vadd.f32 %v5168, %v5396
      %v5475 = vadd.f32 %v5169, %v5399
      %v5476 = vadd.f32 %v5170, %v5401
      %v5477 = vadd.f32 %v5171, %v5404
      %v5478 = vadd.f32 %v5172, %v5406
      %v5479 = vadd.f32 %v5173, %v5409
      %v5480 = vadd.f32 %v5174, %v5411
      %v5481 = vadd.f32 %v5175, %v5414
      %v5482 = vadd.f32 %v5176, %v5416
      %v5483 = vadd.f32 %v5177, %v5419
      %v5484 = vadd.f32 %v5178, %v5421
      %v5485 = vadd.f32 %v5179, %v5424
      %v5486 = vadd.f32 %v5180, %v5426
      %v5487 = vadd.f32 %v5181, %v5429
      %v5488 = vadd.f32 %v5182, %v5431
      %v5489 = vadd.f32 %v5183, %v5434
      %v5490 = vadd.f32 %v5184, %v5436
      %v5491 = vadd.f32 %v5185, %v5439
      %v5492 = vadd.f32 %v5186, %v5441
      %v5493 = vadd.f32 %v5187, %v5444
      %v5494 = vadd.f32 %v5188, %v5446
      %v5495 = vadd.f32 %v5189, %v5449
      %v5496 = vadd.f32 %v5190, %v5451
      %v5497 = vadd.f32 %v5191, %v5454
      %v5498 = vadd.f32 %v5192, %v5456
      %v5499 = vadd.f32 %v5193, %v5459
      %v5500 = vadd.f32 %v5194, %v5461
      %v5501 = vadd.f32 %v5195, %v5464
      %v5502 = vadd.f32 %v5196, %v5466
      %v5503 = vadd.f32 %v5197, %v5469
      %v5504 = vadd.f32 %v5198, %v5471
      %s5505 = scalar_lea.vmem [#allocation2], 64
      %v5506 = vld [vmem:[%s5505] sm:$0xf]
      %v5507 = vld [vmem:[%s5505 + $0x4] sm:$0xf]
      %v5508 = vld [vmem:[%s5505 + $0x8] sm:$0xf]
      %v5509 = vld [vmem:[%s5505 + $0xc] sm:$0xf]
      %v5510 = vld [vmem:[%s5505 + $0x10] sm:$0xf]
      %v5511 = vld [vmem:[%s5505 + $0x14] sm:$0xf]
      %v5512 = vld [vmem:[%s5505 + $0x18] sm:$0xf]
      %v5513 = vld [vmem:[%s5505 + $0x1c] sm:$0xf]
      %v5514 = vld [vmem:[%s5505 + $0x20] sm:$0xf]
      %v5515 = vld [vmem:[%s5505 + $0x24] sm:$0xf]
      %v5516 = vld [vmem:[%s5505 + $0x28] sm:$0xf]
      %v5517 = vld [vmem:[%s5505 + $0x2c] sm:$0xf]
      %v5518 = vld [vmem:[%s5505 + $0x30] sm:$0xf]
      %v5519 = vld [vmem:[%s5505 + $0x34] sm:$0xf]
      %v5520 = vld [vmem:[%s5505 + $0x38] sm:$0xf]
      %v5521 = vld [vmem:[%s5505 + $0x3c] sm:$0xf]
      %v5522 = vld [vmem:[%s5505 + $0x40] sm:$0xf]
      %v5523 = vld [vmem:[%s5505 + $0x44] sm:$0xf]
      %v5524 = vld [vmem:[%s5505 + $0x48] sm:$0xf]
      %v5525 = vld [vmem:[%s5505 + $0x4c] sm:$0xf]
      %v5526 = vld [vmem:[%s5505 + $0x50] sm:$0xf]
      %v5527 = vld [vmem:[%s5505 + $0x54] sm:$0xf]
      %v5528 = vld [vmem:[%s5505 + $0x58] sm:$0xf]
      %v5529 = vld [vmem:[%s5505 + $0x5c] sm:$0xf]
      %v5530 = vld [vmem:[%s5505 + $0x60] sm:$0xf]
      %v5531 = vld [vmem:[%s5505 + $0x64] sm:$0xf]
      %v5532 = vld [vmem:[%s5505 + $0x68] sm:$0xf]
      %v5533 = vld [vmem:[%s5505 + $0x6c] sm:$0xf]
      %v5534 = vld [vmem:[%s5505 + $0x70] sm:$0xf]
      %v5535 = vld [vmem:[%s5505 + $0x74] sm:$0xf]
      %v5536 = vld [vmem:[%s5505 + $0x78] sm:$0xf]
      %v5537 = vld [vmem:[%s5505 + $0x7c] sm:$0xf]
      %s5538 = scalar_lea.vmem %s1, 160
      %v5539 = vld [vmem:[%s5538] sm:$0xf]
      %v5540 = vld [vmem:[%s5538 + $0x4] sm:$0xf]
      %v5541 = vld [vmem:[%s5538 + $0x8] sm:$0xf]
      %v5542 = vld [vmem:[%s5538 + $0xc] sm:$0xf]
      %v5543 = vld [vmem:[%s5538 + $0x10] sm:$0x3]
      %v5576 = vunpack.c.l.b16 %v5506
      %v5577 = vunpack.c.l.b16 %v5507
      %v5578 = vunpack.c.l.b16 %v5508
      %v5579 = vunpack.c.l.b16 %v5509
      %v5580 = vunpack.c.l.b16 %v5510
      %v5581 = vunpack.c.l.b16 %v5511
      %v5582 = vunpack.c.l.b16 %v5512
      %v5583 = vunpack.c.l.b16 %v5513
      %v5584 = vunpack.c.l.b16 %v5514
      %v5585 = vunpack.c.l.b16 %v5515
      %v5586 = vunpack.c.l.b16 %v5516
      %v5587 = vunpack.c.l.b16 %v5517
      %v5588 = vunpack.c.l.b16 %v5518
      %v5589 = vunpack.c.l.b16 %v5519
      %v5590 = vunpack.c.l.b16 %v5520
      %v5591 = vunpack.c.l.b16 %v5521
      %v5592 = vunpack.c.l.b16 %v5522
      %v5593 = vunpack.c.l.b16 %v5523
      %v5594 = vunpack.c.l.b16 %v5524
      %v5595 = vunpack.c.l.b16 %v5525
      %v5596 = vunpack.c.l.b16 %v5526
      %v5597 = vunpack.c.l.b16 %v5527
      %v5598 = vunpack.c.l.b16 %v5528
      %v5599 = vunpack.c.l.b16 %v5529
      %v5600 = vunpack.c.l.b16 %v5530
      %v5601 = vunpack.c.l.b16 %v5531
      %v5602 = vunpack.c.l.b16 %v5532
      %v5603 = vunpack.c.l.b16 %v5533
      %v5604 = vunpack.c.l.b16 %v5534
      %v5605 = vunpack.c.l.b16 %v5535
      %v5606 = vunpack.c.l.b16 %v5536
      %v5607 = vunpack.c.l.b16 %v5537
      %v5608 = vpack.c.b16 %v5577, %v5576
      %v5609 = vpack.c.b16 %v5579, %v5578
      %v5610 = vpack.c.b16 %v5581, %v5580
      %v5611 = vpack.c.b16 %v5583, %v5582
      %v5612 = vpack.c.b16 %v5585, %v5584
      %v5613 = vpack.c.b16 %v5587, %v5586
      %v5614 = vpack.c.b16 %v5589, %v5588
      %v5615 = vpack.c.b16 %v5591, %v5590
      %v5616 = vpack.c.b16 %v5593, %v5592
      %v5617 = vpack.c.b16 %v5595, %v5594
      %v5618 = vpack.c.b16 %v5597, %v5596
      %v5619 = vpack.c.b16 %v5599, %v5598
      %v5620 = vpack.c.b16 %v5601, %v5600
      %v5621 = vpack.c.b16 %v5603, %v5602
      %v5622 = vpack.c.b16 %v5605, %v5604
      %v5623 = vpack.c.b16 %v5607, %v5606
      %v5629 = vunpack.c.l.b16 %v5539
      %v5630 = vunpack.c.l.b16 %v5540
      %v5631 = vunpack.c.l.b16 %v5541
      %v5632 = vunpack.c.l.b16 %v5542
      %v5633 = vunpack.c.l.b16 %v5543
      %v5634 = vpack.c.b16 %v5630, %v5629
      %v5635 = vpack.c.b16 %v5632, %v5631
      %v5636 = vpack.c.b16 %v5633, %v5633
      %v5640 = vsel %vm3292, %v5608, 0
      %v5643 = vsel %vm3292, %v5609, 0
      %v5646 = vsel %vm3292, %v5610, 0
      %v5649 = vsel %vm3292, %v5611, 0
      %v5652 = vsel %vm3292, %v5612, 0
      %v5655 = vsel %vm3292, %v5613, 0
      %v5658 = vsel %vm3292, %v5614, 0
      %v5661 = vsel %vm3292, %v5615, 0
      %v5664 = vsel %vm3292, %v5616, 0
      %v5667 = vsel %vm3292, %v5617, 0
      %v5670 = vsel %vm3292, %v5618, 0
      %v5673 = vsel %vm3292, %v5619, 0
      %v5676 = vsel %vm3292, %v5620, 0
      %v5679 = vsel %vm3292, %v5621, 0
      %v5682 = vsel %vm3292, %v5622, 0
      %v5685 = vsel %vm3292, %v5623, 0
      %v5688 = vsel %vm3341, %v5636, 0
      %5690 = vmatpush.bf16.msra.mxu0 0
      %5691 = vmatpush.bf16.msra.mxu0 0
      %5692 = vmatpush.bf16.msra.mxu0 0
      %5693 = vmatpush.bf16.msra.mxu0 0
      %5694 = vmatpush.bf16.msra.mxu0 0
      %5695 = vmatpush.bf16.msra.mxu0 %v5688
      %5696 = vmatpush.bf16.msra.mxu0 %v5635
      %5697 = vmatpush.bf16.msra.mxu0 %v5634
      %5698 = vmatmul.bf16.gmra.mxu0 %v5640
      %v5699 = vpop.f32.mrf.mxu0
      %v5700 = vadd.f32 0.0, %v5699
      %v5701 = vpop.f32.mrf.mxu0
      %v5702 = vadd.f32 0.0, %v5701
      %5703 = vmatmul.bf16.gmra.mxu0 %v5643
      %v5704 = vpop.f32.mrf.mxu0
      %v5705 = vadd.f32 0.0, %v5704
      %v5706 = vpop.f32.mrf.mxu0
      %v5707 = vadd.f32 0.0, %v5706
      %5708 = vmatmul.bf16.gmra.mxu0 %v5646
      %v5709 = vpop.f32.mrf.mxu0
      %v5710 = vadd.f32 0.0, %v5709
      %v5711 = vpop.f32.mrf.mxu0
      %v5712 = vadd.f32 0.0, %v5711
      %5713 = vmatmul.bf16.gmra.mxu0 %v5649
      %v5714 = vpop.f32.mrf.mxu0
      %v5715 = vadd.f32 0.0, %v5714
      %v5716 = vpop.f32.mrf.mxu0
      %v5717 = vadd.f32 0.0, %v5716
      %5718 = vmatmul.bf16.gmra.mxu0 %v5652
      %v5719 = vpop.f32.mrf.mxu0
      %v5720 = vadd.f32 0.0, %v5719
      %v5721 = vpop.f32.mrf.mxu0
      %v5722 = vadd.f32 0.0, %v5721
      %5723 = vmatmul.bf16.gmra.mxu0 %v5655
      %v5724 = vpop.f32.mrf.mxu0
      %v5725 = vadd.f32 0.0, %v5724
      %v5726 = vpop.f32.mrf.mxu0
      %v5727 = vadd.f32 0.0, %v5726
      %5728 = vmatmul.bf16.gmra.mxu0 %v5658
      %v5729 = vpop.f32.mrf.mxu0
      %v5730 = vadd.f32 0.0, %v5729
      %v5731 = vpop.f32.mrf.mxu0
      %v5732 = vadd.f32 0.0, %v5731
      %5733 = vmatmul.bf16.gmra.mxu0 %v5661
      %v5734 = vpop.f32.mrf.mxu0
      %v5735 = vadd.f32 0.0, %v5734
      %v5736 = vpop.f32.mrf.mxu0
      %v5737 = vadd.f32 0.0, %v5736
      %5738 = vmatmul.bf16.gmra.mxu0 %v5664
      %v5739 = vpop.f32.mrf.mxu0
      %v5740 = vadd.f32 0.0, %v5739
      %v5741 = vpop.f32.mrf.mxu0
      %v5742 = vadd.f32 0.0, %v5741
      %5743 = vmatmul.bf16.gmra.mxu0 %v5667
      %v5744 = vpop.f32.mrf.mxu0
      %v5745 = vadd.f32 0.0, %v5744
      %v5746 = vpop.f32.mrf.mxu0
      %v5747 = vadd.f32 0.0, %v5746
      %5748 = vmatmul.bf16.gmra.mxu0 %v5670
      %v5749 = vpop.f32.mrf.mxu0
      %v5750 = vadd.f32 0.0, %v5749
      %v5751 = vpop.f32.mrf.mxu0
      %v5752 = vadd.f32 0.0, %v5751
      %5753 = vmatmul.bf16.gmra.mxu0 %v5673
      %v5754 = vpop.f32.mrf.mxu0
      %v5755 = vadd.f32 0.0, %v5754
      %v5756 = vpop.f32.mrf.mxu0
      %v5757 = vadd.f32 0.0, %v5756
      %5758 = vmatmul.bf16.gmra.mxu0 %v5676
      %v5759 = vpop.f32.mrf.mxu0
      %v5760 = vadd.f32 0.0, %v5759
      %v5761 = vpop.f32.mrf.mxu0
      %v5762 = vadd.f32 0.0, %v5761
      %5763 = vmatmul.bf16.gmra.mxu0 %v5679
      %v5764 = vpop.f32.mrf.mxu0
      %v5765 = vadd.f32 0.0, %v5764
      %v5766 = vpop.f32.mrf.mxu0
      %v5767 = vadd.f32 0.0, %v5766
      %5768 = vmatmul.bf16.gmra.mxu0 %v5682
      %v5769 = vpop.f32.mrf.mxu0
      %v5770 = vadd.f32 0.0, %v5769
      %v5771 = vpop.f32.mrf.mxu0
      %v5772 = vadd.f32 0.0, %v5771
      %5773 = vmatmul.bf16.gmra.mxu0 %v5685
      %v5774 = vpop.f32.mrf.mxu0
      %v5775 = vadd.f32 0.0, %v5774
      %v5776 = vpop.f32.mrf.mxu0
      %v5777 = vadd.f32 0.0, %v5776
      %5778 = vdwg.mxu0
      %v5779 = vadd.f32 %v5473, %v5700
      %v5780 = vadd.f32 %v5474, %v5702
      %v5781 = vadd.f32 %v5475, %v5705
      %v5782 = vadd.f32 %v5476, %v5707
      %v5783 = vadd.f32 %v5477, %v5710
      %v5784 = vadd.f32 %v5478, %v5712
      %v5785 = vadd.f32 %v5479, %v5715
      %v5786 = vadd.f32 %v5480, %v5717
      %v5787 = vadd.f32 %v5481, %v5720
      %v5788 = vadd.f32 %v5482, %v5722
      %v5789 = vadd.f32 %v5483, %v5725
      %v5790 = vadd.f32 %v5484, %v5727
      %v5791 = vadd.f32 %v5485, %v5730
      %v5792 = vadd.f32 %v5486, %v5732
      %v5793 = vadd.f32 %v5487, %v5735
      %v5794 = vadd.f32 %v5488, %v5737
      %v5795 = vadd.f32 %v5489, %v5740
      %v5796 = vadd.f32 %v5490, %v5742
      %v5797 = vadd.f32 %v5491, %v5745
      %v5798 = vadd.f32 %v5492, %v5747
      %v5799 = vadd.f32 %v5493, %v5750
      %v5800 = vadd.f32 %v5494, %v5752
      %v5801 = vadd.f32 %v5495, %v5755
      %v5802 = vadd.f32 %v5496, %v5757
      %v5803 = vadd.f32 %v5497, %v5760
      %v5804 = vadd.f32 %v5498, %v5762
      %v5805 = vadd.f32 %v5499, %v5765
      %v5806 = vadd.f32 %v5500, %v5767
      %v5807 = vadd.f32 %v5501, %v5770
      %v5808 = vadd.f32 %v5502, %v5772
      %v5809 = vadd.f32 %v5503, %v5775
      %v5810 = vadd.f32 %v5504, %v5777
      %v5811 = vld [vmem:[%s2] sm:$0x1]
      %v5813 = vperm.slane %v5811, 0
      %v5815 = vadd.f32 %v5779, %v5813
      %v5816 = vadd.f32 %v5780, %v5813
      %v5817 = vadd.f32 %v5781, %v5813
      %v5818 = vadd.f32 %v5782, %v5813
      %v5819 = vadd.f32 %v5783, %v5813
      %v5820 = vadd.f32 %v5784, %v5813
      %v5821 = vadd.f32 %v5785, %v5813
      %v5822 = vadd.f32 %v5786, %v5813
      %v5823 = vadd.f32 %v5787, %v5813
      %v5824 = vadd.f32 %v5788, %v5813
      %v5825 = vadd.f32 %v5789, %v5813
      %v5826 = vadd.f32 %v5790, %v5813
      %v5827 = vadd.f32 %v5791, %v5813
      %v5828 = vadd.f32 %v5792, %v5813
      %v5829 = vadd.f32 %v5793, %v5813
      %v5830 = vadd.f32 %v5794, %v5813
      %v5831 = vadd.f32 %v5795, %v5813
      %v5832 = vadd.f32 %v5796, %v5813
      %v5833 = vadd.f32 %v5797, %v5813
      %v5834 = vadd.f32 %v5798, %v5813
      %v5835 = vadd.f32 %v5799, %v5813
      %v5836 = vadd.f32 %v5800, %v5813
      %v5837 = vadd.f32 %v5801, %v5813
      %v5838 = vadd.f32 %v5802, %v5813
      %v5839 = vadd.f32 %v5803, %v5813
      %v5840 = vadd.f32 %v5804, %v5813
      %v5841 = vadd.f32 %v5805, %v5813
      %v5842 = vadd.f32 %v5806, %v5813
      %v5843 = vadd.f32 %v5807, %v5813
      %v5844 = vadd.f32 %v5808, %v5813
      %v5845 = vadd.f32 %v5809, %v5813
      %v5846 = vadd.f32 %v5810, %v5813
      %v5847 = vmax.f32 %v5815, 0.0
      %v5848 = vmax.f32 %v5816, 0.0
      %v5849 = vmax.f32 %v5817, 0.0
      %v5850 = vmax.f32 %v5818, 0.0
      %v5851 = vmax.f32 %v5819, 0.0
      %v5852 = vmax.f32 %v5820, 0.0
      %v5853 = vmax.f32 %v5821, 0.0
      %v5854 = vmax.f32 %v5822, 0.0
      %v5855 = vmax.f32 %v5823, 0.0
      %v5856 = vmax.f32 %v5824, 0.0
      %v5857 = vmax.f32 %v5825, 0.0
      %v5858 = vmax.f32 %v5826, 0.0
      %v5859 = vmax.f32 %v5827, 0.0
      %v5860 = vmax.f32 %v5828, 0.0
      %v5861 = vmax.f32 %v5829, 0.0
      %v5862 = vmax.f32 %v5830, 0.0
      %v5863 = vmax.f32 %v5831, 0.0
      %v5864 = vmax.f32 %v5832, 0.0
      %v5865 = vmax.f32 %v5833, 0.0
      %v5866 = vmax.f32 %v5834, 0.0
      %v5867 = vmax.f32 %v5835, 0.0
      %v5868 = vmax.f32 %v5836, 0.0
      %v5869 = vmax.f32 %v5837, 0.0
      %v5870 = vmax.f32 %v5838, 0.0
      %v5871 = vmax.f32 %v5839, 0.0
      %v5872 = vmax.f32 %v5840, 0.0
      %v5873 = vmax.f32 %v5841, 0.0
      %v5874 = vmax.f32 %v5842, 0.0
      %v5875 = vmax.f32 %v5843, 0.0
      %v5876 = vmax.f32 %v5844, 0.0
      %v5877 = vmax.f32 %v5845, 0.0
      %v5878 = vmax.f32 %v5846, 0.0
      %v5879 = vpack.c.bf16 %v5848, %v5847
      %v5880 = vpack.c.bf16 %v5850, %v5849
      %v5881 = vpack.c.bf16 %v5852, %v5851
      %v5882 = vpack.c.bf16 %v5854, %v5853
      %v5883 = vpack.c.bf16 %v5856, %v5855
      %v5884 = vpack.c.bf16 %v5858, %v5857
      %v5885 = vpack.c.bf16 %v5860, %v5859
      %v5886 = vpack.c.bf16 %v5862, %v5861
      %v5887 = vpack.c.bf16 %v5864, %v5863
      %v5888 = vpack.c.bf16 %v5866, %v5865
      %v5889 = vpack.c.bf16 %v5868, %v5867
      %v5890 = vpack.c.bf16 %v5870, %v5869
      %v5891 = vpack.c.bf16 %v5872, %v5871
      %v5892 = vpack.c.bf16 %v5874, %v5873
      %v5893 = vpack.c.bf16 %v5876, %v5875
      %v5894 = vpack.c.bf16 %v5878, %v5877
      %v5895 = vld [vmem:[%s3] sm:$0xf]
      %v5896 = vld [vmem:[%s3 + $0x4] sm:$0xf]
      %v5897 = vld [vmem:[%s3 + $0x8] sm:$0xf]
      %v5898 = vld [vmem:[%s3 + $0xc] sm:$0xf]
      %v5899 = vld [vmem:[%s3 + $0x10] sm:$0xf]
      %v5900 = vld [vmem:[%s3 + $0x14] sm:$0xf]
      %v5901 = vld [vmem:[%s3 + $0x18] sm:$0xf]
      %v5902 = vld [vmem:[%s3 + $0x1c] sm:$0xf]
      %v5903 = vld [vmem:[%s4] sm:$0x1]
      %v5905 = vperm.slane %v5903, 0
      %v5915 = vunpack.c.l.b16 %v5895
      %v5916 = vunpack.c.l.b16 %v5896
      %v5917 = vunpack.c.l.b16 %v5897
      %v5918 = vunpack.c.l.b16 %v5898
      %v5919 = vunpack.c.l.b16 %v5899
      %v5920 = vunpack.c.l.b16 %v5900
      %v5921 = vunpack.c.l.b16 %v5901
      %v5922 = vunpack.c.l.b16 %v5902
      %v5923 = vpack.c.b16 %v5916, %v5915
      %v5924 = vpack.c.b16 %v5918, %v5917
      %v5925 = vpack.c.b16 %v5920, %v5919
      %v5926 = vpack.c.b16 %v5922, %v5921
      %vm5931 = vcmask 523264
      %v5933 = vsel %vm5931, %v5879, 0
      %v5936 = vsel %vm5931, %v5880, 0
      %v5939 = vsel %vm5931, %v5881, 0
      %v5942 = vsel %vm5931, %v5882, 0
      %v5945 = vsel %vm5931, %v5883, 0
      %v5948 = vsel %vm5931, %v5884, 0
      %v5951 = vsel %vm5931, %v5885, 0
      %v5954 = vsel %vm5931, %v5886, 0
      %v5957 = vsel %vm5931, %v5887, 0
      %v5960 = vsel %vm5931, %v5888, 0
      %v5963 = vsel %vm5931, %v5889, 0
      %v5966 = vsel %vm5931, %v5890, 0
      %v5969 = vsel %vm5931, %v5891, 0
      %v5972 = vsel %vm5931, %v5892, 0
      %v5975 = vsel %vm5931, %v5893, 0
      %v5978 = vsel %vm5931, %v5894, 0
      %5980 = vmatpush.bf16.msra.mxu0 0
      %5981 = vmatpush.bf16.msra.mxu0 0
      %5982 = vmatpush.bf16.msra.mxu0 0
      %5983 = vmatpush.bf16.msra.mxu0 0
      %5984 = vmatpush.bf16.msra.mxu0 %v5926
      %5985 = vmatpush.bf16.msra.mxu0 %v5925
      %5986 = vmatpush.bf16.msra.mxu0 %v5924
      %5987 = vmatpush.bf16.msra.mxu0 %v5923
      %5988 = vmatmul.bf16.gmra.mxu0 %v5933
      %v5989 = vpop.f32.mrf.mxu0
      %v5990 = vadd.f32 %v5905, %v5989
      %v5991 = vpop.f32.mrf.mxu0
      %v5992 = vadd.f32 %v5905, %v5991
      %5993 = vmatmul.bf16.gmra.mxu0 %v5936
      %v5994 = vpop.f32.mrf.mxu0
      %v5995 = vadd.f32 %v5905, %v5994
      %v5996 = vpop.f32.mrf.mxu0
      %v5997 = vadd.f32 %v5905, %v5996
      %5998 = vmatmul.bf16.gmra.mxu0 %v5939
      %v5999 = vpop.f32.mrf.mxu0
      %v6000 = vadd.f32 %v5905, %v5999
      %v6001 = vpop.f32.mrf.mxu0
      %v6002 = vadd.f32 %v5905, %v6001
      %6003 = vmatmul.bf16.gmra.mxu0 %v5942
      %v6004 = vpop.f32.mrf.mxu0
      %v6005 = vadd.f32 %v5905, %v6004
      %v6006 = vpop.f32.mrf.mxu0
      %v6007 = vadd.f32 %v5905, %v6006
      %6008 = vmatmul.bf16.gmra.mxu0 %v5945
      %v6009 = vpop.f32.mrf.mxu0
      %v6010 = vadd.f32 %v5905, %v6009
      %v6011 = vpop.f32.mrf.mxu0
      %v6012 = vadd.f32 %v5905, %v6011
      %6013 = vmatmul.bf16.gmra.mxu0 %v5948
      %v6014 = vpop.f32.mrf.mxu0
      %v6015 = vadd.f32 %v5905, %v6014
      %v6016 = vpop.f32.mrf.mxu0
      %v6017 = vadd.f32 %v5905, %v6016
      %6018 = vmatmul.bf16.gmra.mxu0 %v5951
      %v6019 = vpop.f32.mrf.mxu0
      %v6020 = vadd.f32 %v5905, %v6019
      %v6021 = vpop.f32.mrf.mxu0
      %v6022 = vadd.f32 %v5905, %v6021
      %6023 = vmatmul.bf16.gmra.mxu0 %v5954
      %v6024 = vpop.f32.mrf.mxu0
      %v6025 = vadd.f32 %v5905, %v6024
      %v6026 = vpop.f32.mrf.mxu0
      %v6027 = vadd.f32 %v5905, %v6026
      %6028 = vmatmul.bf16.gmra.mxu0 %v5957
      %v6029 = vpop.f32.mrf.mxu0
      %v6030 = vadd.f32 %v5905, %v6029
      %v6031 = vpop.f32.mrf.mxu0
      %v6032 = vadd.f32 %v5905, %v6031
      %6033 = vmatmul.bf16.gmra.mxu0 %v5960
      %v6034 = vpop.f32.mrf.mxu0
      %v6035 = vadd.f32 %v5905, %v6034
      %v6036 = vpop.f32.mrf.mxu0
      %v6037 = vadd.f32 %v5905, %v6036
      %6038 = vmatmul.bf16.gmra.mxu0 %v5963
      %v6039 = vpop.f32.mrf.mxu0
      %v6040 = vadd.f32 %v5905, %v6039
      %v6041 = vpop.f32.mrf.mxu0
      %v6042 = vadd.f32 %v5905, %v6041
      %6043 = vmatmul.bf16.gmra.mxu0 %v5966
      %v6044 = vpop.f32.mrf.mxu0
      %v6045 = vadd.f32 %v5905, %v6044
      %v6046 = vpop.f32.mrf.mxu0
      %v6047 = vadd.f32 %v5905, %v6046
      %6048 = vmatmul.bf16.gmra.mxu0 %v5969
      %v6049 = vpop.f32.mrf.mxu0
      %v6050 = vadd.f32 %v5905, %v6049
      %v6051 = vpop.f32.mrf.mxu0
      %v6052 = vadd.f32 %v5905, %v6051
      %6053 = vmatmul.bf16.gmra.mxu0 %v5972
      %v6054 = vpop.f32.mrf.mxu0
      %v6055 = vadd.f32 %v5905, %v6054
      %v6056 = vpop.f32.mrf.mxu0
      %v6057 = vadd.f32 %v5905, %v6056
      %6058 = vmatmul.bf16.gmra.mxu0 %v5975
      %v6059 = vpop.f32.mrf.mxu0
      %v6060 = vadd.f32 %v5905, %v6059
      %v6061 = vpop.f32.mrf.mxu0
      %v6062 = vadd.f32 %v5905, %v6061
      %6063 = vmatmul.bf16.gmra.mxu0 %v5978
      %v6064 = vpop.f32.mrf.mxu0
      %v6065 = vadd.f32 %v5905, %v6064
      %v6066 = vpop.f32.mrf.mxu0
      %v6067 = vadd.f32 %v5905, %v6066
      %6068 = vdwg.mxu0
      %v6069 = vmax.f32 %v5990, 0.0
      %v6070 = vmax.f32 %v5992, 0.0
      %v6071 = vmax.f32 %v5995, 0.0
      %v6072 = vmax.f32 %v5997, 0.0
      %v6073 = vmax.f32 %v6000, 0.0
      %v6074 = vmax.f32 %v6002, 0.0
      %v6075 = vmax.f32 %v6005, 0.0
      %v6076 = vmax.f32 %v6007, 0.0
      %v6077 = vmax.f32 %v6010, 0.0
      %v6078 = vmax.f32 %v6012, 0.0
      %v6079 = vmax.f32 %v6015, 0.0
      %v6080 = vmax.f32 %v6017, 0.0
      %v6081 = vmax.f32 %v6020, 0.0
      %v6082 = vmax.f32 %v6022, 0.0
      %v6083 = vmax.f32 %v6025, 0.0
      %v6084 = vmax.f32 %v6027, 0.0
      %v6085 = vmax.f32 %v6030, 0.0
      %v6086 = vmax.f32 %v6032, 0.0
      %v6087 = vmax.f32 %v6035, 0.0
      %v6088 = vmax.f32 %v6037, 0.0
      %v6089 = vmax.f32 %v6040, 0.0
      %v6090 = vmax.f32 %v6042, 0.0
      %v6091 = vmax.f32 %v6045, 0.0
      %v6092 = vmax.f32 %v6047, 0.0
      %v6093 = vmax.f32 %v6050, 0.0
      %v6094 = vmax.f32 %v6052, 0.0
      %v6095 = vmax.f32 %v6055, 0.0
      %v6096 = vmax.f32 %v6057, 0.0
      %v6097 = vmax.f32 %v6060, 0.0
      %v6098 = vmax.f32 %v6062, 0.0
      %v6099 = vmax.f32 %v6065, 0.0
      %v6100 = vmax.f32 %v6067, 0.0
      %vm6101 = vcmask 257024
      %6102 = vst.msk [vmem:[#allocation3] sm:$0xf] %vm6101, 0
      %6103 = vst.msk [vmem:[#allocation3 + $0x4] sm:$0xf] %vm6101, 0
      %vm6104 = vcmask 254976
      %6105 = vst.msk [vmem:[#allocation3 + $0x8] sm:$0x3] %vm6104, 0
      %6106 = vst.msk [vmem:[#allocation3 + $0xc] sm:$0xf] %vm6101, 0
      %6107 = vst.msk [vmem:[#allocation3 + $0x10] sm:$0xf] %vm6101, 0
      %6108 = vst.msk [vmem:[#allocation3 + $0x14] sm:$0x3] %vm6104, 0
      %s6109 = scalar_lea.vmem [#allocation3], 216
      %6110 = vst.msk [vmem:[%s6109] sm:$0xf] %vm6101, 0
      %6111 = vst.msk [vmem:[%s6109 + $0x4] sm:$0xf] %vm6101, 0
      %6112 = vst.msk [vmem:[%s6109 + $0x8] sm:$0x3] %vm6104, 0
      %6113 = vst.msk [vmem:[%s6109 + $0xc] sm:$0xf] %vm6101, 0
      %6114 = vst.msk [vmem:[%s6109 + $0x10] sm:$0xf] %vm6101, 0
      %6115 = vst.msk [vmem:[%s6109 + $0x14] sm:$0x3] %vm6104, 0
      %s6116 = scalar_lea.vmem [#allocation3], 24
      %vm6117 = vcmask 253952
      %6118 = vst.msk [vmem:[%s6116] sm:$0x1] %vm6117, 0
      %6119 = vst.msk [vmem:[%s6116 + $0xc] sm:$0x1] %vm6117, 0
      %6120 = vst.msk [vmem:[%s6116 + $0x18] sm:$0x1] %vm6117, 0
      %6121 = vst.msk [vmem:[%s6116 + $0x24] sm:$0x1] %vm6117, 0
      %6122 = vst.msk [vmem:[%s6116 + $0x30] sm:$0x1] %vm6117, 0
      %6123 = vst.msk [vmem:[%s6116 + $0x3c] sm:$0x1] %vm6117, 0
      %6124 = vst.msk [vmem:[%s6116 + $0x48] sm:$0x1] %vm6117, 0
      %6125 = vst.msk [vmem:[%s6116 + $0x54] sm:$0x1] %vm6117, 0
      %6126 = vst.msk [vmem:[%s6116 + $0x60] sm:$0x1] %vm6117, 0
      %6127 = vst.msk [vmem:[%s6116 + $0x6c] sm:$0x1] %vm6117, 0
      %6128 = vst.msk [vmem:[%s6116 + $0x78] sm:$0x1] %vm6117, 0
      %6129 = vst.msk [vmem:[%s6116 + $0x84] sm:$0x1] %vm6117, 0
      %6130 = vst.msk [vmem:[%s6116 + $0x90] sm:$0x1] %vm6117, 0
      %6131 = vst.msk [vmem:[%s6116 + $0x9c] sm:$0x1] %vm6117, 0
      %6132 = vst.msk [vmem:[%s6116 + $0xa8] sm:$0x1] %vm6117, 0
      %6133 = vst.msk [vmem:[%s6116 + $0xb4] sm:$0x1] %vm6117, 0
      %vm6134 = vcmask 254977
      %6135 = vst.msk [vmem:[%s6116 + $0x8] sm:$0x2] %vm6134, 0
      %6136 = vst.msk [vmem:[%s6116 + $0x14] sm:$0x2] %vm6134, 0
      %6137 = vst.msk [vmem:[%s6116 + $0x20] sm:$0x2] %vm6134, 0
      %6138 = vst.msk [vmem:[%s6116 + $0x2c] sm:$0x2] %vm6134, 0
      %6139 = vst.msk [vmem:[%s6116 + $0x38] sm:$0x2] %vm6134, 0
      %6140 = vst.msk [vmem:[%s6116 + $0x44] sm:$0x2] %vm6134, 0
      %6141 = vst.msk [vmem:[%s6116 + $0x50] sm:$0x2] %vm6134, 0
      %6142 = vst.msk [vmem:[%s6116 + $0x5c] sm:$0x2] %vm6134, 0
      %6143 = vst.msk [vmem:[%s6116 + $0x68] sm:$0x2] %vm6134, 0
      %6144 = vst.msk [vmem:[%s6116 + $0x74] sm:$0x2] %vm6134, 0
      %6145 = vst.msk [vmem:[%s6116 + $0x80] sm:$0x2] %vm6134, 0
      %6146 = vst.msk [vmem:[%s6116 + $0x8c] sm:$0x2] %vm6134, 0
      %6147 = vst.msk [vmem:[%s6116 + $0x98] sm:$0x2] %vm6134, 0
      %6148 = vst.msk [vmem:[%s6116 + $0xa4] sm:$0x2] %vm6134, 0
      %6149 = vst.msk [vmem:[%s6116 + $0xb0] sm:$0x2] %vm6134, 0
      %6150 = vst.msk [vmem:[%s6116 + $0xbc] sm:$0x2] %vm6134, 0
      %v6151 = vpack.c.bf16 %v6069, %v6069
      %v6152 = vpack.c.bf16 %v6070, %v6070
      %v6153 = vpack.c.bf16 %v6071, %v6071
      %v6154 = vpack.c.bf16 %v6072, %v6072
      %v6155 = vpack.c.bf16 %v6073, %v6073
      %v6156 = vpack.c.bf16 %v6074, %v6074
      %v6157 = vpack.c.bf16 %v6075, %v6075
      %v6158 = vpack.c.bf16 %v6076, %v6076
      %v6159 = vpack.c.bf16 %v6077, %v6077
      %v6160 = vpack.c.bf16 %v6078, %v6078
      %v6161 = vpack.c.bf16 %v6079, %v6079
      %v6162 = vpack.c.bf16 %v6080, %v6080
      %v6163 = vpack.c.bf16 %v6081, %v6081
      %v6164 = vpack.c.bf16 %v6082, %v6082
      %v6165 = vpack.c.bf16 %v6083, %v6083
      %v6166 = vpack.c.bf16 %v6084, %v6084
      %v6167 = vpack.c.bf16 %v6085, %v6085
      %v6168 = vpack.c.bf16 %v6086, %v6086
      %v6169 = vpack.c.bf16 %v6087, %v6087
      %v6170 = vpack.c.bf16 %v6088, %v6088
      %v6171 = vpack.c.bf16 %v6089, %v6089
      %v6172 = vpack.c.bf16 %v6090, %v6090
      %v6173 = vpack.c.bf16 %v6091, %v6091
      %v6174 = vpack.c.bf16 %v6092, %v6092
      %v6175 = vpack.c.bf16 %v6093, %v6093
      %v6176 = vpack.c.bf16 %v6094, %v6094
      %v6177 = vpack.c.bf16 %v6095, %v6095
      %v6178 = vpack.c.bf16 %v6096, %v6096
      %v6179 = vpack.c.bf16 %v6097, %v6097
      %v6180 = vpack.c.bf16 %v6098, %v6098
      %v6181 = vpack.c.bf16 %v6099, %v6099
      %v6182 = vpack.c.bf16 %v6100, %v6100
      %vm6215 = vcmask 1040384
      %vm6216 = vcmask 1044484
      %vm6217 = vmor %vm6215, %vm6216
      %v6218 = vrot.slane %v6151, 7
      %v6219 = vrot.slane %v6218, 4
      %v6220 = vrot.slane %v6152, 7
      %v6221 = vsel %vm6217, %v6219, %v6220
      %v6222 = vrot.slane %v6220, 4
      %v6223 = vrot.slane %v6153, 7
      %v6224 = vrot.slane %v6223, 4
      %v6225 = vrot.slane %v6154, 7
      %v6226 = vsel %vm6217, %v6224, %v6225
      %v6227 = vrot.slane %v6225, 4
      %v6228 = vrot.slane %v6155, 7
      %v6229 = vrot.slane %v6228, 4
      %v6230 = vrot.slane %v6156, 7
      %v6231 = vsel %vm6217, %v6229, %v6230
      %v6232 = vrot.slane %v6230, 4
      %v6233 = vrot.slane %v6157, 7
      %v6234 = vrot.slane %v6233, 4
      %v6235 = vrot.slane %v6158, 7
      %v6236 = vsel %vm6217, %v6234, %v6235
      %v6237 = vrot.slane %v6235, 4
      %v6238 = vrot.slane %v6159, 7
      %v6239 = vrot.slane %v6238, 4
      %v6240 = vrot.slane %v6160, 7
      %v6241 = vsel %vm6217, %v6239, %v6240
      %v6242 = vrot.slane %v6240, 4
      %v6243 = vrot.slane %v6161, 7
      %v6244 = vrot.slane %v6243, 4
      %v6245 = vrot.slane %v6162, 7
      %v6246 = vsel %vm6217, %v6244, %v6245
      %v6247 = vrot.slane %v6245, 4
      %v6248 = vrot.slane %v6163, 7
      %v6249 = vrot.slane %v6248, 4
      %v6250 = vrot.slane %v6164, 7
      %v6251 = vsel %vm6217, %v6249, %v6250
      %v6252 = vrot.slane %v6250, 4
      %v6253 = vrot.slane %v6165, 7
      %v6254 = vrot.slane %v6253, 4
      %v6255 = vrot.slane %v6166, 7
      %v6256 = vsel %vm6217, %v6254, %v6255
      %v6257 = vrot.slane %v6255, 4
      %v6258 = vrot.slane %v6167, 7
      %v6259 = vrot.slane %v6258, 4
      %v6260 = vrot.slane %v6168, 7
      %v6261 = vsel %vm6217, %v6259, %v6260
      %v6262 = vrot.slane %v6260, 4
      %v6263 = vrot.slane %v6169, 7
      %v6264 = vrot.slane %v6263, 4
      %v6265 = vrot.slane %v6170, 7
      %v6266 = vsel %vm6217, %v6264, %v6265
      %v6267 = vrot.slane %v6265, 4
      %v6268 = vrot.slane %v6171, 7
      %v6269 = vrot.slane %v6268, 4
      %v6270 = vrot.slane %v6172, 7
      %v6271 = vsel %vm6217, %v6269, %v6270
      %v6272 = vrot.slane %v6270, 4
      %v6273 = vrot.slane %v6173, 7
      %v6274 = vrot.slane %v6273, 4
      %v6275 = vrot.slane %v6174, 7
      %v6276 = vsel %vm6217, %v6274, %v6275
      %v6277 = vrot.slane %v6275, 4
      %v6278 = vrot.slane %v6175, 7
      %v6279 = vrot.slane %v6278, 4
      %v6280 = vrot.slane %v6176, 7
      %v6281 = vsel %vm6217, %v6279, %v6280
      %v6282 = vrot.slane %v6280, 4
      %v6283 = vrot.slane %v6177, 7
      %v6284 = vrot.slane %v6283, 4
      %v6285 = vrot.slane %v6178, 7
      %v6286 = vsel %vm6217, %v6284, %v6285
      %v6287 = vrot.slane %v6285, 4
      %v6288 = vrot.slane %v6179, 7
      %v6289 = vrot.slane %v6288, 4
      %v6290 = vrot.slane %v6180, 7
      %v6291 = vsel %vm6217, %v6289, %v6290
      %v6292 = vrot.slane %v6290, 4
      %v6293 = vrot.slane %v6181, 7
      %v6294 = vrot.slane %v6293, 4
      %v6295 = vrot.slane %v6182, 7
      %v6296 = vsel %vm6217, %v6294, %v6295
      %v6297 = vrot.slane %v6295, 4
      %vm6346 = vcmask 257025
      %6347 = vst.msk [vmem:[%s6116] sm:$0xe] %vm6346, %v6218
      %6348 = vst.msk [vmem:[%s6116 + $0x4] sm:$0xf] %vm6101, %v6221
      %6349 = vst.msk [vmem:[%s6116 + $0x8] sm:$0x1] %vm6117, %v6222
      %6350 = vst.msk [vmem:[%s6116 + $0xc] sm:$0xe] %vm6346, %v6223
      %6351 = vst.msk [vmem:[%s6116 + $0x10] sm:$0xf] %vm6101, %v6226
      %6352 = vst.msk [vmem:[%s6116 + $0x14] sm:$0x1] %vm6117, %v6227
      %6353 = vst.msk [vmem:[%s6116 + $0x18] sm:$0xe] %vm6346, %v6228
      %6354 = vst.msk [vmem:[%s6116 + $0x1c] sm:$0xf] %vm6101, %v6231
      %6355 = vst.msk [vmem:[%s6116 + $0x20] sm:$0x1] %vm6117, %v6232
      %6356 = vst.msk [vmem:[%s6116 + $0x24] sm:$0xe] %vm6346, %v6233
      %6357 = vst.msk [vmem:[%s6116 + $0x28] sm:$0xf] %vm6101, %v6236
      %6358 = vst.msk [vmem:[%s6116 + $0x2c] sm:$0x1] %vm6117, %v6237
      %6359 = vst.msk [vmem:[%s6116 + $0x30] sm:$0xe] %vm6346, %v6238
      %6360 = vst.msk [vmem:[%s6116 + $0x34] sm:$0xf] %vm6101, %v6241
      %6361 = vst.msk [vmem:[%s6116 + $0x38] sm:$0x1] %vm6117, %v6242
      %6362 = vst.msk [vmem:[%s6116 + $0x3c] sm:$0xe] %vm6346, %v6243
      %6363 = vst.msk [vmem:[%s6116 + $0x40] sm:$0xf] %vm6101, %v6246
      %6364 = vst.msk [vmem:[%s6116 + $0x44] sm:$0x1] %vm6117, %v6247
      %6365 = vst.msk [vmem:[%s6116 + $0x48] sm:$0xe] %vm6346, %v6248
      %6366 = vst.msk [vmem:[%s6116 + $0x4c] sm:$0xf] %vm6101, %v6251
      %6367 = vst.msk [vmem:[%s6116 + $0x50] sm:$0x1] %vm6117, %v6252
      %6368 = vst.msk [vmem:[%s6116 + $0x54] sm:$0xe] %vm6346, %v6253
      %6369 = vst.msk [vmem:[%s6116 + $0x58] sm:$0xf] %vm6101, %v6256
      %6370 = vst.msk [vmem:[%s6116 + $0x5c] sm:$0x1] %vm6117, %v6257
      %6371 = vst.msk [vmem:[%s6116 + $0x60] sm:$0xe] %vm6346, %v6258
      %6372 = vst.msk [vmem:[%s6116 + $0x64] sm:$0xf] %vm6101, %v6261
      %6373 = vst.msk [vmem:[%s6116 + $0x68] sm:$0x1] %vm6117, %v6262
      %6374 = vst.msk [vmem:[%s6116 + $0x6c] sm:$0xe] %vm6346, %v6263
      %6375 = vst.msk [vmem:[%s6116 + $0x70] sm:$0xf] %vm6101, %v6266
      %6376 = vst.msk [vmem:[%s6116 + $0x74] sm:$0x1] %vm6117, %v6267
      %6377 = vst.msk [vmem:[%s6116 + $0x78] sm:$0xe] %vm6346, %v6268
      %6378 = vst.msk [vmem:[%s6116 + $0x7c] sm:$0xf] %vm6101, %v6271
      %6379 = vst.msk [vmem:[%s6116 + $0x80] sm:$0x1] %vm6117, %v6272
      %6380 = vst.msk [vmem:[%s6116 + $0x84] sm:$0xe] %vm6346, %v6273
      %6381 = vst.msk [vmem:[%s6116 + $0x88] sm:$0xf] %vm6101, %v6276
      %6382 = vst.msk [vmem:[%s6116 + $0x8c] sm:$0x1] %vm6117, %v6277
      %6383 = vst.msk [vmem:[%s6116 + $0x90] sm:$0xe] %vm6346, %v6278
      %6384 = vst.msk [vmem:[%s6116 + $0x94] sm:$0xf] %vm6101, %v6281
      %6385 = vst.msk [vmem:[%s6116 + $0x98] sm:$0x1] %vm6117, %v6282
      %6386 = vst.msk [vmem:[%s6116 + $0x9c] sm:$0xe] %vm6346, %v6283
      %6387 = vst.msk [vmem:[%s6116 + $0xa0] sm:$0xf] %vm6101, %v6286
      %6388 = vst.msk [vmem:[%s6116 + $0xa4] sm:$0x1] %vm6117, %v6287
      %6389 = vst.msk [vmem:[%s6116 + $0xa8] sm:$0xe] %vm6346, %v6288
      %6390 = vst.msk [vmem:[%s6116 + $0xac] sm:$0xf] %vm6101, %v6291
      %6391 = vst.msk [vmem:[%s6116 + $0xb0] sm:$0x1] %vm6117, %v6292
      %6392 = vst.msk [vmem:[%s6116 + $0xb4] sm:$0xe] %vm6346, %v6293
      %6393 = vst.msk [vmem:[%s6116 + $0xb8] sm:$0xf] %vm6101, %v6296
      %6394 = vst.msk [vmem:[%s6116 + $0xbc] sm:$0x1] %vm6117, %v6297
      %v6395 = vld [vmem:[#allocation3] sm:$0xf]
      %v6396 = vld [vmem:[#allocation3 + $0x4] sm:$0xf]
      %v6397 = vld [vmem:[#allocation3 + $0xc] sm:$0xf]
      %v6398 = vld [vmem:[#allocation3 + $0x10] sm:$0xf]
      %v6399 = vld [vmem:[#allocation3 + $0x18] sm:$0xf]
      %v6400 = vld [vmem:[#allocation3 + $0x1c] sm:$0xf]
      %v6401 = vld [vmem:[#allocation3 + $0x24] sm:$0xf]
      %v6402 = vld [vmem:[#allocation3 + $0x28] sm:$0xf]
      %v6403 = vld [vmem:[#allocation3 + $0x30] sm:$0xf]
      %v6404 = vld [vmem:[#allocation3 + $0x34] sm:$0xf]
      %v6405 = vld [vmem:[#allocation3 + $0x3c] sm:$0xf]
      %v6406 = vld [vmem:[#allocation3 + $0x40] sm:$0xf]
      %v6407 = vld [vmem:[#allocation3 + $0x48] sm:$0xf]
      %v6408 = vld [vmem:[#allocation3 + $0x4c] sm:$0xf]
      %v6409 = vld [vmem:[#allocation3 + $0x54] sm:$0xf]
      %v6410 = vld [vmem:[#allocation3 + $0x58] sm:$0xf]
      %v6411 = vld [vmem:[#allocation3 + $0x60] sm:$0xf]
      %v6412 = vld [vmem:[#allocation3 + $0x64] sm:$0xf]
      %v6413 = vld [vmem:[#allocation3 + $0x6c] sm:$0xf]
      %v6414 = vld [vmem:[#allocation3 + $0x70] sm:$0xf]
      %v6415 = vld [vmem:[#allocation3 + $0x78] sm:$0xf]
      %v6416 = vld [vmem:[#allocation3 + $0x7c] sm:$0xf]
      %v6417 = vld [vmem:[#allocation3 + $0x84] sm:$0xf]
      %v6418 = vld [vmem:[#allocation3 + $0x88] sm:$0xf]
      %v6419 = vld [vmem:[#allocation3 + $0x90] sm:$0xf]
      %v6420 = vld [vmem:[#allocation3 + $0x94] sm:$0xf]
      %v6421 = vld [vmem:[#allocation3 + $0x9c] sm:$0xf]
      %v6422 = vld [vmem:[#allocation3 + $0xa0] sm:$0xf]
      %v6423 = vld [vmem:[#allocation3 + $0xa8] sm:$0xf]
      %v6424 = vld [vmem:[#allocation3 + $0xac] sm:$0xf]
      %v6425 = vld [vmem:[#allocation3 + $0xb4] sm:$0xf]
      %v6426 = vld [vmem:[#allocation3 + $0xb8] sm:$0xf]
      %v6427 = vld [vmem:[#allocation3 + $0xc0] sm:$0xf]
      %v6428 = vld [vmem:[#allocation3 + $0xc4] sm:$0xf]
      %v6429 = vld [vmem:[#allocation3 + $0xcc] sm:$0xf]
      %v6430 = vld [vmem:[#allocation3 + $0xd0] sm:$0xf]
      %v6431 = vld [vmem:[#allocation3 + $0xd8] sm:$0xf]
      %v6432 = vld [vmem:[#allocation3 + $0xdc] sm:$0xf]
      %v6433 = vld [vmem:[#allocation3 + $0xe4] sm:$0xf]
      %v6434 = vld [vmem:[#allocation3 + $0xe8] sm:$0xf]
      %6435 = vst.msk [vmem:[#allocation4] sm:$0xf] %vm6101, %v6395
      %6436 = vst.msk [vmem:[#allocation4 + $0x8] sm:$0xf] %vm6101, %v6396
      %6437 = vst.msk [vmem:[#allocation4 + $0x10] sm:$0xf] %vm6101, %v6397
      %6438 = vst.msk [vmem:[#allocation4 + $0x18] sm:$0xf] %vm6101, %v6398
      %6439 = vst.msk [vmem:[#allocation4 + $0x20] sm:$0xf] %vm6101, %v6399
      %6440 = vst.msk [vmem:[#allocation4 + $0x28] sm:$0xf] %vm6101, %v6400
      %6441 = vst.msk [vmem:[#allocation4 + $0x30] sm:$0xf] %vm6101, %v6401
      %6442 = vst.msk [vmem:[#allocation4 + $0x38] sm:$0xf] %vm6101, %v6402
      %6443 = vst.msk [vmem:[#allocation4 + $0x40] sm:$0xf] %vm6101, %v6403
      %6444 = vst.msk [vmem:[#allocation4 + $0x48] sm:$0xf] %vm6101, %v6404
      %6445 = vst.msk [vmem:[#allocation4 + $0x50] sm:$0xf] %vm6101, %v6405
      %6446 = vst.msk [vmem:[#allocation4 + $0x58] sm:$0xf] %vm6101, %v6406
      %6447 = vst.msk [vmem:[#allocation4 + $0x60] sm:$0xf] %vm6101, %v6407
      %6448 = vst.msk [vmem:[#allocation4 + $0x68] sm:$0xf] %vm6101, %v6408
      %6449 = vst.msk [vmem:[#allocation4 + $0x70] sm:$0xf] %vm6101, %v6409
      %6450 = vst.msk [vmem:[#allocation4 + $0x78] sm:$0xf] %vm6101, %v6410
      %6451 = vst.msk [vmem:[#allocation4 + $0x80] sm:$0xf] %vm6101, %v6411
      %6452 = vst.msk [vmem:[#allocation4 + $0x88] sm:$0xf] %vm6101, %v6412
      %6453 = vst.msk [vmem:[#allocation4 + $0x90] sm:$0xf] %vm6101, %v6413
      %6454 = vst.msk [vmem:[#allocation4 + $0x98] sm:$0xf] %vm6101, %v6414
      %6455 = vst.msk [vmem:[#allocation4 + $0xa0] sm:$0xf] %vm6101, %v6415
      %6456 = vst.msk [vmem:[#allocation4 + $0xa8] sm:$0xf] %vm6101, %v6416
      %6457 = vst.msk [vmem:[#allocation4 + $0xb0] sm:$0xf] %vm6101, %v6417
      %6458 = vst.msk [vmem:[#allocation4 + $0xb8] sm:$0xf] %vm6101, %v6418
      %6459 = vst.msk [vmem:[#allocation4 + $0xc0] sm:$0xf] %vm6101, %v6419
      %6460 = vst.msk [vmem:[#allocation4 + $0xc8] sm:$0xf] %vm6101, %v6420
      %6461 = vst.msk [vmem:[#allocation4 + $0xd0] sm:$0xf] %vm6101, %v6421
      %6462 = vst.msk [vmem:[#allocation4 + $0xd8] sm:$0xf] %vm6101, %v6422
      %6463 = vst.msk [vmem:[#allocation4 + $0xe0] sm:$0xf] %vm6101, %v6423
      %6464 = vst.msk [vmem:[#allocation4 + $0xe8] sm:$0xf] %vm6101, %v6424
      %6465 = vst.msk [vmem:[#allocation4 + $0xf0] sm:$0xf] %vm6101, %v6425
      %6466 = vst.msk [vmem:[#allocation4 + $0xf8] sm:$0xf] %vm6101, %v6426
      %6467 = vst.msk [vmem:[#allocation4 + $0x100] sm:$0xf] %vm6101, %v6427
      %6468 = vst.msk [vmem:[#allocation4 + $0x108] sm:$0xf] %vm6101, %v6428
      %6469 = vst.msk [vmem:[#allocation4 + $0x110] sm:$0xf] %vm6101, %v6429
      %6470 = vst.msk [vmem:[#allocation4 + $0x118] sm:$0xf] %vm6101, %v6430
      %6471 = vst.msk [vmem:[#allocation4 + $0x120] sm:$0xf] %vm6101, %v6431
      %6472 = vst.msk [vmem:[#allocation4 + $0x128] sm:$0xf] %vm6101, %v6432
      %6473 = vst.msk [vmem:[#allocation4 + $0x130] sm:$0xf] %vm6101, %v6433
      %6474 = vst.msk [vmem:[#allocation4 + $0x138] sm:$0xf] %vm6101, %v6434
      %v6475 = vld [vmem:[#allocation3] sm:$0xf]
      %v6476 = vld [vmem:[#allocation3 + $0x4] sm:$0xf]
      %v6477 = vld [vmem:[#allocation3 + $0x8] sm:$0x1]
      %v6478 = vld [vmem:[#allocation3 + $0xc] sm:$0xf]
      %v6479 = vld [vmem:[#allocation3 + $0x10] sm:$0xf]
      %v6480 = vld [vmem:[#allocation3 + $0x14] sm:$0x1]
      %v6481 = vld [vmem:[#allocation3 + $0x18] sm:$0xf]
      %v6482 = vld [vmem:[#allocation3 + $0x1c] sm:$0xf]
      %v6483 = vld [vmem:[#allocation3 + $0x20] sm:$0x1]
      %v6484 = vld [vmem:[#allocation3 + $0x24] sm:$0xf]
      %v6485 = vld [vmem:[#allocation3 + $0x28] sm:$0xf]
      %v6486 = vld [vmem:[#allocation3 + $0x2c] sm:$0x1]
      %v6487 = vld [vmem:[#allocation3 + $0x30] sm:$0xf]
      %v6488 = vld [vmem:[#allocation3 + $0x34] sm:$0xf]
      %v6489 = vld [vmem:[#allocation3 + $0x38] sm:$0x1]
      %v6490 = vld [vmem:[#allocation3 + $0x3c] sm:$0xf]
      %v6491 = vld [vmem:[#allocation3 + $0x40] sm:$0xf]
      %v6492 = vld [vmem:[#allocation3 + $0x44] sm:$0x1]
      %v6493 = vld [vmem:[#allocation3 + $0x48] sm:$0xf]
      %v6494 = vld [vmem:[#allocation3 + $0x4c] sm:$0xf]
      %v6495 = vld [vmem:[#allocation3 + $0x50] sm:$0x1]
      %v6496 = vld [vmem:[#allocation3 + $0x54] sm:$0xf]
      %v6497 = vld [vmem:[#allocation3 + $0x58] sm:$0xf]
      %v6498 = vld [vmem:[#allocation3 + $0x5c] sm:$0x1]
      %v6499 = vld [vmem:[#allocation3 + $0x60] sm:$0xf]
      %v6500 = vld [vmem:[#allocation3 + $0x64] sm:$0xf]
      %v6501 = vld [vmem:[#allocation3 + $0x68] sm:$0x1]
      %v6502 = vld [vmem:[#allocation3 + $0x6c] sm:$0xf]
      %v6503 = vld [vmem:[#allocation3 + $0x70] sm:$0xf]
      %v6504 = vld [vmem:[#allocation3 + $0x74] sm:$0x1]
      %v6505 = vld [vmem:[#allocation3 + $0x78] sm:$0xf]
      %v6506 = vld [vmem:[#allocation3 + $0x7c] sm:$0xf]
      %v6507 = vld [vmem:[#allocation3 + $0x80] sm:$0x1]
      %v6508 = vld [vmem:[#allocation3 + $0x84] sm:$0xf]
      %v6509 = vld [vmem:[#allocation3 + $0x88] sm:$0xf]
      %v6510 = vld [vmem:[#allocation3 + $0x8c] sm:$0x1]
      %v6511 = vld [vmem:[#allocation3 + $0x90] sm:$0xf]
      %v6512 = vld [vmem:[#allocation3 + $0x94] sm:$0xf]
      %v6513 = vld [vmem:[#allocation3 + $0x98] sm:$0x1]
      %v6514 = vld [vmem:[#allocation3 + $0x9c] sm:$0xf]
      %v6515 = vld [vmem:[#allocation3 + $0xa0] sm:$0xf]
      %v6516 = vld [vmem:[#allocation3 + $0xa4] sm:$0x1]
      %v6517 = vld [vmem:[#allocation3 + $0xa8] sm:$0xf]
      %v6518 = vld [vmem:[#allocation3 + $0xac] sm:$0xf]
      %v6519 = vld [vmem:[#allocation3 + $0xb0] sm:$0x1]
      %v6520 = vld [vmem:[#allocation3 + $0xb4] sm:$0xf]
      %v6521 = vld [vmem:[#allocation3 + $0xb8] sm:$0xf]
      %v6522 = vld [vmem:[#allocation3 + $0xbc] sm:$0x1]
      %v6523 = vld [vmem:[#allocation3 + $0xc0] sm:$0xf]
      %v6524 = vld [vmem:[#allocation3 + $0xc4] sm:$0xf]
      %v6525 = vld [vmem:[#allocation3 + $0xc8] sm:$0x1]
      %v6526 = vld [vmem:[#allocation3 + $0xcc] sm:$0xf]
      %v6527 = vld [vmem:[#allocation3 + $0xd0] sm:$0xf]
      %v6528 = vld [vmem:[#allocation3 + $0xd4] sm:$0x1]
      %v6529 = vld [vmem:[#allocation3 + $0xd8] sm:$0xf]
      %v6530 = vld [vmem:[#allocation3 + $0xdc] sm:$0xf]
      %v6531 = vld [vmem:[#allocation3 + $0xe0] sm:$0x1]
      %v6532 = vld [vmem:[#allocation3 + $0xe4] sm:$0xf]
      %v6533 = vld [vmem:[#allocation3 + $0xe8] sm:$0xf]
      %v6534 = vld [vmem:[#allocation3 + $0xec] sm:$0x1]
      %vm6535 = vsmask.f32 3328
      %vm6536 = vsmask.f32 7440
      %vm6537 = vmor %vm6535, %vm6536
      %v6539 = vshrl.u32 %v6475, 16
      %v6541 = vrot.slane %v6539, 4
      %v6542 = vshll.u32 %v6475, 16
      %v6544 = vrot.slane %v6542, 5
      %v6545 = vor.u32 %v6541, %v6544
      %v6546 = vrot.slane %v6545, 4
      %v6548 = vshll.u32 %v6476, 16
      %v6550 = vrot.slane %v6548, 5
      %v6551 = vsel %vm6537, %v6546, %v6550
      %v6552 = vshrl.u32 %v6476, 16
      %v6554 = vrot.slane %v6552, 4
      %v6555 = vor.u32 %v6554, %v6550
      %v6556 = vrot.slane %v6555, 4
      %v6558 = vshll.u32 %v6477, 16
      %v6560 = vrot.slane %v6558, 5
      %v6561 = vsel %vm6537, %v6556, %v6560
      %v6563 = vshrl.u32 %v6478, 16
      %v6565 = vrot.slane %v6563, 4
      %v6566 = vshll.u32 %v6478, 16
      %v6568 = vrot.slane %v6566, 5
      %v6569 = vor.u32 %v6565, %v6568
      %v6570 = vrot.slane %v6569, 4
      %v6572 = vshll.u32 %v6479, 16
      %v6574 = vrot.slane %v6572, 5
      %v6575 = vsel %vm6537, %v6570, %v6574
      %v6576 = vshrl.u32 %v6479, 16
      %v6578 = vrot.slane %v6576, 4
      %v6579 = vor.u32 %v6578, %v6574
      %v6580 = vrot.slane %v6579, 4
      %v6582 = vshll.u32 %v6480, 16
      %v6584 = vrot.slane %v6582, 5
      %v6585 = vsel %vm6537, %v6580, %v6584
      %v6587 = vshrl.u32 %v6481, 16
      %v6589 = vrot.slane %v6587, 4
      %v6590 = vshll.u32 %v6481, 16
      %v6592 = vrot.slane %v6590, 5
      %v6593 = vor.u32 %v6589, %v6592
      %v6594 = vrot.slane %v6593, 4
      %v6596 = vshll.u32 %v6482, 16
      %v6598 = vrot.slane %v6596, 5
      %v6599 = vsel %vm6537, %v6594, %v6598
      %v6600 = vshrl.u32 %v6482, 16
      %v6602 = vrot.slane %v6600, 4
      %v6603 = vor.u32 %v6602, %v6598
      %v6604 = vrot.slane %v6603, 4
      %v6606 = vshll.u32 %v6483, 16
      %v6608 = vrot.slane %v6606, 5
      %v6609 = vsel %vm6537, %v6604, %v6608
      %v6611 = vshrl.u32 %v6484, 16
      %v6613 = vrot.slane %v6611, 4
      %v6614 = vshll.u32 %v6484, 16
      %v6616 = vrot.slane %v6614, 5
      %v6617 = vor.u32 %v6613, %v6616
      %v6618 = vrot.slane %v6617, 4
      %v6620 = vshll.u32 %v6485, 16
      %v6622 = vrot.slane %v6620, 5
      %v6623 = vsel %vm6537, %v6618, %v6622
      %v6624 = vshrl.u32 %v6485, 16
      %v6626 = vrot.slane %v6624, 4
      %v6627 = vor.u32 %v6626, %v6622
      %v6628 = vrot.slane %v6627, 4
      %v6630 = vshll.u32 %v6486, 16
      %v6632 = vrot.slane %v6630, 5
      %v6633 = vsel %vm6537, %v6628, %v6632
      %v6635 = vshrl.u32 %v6487, 16
      %v6637 = vrot.slane %v6635, 4
      %v6638 = vshll.u32 %v6487, 16
      %v6640 = vrot.slane %v6638, 5
      %v6641 = vor.u32 %v6637, %v6640
      %v6642 = vrot.slane %v6641, 4
      %v6644 = vshll.u32 %v6488, 16
      %v6646 = vrot.slane %v6644, 5
      %v6647 = vsel %vm6537, %v6642, %v6646
      %v6648 = vshrl.u32 %v6488, 16
      %v6650 = vrot.slane %v6648, 4
      %v6651 = vor.u32 %v6650, %v6646
      %v6652 = vrot.slane %v6651, 4
      %v6654 = vshll.u32 %v6489, 16
      %v6656 = vrot.slane %v6654, 5
      %v6657 = vsel %vm6537, %v6652, %v6656
      %v6659 = vshrl.u32 %v6490, 16
      %v6661 = vrot.slane %v6659, 4
      %v6662 = vshll.u32 %v6490, 16
      %v6664 = vrot.slane %v6662, 5
      %v6665 = vor.u32 %v6661, %v6664
      %v6666 = vrot.slane %v6665, 4
      %v6668 = vshll.u32 %v6491, 16
      %v6670 = vrot.slane %v6668, 5
      %v6671 = vsel %vm6537, %v6666, %v6670
      %v6672 = vshrl.u32 %v6491, 16
      %v6674 = vrot.slane %v6672, 4
      %v6675 = vor.u32 %v6674, %v6670
      %v6676 = vrot.slane %v6675, 4
      %v6678 = vshll.u32 %v6492, 16
      %v6680 = vrot.slane %v6678, 5
      %v6681 = vsel %vm6537, %v6676, %v6680
      %v6683 = vshrl.u32 %v6493, 16
      %v6685 = vrot.slane %v6683, 4
      %v6686 = vshll.u32 %v6493, 16
      %v6688 = vrot.slane %v6686, 5
      %v6689 = vor.u32 %v6685, %v6688
      %v6690 = vrot.slane %v6689, 4
      %v6692 = vshll.u32 %v6494, 16
      %v6694 = vrot.slane %v6692, 5
      %v6695 = vsel %vm6537, %v6690, %v6694
      %v6696 = vshrl.u32 %v6494, 16
      %v6698 = vrot.slane %v6696, 4
      %v6699 = vor.u32 %v6698, %v6694
      %v6700 = vrot.slane %v6699, 4
      %v6702 = vshll.u32 %v6495, 16
      %v6704 = vrot.slane %v6702, 5
      %v6705 = vsel %vm6537, %v6700, %v6704
      %v6707 = vshrl.u32 %v6496, 16
      %v6709 = vrot.slane %v6707, 4
      %v6710 = vshll.u32 %v6496, 16
      %v6712 = vrot.slane %v6710, 5
      %v6713 = vor.u32 %v6709, %v6712
      %v6714 = vrot.slane %v6713, 4
      %v6716 = vshll.u32 %v6497, 16
      %v6718 = vrot.slane %v6716, 5
      %v6719 = vsel %vm6537, %v6714, %v6718
      %v6720 = vshrl.u32 %v6497, 16
      %v6722 = vrot.slane %v6720, 4
      %v6723 = vor.u32 %v6722, %v6718
      %v6724 = vrot.slane %v6723, 4
      %v6726 = vshll.u32 %v6498, 16
      %v6728 = vrot.slane %v6726, 5
      %v6729 = vsel %vm6537, %v6724, %v6728
      %v6731 = vshrl.u32 %v6499, 16
      %v6733 = vrot.slane %v6731, 4
      %v6734 = vshll.u32 %v6499, 16
      %v6736 = vrot.slane %v6734, 5
      %v6737 = vor.u32 %v6733, %v6736
      %v6738 = vrot.slane %v6737, 4
      %v6740 = vshll.u32 %v6500, 16
      %v6742 = vrot.slane %v6740, 5
      %v6743 = vsel %vm6537, %v6738, %v6742
      %v6744 = vshrl.u32 %v6500, 16
      %v6746 = vrot.slane %v6744, 4
      %v6747 = vor.u32 %v6746, %v6742
      %v6748 = vrot.slane %v6747, 4
      %v6750 = vshll.u32 %v6501, 16
      %v6752 = vrot.slane %v6750, 5
      %v6753 = vsel %vm6537, %v6748, %v6752
      %v6755 = vshrl.u32 %v6502, 16
      %v6757 = vrot.slane %v6755, 4
      %v6758 = vshll.u32 %v6502, 16
      %v6760 = vrot.slane %v6758, 5
      %v6761 = vor.u32 %v6757, %v6760
      %v6762 = vrot.slane %v6761, 4
      %v6764 = vshll.u32 %v6503, 16
      %v6766 = vrot.slane %v6764, 5
      %v6767 = vsel %vm6537, %v6762, %v6766
      %v6768 = vshrl.u32 %v6503, 16
      %v6770 = vrot.slane %v6768, 4
      %v6771 = vor.u32 %v6770, %v6766
      %v6772 = vrot.slane %v6771, 4
      %v6774 = vshll.u32 %v6504, 16
      %v6776 = vrot.slane %v6774, 5
      %v6777 = vsel %vm6537, %v6772, %v6776
      %v6779 = vshrl.u32 %v6505, 16
      %v6781 = vrot.slane %v6779, 4
      %v6782 = vshll.u32 %v6505, 16
      %v6784 = vrot.slane %v6782, 5
      %v6785 = vor.u32 %v6781, %v6784
      %v6786 = vrot.slane %v6785, 4
      %v6788 = vshll.u32 %v6506, 16
      %v6790 = vrot.slane %v6788, 5
      %v6791 = vsel %vm6537, %v6786, %v6790
      %v6792 = vshrl.u32 %v6506, 16
      %v6794 = vrot.slane %v6792, 4
      %v6795 = vor.u32 %v6794, %v6790
      %v6796 = vrot.slane %v6795, 4
      %v6798 = vshll.u32 %v6507, 16
      %v6800 = vrot.slane %v6798, 5
      %v6801 = vsel %vm6537, %v6796, %v6800
      %v6803 = vshrl.u32 %v6508, 16
      %v6805 = vrot.slane %v6803, 4
      %v6806 = vshll.u32 %v6508, 16
      %v6808 = vrot.slane %v6806, 5
      %v6809 = vor.u32 %v6805, %v6808
      %v6810 = vrot.slane %v6809, 4
      %v6812 = vshll.u32 %v6509, 16
      %v6814 = vrot.slane %v6812, 5
      %v6815 = vsel %vm6537, %v6810, %v6814
      %v6816 = vshrl.u32 %v6509, 16
      %v6818 = vrot.slane %v6816, 4
      %v6819 = vor.u32 %v6818, %v6814
      %v6820 = vrot.slane %v6819, 4
      %v6822 = vshll.u32 %v6510, 16
      %v6824 = vrot.slane %v6822, 5
      %v6825 = vsel %vm6537, %v6820, %v6824
      %v6827 = vshrl.u32 %v6511, 16
      %v6829 = vrot.slane %v6827, 4
      %v6830 = vshll.u32 %v6511, 16
      %v6832 = vrot.slane %v6830, 5
      %v6833 = vor.u32 %v6829, %v6832
      %v6834 = vrot.slane %v6833, 4
      %v6836 = vshll.u32 %v6512, 16
      %v6838 = vrot.slane %v6836, 5
      %v6839 = vsel %vm6537, %v6834, %v6838
      %v6840 = vshrl.u32 %v6512, 16
      %v6842 = vrot.slane %v6840, 4
      %v6843 = vor.u32 %v6842, %v6838
      %v6844 = vrot.slane %v6843, 4
      %v6846 = vshll.u32 %v6513, 16
      %v6848 = vrot.slane %v6846, 5
      %v6849 = vsel %vm6537, %v6844, %v6848
      %v6851 = vshrl.u32 %v6514, 16
      %v6853 = vrot.slane %v6851, 4
      %v6854 = vshll.u32 %v6514, 16
      %v6856 = vrot.slane %v6854, 5
      %v6857 = vor.u32 %v6853, %v6856
      %v6858 = vrot.slane %v6857, 4
      %v6860 = vshll.u32 %v6515, 16
      %v6862 = vrot.slane %v6860, 5
      %v6863 = vsel %vm6537, %v6858, %v6862
      %v6864 = vshrl.u32 %v6515, 16
      %v6866 = vrot.slane %v6864, 4
      %v6867 = vor.u32 %v6866, %v6862
      %v6868 = vrot.slane %v6867, 4
      %v6870 = vshll.u32 %v6516, 16
      %v6872 = vrot.slane %v6870, 5
      %v6873 = vsel %vm6537, %v6868, %v6872
      %v6875 = vshrl.u32 %v6517, 16
      %v6877 = vrot.slane %v6875, 4
      %v6878 = vshll.u32 %v6517, 16
      %v6880 = vrot.slane %v6878, 5
      %v6881 = vor.u32 %v6877, %v6880
      %v6882 = vrot.slane %v6881, 4
      %v6884 = vshll.u32 %v6518, 16
      %v6886 = vrot.slane %v6884, 5
      %v6887 = vsel %vm6537, %v6882, %v6886
      %v6888 = vshrl.u32 %v6518, 16
      %v6890 = vrot.slane %v6888, 4
      %v6891 = vor.u32 %v6890, %v6886
      %v6892 = vrot.slane %v6891, 4
      %v6894 = vshll.u32 %v6519, 16
      %v6896 = vrot.slane %v6894, 5
      %v6897 = vsel %vm6537, %v6892, %v6896
      %v6899 = vshrl.u32 %v6520, 16
      %v6901 = vrot.slane %v6899, 4
      %v6902 = vshll.u32 %v6520, 16
      %v6904 = vrot.slane %v6902, 5
      %v6905 = vor.u32 %v6901, %v6904
      %v6906 = vrot.slane %v6905, 4
      %v6908 = vshll.u32 %v6521, 16
      %v6910 = vrot.slane %v6908, 5
      %v6911 = vsel %vm6537, %v6906, %v6910
      %v6912 = vshrl.u32 %v6521, 16
      %v6914 = vrot.slane %v6912, 4
      %v6915 = vor.u32 %v6914, %v6910
      %v6916 = vrot.slane %v6915, 4
      %v6918 = vshll.u32 %v6522, 16
      %v6920 = vrot.slane %v6918, 5
      %v6921 = vsel %vm6537, %v6916, %v6920
      %v6923 = vshrl.u32 %v6523, 16
      %v6925 = vrot.slane %v6923, 4
      %v6926 = vshll.u32 %v6523, 16
      %v6928 = vrot.slane %v6926, 5
      %v6929 = vor.u32 %v6925, %v6928
      %v6930 = vrot.slane %v6929, 4
      %v6932 = vshll.u32 %v6524, 16
      %v6934 = vrot.slane %v6932, 5
      %v6935 = vsel %vm6537, %v6930, %v6934
      %v6936 = vshrl.u32 %v6524, 16
      %v6938 = vrot.slane %v6936, 4
      %v6939 = vor.u32 %v6938, %v6934
      %v6940 = vrot.slane %v6939, 4
      %v6942 = vshll.u32 %v6525, 16
      %v6944 = vrot.slane %v6942, 5
      %v6945 = vsel %vm6537, %v6940, %v6944
      %v6947 = vshrl.u32 %v6526, 16
      %v6949 = vrot.slane %v6947, 4
      %v6950 = vshll.u32 %v6526, 16
      %v6952 = vrot.slane %v6950, 5
      %v6953 = vor.u32 %v6949, %v6952
      %v6954 = vrot.slane %v6953, 4
      %v6956 = vshll.u32 %v6527, 16
      %v6958 = vrot.slane %v6956, 5
      %v6959 = vsel %vm6537, %v6954, %v6958
      %v6960 = vshrl.u32 %v6527, 16
      %v6962 = vrot.slane %v6960, 4
      %v6963 = vor.u32 %v6962, %v6958
      %v6964 = vrot.slane %v6963, 4
      %v6966 = vshll.u32 %v6528, 16
      %v6968 = vrot.slane %v6966, 5
      %v6969 = vsel %vm6537, %v6964, %v6968
      %v6971 = vshrl.u32 %v6529, 16
      %v6973 = vrot.slane %v6971, 4
      %v6974 = vshll.u32 %v6529, 16
      %v6976 = vrot.slane %v6974, 5
      %v6977 = vor.u32 %v6973, %v6976
      %v6978 = vrot.slane %v6977, 4
      %v6980 = vshll.u32 %v6530, 16
      %v6982 = vrot.slane %v6980, 5
      %v6983 = vsel %vm6537, %v6978, %v6982
      %v6984 = vshrl.u32 %v6530, 16
      %v6986 = vrot.slane %v6984, 4
      %v6987 = vor.u32 %v6986, %v6982
      %v6988 = vrot.slane %v6987, 4
      %v6990 = vshll.u32 %v6531, 16
      %v6992 = vrot.slane %v6990, 5
      %v6993 = vsel %vm6537, %v6988, %v6992
      %v6995 = vshrl.u32 %v6532, 16
      %v6997 = vrot.slane %v6995, 4
      %v6998 = vshll.u32 %v6532, 16
      %v7000 = vrot.slane %v6998, 5
      %v7001 = vor.u32 %v6997, %v7000
      %v7002 = vrot.slane %v7001, 4
      %v7004 = vshll.u32 %v6533, 16
      %v7006 = vrot.slane %v7004, 5
      %v7007 = vsel %vm6537, %v7002, %v7006
      %v7008 = vshrl.u32 %v6533, 16
      %v7010 = vrot.slane %v7008, 4
      %v7011 = vor.u32 %v7010, %v7006
      %v7012 = vrot.slane %v7011, 4
      %v7014 = vshll.u32 %v6534, 16
      %v7016 = vrot.slane %v7014, 5
      %v7017 = vsel %vm6537, %v7012, %v7016
      %7018 = vrot.lane.b32.xlu0 %v6551, 32
      %v7019 = vpop.permute.xlu0 %7018
      %7020 = vrot.lane.b32.xlu0 %v6561, 32
      %v7021 = vpop.permute.xlu0 %7020
      %7022 = vrot.lane.b32.xlu0 %v6575, 32
      %v7023 = vpop.permute.xlu0 %7022
      %7024 = vrot.lane.b32.xlu0 %v6585, 32
      %v7025 = vpop.permute.xlu0 %7024
      %7026 = vrot.lane.b32.xlu0 %v6599, 32
      %v7027 = vpop.permute.xlu0 %7026
      %7028 = vrot.lane.b32.xlu0 %v6609, 32
      %v7029 = vpop.permute.xlu0 %7028
      %7030 = vrot.lane.b32.xlu0 %v6623, 32
      %v7031 = vpop.permute.xlu0 %7030
      %7032 = vrot.lane.b32.xlu0 %v6633, 32
      %v7033 = vpop.permute.xlu0 %7032
      %7034 = vrot.lane.b32.xlu0 %v6647, 32
      %v7035 = vpop.permute.xlu0 %7034
      %7036 = vrot.lane.b32.xlu0 %v6657, 32
      %v7037 = vpop.permute.xlu0 %7036
      %7038 = vrot.lane.b32.xlu0 %v6671, 32
      %v7039 = vpop.permute.xlu0 %7038
      %7040 = vrot.lane.b32.xlu0 %v6681, 32
      %v7041 = vpop.permute.xlu0 %7040
      %7042 = vrot.lane.b32.xlu0 %v6695, 32
      %v7043 = vpop.permute.xlu0 %7042
      %7044 = vrot.lane.b32.xlu0 %v6705, 32
      %v7045 = vpop.permute.xlu0 %7044
      %7046 = vrot.lane.b32.xlu0 %v6719, 32
      %v7047 = vpop.permute.xlu0 %7046
      %7048 = vrot.lane.b32.xlu0 %v6729, 32
      %v7049 = vpop.permute.xlu0 %7048
      %7050 = vrot.lane.b32.xlu0 %v6743, 32
      %v7051 = vpop.permute.xlu0 %7050
      %7052 = vrot.lane.b32.xlu0 %v6753, 32
      %v7053 = vpop.permute.xlu0 %7052
      %7054 = vrot.lane.b32.xlu0 %v6767, 32
      %v7055 = vpop.permute.xlu0 %7054
      %7056 = vrot.lane.b32.xlu0 %v6777, 32
      %v7057 = vpop.permute.xlu0 %7056
      %7058 = vrot.lane.b32.xlu0 %v6791, 32
      %v7059 = vpop.permute.xlu0 %7058
      %7060 = vrot.lane.b32.xlu0 %v6801, 32
      %v7061 = vpop.permute.xlu0 %7060
      %7062 = vrot.lane.b32.xlu0 %v6815, 32
      %v7063 = vpop.permute.xlu0 %7062
      %7064 = vrot.lane.b32.xlu0 %v6825, 32
      %v7065 = vpop.permute.xlu0 %7064
      %7066 = vrot.lane.b32.xlu0 %v6839, 32
      %v7067 = vpop.permute.xlu0 %7066
      %7068 = vrot.lane.b32.xlu0 %v6849, 32
      %v7069 = vpop.permute.xlu0 %7068
      %7070 = vrot.lane.b32.xlu0 %v6863, 32
      %v7071 = vpop.permute.xlu0 %7070
      %7072 = vrot.lane.b32.xlu0 %v6873, 32
      %v7073 = vpop.permute.xlu0 %7072
      %7074 = vrot.lane.b32.xlu0 %v6887, 32
      %v7075 = vpop.permute.xlu0 %7074
      %7076 = vrot.lane.b32.xlu0 %v6897, 32
      %v7077 = vpop.permute.xlu0 %7076
      %7078 = vrot.lane.b32.xlu0 %v6911, 32
      %v7079 = vpop.permute.xlu0 %7078
      %7080 = vrot.lane.b32.xlu0 %v6921, 32
      %v7081 = vpop.permute.xlu0 %7080
      %7082 = vrot.lane.b32.xlu0 %v6935, 32
      %v7083 = vpop.permute.xlu0 %7082
      %7084 = vrot.lane.b32.xlu0 %v6945, 32
      %v7085 = vpop.permute.xlu0 %7084
      %7086 = vrot.lane.b32.xlu0 %v6959, 32
      %v7087 = vpop.permute.xlu0 %7086
      %7088 = vrot.lane.b32.xlu0 %v6969, 32
      %v7089 = vpop.permute.xlu0 %7088
      %7090 = vrot.lane.b32.xlu0 %v6983, 32
      %v7091 = vpop.permute.xlu0 %7090
      %7092 = vrot.lane.b32.xlu0 %v6993, 32
      %v7093 = vpop.permute.xlu0 %7092
      %7094 = vrot.lane.b32.xlu0 %v7007, 32
      %v7095 = vpop.permute.xlu0 %7094
      %7096 = vrot.lane.b32.xlu0 %v7017, 32
      %v7097 = vpop.permute.xlu0 %7096
      %vm7138 = vcmask 519424
      %7139 = vst.msk [vmem:[#allocation4] sm:$0xf] %vm7138, %v7019
      %7140 = vst.msk [vmem:[#allocation4 + $0x8] sm:$0xf] %vm7138, %v7021
      %7141 = vst.msk [vmem:[#allocation4 + $0x10] sm:$0xf] %vm7138, %v7023
      %7142 = vst.msk [vmem:[#allocation4 + $0x18] sm:$0xf] %vm7138, %v7025
      %7143 = vst.msk [vmem:[#allocation4 + $0x20] sm:$0xf] %vm7138, %v7027
      %7144 = vst.msk [vmem:[#allocation4 + $0x28] sm:$0xf] %vm7138, %v7029
      %7145 = vst.msk [vmem:[#allocation4 + $0x30] sm:$0xf] %vm7138, %v7031
      %7146 = vst.msk [vmem:[#allocation4 + $0x38] sm:$0xf] %vm7138, %v7033
      %7147 = vst.msk [vmem:[#allocation4 + $0x40] sm:$0xf] %vm7138, %v7035
      %7148 = vst.msk [vmem:[#allocation4 + $0x48] sm:$0xf] %vm7138, %v7037
      %7149 = vst.msk [vmem:[#allocation4 + $0x50] sm:$0xf] %vm7138, %v7039
      %7150 = vst.msk [vmem:[#allocation4 + $0x58] sm:$0xf] %vm7138, %v7041
      %7151 = vst.msk [vmem:[#allocation4 + $0x60] sm:$0xf] %vm7138, %v7043
      %7152 = vst.msk [vmem:[#allocation4 + $0x68] sm:$0xf] %vm7138, %v7045
      %7153 = vst.msk [vmem:[#allocation4 + $0x70] sm:$0xf] %vm7138, %v7047
      %7154 = vst.msk [vmem:[#allocation4 + $0x78] sm:$0xf] %vm7138, %v7049
      %7155 = vst.msk [vmem:[#allocation4 + $0x80] sm:$0xf] %vm7138, %v7051
      %7156 = vst.msk [vmem:[#allocation4 + $0x88] sm:$0xf] %vm7138, %v7053
      %7157 = vst.msk [vmem:[#allocation4 + $0x90] sm:$0xf] %vm7138, %v7055
      %7158 = vst.msk [vmem:[#allocation4 + $0x98] sm:$0xf] %vm7138, %v7057
      %7159 = vst.msk [vmem:[#allocation4 + $0xa0] sm:$0xf] %vm7138, %v7059
      %7160 = vst.msk [vmem:[#allocation4 + $0xa8] sm:$0xf] %vm7138, %v7061
      %7161 = vst.msk [vmem:[#allocation4 + $0xb0] sm:$0xf] %vm7138, %v7063
      %7162 = vst.msk [vmem:[#allocation4 + $0xb8] sm:$0xf] %vm7138, %v7065
      %7163 = vst.msk [vmem:[#allocation4 + $0xc0] sm:$0xf] %vm7138, %v7067
      %7164 = vst.msk [vmem:[#allocation4 + $0xc8] sm:$0xf] %vm7138, %v7069
      %7165 = vst.msk [vmem:[#allocation4 + $0xd0] sm:$0xf] %vm7138, %v7071
      %7166 = vst.msk [vmem:[#allocation4 + $0xd8] sm:$0xf] %vm7138, %v7073
      %7167 = vst.msk [vmem:[#allocation4 + $0xe0] sm:$0xf] %vm7138, %v7075
      %7168 = vst.msk [vmem:[#allocation4 + $0xe8] sm:$0xf] %vm7138, %v7077
      %7169 = vst.msk [vmem:[#allocation4 + $0xf0] sm:$0xf] %vm7138, %v7079
      %7170 = vst.msk [vmem:[#allocation4 + $0xf8] sm:$0xf] %vm7138, %v7081
      %7171 = vst.msk [vmem:[#allocation4 + $0x100] sm:$0xf] %vm7138, %v7083
      %7172 = vst.msk [vmem:[#allocation4 + $0x108] sm:$0xf] %vm7138, %v7085
      %7173 = vst.msk [vmem:[#allocation4 + $0x110] sm:$0xf] %vm7138, %v7087
      %7174 = vst.msk [vmem:[#allocation4 + $0x118] sm:$0xf] %vm7138, %v7089
      %7175 = vst.msk [vmem:[#allocation4 + $0x120] sm:$0xf] %vm7138, %v7091
      %7176 = vst.msk [vmem:[#allocation4 + $0x128] sm:$0xf] %vm7138, %v7093
      %7177 = vst.msk [vmem:[#allocation4 + $0x130] sm:$0xf] %vm7138, %v7095
      %7178 = vst.msk [vmem:[#allocation4 + $0x138] sm:$0xf] %vm7138, %v7097
      %v7179 = vld [vmem:[#allocation3] sm:$0xe]
      %v7180 = vld [vmem:[#allocation3 + $0x4] sm:$0xf]
      %v7181 = vld [vmem:[#allocation3 + $0x8] sm:$0x1]
      %v7182 = vld [vmem:[#allocation3 + $0xc] sm:$0xe]
      %v7183 = vld [vmem:[#allocation3 + $0x10] sm:$0xf]
      %v7184 = vld [vmem:[#allocation3 + $0x14] sm:$0x1]
      %v7185 = vld [vmem:[#allocation3 + $0x18] sm:$0xe]
      %v7186 = vld [vmem:[#allocation3 + $0x1c] sm:$0xf]
      %v7187 = vld [vmem:[#allocation3 + $0x20] sm:$0x1]
      %v7188 = vld [vmem:[#allocation3 + $0x24] sm:$0xe]
      %v7189 = vld [vmem:[#allocation3 + $0x28] sm:$0xf]
      %v7190 = vld [vmem:[#allocation3 + $0x2c] sm:$0x1]
      %v7191 = vld [vmem:[#allocation3 + $0x30] sm:$0xe]
      %v7192 = vld [vmem:[#allocation3 + $0x34] sm:$0xf]
      %v7193 = vld [vmem:[#allocation3 + $0x38] sm:$0x1]
      %v7194 = vld [vmem:[#allocation3 + $0x3c] sm:$0xe]
      %v7195 = vld [vmem:[#allocation3 + $0x40] sm:$0xf]
      %v7196 = vld [vmem:[#allocation3 + $0x44] sm:$0x1]
      %v7197 = vld [vmem:[#allocation3 + $0x48] sm:$0xe]
      %v7198 = vld [vmem:[#allocation3 + $0x4c] sm:$0xf]
      %v7199 = vld [vmem:[#allocation3 + $0x50] sm:$0x1]
      %v7200 = vld [vmem:[#allocation3 + $0x54] sm:$0xe]
      %v7201 = vld [vmem:[#allocation3 + $0x58] sm:$0xf]
      %v7202 = vld [vmem:[#allocation3 + $0x5c] sm:$0x1]
      %v7203 = vld [vmem:[#allocation3 + $0x60] sm:$0xe]
      %v7204 = vld [vmem:[#allocation3 + $0x64] sm:$0xf]
      %v7205 = vld [vmem:[#allocation3 + $0x68] sm:$0x1]
      %v7206 = vld [vmem:[#allocation3 + $0x6c] sm:$0xe]
      %v7207 = vld [vmem:[#allocation3 + $0x70] sm:$0xf]
      %v7208 = vld [vmem:[#allocation3 + $0x74] sm:$0x1]
      %v7209 = vld [vmem:[#allocation3 + $0x78] sm:$0xe]
      %v7210 = vld [vmem:[#allocation3 + $0x7c] sm:$0xf]
      %v7211 = vld [vmem:[#allocation3 + $0x80] sm:$0x1]
      %v7212 = vld [vmem:[#allocation3 + $0x84] sm:$0xe]
      %v7213 = vld [vmem:[#allocation3 + $0x88] sm:$0xf]
      %v7214 = vld [vmem:[#allocation3 + $0x8c] sm:$0x1]
      %v7215 = vld [vmem:[#allocation3 + $0x90] sm:$0xe]
      %v7216 = vld [vmem:[#allocation3 + $0x94] sm:$0xf]
      %v7217 = vld [vmem:[#allocation3 + $0x98] sm:$0x1]
      %v7218 = vld [vmem:[#allocation3 + $0x9c] sm:$0xe]
      %v7219 = vld [vmem:[#allocation3 + $0xa0] sm:$0xf]
      %v7220 = vld [vmem:[#allocation3 + $0xa4] sm:$0x1]
      %v7221 = vld [vmem:[#allocation3 + $0xa8] sm:$0xe]
      %v7222 = vld [vmem:[#allocation3 + $0xac] sm:$0xf]
      %v7223 = vld [vmem:[#allocation3 + $0xb0] sm:$0x1]
      %v7224 = vld [vmem:[#allocation3 + $0xb4] sm:$0xe]
      %v7225 = vld [vmem:[#allocation3 + $0xb8] sm:$0xf]
      %v7226 = vld [vmem:[#allocation3 + $0xbc] sm:$0x1]
      %v7227 = vld [vmem:[#allocation3 + $0xc0] sm:$0xe]
      %v7228 = vld [vmem:[#allocation3 + $0xc4] sm:$0xf]
      %v7229 = vld [vmem:[#allocation3 + $0xc8] sm:$0x1]
      %v7230 = vld [vmem:[#allocation3 + $0xcc] sm:$0xe]
      %v7231 = vld [vmem:[#allocation3 + $0xd0] sm:$0xf]
      %v7232 = vld [vmem:[#allocation3 + $0xd4] sm:$0x1]
      %v7233 = vld [vmem:[#allocation3 + $0xd8] sm:$0xe]
      %v7234 = vld [vmem:[#allocation3 + $0xdc] sm:$0xf]
      %v7235 = vld [vmem:[#allocation3 + $0xe0] sm:$0x1]
      %v7236 = vld [vmem:[#allocation3 + $0xe4] sm:$0xe]
      %v7237 = vld [vmem:[#allocation3 + $0xe8] sm:$0xf]
      %v7238 = vld [vmem:[#allocation3 + $0xec] sm:$0x1]
      %vm7299 = vcmask 1042432
      %vm7300 = vcmask 1046532
      %vm7301 = vmor %vm7299, %vm7300
      %v7302 = vrot.slane %v7179, 5
      %v7303 = vrot.slane %v7302, 4
      %v7304 = vrot.slane %v7180, 5
      %v7305 = vsel %vm7301, %v7303, %v7304
      %v7306 = vrot.slane %v7304, 4
      %v7307 = vrot.slane %v7181, 5
      %v7308 = vsel %vm7301, %v7306, %v7307
      %v7309 = vrot.slane %v7182, 5
      %v7310 = vrot.slane %v7309, 4
      %v7311 = vrot.slane %v7183, 5
      %v7312 = vsel %vm7301, %v7310, %v7311
      %v7313 = vrot.slane %v7311, 4
      %v7314 = vrot.slane %v7184, 5
      %v7315 = vsel %vm7301, %v7313, %v7314
      %v7316 = vrot.slane %v7185, 5
      %v7317 = vrot.slane %v7316, 4
      %v7318 = vrot.slane %v7186, 5
      %v7319 = vsel %vm7301, %v7317, %v7318
      %v7320 = vrot.slane %v7318, 4
      %v7321 = vrot.slane %v7187, 5
      %v7322 = vsel %vm7301, %v7320, %v7321
      %v7323 = vrot.slane %v7188, 5
      %v7324 = vrot.slane %v7323, 4
      %v7325 = vrot.slane %v7189, 5
      %v7326 = vsel %vm7301, %v7324, %v7325
      %v7327 = vrot.slane %v7325, 4
      %v7328 = vrot.slane %v7190, 5
      %v7329 = vsel %vm7301, %v7327, %v7328
      %v7330 = vrot.slane %v7191, 5
      %v7331 = vrot.slane %v7330, 4
      %v7332 = vrot.slane %v7192, 5
      %v7333 = vsel %vm7301, %v7331, %v7332
      %v7334 = vrot.slane %v7332, 4
      %v7335 = vrot.slane %v7193, 5
      %v7336 = vsel %vm7301, %v7334, %v7335
      %v7337 = vrot.slane %v7194, 5
      %v7338 = vrot.slane %v7337, 4
      %v7339 = vrot.slane %v7195, 5
      %v7340 = vsel %vm7301, %v7338, %v7339
      %v7341 = vrot.slane %v7339, 4
      %v7342 = vrot.slane %v7196, 5
      %v7343 = vsel %vm7301, %v7341, %v7342
      %v7344 = vrot.slane %v7197, 5
      %v7345 = vrot.slane %v7344, 4
      %v7346 = vrot.slane %v7198, 5
      %v7347 = vsel %vm7301, %v7345, %v7346
      %v7348 = vrot.slane %v7346, 4
      %v7349 = vrot.slane %v7199, 5
      %v7350 = vsel %vm7301, %v7348, %v7349
      %v7351 = vrot.slane %v7200, 5
      %v7352 = vrot.slane %v7351, 4
      %v7353 = vrot.slane %v7201, 5
      %v7354 = vsel %vm7301, %v7352, %v7353
      %v7355 = vrot.slane %v7353, 4
      %v7356 = vrot.slane %v7202, 5
      %v7357 = vsel %vm7301, %v7355, %v7356
      %v7358 = vrot.slane %v7203, 5
      %v7359 = vrot.slane %v7358, 4
      %v7360 = vrot.slane %v7204, 5
      %v7361 = vsel %vm7301, %v7359, %v7360
      %v7362 = vrot.slane %v7360, 4
      %v7363 = vrot.slane %v7205, 5
      %v7364 = vsel %vm7301, %v7362, %v7363
      %v7365 = vrot.slane %v7206, 5
      %v7366 = vrot.slane %v7365, 4
      %v7367 = vrot.slane %v7207, 5
      %v7368 = vsel %vm7301, %v7366, %v7367
      %v7369 = vrot.slane %v7367, 4
      %v7370 = vrot.slane %v7208, 5
      %v7371 = vsel %vm7301, %v7369, %v7370
      %v7372 = vrot.slane %v7209, 5
      %v7373 = vrot.slane %v7372, 4
      %v7374 = vrot.slane %v7210, 5
      %v7375 = vsel %vm7301, %v7373, %v7374
      %v7376 = vrot.slane %v7374, 4
      %v7377 = vrot.slane %v7211, 5
      %v7378 = vsel %vm7301, %v7376, %v7377
      %v7379 = vrot.slane %v7212, 5
      %v7380 = vrot.slane %v7379, 4
      %v7381 = vrot.slane %v7213, 5
      %v7382 = vsel %vm7301, %v7380, %v7381
      %v7383 = vrot.slane %v7381, 4
      %v7384 = vrot.slane %v7214, 5
      %v7385 = vsel %vm7301, %v7383, %v7384
      %v7386 = vrot.slane %v7215, 5
      %v7387 = vrot.slane %v7386, 4
      %v7388 = vrot.slane %v7216, 5
      %v7389 = vsel %vm7301, %v7387, %v7388
      %v7390 = vrot.slane %v7388, 4
      %v7391 = vrot.slane %v7217, 5
      %v7392 = vsel %vm7301, %v7390, %v7391
      %v7393 = vrot.slane %v7218, 5
      %v7394 = vrot.slane %v7393, 4
      %v7395 = vrot.slane %v7219, 5
      %v7396 = vsel %vm7301, %v7394, %v7395
      %v7397 = vrot.slane %v7395, 4
      %v7398 = vrot.slane %v7220, 5
      %v7399 = vsel %vm7301, %v7397, %v7398
      %v7400 = vrot.slane %v7221, 5
      %v7401 = vrot.slane %v7400, 4
      %v7402 = vrot.slane %v7222, 5
      %v7403 = vsel %vm7301, %v7401, %v7402
      %v7404 = vrot.slane %v7402, 4
      %v7405 = vrot.slane %v7223, 5
      %v7406 = vsel %vm7301, %v7404, %v7405
      %v7407 = vrot.slane %v7224, 5
      %v7408 = vrot.slane %v7407, 4
      %v7409 = vrot.slane %v7225, 5
      %v7410 = vsel %vm7301, %v7408, %v7409
      %v7411 = vrot.slane %v7409, 4
      %v7412 = vrot.slane %v7226, 5
      %v7413 = vsel %vm7301, %v7411, %v7412
      %v7414 = vrot.slane %v7227, 5
      %v7415 = vrot.slane %v7414, 4
      %v7416 = vrot.slane %v7228, 5
      %v7417 = vsel %vm7301, %v7415, %v7416
      %v7418 = vrot.slane %v7416, 4
      %v7419 = vrot.slane %v7229, 5
      %v7420 = vsel %vm7301, %v7418, %v7419
      %v7421 = vrot.slane %v7230, 5
      %v7422 = vrot.slane %v7421, 4
      %v7423 = vrot.slane %v7231, 5
      %v7424 = vsel %vm7301, %v7422, %v7423
      %v7425 = vrot.slane %v7423, 4
      %v7426 = vrot.slane %v7232, 5
      %v7427 = vsel %vm7301, %v7425, %v7426
      %v7428 = vrot.slane %v7233, 5
      %v7429 = vrot.slane %v7428, 4
      %v7430 = vrot.slane %v7234, 5
      %v7431 = vsel %vm7301, %v7429, %v7430
      %v7432 = vrot.slane %v7430, 4
      %v7433 = vrot.slane %v7235, 5
      %v7434 = vsel %vm7301, %v7432, %v7433
      %v7435 = vrot.slane %v7236, 5
      %v7436 = vrot.slane %v7435, 4
      %v7437 = vrot.slane %v7237, 5
      %v7438 = vsel %vm7301, %v7436, %v7437
      %v7439 = vrot.slane %v7437, 4
      %v7440 = vrot.slane %v7238, 5
      %v7441 = vsel %vm7301, %v7439, %v7440
      %7442 = vrot.lane.b32.xlu0 %v7305, 64
      %v7443 = vpop.permute.xlu0 %7442
      %7444 = vrot.lane.b32.xlu0 %v7308, 64
      %v7445 = vpop.permute.xlu0 %7444
      %7446 = vrot.lane.b32.xlu0 %v7312, 64
      %v7447 = vpop.permute.xlu0 %7446
      %7448 = vrot.lane.b32.xlu0 %v7315, 64
      %v7449 = vpop.permute.xlu0 %7448
      %7450 = vrot.lane.b32.xlu0 %v7319, 64
      %v7451 = vpop.permute.xlu0 %7450
      %7452 = vrot.lane.b32.xlu0 %v7322, 64
      %v7453 = vpop.permute.xlu0 %7452
      %7454 = vrot.lane.b32.xlu0 %v7326, 64
      %v7455 = vpop.permute.xlu0 %7454
      %7456 = vrot.lane.b32.xlu0 %v7329, 64
      %v7457 = vpop.permute.xlu0 %7456
      %7458 = vrot.lane.b32.xlu0 %v7333, 64
      %v7459 = vpop.permute.xlu0 %7458
      %7460 = vrot.lane.b32.xlu0 %v7336, 64
      %v7461 = vpop.permute.xlu0 %7460
      %7462 = vrot.lane.b32.xlu0 %v7340, 64
      %v7463 = vpop.permute.xlu0 %7462
      %7464 = vrot.lane.b32.xlu0 %v7343, 64
      %v7465 = vpop.permute.xlu0 %7464
      %7466 = vrot.lane.b32.xlu0 %v7347, 64
      %v7467 = vpop.permute.xlu0 %7466
      %7468 = vrot.lane.b32.xlu0 %v7350, 64
      %v7469 = vpop.permute.xlu0 %7468
      %7470 = vrot.lane.b32.xlu0 %v7354, 64
      %v7471 = vpop.permute.xlu0 %7470
      %7472 = vrot.lane.b32.xlu0 %v7357, 64
      %v7473 = vpop.permute.xlu0 %7472
      %7474 = vrot.lane.b32.xlu0 %v7361, 64
      %v7475 = vpop.permute.xlu0 %7474
      %7476 = vrot.lane.b32.xlu0 %v7364, 64
      %v7477 = vpop.permute.xlu0 %7476
      %7478 = vrot.lane.b32.xlu0 %v7368, 64
      %v7479 = vpop.permute.xlu0 %7478
      %7480 = vrot.lane.b32.xlu0 %v7371, 64
      %v7481 = vpop.permute.xlu0 %7480
      %7482 = vrot.lane.b32.xlu0 %v7375, 64
      %v7483 = vpop.permute.xlu0 %7482
      %7484 = vrot.lane.b32.xlu0 %v7378, 64
      %v7485 = vpop.permute.xlu0 %7484
      %7486 = vrot.lane.b32.xlu0 %v7382, 64
      %v7487 = vpop.permute.xlu0 %7486
      %7488 = vrot.lane.b32.xlu0 %v7385, 64
      %v7489 = vpop.permute.xlu0 %7488
      %7490 = vrot.lane.b32.xlu0 %v7389, 64
      %v7491 = vpop.permute.xlu0 %7490
      %7492 = vrot.lane.b32.xlu0 %v7392, 64
      %v7493 = vpop.permute.xlu0 %7492
      %7494 = vrot.lane.b32.xlu0 %v7396, 64
      %v7495 = vpop.permute.xlu0 %7494
      %7496 = vrot.lane.b32.xlu0 %v7399, 64
      %v7497 = vpop.permute.xlu0 %7496
      %7498 = vrot.lane.b32.xlu0 %v7403, 64
      %v7499 = vpop.permute.xlu0 %7498
      %7500 = vrot.lane.b32.xlu0 %v7406, 64
      %v7501 = vpop.permute.xlu0 %7500
      %7502 = vrot.lane.b32.xlu0 %v7410, 64
      %v7503 = vpop.permute.xlu0 %7502
      %7504 = vrot.lane.b32.xlu0 %v7413, 64
      %v7505 = vpop.permute.xlu0 %7504
      %7506 = vrot.lane.b32.xlu0 %v7417, 64
      %v7507 = vpop.permute.xlu0 %7506
      %7508 = vrot.lane.b32.xlu0 %v7420, 64
      %v7509 = vpop.permute.xlu0 %7508
      %7510 = vrot.lane.b32.xlu0 %v7424, 64
      %v7511 = vpop.permute.xlu0 %7510
      %7512 = vrot.lane.b32.xlu0 %v7427, 64
      %v7513 = vpop.permute.xlu0 %7512
      %7514 = vrot.lane.b32.xlu0 %v7431, 64
      %v7515 = vpop.permute.xlu0 %7514
      %7516 = vrot.lane.b32.xlu0 %v7434, 64
      %v7517 = vpop.permute.xlu0 %7516
      %7518 = vrot.lane.b32.xlu0 %v7438, 64
      %v7519 = vpop.permute.xlu0 %7518
      %7520 = vrot.lane.b32.xlu0 %v7441, 64
      %v7521 = vpop.permute.xlu0 %7520
      %vm7562 = vcmask 781824
      %7563 = vst.msk [vmem:[#allocation4] sm:$0xf] %vm7562, %v7443
      %7564 = vst.msk [vmem:[#allocation4 + $0x8] sm:$0xf] %vm7562, %v7445
      %7565 = vst.msk [vmem:[#allocation4 + $0x10] sm:$0xf] %vm7562, %v7447
      %7566 = vst.msk [vmem:[#allocation4 + $0x18] sm:$0xf] %vm7562, %v7449
      %7567 = vst.msk [vmem:[#allocation4 + $0x20] sm:$0xf] %vm7562, %v7451
      %7568 = vst.msk [vmem:[#allocation4 + $0x28] sm:$0xf] %vm7562, %v7453
      %7569 = vst.msk [vmem:[#allocation4 + $0x30] sm:$0xf] %vm7562, %v7455
      %7570 = vst.msk [vmem:[#allocation4 + $0x38] sm:$0xf] %vm7562, %v7457
      %7571 = vst.msk [vmem:[#allocation4 + $0x40] sm:$0xf] %vm7562, %v7459
      %7572 = vst.msk [vmem:[#allocation4 + $0x48] sm:$0xf] %vm7562, %v7461
      %7573 = vst.msk [vmem:[#allocation4 + $0x50] sm:$0xf] %vm7562, %v7463
      %7574 = vst.msk [vmem:[#allocation4 + $0x58] sm:$0xf] %vm7562, %v7465
      %7575 = vst.msk [vmem:[#allocation4 + $0x60] sm:$0xf] %vm7562, %v7467
      %7576 = vst.msk [vmem:[#allocation4 + $0x68] sm:$0xf] %vm7562, %v7469
      %7577 = vst.msk [vmem:[#allocation4 + $0x70] sm:$0xf] %vm7562, %v7471
      %7578 = vst.msk [vmem:[#allocation4 + $0x78] sm:$0xf] %vm7562, %v7473
      %7579 = vst.msk [vmem:[#allocation4 + $0x80] sm:$0xf] %vm7562, %v7475
      %7580 = vst.msk [vmem:[#allocation4 + $0x88] sm:$0xf] %vm7562, %v7477
      %7581 = vst.msk [vmem:[#allocation4 + $0x90] sm:$0xf] %vm7562, %v7479
      %7582 = vst.msk [vmem:[#allocation4 + $0x98] sm:$0xf] %vm7562, %v7481
      %7583 = vst.msk [vmem:[#allocation4 + $0xa0] sm:$0xf] %vm7562, %v7483
      %7584 = vst.msk [vmem:[#allocation4 + $0xa8] sm:$0xf] %vm7562, %v7485
      %7585 = vst.msk [vmem:[#allocation4 + $0xb0] sm:$0xf] %vm7562, %v7487
      %7586 = vst.msk [vmem:[#allocation4 + $0xb8] sm:$0xf] %vm7562, %v7489
      %7587 = vst.msk [vmem:[#allocation4 + $0xc0] sm:$0xf] %vm7562, %v7491
      %7588 = vst.msk [vmem:[#allocation4 + $0xc8] sm:$0xf] %vm7562, %v7493
      %7589 = vst.msk [vmem:[#allocation4 + $0xd0] sm:$0xf] %vm7562, %v7495
      %7590 = vst.msk [vmem:[#allocation4 + $0xd8] sm:$0xf] %vm7562, %v7497
      %7591 = vst.msk [vmem:[#allocation4 + $0xe0] sm:$0xf] %vm7562, %v7499
      %7592 = vst.msk [vmem:[#allocation4 + $0xe8] sm:$0xf] %vm7562, %v7501
      %7593 = vst.msk [vmem:[#allocation4 + $0xf0] sm:$0xf] %vm7562, %v7503
      %7594 = vst.msk [vmem:[#allocation4 + $0xf8] sm:$0xf] %vm7562, %v7505
      %7595 = vst.msk [vmem:[#allocation4 + $0x100] sm:$0xf] %vm7562, %v7507
      %7596 = vst.msk [vmem:[#allocation4 + $0x108] sm:$0xf] %vm7562, %v7509
      %7597 = vst.msk [vmem:[#allocation4 + $0x110] sm:$0xf] %vm7562, %v7511
      %7598 = vst.msk [vmem:[#allocation4 + $0x118] sm:$0xf] %vm7562, %v7513
      %7599 = vst.msk [vmem:[#allocation4 + $0x120] sm:$0xf] %vm7562, %v7515
      %7600 = vst.msk [vmem:[#allocation4 + $0x128] sm:$0xf] %vm7562, %v7517
      %7601 = vst.msk [vmem:[#allocation4 + $0x130] sm:$0xf] %vm7562, %v7519
      %7602 = vst.msk [vmem:[#allocation4 + $0x138] sm:$0xf] %vm7562, %v7521
      %v7603 = vld [vmem:[#allocation3] sm:$0xe]
      %v7604 = vld [vmem:[#allocation3 + $0x4] sm:$0xf]
      %v7605 = vld [vmem:[#allocation3 + $0x8] sm:$0x3]
      %v7606 = vld [vmem:[#allocation3 + $0xc] sm:$0xe]
      %v7607 = vld [vmem:[#allocation3 + $0x10] sm:$0xf]
      %v7608 = vld [vmem:[#allocation3 + $0x14] sm:$0x3]
      %v7609 = vld [vmem:[#allocation3 + $0x18] sm:$0xe]
      %v7610 = vld [vmem:[#allocation3 + $0x1c] sm:$0xf]
      %v7611 = vld [vmem:[#allocation3 + $0x20] sm:$0x3]
      %v7612 = vld [vmem:[#allocation3 + $0x24] sm:$0xe]
      %v7613 = vld [vmem:[#allocation3 + $0x28] sm:$0xf]
      %v7614 = vld [vmem:[#allocation3 + $0x2c] sm:$0x3]
      %v7615 = vld [vmem:[#allocation3 + $0x30] sm:$0xe]
      %v7616 = vld [vmem:[#allocation3 + $0x34] sm:$0xf]
      %v7617 = vld [vmem:[#allocation3 + $0x38] sm:$0x3]
      %v7618 = vld [vmem:[#allocation3 + $0x3c] sm:$0xe]
      %v7619 = vld [vmem:[#allocation3 + $0x40] sm:$0xf]
      %v7620 = vld [vmem:[#allocation3 + $0x44] sm:$0x3]
      %v7621 = vld [vmem:[#allocation3 + $0x48] sm:$0xe]
      %v7622 = vld [vmem:[#allocation3 + $0x4c] sm:$0xf]
      %v7623 = vld [vmem:[#allocation3 + $0x50] sm:$0x3]
      %v7624 = vld [vmem:[#allocation3 + $0x54] sm:$0xe]
      %v7625 = vld [vmem:[#allocation3 + $0x58] sm:$0xf]
      %v7626 = vld [vmem:[#allocation3 + $0x5c] sm:$0x3]
      %v7627 = vld [vmem:[#allocation3 + $0x60] sm:$0xe]
      %v7628 = vld [vmem:[#allocation3 + $0x64] sm:$0xf]
      %v7629 = vld [vmem:[#allocation3 + $0x68] sm:$0x3]
      %v7630 = vld [vmem:[#allocation3 + $0x6c] sm:$0xe]
      %v7631 = vld [vmem:[#allocation3 + $0x70] sm:$0xf]
      %v7632 = vld [vmem:[#allocation3 + $0x74] sm:$0x3]
      %v7633 = vld [vmem:[#allocation3 + $0x78] sm:$0xe]
      %v7634 = vld [vmem:[#allocation3 + $0x7c] sm:$0xf]
      %v7635 = vld [vmem:[#allocation3 + $0x80] sm:$0x3]
      %v7636 = vld [vmem:[#allocation3 + $0x84] sm:$0xe]
      %v7637 = vld [vmem:[#allocation3 + $0x88] sm:$0xf]
      %v7638 = vld [vmem:[#allocation3 + $0x8c] sm:$0x3]
      %v7639 = vld [vmem:[#allocation3 + $0x90] sm:$0xe]
      %v7640 = vld [vmem:[#allocation3 + $0x94] sm:$0xf]
      %v7641 = vld [vmem:[#allocation3 + $0x98] sm:$0x3]
      %v7642 = vld [vmem:[#allocation3 + $0x9c] sm:$0xe]
      %v7643 = vld [vmem:[#allocation3 + $0xa0] sm:$0xf]
      %v7644 = vld [vmem:[#allocation3 + $0xa4] sm:$0x3]
      %v7645 = vld [vmem:[#allocation3 + $0xa8] sm:$0xe]
      %v7646 = vld [vmem:[#allocation3 + $0xac] sm:$0xf]
      %v7647 = vld [vmem:[#allocation3 + $0xb0] sm:$0x3]
      %v7648 = vld [vmem:[#allocation3 + $0xb4] sm:$0xe]
      %v7649 = vld [vmem:[#allocation3 + $0xb8] sm:$0xf]
      %v7650 = vld [vmem:[#allocation3 + $0xbc] sm:$0x3]
      %v7651 = vld [vmem:[#allocation3 + $0xc0] sm:$0xe]
      %v7652 = vld [vmem:[#allocation3 + $0xc4] sm:$0xf]
      %v7653 = vld [vmem:[#allocation3 + $0xc8] sm:$0x3]
      %v7654 = vld [vmem:[#allocation3 + $0xcc] sm:$0xe]
      %v7655 = vld [vmem:[#allocation3 + $0xd0] sm:$0xf]
      %v7656 = vld [vmem:[#allocation3 + $0xd4] sm:$0x3]
      %v7657 = vld [vmem:[#allocation3 + $0xd8] sm:$0xe]
      %v7658 = vld [vmem:[#allocation3 + $0xdc] sm:$0xf]
      %v7659 = vld [vmem:[#allocation3 + $0xe0] sm:$0x3]
      %v7660 = vld [vmem:[#allocation3 + $0xe4] sm:$0xe]
      %v7661 = vld [vmem:[#allocation3 + $0xe8] sm:$0xf]
      %v7662 = vld [vmem:[#allocation3 + $0xec] sm:$0x3]
      %vm7663 = vsmask.f32 2304
      %vm7664 = vsmask.f32 6416
      %vm7665 = vmor %vm7663, %vm7664
      %v7667 = vshrl.u32 %v7603, 16
      %v7669 = vrot.slane %v7667, 5
      %v7670 = vshll.u32 %v7603, 16
      %v7672 = vrot.slane %v7670, 6
      %v7673 = vor.u32 %v7669, %v7672
      %v7674 = vrot.slane %v7673, 4
      %v7676 = vshrl.u32 %v7604, 16
      %v7678 = vrot.slane %v7676, 5
      %v7679 = vshll.u32 %v7604, 16
      %v7681 = vrot.slane %v7679, 6
      %v7682 = vor.u32 %v7678, %v7681
      %v7683 = vsel %vm7665, %v7674, %v7682
      %v7684 = vrot.slane %v7682, 4
      %v7686 = vshrl.u32 %v7605, 16
      %v7688 = vrot.slane %v7686, 5
      %v7689 = vshll.u32 %v7605, 16
      %v7691 = vrot.slane %v7689, 6
      %v7692 = vor.u32 %v7688, %v7691
      %v7693 = vsel %vm7665, %v7684, %v7692
      %v7695 = vshrl.u32 %v7606, 16
      %v7697 = vrot.slane %v7695, 5
      %v7698 = vshll.u32 %v7606, 16
      %v7700 = vrot.slane %v7698, 6
      %v7701 = vor.u32 %v7697, %v7700
      %v7702 = vrot.slane %v7701, 4
      %v7704 = vshrl.u32 %v7607, 16
      %v7706 = vrot.slane %v7704, 5
      %v7707 = vshll.u32 %v7607, 16
      %v7709 = vrot.slane %v7707, 6
      %v7710 = vor.u32 %v7706, %v7709
      %v7711 = vsel %vm7665, %v7702, %v7710
      %v7712 = vrot.slane %v7710, 4
      %v7714 = vshrl.u32 %v7608, 16
      %v7716 = vrot.slane %v7714, 5
      %v7717 = vshll.u32 %v7608, 16
      %v7719 = vrot.slane %v7717, 6
      %v7720 = vor.u32 %v7716, %v7719
      %v7721 = vsel %vm7665, %v7712, %v7720
      %v7723 = vshrl.u32 %v7609, 16
      %v7725 = vrot.slane %v7723, 5
      %v7726 = vshll.u32 %v7609, 16
      %v7728 = vrot.slane %v7726, 6
      %v7729 = vor.u32 %v7725, %v7728
      %v7730 = vrot.slane %v7729, 4
      %v7732 = vshrl.u32 %v7610, 16
      %v7734 = vrot.slane %v7732, 5
      %v7735 = vshll.u32 %v7610, 16
      %v7737 = vrot.slane %v7735, 6
      %v7738 = vor.u32 %v7734, %v7737
      %v7739 = vsel %vm7665, %v7730, %v7738
      %v7740 = vrot.slane %v7738, 4
      %v7742 = vshrl.u32 %v7611, 16
      %v7744 = vrot.slane %v7742, 5
      %v7745 = vshll.u32 %v7611, 16
      %v7747 = vrot.slane %v7745, 6
      %v7748 = vor.u32 %v7744, %v7747
      %v7749 = vsel %vm7665, %v7740, %v7748
      %v7751 = vshrl.u32 %v7612, 16
      %v7753 = vrot.slane %v7751, 5
      %v7754 = vshll.u32 %v7612, 16
      %v7756 = vrot.slane %v7754, 6
      %v7757 = vor.u32 %v7753, %v7756
      %v7758 = vrot.slane %v7757, 4
      %v7760 = vshrl.u32 %v7613, 16
      %v7762 = vrot.slane %v7760, 5
      %v7763 = vshll.u32 %v7613, 16
      %v7765 = vrot.slane %v7763, 6
      %v7766 = vor.u32 %v7762, %v7765
      %v7767 = vsel %vm7665, %v7758, %v7766
      %v7768 = vrot.slane %v7766, 4
      %v7770 = vshrl.u32 %v7614, 16
      %v7772 = vrot.slane %v7770, 5
      %v7773 = vshll.u32 %v7614, 16
      %v7775 = vrot.slane %v7773, 6
      %v7776 = vor.u32 %v7772, %v7775
      %v7777 = vsel %vm7665, %v7768, %v7776
      %v7779 = vshrl.u32 %v7615, 16
      %v7781 = vrot.slane %v7779, 5
      %v7782 = vshll.u32 %v7615, 16
      %v7784 = vrot.slane %v7782, 6
      %v7785 = vor.u32 %v7781, %v7784
      %v7786 = vrot.slane %v7785, 4
      %v7788 = vshrl.u32 %v7616, 16
      %v7790 = vrot.slane %v7788, 5
      %v7791 = vshll.u32 %v7616, 16
      %v7793 = vrot.slane %v7791, 6
      %v7794 = vor.u32 %v7790, %v7793
      %v7795 = vsel %vm7665, %v7786, %v7794
      %v7796 = vrot.slane %v7794, 4
      %v7798 = vshrl.u32 %v7617, 16
      %v7800 = vrot.slane %v7798, 5
      %v7801 = vshll.u32 %v7617, 16
      %v7803 = vrot.slane %v7801, 6
      %v7804 = vor.u32 %v7800, %v7803
      %v7805 = vsel %vm7665, %v7796, %v7804
      %v7807 = vshrl.u32 %v7618, 16
      %v7809 = vrot.slane %v7807, 5
      %v7810 = vshll.u32 %v7618, 16
      %v7812 = vrot.slane %v7810, 6
      %v7813 = vor.u32 %v7809, %v7812
      %v7814 = vrot.slane %v7813, 4
      %v7816 = vshrl.u32 %v7619, 16
      %v7818 = vrot.slane %v7816, 5
      %v7819 = vshll.u32 %v7619, 16
      %v7821 = vrot.slane %v7819, 6
      %v7822 = vor.u32 %v7818, %v7821
      %v7823 = vsel %vm7665, %v7814, %v7822
      %v7824 = vrot.slane %v7822, 4
      %v7826 = vshrl.u32 %v7620, 16
      %v7828 = vrot.slane %v7826, 5
      %v7829 = vshll.u32 %v7620, 16
      %v7831 = vrot.slane %v7829, 6
      %v7832 = vor.u32 %v7828, %v7831
      %v7833 = vsel %vm7665, %v7824, %v7832
      %v7835 = vshrl.u32 %v7621, 16
      %v7837 = vrot.slane %v7835, 5
      %v7838 = vshll.u32 %v7621, 16
      %v7840 = vrot.slane %v7838, 6
      %v7841 = vor.u32 %v7837, %v7840
      %v7842 = vrot.slane %v7841, 4
      %v7844 = vshrl.u32 %v7622, 16
      %v7846 = vrot.slane %v7844, 5
      %v7847 = vshll.u32 %v7622, 16
      %v7849 = vrot.slane %v7847, 6
      %v7850 = vor.u32 %v7846, %v7849
      %v7851 = vsel %vm7665, %v7842, %v7850
      %v7852 = vrot.slane %v7850, 4
      %v7854 = vshrl.u32 %v7623, 16
      %v7856 = vrot.slane %v7854, 5
      %v7857 = vshll.u32 %v7623, 16
      %v7859 = vrot.slane %v7857, 6
      %v7860 = vor.u32 %v7856, %v7859
      %v7861 = vsel %vm7665, %v7852, %v7860
      %v7863 = vshrl.u32 %v7624, 16
      %v7865 = vrot.slane %v7863, 5
      %v7866 = vshll.u32 %v7624, 16
      %v7868 = vrot.slane %v7866, 6
      %v7869 = vor.u32 %v7865, %v7868
      %v7870 = vrot.slane %v7869, 4
      %v7872 = vshrl.u32 %v7625, 16
      %v7874 = vrot.slane %v7872, 5
      %v7875 = vshll.u32 %v7625, 16
      %v7877 = vrot.slane %v7875, 6
      %v7878 = vor.u32 %v7874, %v7877
      %v7879 = vsel %vm7665, %v7870, %v7878
      %v7880 = vrot.slane %v7878, 4
      %v7882 = vshrl.u32 %v7626, 16
      %v7884 = vrot.slane %v7882, 5
      %v7885 = vshll.u32 %v7626, 16
      %v7887 = vrot.slane %v7885, 6
      %v7888 = vor.u32 %v7884, %v7887
      %v7889 = vsel %vm7665, %v7880, %v7888
      %v7891 = vshrl.u32 %v7627, 16
      %v7893 = vrot.slane %v7891, 5
      %v7894 = vshll.u32 %v7627, 16
      %v7896 = vrot.slane %v7894, 6
      %v7897 = vor.u32 %v7893, %v7896
      %v7898 = vrot.slane %v7897, 4
      %v7900 = vshrl.u32 %v7628, 16
      %v7902 = vrot.slane %v7900, 5
      %v7903 = vshll.u32 %v7628, 16
      %v7905 = vrot.slane %v7903, 6
      %v7906 = vor.u32 %v7902, %v7905
      %v7907 = vsel %vm7665, %v7898, %v7906
      %v7908 = vrot.slane %v7906, 4
      %v7910 = vshrl.u32 %v7629, 16
      %v7912 = vrot.slane %v7910, 5
      %v7913 = vshll.u32 %v7629, 16
      %v7915 = vrot.slane %v7913, 6
      %v7916 = vor.u32 %v7912, %v7915
      %v7917 = vsel %vm7665, %v7908, %v7916
      %v7919 = vshrl.u32 %v7630, 16
      %v7921 = vrot.slane %v7919, 5
      %v7922 = vshll.u32 %v7630, 16
      %v7924 = vrot.slane %v7922, 6
      %v7925 = vor.u32 %v7921, %v7924
      %v7926 = vrot.slane %v7925, 4
      %v7928 = vshrl.u32 %v7631, 16
      %v7930 = vrot.slane %v7928, 5
      %v7931 = vshll.u32 %v7631, 16
      %v7933 = vrot.slane %v7931, 6
      %v7934 = vor.u32 %v7930, %v7933
      %v7935 = vsel %vm7665, %v7926, %v7934
      %v7936 = vrot.slane %v7934, 4
      %v7938 = vshrl.u32 %v7632, 16
      %v7940 = vrot.slane %v7938, 5
      %v7941 = vshll.u32 %v7632, 16
      %v7943 = vrot.slane %v7941, 6
      %v7944 = vor.u32 %v7940, %v7943
      %v7945 = vsel %vm7665, %v7936, %v7944
      %v7947 = vshrl.u32 %v7633, 16
      %v7949 = vrot.slane %v7947, 5
      %v7950 = vshll.u32 %v7633, 16
      %v7952 = vrot.slane %v7950, 6
      %v7953 = vor.u32 %v7949, %v7952
      %v7954 = vrot.slane %v7953, 4
      %v7956 = vshrl.u32 %v7634, 16
      %v7958 = vrot.slane %v7956, 5
      %v7959 = vshll.u32 %v7634, 16
      %v7961 = vrot.slane %v7959, 6
      %v7962 = vor.u32 %v7958, %v7961
      %v7963 = vsel %vm7665, %v7954, %v7962
      %v7964 = vrot.slane %v7962, 4
      %v7966 = vshrl.u32 %v7635, 16
      %v7968 = vrot.slane %v7966, 5
      %v7969 = vshll.u32 %v7635, 16
      %v7971 = vrot.slane %v7969, 6
      %v7972 = vor.u32 %v7968, %v7971
      %v7973 = vsel %vm7665, %v7964, %v7972
      %v7975 = vshrl.u32 %v7636, 16
      %v7977 = vrot.slane %v7975, 5
      %v7978 = vshll.u32 %v7636, 16
      %v7980 = vrot.slane %v7978, 6
      %v7981 = vor.u32 %v7977, %v7980
      %v7982 = vrot.slane %v7981, 4
      %v7984 = vshrl.u32 %v7637, 16
      %v7986 = vrot.slane %v7984, 5
      %v7987 = vshll.u32 %v7637, 16
      %v7989 = vrot.slane %v7987, 6
      %v7990 = vor.u32 %v7986, %v7989
      %v7991 = vsel %vm7665, %v7982, %v7990
      %v7992 = vrot.slane %v7990, 4
      %v7994 = vshrl.u32 %v7638, 16
      %v7996 = vrot.slane %v7994, 5
      %v7997 = vshll.u32 %v7638, 16
      %v7999 = vrot.slane %v7997, 6
      %v8000 = vor.u32 %v7996, %v7999
      %v8001 = vsel %vm7665, %v7992, %v8000
      %v8003 = vshrl.u32 %v7639, 16
      %v8005 = vrot.slane %v8003, 5
      %v8006 = vshll.u32 %v7639, 16
      %v8008 = vrot.slane %v8006, 6
      %v8009 = vor.u32 %v8005, %v8008
      %v8010 = vrot.slane %v8009, 4
      %v8012 = vshrl.u32 %v7640, 16
      %v8014 = vrot.slane %v8012, 5
      %v8015 = vshll.u32 %v7640, 16
      %v8017 = vrot.slane %v8015, 6
      %v8018 = vor.u32 %v8014, %v8017
      %v8019 = vsel %vm7665, %v8010, %v8018
      %v8020 = vrot.slane %v8018, 4
      %v8022 = vshrl.u32 %v7641, 16
      %v8024 = vrot.slane %v8022, 5
      %v8025 = vshll.u32 %v7641, 16
      %v8027 = vrot.slane %v8025, 6
      %v8028 = vor.u32 %v8024, %v8027
      %v8029 = vsel %vm7665, %v8020, %v8028
      %v8031 = vshrl.u32 %v7642, 16
      %v8033 = vrot.slane %v8031, 5
      %v8034 = vshll.u32 %v7642, 16
      %v8036 = vrot.slane %v8034, 6
      %v8037 = vor.u32 %v8033, %v8036
      %v8038 = vrot.slane %v8037, 4
      %v8040 = vshrl.u32 %v7643, 16
      %v8042 = vrot.slane %v8040, 5
      %v8043 = vshll.u32 %v7643, 16
      %v8045 = vrot.slane %v8043, 6
      %v8046 = vor.u32 %v8042, %v8045
      %v8047 = vsel %vm7665, %v8038, %v8046
      %v8048 = vrot.slane %v8046, 4
      %v8050 = vshrl.u32 %v7644, 16
      %v8052 = vrot.slane %v8050, 5
      %v8053 = vshll.u32 %v7644, 16
      %v8055 = vrot.slane %v8053, 6
      %v8056 = vor.u32 %v8052, %v8055
      %v8057 = vsel %vm7665, %v8048, %v8056
      %v8059 = vshrl.u32 %v7645, 16
      %v8061 = vrot.slane %v8059, 5
      %v8062 = vshll.u32 %v7645, 16
      %v8064 = vrot.slane %v8062, 6
      %v8065 = vor.u32 %v8061, %v8064
      %v8066 = vrot.slane %v8065, 4
      %v8068 = vshrl.u32 %v7646, 16
      %v8070 = vrot.slane %v8068, 5
      %v8071 = vshll.u32 %v7646, 16
      %v8073 = vrot.slane %v8071, 6
      %v8074 = vor.u32 %v8070, %v8073
      %v8075 = vsel %vm7665, %v8066, %v8074
      %v8076 = vrot.slane %v8074, 4
      %v8078 = vshrl.u32 %v7647, 16
      %v8080 = vrot.slane %v8078, 5
      %v8081 = vshll.u32 %v7647, 16
      %v8083 = vrot.slane %v8081, 6
      %v8084 = vor.u32 %v8080, %v8083
      %v8085 = vsel %vm7665, %v8076, %v8084
      %v8087 = vshrl.u32 %v7648, 16
      %v8089 = vrot.slane %v8087, 5
      %v8090 = vshll.u32 %v7648, 16
      %v8092 = vrot.slane %v8090, 6
      %v8093 = vor.u32 %v8089, %v8092
      %v8094 = vrot.slane %v8093, 4
      %v8096 = vshrl.u32 %v7649, 16
      %v8098 = vrot.slane %v8096, 5
      %v8099 = vshll.u32 %v7649, 16
      %v8101 = vrot.slane %v8099, 6
      %v8102 = vor.u32 %v8098, %v8101
      %v8103 = vsel %vm7665, %v8094, %v8102
      %v8104 = vrot.slane %v8102, 4
      %v8106 = vshrl.u32 %v7650, 16
      %v8108 = vrot.slane %v8106, 5
      %v8109 = vshll.u32 %v7650, 16
      %v8111 = vrot.slane %v8109, 6
      %v8112 = vor.u32 %v8108, %v8111
      %v8113 = vsel %vm7665, %v8104, %v8112
      %v8115 = vshrl.u32 %v7651, 16
      %v8117 = vrot.slane %v8115, 5
      %v8118 = vshll.u32 %v7651, 16
      %v8120 = vrot.slane %v8118, 6
      %v8121 = vor.u32 %v8117, %v8120
      %v8122 = vrot.slane %v8121, 4
      %v8124 = vshrl.u32 %v7652, 16
      %v8126 = vrot.slane %v8124, 5
      %v8127 = vshll.u32 %v7652, 16
      %v8129 = vrot.slane %v8127, 6
      %v8130 = vor.u32 %v8126, %v8129
      %v8131 = vsel %vm7665, %v8122, %v8130
      %v8132 = vrot.slane %v8130, 4
      %v8134 = vshrl.u32 %v7653, 16
      %v8136 = vrot.slane %v8134, 5
      %v8137 = vshll.u32 %v7653, 16
      %v8139 = vrot.slane %v8137, 6
      %v8140 = vor.u32 %v8136, %v8139
      %v8141 = vsel %vm7665, %v8132, %v8140
      %v8143 = vshrl.u32 %v7654, 16
      %v8145 = vrot.slane %v8143, 5
      %v8146 = vshll.u32 %v7654, 16
      %v8148 = vrot.slane %v8146, 6
      %v8149 = vor.u32 %v8145, %v8148
      %v8150 = vrot.slane %v8149, 4
      %v8152 = vshrl.u32 %v7655, 16
      %v8154 = vrot.slane %v8152, 5
      %v8155 = vshll.u32 %v7655, 16
      %v8157 = vrot.slane %v8155, 6
      %v8158 = vor.u32 %v8154, %v8157
      %v8159 = vsel %vm7665, %v8150, %v8158
      %v8160 = vrot.slane %v8158, 4
      %v8162 = vshrl.u32 %v7656, 16
      %v8164 = vrot.slane %v8162, 5
      %v8165 = vshll.u32 %v7656, 16
      %v8167 = vrot.slane %v8165, 6
      %v8168 = vor.u32 %v8164, %v8167
      %v8169 = vsel %vm7665, %v8160, %v8168
      %v8171 = vshrl.u32 %v7657, 16
      %v8173 = vrot.slane %v8171, 5
      %v8174 = vshll.u32 %v7657, 16
      %v8176 = vrot.slane %v8174, 6
      %v8177 = vor.u32 %v8173, %v8176
      %v8178 = vrot.slane %v8177, 4
      %v8180 = vshrl.u32 %v7658, 16
      %v8182 = vrot.slane %v8180, 5
      %v8183 = vshll.u32 %v7658, 16
      %v8185 = vrot.slane %v8183, 6
      %v8186 = vor.u32 %v8182, %v8185
      %v8187 = vsel %vm7665, %v8178, %v8186
      %v8188 = vrot.slane %v8186, 4
      %v8190 = vshrl.u32 %v7659, 16
      %v8192 = vrot.slane %v8190, 5
      %v8193 = vshll.u32 %v7659, 16
      %v8195 = vrot.slane %v8193, 6
      %v8196 = vor.u32 %v8192, %v8195
      %v8197 = vsel %vm7665, %v8188, %v8196
      %v8199 = vshrl.u32 %v7660, 16
      %v8201 = vrot.slane %v8199, 5
      %v8202 = vshll.u32 %v7660, 16
      %v8204 = vrot.slane %v8202, 6
      %v8205 = vor.u32 %v8201, %v8204
      %v8206 = vrot.slane %v8205, 4
      %v8208 = vshrl.u32 %v7661, 16
      %v8210 = vrot.slane %v8208, 5
      %v8211 = vshll.u32 %v7661, 16
      %v8213 = vrot.slane %v8211, 6
      %v8214 = vor.u32 %v8210, %v8213
      %v8215 = vsel %vm7665, %v8206, %v8214
      %v8216 = vrot.slane %v8214, 4
      %v8218 = vshrl.u32 %v7662, 16
      %v8220 = vrot.slane %v8218, 5
      %v8221 = vshll.u32 %v7662, 16
      %v8223 = vrot.slane %v8221, 6
      %v8224 = vor.u32 %v8220, %v8223
      %v8225 = vsel %vm7665, %v8216, %v8224
      %8226 = vrot.lane.b32.xlu0 %v7683, 96
      %v8227 = vpop.permute.xlu0 %8226
      %8228 = vrot.lane.b32.xlu0 %v7693, 96
      %v8229 = vpop.permute.xlu0 %8228
      %8230 = vrot.lane.b32.xlu0 %v7711, 96
      %v8231 = vpop.permute.xlu0 %8230
      %8232 = vrot.lane.b32.xlu0 %v7721, 96
      %v8233 = vpop.permute.xlu0 %8232
      %8234 = vrot.lane.b32.xlu0 %v7739, 96
      %v8235 = vpop.permute.xlu0 %8234
      %8236 = vrot.lane.b32.xlu0 %v7749, 96
      %v8237 = vpop.permute.xlu0 %8236
      %8238 = vrot.lane.b32.xlu0 %v7767, 96
      %v8239 = vpop.permute.xlu0 %8238
      %8240 = vrot.lane.b32.xlu0 %v7777, 96
      %v8241 = vpop.permute.xlu0 %8240
      %8242 = vrot.lane.b32.xlu0 %v7795, 96
      %v8243 = vpop.permute.xlu0 %8242
      %8244 = vrot.lane.b32.xlu0 %v7805, 96
      %v8245 = vpop.permute.xlu0 %8244
      %8246 = vrot.lane.b32.xlu0 %v7823, 96
      %v8247 = vpop.permute.xlu0 %8246
      %8248 = vrot.lane.b32.xlu0 %v7833, 96
      %v8249 = vpop.permute.xlu0 %8248
      %8250 = vrot.lane.b32.xlu0 %v7851, 96
      %v8251 = vpop.permute.xlu0 %8250
      %8252 = vrot.lane.b32.xlu0 %v7861, 96
      %v8253 = vpop.permute.xlu0 %8252
      %8254 = vrot.lane.b32.xlu0 %v7879, 96
      %v8255 = vpop.permute.xlu0 %8254
      %8256 = vrot.lane.b32.xlu0 %v7889, 96
      %v8257 = vpop.permute.xlu0 %8256
      %8258 = vrot.lane.b32.xlu0 %v7907, 96
      %v8259 = vpop.permute.xlu0 %8258
      %8260 = vrot.lane.b32.xlu0 %v7917, 96
      %v8261 = vpop.permute.xlu0 %8260
      %8262 = vrot.lane.b32.xlu0 %v7935, 96
      %v8263 = vpop.permute.xlu0 %8262
      %8264 = vrot.lane.b32.xlu0 %v7945, 96
      %v8265 = vpop.permute.xlu0 %8264
      %8266 = vrot.lane.b32.xlu0 %v7963, 96
      %v8267 = vpop.permute.xlu0 %8266
      %8268 = vrot.lane.b32.xlu0 %v7973, 96
      %v8269 = vpop.permute.xlu0 %8268
      %8270 = vrot.lane.b32.xlu0 %v7991, 96
      %v8271 = vpop.permute.xlu0 %8270
      %8272 = vrot.lane.b32.xlu0 %v8001, 96
      %v8273 = vpop.permute.xlu0 %8272
      %8274 = vrot.lane.b32.xlu0 %v8019, 96
      %v8275 = vpop.permute.xlu0 %8274
      %8276 = vrot.lane.b32.xlu0 %v8029, 96
      %v8277 = vpop.permute.xlu0 %8276
      %8278 = vrot.lane.b32.xlu0 %v8047, 96
      %v8279 = vpop.permute.xlu0 %8278
      %8280 = vrot.lane.b32.xlu0 %v8057, 96
      %v8281 = vpop.permute.xlu0 %8280
      %8282 = vrot.lane.b32.xlu0 %v8075, 96
      %v8283 = vpop.permute.xlu0 %8282
      %8284 = vrot.lane.b32.xlu0 %v8085, 96
      %v8285 = vpop.permute.xlu0 %8284
      %8286 = vrot.lane.b32.xlu0 %v8103, 96
      %v8287 = vpop.permute.xlu0 %8286
      %8288 = vrot.lane.b32.xlu0 %v8113, 96
      %v8289 = vpop.permute.xlu0 %8288
      %8290 = vrot.lane.b32.xlu0 %v8131, 96
      %v8291 = vpop.permute.xlu0 %8290
      %8292 = vrot.lane.b32.xlu0 %v8141, 96
      %v8293 = vpop.permute.xlu0 %8292
      %8294 = vrot.lane.b32.xlu0 %v8159, 96
      %v8295 = vpop.permute.xlu0 %8294
      %8296 = vrot.lane.b32.xlu0 %v8169, 96
      %v8297 = vpop.permute.xlu0 %8296
      %8298 = vrot.lane.b32.xlu0 %v8187, 96
      %v8299 = vpop.permute.xlu0 %8298
      %8300 = vrot.lane.b32.xlu0 %v8197, 96
      %v8301 = vpop.permute.xlu0 %8300
      %8302 = vrot.lane.b32.xlu0 %v8215, 96
      %v8303 = vpop.permute.xlu0 %8302
      %8304 = vrot.lane.b32.xlu0 %v8225, 96
      %v8305 = vpop.permute.xlu0 %8304
      %vm8346 = vcmask 1044224
      %8347 = vst.msk [vmem:[#allocation4] sm:$0xf] %vm8346, %v8227
      %8348 = vst.msk [vmem:[#allocation4 + $0x8] sm:$0xf] %vm8346, %v8229
      %8349 = vst.msk [vmem:[#allocation4 + $0x10] sm:$0xf] %vm8346, %v8231
      %8350 = vst.msk [vmem:[#allocation4 + $0x18] sm:$0xf] %vm8346, %v8233
      %8351 = vst.msk [vmem:[#allocation4 + $0x20] sm:$0xf] %vm8346, %v8235
      %8352 = vst.msk [vmem:[#allocation4 + $0x28] sm:$0xf] %vm8346, %v8237
      %8353 = vst.msk [vmem:[#allocation4 + $0x30] sm:$0xf] %vm8346, %v8239
      %8354 = vst.msk [vmem:[#allocation4 + $0x38] sm:$0xf] %vm8346, %v8241
      %8355 = vst.msk [vmem:[#allocation4 + $0x40] sm:$0xf] %vm8346, %v8243
      %8356 = vst.msk [vmem:[#allocation4 + $0x48] sm:$0xf] %vm8346, %v8245
      %8357 = vst.msk [vmem:[#allocation4 + $0x50] sm:$0xf] %vm8346, %v8247
      %8358 = vst.msk [vmem:[#allocation4 + $0x58] sm:$0xf] %vm8346, %v8249
      %8359 = vst.msk [vmem:[#allocation4 + $0x60] sm:$0xf] %vm8346, %v8251
      %8360 = vst.msk [vmem:[#allocation4 + $0x68] sm:$0xf] %vm8346, %v8253
      %8361 = vst.msk [vmem:[#allocation4 + $0x70] sm:$0xf] %vm8346, %v8255
      %8362 = vst.msk [vmem:[#allocation4 + $0x78] sm:$0xf] %vm8346, %v8257
      %8363 = vst.msk [vmem:[#allocation4 + $0x80] sm:$0xf] %vm8346, %v8259
      %8364 = vst.msk [vmem:[#allocation4 + $0x88] sm:$0xf] %vm8346, %v8261
      %8365 = vst.msk [vmem:[#allocation4 + $0x90] sm:$0xf] %vm8346, %v8263
      %8366 = vst.msk [vmem:[#allocation4 + $0x98] sm:$0xf] %vm8346, %v8265
      %8367 = vst.msk [vmem:[#allocation4 + $0xa0] sm:$0xf] %vm8346, %v8267
      %8368 = vst.msk [vmem:[#allocation4 + $0xa8] sm:$0xf] %vm8346, %v8269
      %8369 = vst.msk [vmem:[#allocation4 + $0xb0] sm:$0xf] %vm8346, %v8271
      %8370 = vst.msk [vmem:[#allocation4 + $0xb8] sm:$0xf] %vm8346, %v8273
      %8371 = vst.msk [vmem:[#allocation4 + $0xc0] sm:$0xf] %vm8346, %v8275
      %8372 = vst.msk [vmem:[#allocation4 + $0xc8] sm:$0xf] %vm8346, %v8277
      %8373 = vst.msk [vmem:[#allocation4 + $0xd0] sm:$0xf] %vm8346, %v8279
      %8374 = vst.msk [vmem:[#allocation4 + $0xd8] sm:$0xf] %vm8346, %v8281
      %8375 = vst.msk [vmem:[#allocation4 + $0xe0] sm:$0xf] %vm8346, %v8283
      %8376 = vst.msk [vmem:[#allocation4 + $0xe8] sm:$0xf] %vm8346, %v8285
      %8377 = vst.msk [vmem:[#allocation4 + $0xf0] sm:$0xf] %vm8346, %v8287
      %8378 = vst.msk [vmem:[#allocation4 + $0xf8] sm:$0xf] %vm8346, %v8289
      %8379 = vst.msk [vmem:[#allocation4 + $0x100] sm:$0xf] %vm8346, %v8291
      %8380 = vst.msk [vmem:[#allocation4 + $0x108] sm:$0xf] %vm8346, %v8293
      %8381 = vst.msk [vmem:[#allocation4 + $0x110] sm:$0xf] %vm8346, %v8295
      %8382 = vst.msk [vmem:[#allocation4 + $0x118] sm:$0xf] %vm8346, %v8297
      %8383 = vst.msk [vmem:[#allocation4 + $0x120] sm:$0xf] %vm8346, %v8299
      %8384 = vst.msk [vmem:[#allocation4 + $0x128] sm:$0xf] %vm8346, %v8301
      %8385 = vst.msk [vmem:[#allocation4 + $0x130] sm:$0xf] %vm8346, %v8303
      %8386 = vst.msk [vmem:[#allocation4 + $0x138] sm:$0xf] %vm8346, %v8305
      %v8387 = vld [vmem:[#allocation3] sm:$0xc]
      %v8388 = vld [vmem:[#allocation3 + $0x4] sm:$0xf]
      %v8389 = vld [vmem:[#allocation3 + $0x8] sm:$0x3]
      %v8390 = vld [vmem:[#allocation3 + $0xc] sm:$0xc]
      %v8391 = vld [vmem:[#allocation3 + $0x10] sm:$0xf]
      %v8392 = vld [vmem:[#allocation3 + $0x14] sm:$0x3]
      %v8393 = vld [vmem:[#allocation3 + $0x18] sm:$0xc]
      %v8394 = vld [vmem:[#allocation3 + $0x1c] sm:$0xf]
      %v8395 = vld [vmem:[#allocation3 + $0x20] sm:$0x3]
      %v8396 = vld [vmem:[#allocation3 + $0x24] sm:$0xc]
      %v8397 = vld [vmem:[#allocation3 + $0x28] sm:$0xf]
      %v8398 = vld [vmem:[#allocation3 + $0x2c] sm:$0x3]
      %v8399 = vld [vmem:[#allocation3 + $0x30] sm:$0xc]
      %v8400 = vld [vmem:[#allocation3 + $0x34] sm:$0xf]
      %v8401 = vld [vmem:[#allocation3 + $0x38] sm:$0x3]
      %v8402 = vld [vmem:[#allocation3 + $0x3c] sm:$0xc]
      %v8403 = vld [vmem:[#allocation3 + $0x40] sm:$0xf]
      %v8404 = vld [vmem:[#allocation3 + $0x44] sm:$0x3]
      %v8405 = vld [vmem:[#allocation3 + $0x48] sm:$0xc]
      %v8406 = vld [vmem:[#allocation3 + $0x4c] sm:$0xf]
      %v8407 = vld [vmem:[#allocation3 + $0x50] sm:$0x3]
      %v8408 = vld [vmem:[#allocation3 + $0x54] sm:$0xc]
      %v8409 = vld [vmem:[#allocation3 + $0x58] sm:$0xf]
      %v8410 = vld [vmem:[#allocation3 + $0x5c] sm:$0x3]
      %v8411 = vld [vmem:[#allocation3 + $0x60] sm:$0xc]
      %v8412 = vld [vmem:[#allocation3 + $0x64] sm:$0xf]
      %v8413 = vld [vmem:[#allocation3 + $0x68] sm:$0x3]
      %v8414 = vld [vmem:[#allocation3 + $0x6c] sm:$0xc]
      %v8415 = vld [vmem:[#allocation3 + $0x70] sm:$0xf]
      %v8416 = vld [vmem:[#allocation3 + $0x74] sm:$0x3]
      %v8417 = vld [vmem:[#allocation3 + $0x78] sm:$0xc]
      %v8418 = vld [vmem:[#allocation3 + $0x7c] sm:$0xf]
      %v8419 = vld [vmem:[#allocation3 + $0x80] sm:$0x3]
      %v8420 = vld [vmem:[#allocation3 + $0x84] sm:$0xc]
      %v8421 = vld [vmem:[#allocation3 + $0x88] sm:$0xf]
      %v8422 = vld [vmem:[#allocation3 + $0x8c] sm:$0x3]
      %v8423 = vld [vmem:[#allocation3 + $0x90] sm:$0xc]
      %v8424 = vld [vmem:[#allocation3 + $0x94] sm:$0xf]
      %v8425 = vld [vmem:[#allocation3 + $0x98] sm:$0x3]
      %v8426 = vld [vmem:[#allocation3 + $0x9c] sm:$0xc]
      %v8427 = vld [vmem:[#allocation3 + $0xa0] sm:$0xf]
      %v8428 = vld [vmem:[#allocation3 + $0xa4] sm:$0x3]
      %v8429 = vld [vmem:[#allocation3 + $0xa8] sm:$0xc]
      %v8430 = vld [vmem:[#allocation3 + $0xac] sm:$0xf]
      %v8431 = vld [vmem:[#allocation3 + $0xb0] sm:$0x3]
      %v8432 = vld [vmem:[#allocation3 + $0xb4] sm:$0xc]
      %v8433 = vld [vmem:[#allocation3 + $0xb8] sm:$0xf]
      %v8434 = vld [vmem:[#allocation3 + $0xbc] sm:$0x3]
      %v8435 = vld [vmem:[#allocation3 + $0xc0] sm:$0xc]
      %v8436 = vld [vmem:[#allocation3 + $0xc4] sm:$0xf]
      %v8437 = vld [vmem:[#allocation3 + $0xc8] sm:$0x3]
      %v8438 = vld [vmem:[#allocation3 + $0xcc] sm:$0xc]
      %v8439 = vld [vmem:[#allocation3 + $0xd0] sm:$0xf]
      %v8440 = vld [vmem:[#allocation3 + $0xd4] sm:$0x3]
      %v8441 = vld [vmem:[#allocation3 + $0xd8] sm:$0xc]
      %v8442 = vld [vmem:[#allocation3 + $0xdc] sm:$0xf]
      %v8443 = vld [vmem:[#allocation3 + $0xe0] sm:$0x3]
      %v8444 = vld [vmem:[#allocation3 + $0xe4] sm:$0xc]
      %v8445 = vld [vmem:[#allocation3 + $0xe8] sm:$0xf]
      %v8446 = vld [vmem:[#allocation3 + $0xec] sm:$0x3]
      %vm8507 = vcmask 1041408
      %vm8508 = vcmask 1045508
      %vm8509 = vmor %vm8507, %vm8508
      %v8510 = vrot.slane %v8387, 6
      %v8511 = vrot.slane %v8510, 4
      %v8512 = vrot.slane %v8388, 6
      %v8513 = vsel %vm8509, %v8511, %v8512
      %v8514 = vrot.slane %v8512, 4
      %v8515 = vrot.slane %v8389, 6
      %v8516 = vsel %vm8509, %v8514, %v8515
      %v8517 = vrot.slane %v8390, 6
      %v8518 = vrot.slane %v8517, 4
      %v8519 = vrot.slane %v8391, 6
      %v8520 = vsel %vm8509, %v8518, %v8519
      %v8521 = vrot.slane %v8519, 4
      %v8522 = vrot.slane %v8392, 6
      %v8523 = vsel %vm8509, %v8521, %v8522
      %v8524 = vrot.slane %v8393, 6
      %v8525 = vrot.slane %v8524, 4
      %v8526 = vrot.slane %v8394, 6
      %v8527 = vsel %vm8509, %v8525, %v8526
      %v8528 = vrot.slane %v8526, 4
      %v8529 = vrot.slane %v8395, 6
      %v8530 = vsel %vm8509, %v8528, %v8529
      %v8531 = vrot.slane %v8396, 6
      %v8532 = vrot.slane %v8531, 4
      %v8533 = vrot.slane %v8397, 6
      %v8534 = vsel %vm8509, %v8532, %v8533
      %v8535 = vrot.slane %v8533, 4
      %v8536 = vrot.slane %v8398, 6
      %v8537 = vsel %vm8509, %v8535, %v8536
      %v8538 = vrot.slane %v8399, 6
      %v8539 = vrot.slane %v8538, 4
      %v8540 = vrot.slane %v8400, 6
      %v8541 = vsel %vm8509, %v8539, %v8540
      %v8542 = vrot.slane %v8540, 4
      %v8543 = vrot.slane %v8401, 6
      %v8544 = vsel %vm8509, %v8542, %v8543
      %v8545 = vrot.slane %v8402, 6
      %v8546 = vrot.slane %v8545, 4
      %v8547 = vrot.slane %v8403, 6
      %v8548 = vsel %vm8509, %v8546, %v8547
      %v8549 = vrot.slane %v8547, 4
      %v8550 = vrot.slane %v8404, 6
      %v8551 = vsel %vm8509, %v8549, %v8550
      %v8552 = vrot.slane %v8405, 6
      %v8553 = vrot.slane %v8552, 4
      %v8554 = vrot.slane %v8406, 6
      %v8555 = vsel %vm8509, %v8553, %v8554
      %v8556 = vrot.slane %v8554, 4
      %v8557 = vrot.slane %v8407, 6
      %v8558 = vsel %vm8509, %v8556, %v8557
      %v8559 = vrot.slane %v8408, 6
      %v8560 = vrot.slane %v8559, 4
      %v8561 = vrot.slane %v8409, 6
      %v8562 = vsel %vm8509, %v8560, %v8561
      %v8563 = vrot.slane %v8561, 4
      %v8564 = vrot.slane %v8410, 6
      %v8565 = vsel %vm8509, %v8563, %v8564
      %v8566 = vrot.slane %v8411, 6
      %v8567 = vrot.slane %v8566, 4
      %v8568 = vrot.slane %v8412, 6
      %v8569 = vsel %vm8509, %v8567, %v8568
      %v8570 = vrot.slane %v8568, 4
      %v8571 = vrot.slane %v8413, 6
      %v8572 = vsel %vm8509, %v8570, %v8571
      %v8573 = vrot.slane %v8414, 6
      %v8574 = vrot.slane %v8573, 4
      %v8575 = vrot.slane %v8415, 6
      %v8576 = vsel %vm8509, %v8574, %v8575
      %v8577 = vrot.slane %v8575, 4
      %v8578 = vrot.slane %v8416, 6
      %v8579 = vsel %vm8509, %v8577, %v8578
      %v8580 = vrot.slane %v8417, 6
      %v8581 = vrot.slane %v8580, 4
      %v8582 = vrot.slane %v8418, 6
      %v8583 = vsel %vm8509, %v8581, %v8582
      %v8584 = vrot.slane %v8582, 4
      %v8585 = vrot.slane %v8419, 6
      %v8586 = vsel %vm8509, %v8584, %v8585
      %v8587 = vrot.slane %v8420, 6
      %v8588 = vrot.slane %v8587, 4
      %v8589 = vrot.slane %v8421, 6
      %v8590 = vsel %vm8509, %v8588, %v8589
      %v8591 = vrot.slane %v8589, 4
      %v8592 = vrot.slane %v8422, 6
      %v8593 = vsel %vm8509, %v8591, %v8592
      %v8594 = vrot.slane %v8423, 6
      %v8595 = vrot.slane %v8594, 4
      %v8596 = vrot.slane %v8424, 6
      %v8597 = vsel %vm8509, %v8595, %v8596
      %v8598 = vrot.slane %v8596, 4
      %v8599 = vrot.slane %v8425, 6
      %v8600 = vsel %vm8509, %v8598, %v8599
      %v8601 = vrot.slane %v8426, 6
      %v8602 = vrot.slane %v8601, 4
      %v8603 = vrot.slane %v8427, 6
      %v8604 = vsel %vm8509, %v8602, %v8603
      %v8605 = vrot.slane %v8603, 4
      %v8606 = vrot.slane %v8428, 6
      %v8607 = vsel %vm8509, %v8605, %v8606
      %v8608 = vrot.slane %v8429, 6
      %v8609 = vrot.slane %v8608, 4
      %v8610 = vrot.slane %v8430, 6
      %v8611 = vsel %vm8509, %v8609, %v8610
      %v8612 = vrot.slane %v8610, 4
      %v8613 = vrot.slane %v8431, 6
      %v8614 = vsel %vm8509, %v8612, %v8613
      %v8615 = vrot.slane %v8432, 6
      %v8616 = vrot.slane %v8615, 4
      %v8617 = vrot.slane %v8433, 6
      %v8618 = vsel %vm8509, %v8616, %v8617
      %v8619 = vrot.slane %v8617, 4
      %v8620 = vrot.slane %v8434, 6
      %v8621 = vsel %vm8509, %v8619, %v8620
      %v8622 = vrot.slane %v8435, 6
      %v8623 = vrot.slane %v8622, 4
      %v8624 = vrot.slane %v8436, 6
      %v8625 = vsel %vm8509, %v8623, %v8624
      %v8626 = vrot.slane %v8624, 4
      %v8627 = vrot.slane %v8437, 6
      %v8628 = vsel %vm8509, %v8626, %v8627
      %v8629 = vrot.slane %v8438, 6
      %v8630 = vrot.slane %v8629, 4
      %v8631 = vrot.slane %v8439, 6
      %v8632 = vsel %vm8509, %v8630, %v8631
      %v8633 = vrot.slane %v8631, 4
      %v8634 = vrot.slane %v8440, 6
      %v8635 = vsel %vm8509, %v8633, %v8634
      %v8636 = vrot.slane %v8441, 6
      %v8637 = vrot.slane %v8636, 4
      %v8638 = vrot.slane %v8442, 6
      %v8639 = vsel %vm8509, %v8637, %v8638
      %v8640 = vrot.slane %v8638, 4
      %v8641 = vrot.slane %v8443, 6
      %v8642 = vsel %vm8509, %v8640, %v8641
      %v8643 = vrot.slane %v8444, 6
      %v8644 = vrot.slane %v8643, 4
      %v8645 = vrot.slane %v8445, 6
      %v8646 = vsel %vm8509, %v8644, %v8645
      %v8647 = vrot.slane %v8645, 4
      %v8648 = vrot.slane %v8446, 6
      %v8649 = vsel %vm8509, %v8647, %v8648
      %8690 = vst.msk [vmem:[#allocation4 + $0x4] sm:$0xf] %vm6101, %v8513
      %8691 = vst.msk [vmem:[#allocation4 + $0xc] sm:$0xf] %vm6101, %v8516
      %8692 = vst.msk [vmem:[#allocation4 + $0x14] sm:$0xf] %vm6101, %v8520
      %8693 = vst.msk [vmem:[#allocation4 + $0x1c] sm:$0xf] %vm6101, %v8523
      %8694 = vst.msk [vmem:[#allocation4 + $0x24] sm:$0xf] %vm6101, %v8527
      %8695 = vst.msk [vmem:[#allocation4 + $0x2c] sm:$0xf] %vm6101, %v8530
      %8696 = vst.msk [vmem:[#allocation4 + $0x34] sm:$0xf] %vm6101, %v8534
      %8697 = vst.msk [vmem:[#allocation4 + $0x3c] sm:$0xf] %vm6101, %v8537
      %8698 = vst.msk [vmem:[#allocation4 + $0x44] sm:$0xf] %vm6101, %v8541
      %8699 = vst.msk [vmem:[#allocation4 + $0x4c] sm:$0xf] %vm6101, %v8544
      %8700 = vst.msk [vmem:[#allocation4 + $0x54] sm:$0xf] %vm6101, %v8548
      %8701 = vst.msk [vmem:[#allocation4 + $0x5c] sm:$0xf] %vm6101, %v8551
      %8702 = vst.msk [vmem:[#allocation4 + $0x64] sm:$0xf] %vm6101, %v8555
      %8703 = vst.msk [vmem:[#allocation4 + $0x6c] sm:$0xf] %vm6101, %v8558
      %8704 = vst.msk [vmem:[#allocation4 + $0x74] sm:$0xf] %vm6101, %v8562
      %8705 = vst.msk [vmem:[#allocation4 + $0x7c] sm:$0xf] %vm6101, %v8565
      %8706 = vst.msk [vmem:[#allocation4 + $0x84] sm:$0xf] %vm6101, %v8569
      %8707 = vst.msk [vmem:[#allocation4 + $0x8c] sm:$0xf] %vm6101, %v8572
      %8708 = vst.msk [vmem:[#allocation4 + $0x94] sm:$0xf] %vm6101, %v8576
      %8709 = vst.msk [vmem:[#allocation4 + $0x9c] sm:$0xf] %vm6101, %v8579
      %8710 = vst.msk [vmem:[#allocation4 + $0xa4] sm:$0xf] %vm6101, %v8583
      %8711 = vst.msk [vmem:[#allocation4 + $0xac] sm:$0xf] %vm6101, %v8586
      %8712 = vst.msk [vmem:[#allocation4 + $0xb4] sm:$0xf] %vm6101, %v8590
      %8713 = vst.msk [vmem:[#allocation4 + $0xbc] sm:$0xf] %vm6101, %v8593
      %8714 = vst.msk [vmem:[#allocation4 + $0xc4] sm:$0xf] %vm6101, %v8597
      %8715 = vst.msk [vmem:[#allocation4 + $0xcc] sm:$0xf] %vm6101, %v8600
      %8716 = vst.msk [vmem:[#allocation4 + $0xd4] sm:$0xf] %vm6101, %v8604
      %8717 = vst.msk [vmem:[#allocation4 + $0xdc] sm:$0xf] %vm6101, %v8607
      %8718 = vst.msk [vmem:[#allocation4 + $0xe4] sm:$0xf] %vm6101, %v8611
      %8719 = vst.msk [vmem:[#allocation4 + $0xec] sm:$0xf] %vm6101, %v8614
      %8720 = vst.msk [vmem:[#allocation4 + $0xf4] sm:$0xf] %vm6101, %v8618
      %8721 = vst.msk [vmem:[#allocation4 + $0xfc] sm:$0xf] %vm6101, %v8621
      %8722 = vst.msk [vmem:[#allocation4 + $0x104] sm:$0xf] %vm6101, %v8625
      %8723 = vst.msk [vmem:[#allocation4 + $0x10c] sm:$0xf] %vm6101, %v8628
      %8724 = vst.msk [vmem:[#allocation4 + $0x114] sm:$0xf] %vm6101, %v8632
      %8725 = vst.msk [vmem:[#allocation4 + $0x11c] sm:$0xf] %vm6101, %v8635
      %8726 = vst.msk [vmem:[#allocation4 + $0x124] sm:$0xf] %vm6101, %v8639
      %8727 = vst.msk [vmem:[#allocation4 + $0x12c] sm:$0xf] %vm6101, %v8642
      %8728 = vst.msk [vmem:[#allocation4 + $0x134] sm:$0xf] %vm6101, %v8646
      %8729 = vst.msk [vmem:[#allocation4 + $0x13c] sm:$0xf] %vm6101, %v8649
      %v8730 = vld [vmem:[#allocation4] sm:$0xff]
      %v8731 = vld [vmem:[#allocation4 + $0x8] sm:$0xff]
      %v8732 = vld [vmem:[#allocation4 + $0x10] sm:$0xff]
      %v8733 = vld [vmem:[#allocation4 + $0x18] sm:$0xff]
      %v8734 = vld [vmem:[#allocation4 + $0x20] sm:$0xff]
      %v8735 = vld [vmem:[#allocation4 + $0x28] sm:$0xff]
      %v8736 = vld [vmem:[#allocation4 + $0x30] sm:$0xff]
      %v8737 = vld [vmem:[#allocation4 + $0x38] sm:$0xff]
      %v8738 = vld [vmem:[#allocation4 + $0x40] sm:$0xff]
      %v8739 = vld [vmem:[#allocation4 + $0x48] sm:$0xff]
      %v8740 = vld [vmem:[#allocation4 + $0x50] sm:$0xff]
      %v8741 = vld [vmem:[#allocation4 + $0x58] sm:$0xff]
      %v8742 = vld [vmem:[#allocation4 + $0x60] sm:$0xff]
      %v8743 = vld [vmem:[#allocation4 + $0x68] sm:$0xff]
      %v8744 = vld [vmem:[#allocation4 + $0x70] sm:$0xff]
      %v8745 = vld [vmem:[#allocation4 + $0x78] sm:$0xff]
      %v8746 = vld [vmem:[#allocation4 + $0x80] sm:$0xff]
      %v8747 = vld [vmem:[#allocation4 + $0x88] sm:$0xff]
      %v8748 = vld [vmem:[#allocation4 + $0x90] sm:$0xff]
      %v8749 = vld [vmem:[#allocation4 + $0x98] sm:$0xff]
      %v8750 = vld [vmem:[#allocation4 + $0xa0] sm:$0xff]
      %v8751 = vld [vmem:[#allocation4 + $0xa8] sm:$0xff]
      %v8752 = vld [vmem:[#allocation4 + $0xb0] sm:$0xff]
      %v8753 = vld [vmem:[#allocation4 + $0xb8] sm:$0xff]
      %v8754 = vld [vmem:[#allocation4 + $0xc0] sm:$0xff]
      %v8755 = vld [vmem:[#allocation4 + $0xc8] sm:$0xff]
      %v8756 = vld [vmem:[#allocation4 + $0xd0] sm:$0xff]
      %v8757 = vld [vmem:[#allocation4 + $0xd8] sm:$0xff]
      %v8758 = vld [vmem:[#allocation4 + $0xe0] sm:$0xff]
      %v8759 = vld [vmem:[#allocation4 + $0xe8] sm:$0xff]
      %v8760 = vld [vmem:[#allocation4 + $0xf0] sm:$0xff]
      %v8761 = vld [vmem:[#allocation4 + $0xf8] sm:$0xff]
      %v8762 = vld [vmem:[%s5] sm:$0xf]
      %v8763 = vld [vmem:[%s5 + $0x4] sm:$0xf]
      %v8764 = vld [vmem:[%s5 + $0x8] sm:$0xf]
      %v8765 = vld [vmem:[%s5 + $0xc] sm:$0xf]
      %v8766 = vld [vmem:[%s5 + $0x10] sm:$0xf]
      %v8767 = vld [vmem:[%s5 + $0x14] sm:$0xf]
      %v8768 = vld [vmem:[%s5 + $0x18] sm:$0xf]
      %v8769 = vld [vmem:[%s5 + $0x1c] sm:$0xf]
      %v8770 = vld [vmem:[%s5 + $0x20] sm:$0xf]
      %v8771 = vld [vmem:[%s5 + $0x24] sm:$0xf]
      %v8772 = vld [vmem:[%s5 + $0x28] sm:$0xf]
      %v8773 = vld [vmem:[%s5 + $0x2c] sm:$0xf]
      %v8774 = vld [vmem:[%s5 + $0x30] sm:$0xf]
      %v8775 = vld [vmem:[%s5 + $0x34] sm:$0xf]
      %v8776 = vld [vmem:[%s5 + $0x38] sm:$0xf]
      %v8777 = vld [vmem:[%s5 + $0x3c] sm:$0xf]
      %v8778 = vld [vmem:[%s5 + $0x40] sm:$0xf]
      %v8779 = vld [vmem:[%s5 + $0x44] sm:$0xf]
      %v8780 = vld [vmem:[%s5 + $0x48] sm:$0xf]
      %v8781 = vld [vmem:[%s5 + $0x4c] sm:$0xf]
      %s8782 = scalar_lea.vmem [#allocation4], 16
      %v8783 = vld [vmem:[%s8782] sm:$0xff]
      %v8784 = vld [vmem:[%s8782 + $0x8] sm:$0xff]
      %v8785 = vld [vmem:[%s8782 + $0x10] sm:$0xff]
      %v8786 = vld [vmem:[%s8782 + $0x18] sm:$0xff]
      %v8787 = vld [vmem:[%s8782 + $0x20] sm:$0xff]
      %v8788 = vld [vmem:[%s8782 + $0x28] sm:$0xff]
      %v8789 = vld [vmem:[%s8782 + $0x30] sm:$0xff]
      %v8790 = vld [vmem:[%s8782 + $0x38] sm:$0xff]
      %v8791 = vld [vmem:[%s8782 + $0x40] sm:$0xff]
      %v8792 = vld [vmem:[%s8782 + $0x48] sm:$0xff]
      %v8793 = vld [vmem:[%s8782 + $0x50] sm:$0xff]
      %v8794 = vld [vmem:[%s8782 + $0x58] sm:$0xff]
      %v8795 = vld [vmem:[%s8782 + $0x60] sm:$0xff]
      %v8796 = vld [vmem:[%s8782 + $0x68] sm:$0xff]
      %v8797 = vld [vmem:[%s8782 + $0x70] sm:$0xff]
      %v8798 = vld [vmem:[%s8782 + $0x78] sm:$0xff]
      %v8799 = vld [vmem:[%s8782 + $0x80] sm:$0xff]
      %v8800 = vld [vmem:[%s8782 + $0x88] sm:$0xff]
      %v8801 = vld [vmem:[%s8782 + $0x90] sm:$0xff]
      %v8802 = vld [vmem:[%s8782 + $0x98] sm:$0xff]
      %v8803 = vld [vmem:[%s8782 + $0xa0] sm:$0xff]
      %v8804 = vld [vmem:[%s8782 + $0xa8] sm:$0xff]
      %v8805 = vld [vmem:[%s8782 + $0xb0] sm:$0xff]
      %v8806 = vld [vmem:[%s8782 + $0xb8] sm:$0xff]
      %v8807 = vld [vmem:[%s8782 + $0xc0] sm:$0xff]
      %v8808 = vld [vmem:[%s8782 + $0xc8] sm:$0xff]
      %v8809 = vld [vmem:[%s8782 + $0xd0] sm:$0xff]
      %v8810 = vld [vmem:[%s8782 + $0xd8] sm:$0xff]
      %v8811 = vld [vmem:[%s8782 + $0xe0] sm:$0xff]
      %v8812 = vld [vmem:[%s8782 + $0xe8] sm:$0xff]
      %v8813 = vld [vmem:[%s8782 + $0xf0] sm:$0xff]
      %v8814 = vld [vmem:[%s8782 + $0xf8] sm:$0xff]
      %s8815 = scalar_lea.vmem %s5, 80
      %v8816 = vld [vmem:[%s8815] sm:$0xf]
      %v8817 = vld [vmem:[%s8815 + $0x4] sm:$0xf]
      %v8818 = vld [vmem:[%s8815 + $0x8] sm:$0xf]
      %v8819 = vld [vmem:[%s8815 + $0xc] sm:$0xf]
      %v8820 = vld [vmem:[%s8815 + $0x10] sm:$0xf]
      %v8821 = vld [vmem:[%s8815 + $0x14] sm:$0xf]
      %v8822 = vld [vmem:[%s8815 + $0x18] sm:$0xf]
      %v8823 = vld [vmem:[%s8815 + $0x1c] sm:$0xf]
      %v8824 = vld [vmem:[%s8815 + $0x20] sm:$0xf]
      %v8825 = vld [vmem:[%s8815 + $0x24] sm:$0xf]
      %v8826 = vld [vmem:[%s8815 + $0x28] sm:$0xf]
      %v8827 = vld [vmem:[%s8815 + $0x2c] sm:$0xf]
      %v8828 = vld [vmem:[%s8815 + $0x30] sm:$0xf]
      %v8829 = vld [vmem:[%s8815 + $0x34] sm:$0xf]
      %v8830 = vld [vmem:[%s8815 + $0x38] sm:$0xf]
      %v8831 = vld [vmem:[%s8815 + $0x3c] sm:$0xf]
      %v8832 = vld [vmem:[%s8815 + $0x40] sm:$0xf]
      %v8833 = vld [vmem:[%s8815 + $0x44] sm:$0xf]
      %v8834 = vld [vmem:[%s8815 + $0x48] sm:$0xf]
      %v8835 = vld [vmem:[%s8815 + $0x4c] sm:$0xf]
      %v8868 = vunpack.c.l.b16 %v8783
      %v8869 = vunpack.c.h.b16 %v8783
      %v8870 = vunpack.c.l.b16 %v8784
      %v8871 = vunpack.c.h.b16 %v8784
      %v8872 = vunpack.c.l.b16 %v8785
      %v8873 = vunpack.c.h.b16 %v8785
      %v8874 = vunpack.c.l.b16 %v8786
      %v8875 = vunpack.c.h.b16 %v8786
      %v8876 = vunpack.c.l.b16 %v8787
      %v8877 = vunpack.c.h.b16 %v8787
      %v8878 = vunpack.c.l.b16 %v8788
      %v8879 = vunpack.c.h.b16 %v8788
      %v8880 = vunpack.c.l.b16 %v8789
      %v8881 = vunpack.c.h.b16 %v8789
      %v8882 = vunpack.c.l.b16 %v8790
      %v8883 = vunpack.c.h.b16 %v8790
      %v8884 = vunpack.c.l.b16 %v8791
      %v8885 = vunpack.c.h.b16 %v8791
      %v8886 = vunpack.c.l.b16 %v8792
      %v8887 = vunpack.c.h.b16 %v8792
      %v8888 = vunpack.c.l.b16 %v8793
      %v8889 = vunpack.c.h.b16 %v8793
      %v8890 = vunpack.c.l.b16 %v8794
      %v8891 = vunpack.c.h.b16 %v8794
      %v8892 = vunpack.c.l.b16 %v8795
      %v8893 = vunpack.c.h.b16 %v8795
      %v8894 = vunpack.c.l.b16 %v8796
      %v8895 = vunpack.c.h.b16 %v8796
      %v8896 = vunpack.c.l.b16 %v8797
      %v8897 = vunpack.c.h.b16 %v8797
      %v8898 = vunpack.c.l.b16 %v8798
      %v8899 = vunpack.c.h.b16 %v8798
      %v8900 = vunpack.c.l.b16 %v8799
      %v8901 = vunpack.c.h.b16 %v8799
      %v8902 = vunpack.c.l.b16 %v8800
      %v8903 = vunpack.c.h.b16 %v8800
      %v8904 = vunpack.c.l.b16 %v8801
      %v8905 = vunpack.c.h.b16 %v8801
      %v8906 = vunpack.c.l.b16 %v8802
      %v8907 = vunpack.c.h.b16 %v8802
      %v8908 = vunpack.c.l.b16 %v8803
      %v8909 = vunpack.c.h.b16 %v8803
      %v8910 = vunpack.c.l.b16 %v8804
      %v8911 = vunpack.c.h.b16 %v8804
      %v8912 = vunpack.c.l.b16 %v8805
      %v8913 = vunpack.c.h.b16 %v8805
      %v8914 = vunpack.c.l.b16 %v8806
      %v8915 = vunpack.c.h.b16 %v8806
      %v8916 = vunpack.c.l.b16 %v8807
      %v8917 = vunpack.c.h.b16 %v8807
      %v8918 = vunpack.c.l.b16 %v8808
      %v8919 = vunpack.c.h.b16 %v8808
      %v8920 = vunpack.c.l.b16 %v8809
      %v8921 = vunpack.c.h.b16 %v8809
      %v8922 = vunpack.c.l.b16 %v8810
      %v8923 = vunpack.c.h.b16 %v8810
      %v8924 = vunpack.c.l.b16 %v8811
      %v8925 = vunpack.c.h.b16 %v8811
      %v8926 = vunpack.c.l.b16 %v8812
      %v8927 = vunpack.c.h.b16 %v8812
      %v8928 = vunpack.c.l.b16 %v8813
      %v8929 = vunpack.c.h.b16 %v8813
      %v8930 = vunpack.c.l.b16 %v8814
      %v8931 = vunpack.c.h.b16 %v8814
      %v8932 = vpack.c.b16 %v8870, %v8868
      %v8933 = vpack.c.b16 %v8871, %v8869
      %v8934 = vpack.c.b16 %v8874, %v8872
      %v8935 = vpack.c.b16 %v8875, %v8873
      %v8936 = vpack.c.b16 %v8878, %v8876
      %v8937 = vpack.c.b16 %v8879, %v8877
      %v8938 = vpack.c.b16 %v8882, %v8880
      %v8939 = vpack.c.b16 %v8883, %v8881
      %v8940 = vpack.c.b16 %v8886, %v8884
      %v8941 = vpack.c.b16 %v8887, %v8885
      %v8942 = vpack.c.b16 %v8890, %v8888
      %v8943 = vpack.c.b16 %v8891, %v8889
      %v8944 = vpack.c.b16 %v8894, %v8892
      %v8945 = vpack.c.b16 %v8895, %v8893
      %v8946 = vpack.c.b16 %v8898, %v8896
      %v8947 = vpack.c.b16 %v8899, %v8897
      %v8948 = vpack.c.b16 %v8902, %v8900
      %v8949 = vpack.c.b16 %v8903, %v8901
      %v8950 = vpack.c.b16 %v8906, %v8904
      %v8951 = vpack.c.b16 %v8907, %v8905
      %v8952 = vpack.c.b16 %v8910, %v8908
      %v8953 = vpack.c.b16 %v8911, %v8909
      %v8954 = vpack.c.b16 %v8914, %v8912
      %v8955 = vpack.c.b16 %v8915, %v8913
      %v8956 = vpack.c.b16 %v8918, %v8916
      %v8957 = vpack.c.b16 %v8919, %v8917
      %v8958 = vpack.c.b16 %v8922, %v8920
      %v8959 = vpack.c.b16 %v8923, %v8921
      %v8960 = vpack.c.b16 %v8926, %v8924
      %v8961 = vpack.c.b16 %v8927, %v8925
      %v8962 = vpack.c.b16 %v8930, %v8928
      %v8963 = vpack.c.b16 %v8931, %v8929
      %v9000 = vunpack.c.l.b16 %v8816
      %v9001 = vunpack.c.l.b16 %v8817
      %v9002 = vunpack.c.l.b16 %v8818
      %v9003 = vunpack.c.l.b16 %v8819
      %v9004 = vunpack.c.l.b16 %v8820
      %v9005 = vunpack.c.l.b16 %v8821
      %v9006 = vunpack.c.l.b16 %v8822
      %v9007 = vunpack.c.l.b16 %v8823
      %v9008 = vunpack.c.l.b16 %v8824
      %v9009 = vunpack.c.l.b16 %v8825
      %v9010 = vunpack.c.l.b16 %v8826
      %v9011 = vunpack.c.l.b16 %v8827
      %v9012 = vunpack.c.l.b16 %v8828
      %v9013 = vunpack.c.l.b16 %v8829
      %v9014 = vunpack.c.l.b16 %v8830
      %v9015 = vunpack.c.l.b16 %v8831
      %v9016 = vunpack.c.l.b16 %v8832
      %v9017 = vunpack.c.l.b16 %v8833
      %v9018 = vunpack.c.l.b16 %v8834
      %v9019 = vunpack.c.l.b16 %v8835
      %v9020 = vpack.c.b16 %v9001, %v9000
      %v9021 = vpack.c.b16 %v9003, %v9002
      %v9022 = vpack.c.b16 %v9005, %v9004
      %v9023 = vpack.c.b16 %v9007, %v9006
      %v9024 = vpack.c.b16 %v9009, %v9008
      %v9025 = vpack.c.b16 %v9011, %v9010
      %v9026 = vpack.c.b16 %v9013, %v9012
      %v9027 = vpack.c.b16 %v9015, %v9014
      %v9028 = vpack.c.b16 %v9017, %v9016
      %v9029 = vpack.c.b16 %v9019, %v9018
      %vm9040 = vcmask 261120
      %v9042 = vsel %vm9040, %v8933, 0
      %v9045 = vsel %vm9040, %v8935, 0
      %v9048 = vsel %vm9040, %v8937, 0
      %v9051 = vsel %vm9040, %v8939, 0
      %v9054 = vsel %vm9040, %v8941, 0
      %v9057 = vsel %vm9040, %v8943, 0
      %v9060 = vsel %vm9040, %v8945, 0
      %v9063 = vsel %vm9040, %v8947, 0
      %v9066 = vsel %vm9040, %v8949, 0
      %v9069 = vsel %vm9040, %v8951, 0
      %v9072 = vsel %vm9040, %v8953, 0
      %v9075 = vsel %vm9040, %v8955, 0
      %v9078 = vsel %vm9040, %v8957, 0
      %v9081 = vsel %vm9040, %v8959, 0
      %v9084 = vsel %vm9040, %v8961, 0
      %v9087 = vsel %vm9040, %v8963, 0
      %9089 = vmatpush.bf16.msra.mxu0 %v9027
      %9090 = vmatpush.bf16.msra.mxu0 %v9026
      %9091 = vmatpush.bf16.msra.mxu0 %v9025
      %9092 = vmatpush.bf16.msra.mxu0 %v9024
      %9093 = vmatpush.bf16.msra.mxu0 %v9023
      %9094 = vmatpush.bf16.msra.mxu0 %v9022
      %9095 = vmatpush.bf16.msra.mxu0 %v9021
      %9096 = vmatpush.bf16.msra.mxu0 %v9020
      %9097 = vmatmul.bf16.gmra.mxu0 %v8932
      %v9098 = vpop.f32.mrf.mxu0
      %v9099 = vadd.f32 0.0, %v9098
      %v9100 = vpop.f32.mrf.mxu0
      %v9101 = vadd.f32 0.0, %v9100
      %9102 = vmatmul.bf16.gmra.mxu0 %v8934
      %v9103 = vpop.f32.mrf.mxu0
      %v9104 = vadd.f32 0.0, %v9103
      %v9105 = vpop.f32.mrf.mxu0
      %v9106 = vadd.f32 0.0, %v9105
      %9107 = vmatmul.bf16.gmra.mxu0 %v8936
      %v9108 = vpop.f32.mrf.mxu0
      %v9109 = vadd.f32 0.0, %v9108
      %v9110 = vpop.f32.mrf.mxu0
      %v9111 = vadd.f32 0.0, %v9110
      %9112 = vmatmul.bf16.gmra.mxu0 %v8938
      %v9113 = vpop.f32.mrf.mxu0
      %v9114 = vadd.f32 0.0, %v9113
      %v9115 = vpop.f32.mrf.mxu0
      %v9116 = vadd.f32 0.0, %v9115
      %9117 = vmatmul.bf16.gmra.mxu0 %v8940
      %v9118 = vpop.f32.mrf.mxu0
      %v9119 = vadd.f32 0.0, %v9118
      %v9120 = vpop.f32.mrf.mxu0
      %v9121 = vadd.f32 0.0, %v9120
      %9122 = vmatmul.bf16.gmra.mxu0 %v8942
      %v9123 = vpop.f32.mrf.mxu0
      %v9124 = vadd.f32 0.0, %v9123
      %v9125 = vpop.f32.mrf.mxu0
      %v9126 = vadd.f32 0.0, %v9125
      %9127 = vmatmul.bf16.gmra.mxu0 %v8944
      %v9128 = vpop.f32.mrf.mxu0
      %v9129 = vadd.f32 0.0, %v9128
      %v9130 = vpop.f32.mrf.mxu0
      %v9131 = vadd.f32 0.0, %v9130
      %9132 = vmatmul.bf16.gmra.mxu0 %v8946
      %v9133 = vpop.f32.mrf.mxu0
      %v9134 = vadd.f32 0.0, %v9133
      %v9135 = vpop.f32.mrf.mxu0
      %v9136 = vadd.f32 0.0, %v9135
      %9137 = vmatmul.bf16.gmra.mxu0 %v8948
      %v9138 = vpop.f32.mrf.mxu0
      %v9139 = vadd.f32 0.0, %v9138
      %v9140 = vpop.f32.mrf.mxu0
      %v9141 = vadd.f32 0.0, %v9140
      %9142 = vmatmul.bf16.gmra.mxu0 %v8950
      %v9143 = vpop.f32.mrf.mxu0
      %v9144 = vadd.f32 0.0, %v9143
      %v9145 = vpop.f32.mrf.mxu0
      %v9146 = vadd.f32 0.0, %v9145
      %9147 = vmatmul.bf16.gmra.mxu0 %v8952
      %v9148 = vpop.f32.mrf.mxu0
      %v9149 = vadd.f32 0.0, %v9148
      %v9150 = vpop.f32.mrf.mxu0
      %v9151 = vadd.f32 0.0, %v9150
      %9152 = vmatmul.bf16.gmra.mxu0 %v8954
      %v9153 = vpop.f32.mrf.mxu0
      %v9154 = vadd.f32 0.0, %v9153
      %v9155 = vpop.f32.mrf.mxu0
      %v9156 = vadd.f32 0.0, %v9155
      %9157 = vmatmul.bf16.gmra.mxu0 %v8956
      %v9158 = vpop.f32.mrf.mxu0
      %v9159 = vadd.f32 0.0, %v9158
      %v9160 = vpop.f32.mrf.mxu0
      %v9161 = vadd.f32 0.0, %v9160
      %9162 = vmatmul.bf16.gmra.mxu0 %v8958
      %v9163 = vpop.f32.mrf.mxu0
      %v9164 = vadd.f32 0.0, %v9163
      %v9165 = vpop.f32.mrf.mxu0
      %v9166 = vadd.f32 0.0, %v9165
      %9167 = vmatmul.bf16.gmra.mxu0 %v8960
      %v9168 = vpop.f32.mrf.mxu0
      %v9169 = vadd.f32 0.0, %v9168
      %v9170 = vpop.f32.mrf.mxu0
      %v9171 = vadd.f32 0.0, %v9170
      %9172 = vmatmul.bf16.gmra.mxu0 %v8962
      %v9173 = vpop.f32.mrf.mxu0
      %v9174 = vadd.f32 0.0, %v9173
      %v9175 = vpop.f32.mrf.mxu0
      %v9176 = vadd.f32 0.0, %v9175
      %9177 = vdwg.mxu0
      %9178 = vmatpush.bf16.msra.mxu0 0
      %9179 = vmatpush.bf16.msra.mxu0 0
      %9180 = vmatpush.bf16.msra.mxu0 0
      %9181 = vmatpush.bf16.msra.mxu0 0
      %9182 = vmatpush.bf16.msra.mxu0 0
      %9183 = vmatpush.bf16.msra.mxu0 0
      %9184 = vmatpush.bf16.msra.mxu0 %v9029
      %9185 = vmatpush.bf16.msra.mxu0 %v9028
      %9186 = vmatmul.bf16.gmra.mxu0 %v9042
      %v9187 = vpop.f32.mrf.mxu0
      %v9188 = vadd.f32 %v9099, %v9187
      %v9189 = vpop.f32.mrf.mxu0
      %v9190 = vadd.f32 %v9101, %v9189
      %9191 = vmatmul.bf16.gmra.mxu0 %v9045
      %v9192 = vpop.f32.mrf.mxu0
      %v9193 = vadd.f32 %v9104, %v9192
      %v9194 = vpop.f32.mrf.mxu0
      %v9195 = vadd.f32 %v9106, %v9194
      %9196 = vmatmul.bf16.gmra.mxu0 %v9048
      %v9197 = vpop.f32.mrf.mxu0
      %v9198 = vadd.f32 %v9109, %v9197
      %v9199 = vpop.f32.mrf.mxu0
      %v9200 = vadd.f32 %v9111, %v9199
      %9201 = vmatmul.bf16.gmra.mxu0 %v9051
      %v9202 = vpop.f32.mrf.mxu0
      %v9203 = vadd.f32 %v9114, %v9202
      %v9204 = vpop.f32.mrf.mxu0
      %v9205 = vadd.f32 %v9116, %v9204
      %9206 = vmatmul.bf16.gmra.mxu0 %v9054
      %v9207 = vpop.f32.mrf.mxu0
      %v9208 = vadd.f32 %v9119, %v9207
      %v9209 = vpop.f32.mrf.mxu0
      %v9210 = vadd.f32 %v9121, %v9209
      %9211 = vmatmul.bf16.gmra.mxu0 %v9057
      %v9212 = vpop.f32.mrf.mxu0
      %v9213 = vadd.f32 %v9124, %v9212
      %v9214 = vpop.f32.mrf.mxu0
      %v9215 = vadd.f32 %v9126, %v9214
      %9216 = vmatmul.bf16.gmra.mxu0 %v9060
      %v9217 = vpop.f32.mrf.mxu0
      %v9218 = vadd.f32 %v9129, %v9217
      %v9219 = vpop.f32.mrf.mxu0
      %v9220 = vadd.f32 %v9131, %v9219
      %9221 = vmatmul.bf16.gmra.mxu0 %v9063
      %v9222 = vpop.f32.mrf.mxu0
      %v9223 = vadd.f32 %v9134, %v9222
      %v9224 = vpop.f32.mrf.mxu0
      %v9225 = vadd.f32 %v9136, %v9224
      %9226 = vmatmul.bf16.gmra.mxu0 %v9066
      %v9227 = vpop.f32.mrf.mxu0
      %v9228 = vadd.f32 %v9139, %v9227
      %v9229 = vpop.f32.mrf.mxu0
      %v9230 = vadd.f32 %v9141, %v9229
      %9231 = vmatmul.bf16.gmra.mxu0 %v9069
      %v9232 = vpop.f32.mrf.mxu0
      %v9233 = vadd.f32 %v9144, %v9232
      %v9234 = vpop.f32.mrf.mxu0
      %v9235 = vadd.f32 %v9146, %v9234
      %9236 = vmatmul.bf16.gmra.mxu0 %v9072
      %v9237 = vpop.f32.mrf.mxu0
      %v9238 = vadd.f32 %v9149, %v9237
      %v9239 = vpop.f32.mrf.mxu0
      %v9240 = vadd.f32 %v9151, %v9239
      %9241 = vmatmul.bf16.gmra.mxu0 %v9075
      %v9242 = vpop.f32.mrf.mxu0
      %v9243 = vadd.f32 %v9154, %v9242
      %v9244 = vpop.f32.mrf.mxu0
      %v9245 = vadd.f32 %v9156, %v9244
      %9246 = vmatmul.bf16.gmra.mxu0 %v9078
      %v9247 = vpop.f32.mrf.mxu0
      %v9248 = vadd.f32 %v9159, %v9247
      %v9249 = vpop.f32.mrf.mxu0
      %v9250 = vadd.f32 %v9161, %v9249
      %9251 = vmatmul.bf16.gmra.mxu0 %v9081
      %v9252 = vpop.f32.mrf.mxu0
      %v9253 = vadd.f32 %v9164, %v9252
      %v9254 = vpop.f32.mrf.mxu0
      %v9255 = vadd.f32 %v9166, %v9254
      %9256 = vmatmul.bf16.gmra.mxu0 %v9084
      %v9257 = vpop.f32.mrf.mxu0
      %v9258 = vadd.f32 %v9169, %v9257
      %v9259 = vpop.f32.mrf.mxu0
      %v9260 = vadd.f32 %v9171, %v9259
      %9261 = vmatmul.bf16.gmra.mxu0 %v9087
      %v9262 = vpop.f32.mrf.mxu0
      %v9263 = vadd.f32 %v9174, %v9262
      %v9264 = vpop.f32.mrf.mxu0
      %v9265 = vadd.f32 %v9176, %v9264
      %9266 = vdwg.mxu0
      %v9299 = vunpack.c.l.b16 %v8730
      %v9300 = vunpack.c.h.b16 %v8730
      %v9301 = vunpack.c.l.b16 %v8731
      %v9302 = vunpack.c.h.b16 %v8731
      %v9303 = vunpack.c.l.b16 %v8732
      %v9304 = vunpack.c.h.b16 %v8732
      %v9305 = vunpack.c.l.b16 %v8733
      %v9306 = vunpack.c.h.b16 %v8733
      %v9307 = vunpack.c.l.b16 %v8734
      %v9308 = vunpack.c.h.b16 %v8734
      %v9309 = vunpack.c.l.b16 %v8735
      %v9310 = vunpack.c.h.b16 %v8735
      %v9311 = vunpack.c.l.b16 %v8736
      %v9312 = vunpack.c.h.b16 %v8736
      %v9313 = vunpack.c.l.b16 %v8737
      %v9314 = vunpack.c.h.b16 %v8737
      %v9315 = vunpack.c.l.b16 %v8738
      %v9316 = vunpack.c.h.b16 %v8738
      %v9317 = vunpack.c.l.b16 %v8739
      %v9318 = vunpack.c.h.b16 %v8739
      %v9319 = vunpack.c.l.b16 %v8740
      %v9320 = vunpack.c.h.b16 %v8740
      %v9321 = vunpack.c.l.b16 %v8741
      %v9322 = vunpack.c.h.b16 %v8741
      %v9323 = vunpack.c.l.b16 %v8742
      %v9324 = vunpack.c.h.b16 %v8742
      %v9325 = vunpack.c.l.b16 %v8743
      %v9326 = vunpack.c.h.b16 %v8743
      %v9327 = vunpack.c.l.b16 %v8744
      %v9328 = vunpack.c.h.b16 %v8744
      %v9329 = vunpack.c.l.b16 %v8745
      %v9330 = vunpack.c.h.b16 %v8745
      %v9331 = vunpack.c.l.b16 %v8746
      %v9332 = vunpack.c.h.b16 %v8746
      %v9333 = vunpack.c.l.b16 %v8747
      %v9334 = vunpack.c.h.b16 %v8747
      %v9335 = vunpack.c.l.b16 %v8748
      %v9336 = vunpack.c.h.b16 %v8748
      %v9337 = vunpack.c.l.b16 %v8749
      %v9338 = vunpack.c.h.b16 %v8749
      %v9339 = vunpack.c.l.b16 %v8750
      %v9340 = vunpack.c.h.b16 %v8750
      %v9341 = vunpack.c.l.b16 %v8751
      %v9342 = vunpack.c.h.b16 %v8751
      %v9343 = vunpack.c.l.b16 %v8752
      %v9344 = vunpack.c.h.b16 %v8752
      %v9345 = vunpack.c.l.b16 %v8753
      %v9346 = vunpack.c.h.b16 %v8753
      %v9347 = vunpack.c.l.b16 %v8754
      %v9348 = vunpack.c.h.b16 %v8754
      %v9349 = vunpack.c.l.b16 %v8755
      %v9350 = vunpack.c.h.b16 %v8755
      %v9351 = vunpack.c.l.b16 %v8756
      %v9352 = vunpack.c.h.b16 %v8756
      %v9353 = vunpack.c.l.b16 %v8757
      %v9354 = vunpack.c.h.b16 %v8757
      %v9355 = vunpack.c.l.b16 %v8758
      %v9356 = vunpack.c.h.b16 %v8758
      %v9357 = vunpack.c.l.b16 %v8759
      %v9358 = vunpack.c.h.b16 %v8759
      %v9359 = vunpack.c.l.b16 %v8760
      %v9360 = vunpack.c.h.b16 %v8760
      %v9361 = vunpack.c.l.b16 %v8761
      %v9362 = vunpack.c.h.b16 %v8761
      %v9363 = vpack.c.b16 %v9301, %v9299
      %v9364 = vpack.c.b16 %v9302, %v9300
      %v9365 = vpack.c.b16 %v9305, %v9303
      %v9366 = vpack.c.b16 %v9306, %v9304
      %v9367 = vpack.c.b16 %v9309, %v9307
      %v9368 = vpack.c.b16 %v9310, %v9308
      %v9369 = vpack.c.b16 %v9313, %v9311
      %v9370 = vpack.c.b16 %v9314, %v9312
      %v9371 = vpack.c.b16 %v9317, %v9315
      %v9372 = vpack.c.b16 %v9318, %v9316
      %v9373 = vpack.c.b16 %v9321, %v9319
      %v9374 = vpack.c.b16 %v9322, %v9320
      %v9375 = vpack.c.b16 %v9325, %v9323
      %v9376 = vpack.c.b16 %v9326, %v9324
      %v9377 = vpack.c.b16 %v9329, %v9327
      %v9378 = vpack.c.b16 %v9330, %v9328
      %v9379 = vpack.c.b16 %v9333, %v9331
      %v9380 = vpack.c.b16 %v9334, %v9332
      %v9381 = vpack.c.b16 %v9337, %v9335
      %v9382 = vpack.c.b16 %v9338, %v9336
      %v9383 = vpack.c.b16 %v9341, %v9339
      %v9384 = vpack.c.b16 %v9342, %v9340
      %v9385 = vpack.c.b16 %v9345, %v9343
      %v9386 = vpack.c.b16 %v9346, %v9344
      %v9387 = vpack.c.b16 %v9349, %v9347
      %v9388 = vpack.c.b16 %v9350, %v9348
      %v9389 = vpack.c.b16 %v9353, %v9351
      %v9390 = vpack.c.b16 %v9354, %v9352
      %v9391 = vpack.c.b16 %v9357, %v9355
      %v9392 = vpack.c.b16 %v9358, %v9356
      %v9393 = vpack.c.b16 %v9361, %v9359
      %v9394 = vpack.c.b16 %v9362, %v9360
      %v9431 = vunpack.c.l.b16 %v8762
      %v9432 = vunpack.c.l.b16 %v8763
      %v9433 = vunpack.c.l.b16 %v8764
      %v9434 = vunpack.c.l.b16 %v8765
      %v9435 = vunpack.c.l.b16 %v8766
      %v9436 = vunpack.c.l.b16 %v8767
      %v9437 = vunpack.c.l.b16 %v8768
      %v9438 = vunpack.c.l.b16 %v8769
      %v9439 = vunpack.c.l.b16 %v8770
      %v9440 = vunpack.c.l.b16 %v8771
      %v9441 = vunpack.c.l.b16 %v8772
      %v9442 = vunpack.c.l.b16 %v8773
      %v9443 = vunpack.c.l.b16 %v8774
      %v9444 = vunpack.c.l.b16 %v8775
      %v9445 = vunpack.c.l.b16 %v8776
      %v9446 = vunpack.c.l.b16 %v8777
      %v9447 = vunpack.c.l.b16 %v8778
      %v9448 = vunpack.c.l.b16 %v8779
      %v9449 = vunpack.c.l.b16 %v8780
      %v9450 = vunpack.c.l.b16 %v8781
      %v9451 = vpack.c.b16 %v9432, %v9431
      %v9452 = vpack.c.b16 %v9434, %v9433
      %v9453 = vpack.c.b16 %v9436, %v9435
      %v9454 = vpack.c.b16 %v9438, %v9437
      %v9455 = vpack.c.b16 %v9440, %v9439
      %v9456 = vpack.c.b16 %v9442, %v9441
      %v9457 = vpack.c.b16 %v9444, %v9443
      %v9458 = vpack.c.b16 %v9446, %v9445
      %v9459 = vpack.c.b16 %v9448, %v9447
      %v9460 = vpack.c.b16 %v9450, %v9449
      %v9472 = vsel %vm9040, %v9364, 0
      %v9475 = vsel %vm9040, %v9366, 0
      %v9478 = vsel %vm9040, %v9368, 0
      %v9481 = vsel %vm9040, %v9370, 0
      %v9484 = vsel %vm9040, %v9372, 0
      %v9487 = vsel %vm9040, %v9374, 0
      %v9490 = vsel %vm9040, %v9376, 0
      %v9493 = vsel %vm9040, %v9378, 0
      %v9496 = vsel %vm9040, %v9380, 0
      %v9499 = vsel %vm9040, %v9382, 0
      %v9502 = vsel %vm9040, %v9384, 0
      %v9505 = vsel %vm9040, %v9386, 0
      %v9508 = vsel %vm9040, %v9388, 0
      %v9511 = vsel %vm9040, %v9390, 0
      %v9514 = vsel %vm9040, %v9392, 0
      %v9517 = vsel %vm9040, %v9394, 0
      %9519 = vmatpush.bf16.msra.mxu0 %v9458
      %9520 = vmatpush.bf16.msra.mxu0 %v9457
      %9521 = vmatpush.bf16.msra.mxu0 %v9456
      %9522 = vmatpush.bf16.msra.mxu0 %v9455
      %9523 = vmatpush.bf16.msra.mxu0 %v9454
      %9524 = vmatpush.bf16.msra.mxu0 %v9453
      %9525 = vmatpush.bf16.msra.mxu0 %v9452
      %9526 = vmatpush.bf16.msra.mxu0 %v9451
      %9527 = vmatmul.bf16.gmra.mxu0 %v9363
      %v9528 = vpop.f32.mrf.mxu0
      %v9529 = vadd.f32 %v9188, %v9528
      %v9530 = vpop.f32.mrf.mxu0
      %v9531 = vadd.f32 %v9190, %v9530
      %9532 = vmatmul.bf16.gmra.mxu0 %v9365
      %v9533 = vpop.f32.mrf.mxu0
      %v9534 = vadd.f32 %v9193, %v9533
      %v9535 = vpop.f32.mrf.mxu0
      %v9536 = vadd.f32 %v9195, %v9535
      %9537 = vmatmul.bf16.gmra.mxu0 %v9367
      %v9538 = vpop.f32.mrf.mxu0
      %v9539 = vadd.f32 %v9198, %v9538
      %v9540 = vpop.f32.mrf.mxu0
      %v9541 = vadd.f32 %v9200, %v9540
      %9542 = vmatmul.bf16.gmra.mxu0 %v9369
      %v9543 = vpop.f32.mrf.mxu0
      %v9544 = vadd.f32 %v9203, %v9543
      %v9545 = vpop.f32.mrf.mxu0
      %v9546 = vadd.f32 %v9205, %v9545
      %9547 = vmatmul.bf16.gmra.mxu0 %v9371
      %v9548 = vpop.f32.mrf.mxu0
      %v9549 = vadd.f32 %v9208, %v9548
      %v9550 = vpop.f32.mrf.mxu0
      %v9551 = vadd.f32 %v9210, %v9550
      %9552 = vmatmul.bf16.gmra.mxu0 %v9373
      %v9553 = vpop.f32.mrf.mxu0
      %v9554 = vadd.f32 %v9213, %v9553
      %v9555 = vpop.f32.mrf.mxu0
      %v9556 = vadd.f32 %v9215, %v9555
      %9557 = vmatmul.bf16.gmra.mxu0 %v9375
      %v9558 = vpop.f32.mrf.mxu0
      %v9559 = vadd.f32 %v9218, %v9558
      %v9560 = vpop.f32.mrf.mxu0
      %v9561 = vadd.f32 %v9220, %v9560
      %9562 = vmatmul.bf16.gmra.mxu0 %v9377
      %v9563 = vpop.f32.mrf.mxu0
      %v9564 = vadd.f32 %v9223, %v9563
      %v9565 = vpop.f32.mrf.mxu0
      %v9566 = vadd.f32 %v9225, %v9565
      %9567 = vmatmul.bf16.gmra.mxu0 %v9379
      %v9568 = vpop.f32.mrf.mxu0
      %v9569 = vadd.f32 %v9228, %v9568
      %v9570 = vpop.f32.mrf.mxu0
      %v9571 = vadd.f32 %v9230, %v9570
      %9572 = vmatmul.bf16.gmra.mxu0 %v9381
      %v9573 = vpop.f32.mrf.mxu0
      %v9574 = vadd.f32 %v9233, %v9573
      %v9575 = vpop.f32.mrf.mxu0
      %v9576 = vadd.f32 %v9235, %v9575
      %9577 = vmatmul.bf16.gmra.mxu0 %v9383
      %v9578 = vpop.f32.mrf.mxu0
      %v9579 = vadd.f32 %v9238, %v9578
      %v9580 = vpop.f32.mrf.mxu0
      %v9581 = vadd.f32 %v9240, %v9580
      %9582 = vmatmul.bf16.gmra.mxu0 %v9385
      %v9583 = vpop.f32.mrf.mxu0
      %v9584 = vadd.f32 %v9243, %v9583
      %v9585 = vpop.f32.mrf.mxu0
      %v9586 = vadd.f32 %v9245, %v9585
      %9587 = vmatmul.bf16.gmra.mxu0 %v9387
      %v9588 = vpop.f32.mrf.mxu0
      %v9589 = vadd.f32 %v9248, %v9588
      %v9590 = vpop.f32.mrf.mxu0
      %v9591 = vadd.f32 %v9250, %v9590
      %9592 = vmatmul.bf16.gmra.mxu0 %v9389
      %v9593 = vpop.f32.mrf.mxu0
      %v9594 = vadd.f32 %v9253, %v9593
      %v9595 = vpop.f32.mrf.mxu0
      %v9596 = vadd.f32 %v9255, %v9595
      %9597 = vmatmul.bf16.gmra.mxu0 %v9391
      %v9598 = vpop.f32.mrf.mxu0
      %v9599 = vadd.f32 %v9258, %v9598
      %v9600 = vpop.f32.mrf.mxu0
      %v9601 = vadd.f32 %v9260, %v9600
      %9602 = vmatmul.bf16.gmra.mxu0 %v9393
      %v9603 = vpop.f32.mrf.mxu0
      %v9604 = vadd.f32 %v9263, %v9603
      %v9605 = vpop.f32.mrf.mxu0
      %v9606 = vadd.f32 %v9265, %v9605
      %9607 = vdwg.mxu0
      %9608 = vmatpush.bf16.msra.mxu0 0
      %9609 = vmatpush.bf16.msra.mxu0 0
      %9610 = vmatpush.bf16.msra.mxu0 0
      %9611 = vmatpush.bf16.msra.mxu0 0
      %9612 = vmatpush.bf16.msra.mxu0 0
      %9613 = vmatpush.bf16.msra.mxu0 0
      %9614 = vmatpush.bf16.msra.mxu0 %v9460
      %9615 = vmatpush.bf16.msra.mxu0 %v9459
      %9616 = vmatmul.bf16.gmra.mxu0 %v9472
      %v9617 = vpop.f32.mrf.mxu0
      %v9618 = vadd.f32 %v9529, %v9617
      %v9619 = vpop.f32.mrf.mxu0
      %v9620 = vadd.f32 %v9531, %v9619
      %9621 = vmatmul.bf16.gmra.mxu0 %v9475
      %v9622 = vpop.f32.mrf.mxu0
      %v9623 = vadd.f32 %v9534, %v9622
      %v9624 = vpop.f32.mrf.mxu0
      %v9625 = vadd.f32 %v9536, %v9624
      %9626 = vmatmul.bf16.gmra.mxu0 %v9478
      %v9627 = vpop.f32.mrf.mxu0
      %v9628 = vadd.f32 %v9539, %v9627
      %v9629 = vpop.f32.mrf.mxu0
      %v9630 = vadd.f32 %v9541, %v9629
      %9631 = vmatmul.bf16.gmra.mxu0 %v9481
      %v9632 = vpop.f32.mrf.mxu0
      %v9633 = vadd.f32 %v9544, %v9632
      %v9634 = vpop.f32.mrf.mxu0
      %v9635 = vadd.f32 %v9546, %v9634
      %9636 = vmatmul.bf16.gmra.mxu0 %v9484
      %v9637 = vpop.f32.mrf.mxu0
      %v9638 = vadd.f32 %v9549, %v9637
      %v9639 = vpop.f32.mrf.mxu0
      %v9640 = vadd.f32 %v9551, %v9639
      %9641 = vmatmul.bf16.gmra.mxu0 %v9487
      %v9642 = vpop.f32.mrf.mxu0
      %v9643 = vadd.f32 %v9554, %v9642
      %v9644 = vpop.f32.mrf.mxu0
      %v9645 = vadd.f32 %v9556, %v9644
      %9646 = vmatmul.bf16.gmra.mxu0 %v9490
      %v9647 = vpop.f32.mrf.mxu0
      %v9648 = vadd.f32 %v9559, %v9647
      %v9649 = vpop.f32.mrf.mxu0
      %v9650 = vadd.f32 %v9561, %v9649
      %9651 = vmatmul.bf16.gmra.mxu0 %v9493
      %v9652 = vpop.f32.mrf.mxu0
      %v9653 = vadd.f32 %v9564, %v9652
      %v9654 = vpop.f32.mrf.mxu0
      %v9655 = vadd.f32 %v9566, %v9654
      %9656 = vmatmul.bf16.gmra.mxu0 %v9496
      %v9657 = vpop.f32.mrf.mxu0
      %v9658 = vadd.f32 %v9569, %v9657
      %v9659 = vpop.f32.mrf.mxu0
      %v9660 = vadd.f32 %v9571, %v9659
      %9661 = vmatmul.bf16.gmra.mxu0 %v9499
      %v9662 = vpop.f32.mrf.mxu0
      %v9663 = vadd.f32 %v9574, %v9662
      %v9664 = vpop.f32.mrf.mxu0
      %v9665 = vadd.f32 %v9576, %v9664
      %9666 = vmatmul.bf16.gmra.mxu0 %v9502
      %v9667 = vpop.f32.mrf.mxu0
      %v9668 = vadd.f32 %v9579, %v9667
      %v9669 = vpop.f32.mrf.mxu0
      %v9670 = vadd.f32 %v9581, %v9669
      %9671 = vmatmul.bf16.gmra.mxu0 %v9505
      %v9672 = vpop.f32.mrf.mxu0
      %v9673 = vadd.f32 %v9584, %v9672
      %v9674 = vpop.f32.mrf.mxu0
      %v9675 = vadd.f32 %v9586, %v9674
      %9676 = vmatmul.bf16.gmra.mxu0 %v9508
      %v9677 = vpop.f32.mrf.mxu0
      %v9678 = vadd.f32 %v9589, %v9677
      %v9679 = vpop.f32.mrf.mxu0
      %v9680 = vadd.f32 %v9591, %v9679
      %9681 = vmatmul.bf16.gmra.mxu0 %v9511
      %v9682 = vpop.f32.mrf.mxu0
      %v9683 = vadd.f32 %v9594, %v9682
      %v9684 = vpop.f32.mrf.mxu0
      %v9685 = vadd.f32 %v9596, %v9684
      %9686 = vmatmul.bf16.gmra.mxu0 %v9514
      %v9687 = vpop.f32.mrf.mxu0
      %v9688 = vadd.f32 %v9599, %v9687
      %v9689 = vpop.f32.mrf.mxu0
      %v9690 = vadd.f32 %v9601, %v9689
      %9691 = vmatmul.bf16.gmra.mxu0 %v9517
      %v9692 = vpop.f32.mrf.mxu0
      %v9693 = vadd.f32 %v9604, %v9692
      %v9694 = vpop.f32.mrf.mxu0
      %v9695 = vadd.f32 %v9606, %v9694
      %9696 = vdwg.mxu0
      %s9697 = scalar_lea.vmem [#allocation4], 32
      %v9698 = vld [vmem:[%s9697] sm:$0xff]
      %v9699 = vld [vmem:[%s9697 + $0x8] sm:$0xff]
      %v9700 = vld [vmem:[%s9697 + $0x10] sm:$0xff]
      %v9701 = vld [vmem:[%s9697 + $0x18] sm:$0xff]
      %v9702 = vld [vmem:[%s9697 + $0x20] sm:$0xff]
      %v9703 = vld [vmem:[%s9697 + $0x28] sm:$0xff]
      %v9704 = vld [vmem:[%s9697 + $0x30] sm:$0xff]
      %v9705 = vld [vmem:[%s9697 + $0x38] sm:$0xff]
      %v9706 = vld [vmem:[%s9697 + $0x40] sm:$0xff]
      %v9707 = vld [vmem:[%s9697 + $0x48] sm:$0xff]
      %v9708 = vld [vmem:[%s9697 + $0x50] sm:$0xff]
      %v9709 = vld [vmem:[%s9697 + $0x58] sm:$0xff]
      %v9710 = vld [vmem:[%s9697 + $0x60] sm:$0xff]
      %v9711 = vld [vmem:[%s9697 + $0x68] sm:$0xff]
      %v9712 = vld [vmem:[%s9697 + $0x70] sm:$0xff]
      %v9713 = vld [vmem:[%s9697 + $0x78] sm:$0xff]
      %v9714 = vld [vmem:[%s9697 + $0x80] sm:$0xff]
      %v9715 = vld [vmem:[%s9697 + $0x88] sm:$0xff]
      %v9716 = vld [vmem:[%s9697 + $0x90] sm:$0xff]
      %v9717 = vld [vmem:[%s9697 + $0x98] sm:$0xff]
      %v9718 = vld [vmem:[%s9697 + $0xa0] sm:$0xff]
      %v9719 = vld [vmem:[%s9697 + $0xa8] sm:$0xff]
      %v9720 = vld [vmem:[%s9697 + $0xb0] sm:$0xff]
      %v9721 = vld [vmem:[%s9697 + $0xb8] sm:$0xff]
      %v9722 = vld [vmem:[%s9697 + $0xc0] sm:$0xff]
      %v9723 = vld [vmem:[%s9697 + $0xc8] sm:$0xff]
      %v9724 = vld [vmem:[%s9697 + $0xd0] sm:$0xff]
      %v9725 = vld [vmem:[%s9697 + $0xd8] sm:$0xff]
      %v9726 = vld [vmem:[%s9697 + $0xe0] sm:$0xff]
      %v9727 = vld [vmem:[%s9697 + $0xe8] sm:$0xff]
      %v9728 = vld [vmem:[%s9697 + $0xf0] sm:$0xff]
      %v9729 = vld [vmem:[%s9697 + $0xf8] sm:$0xff]
      %s9730 = scalar_lea.vmem %s5, 160
      %v9731 = vld [vmem:[%s9730] sm:$0xf]
      %v9732 = vld [vmem:[%s9730 + $0x4] sm:$0xf]
      %v9733 = vld [vmem:[%s9730 + $0x8] sm:$0xf]
      %v9734 = vld [vmem:[%s9730 + $0xc] sm:$0xf]
      %v9735 = vld [vmem:[%s9730 + $0x10] sm:$0xf]
      %v9736 = vld [vmem:[%s9730 + $0x14] sm:$0xf]
      %v9737 = vld [vmem:[%s9730 + $0x18] sm:$0xf]
      %v9738 = vld [vmem:[%s9730 + $0x1c] sm:$0xf]
      %v9739 = vld [vmem:[%s9730 + $0x20] sm:$0xf]
      %v9740 = vld [vmem:[%s9730 + $0x24] sm:$0xf]
      %v9741 = vld [vmem:[%s9730 + $0x28] sm:$0xf]
      %v9742 = vld [vmem:[%s9730 + $0x2c] sm:$0xf]
      %v9743 = vld [vmem:[%s9730 + $0x30] sm:$0xf]
      %v9744 = vld [vmem:[%s9730 + $0x34] sm:$0xf]
      %v9745 = vld [vmem:[%s9730 + $0x38] sm:$0xf]
      %v9746 = vld [vmem:[%s9730 + $0x3c] sm:$0xf]
      %v9747 = vld [vmem:[%s9730 + $0x40] sm:$0xf]
      %v9748 = vld [vmem:[%s9730 + $0x44] sm:$0xf]
      %v9749 = vld [vmem:[%s9730 + $0x48] sm:$0xf]
      %v9750 = vld [vmem:[%s9730 + $0x4c] sm:$0xf]
      %v9783 = vunpack.c.l.b16 %v9698
      %v9784 = vunpack.c.h.b16 %v9698
      %v9785 = vunpack.c.l.b16 %v9699
      %v9786 = vunpack.c.h.b16 %v9699
      %v9787 = vunpack.c.l.b16 %v9700
      %v9788 = vunpack.c.h.b16 %v9700
      %v9789 = vunpack.c.l.b16 %v9701
      %v9790 = vunpack.c.h.b16 %v9701
      %v9791 = vunpack.c.l.b16 %v9702
      %v9792 = vunpack.c.h.b16 %v9702
      %v9793 = vunpack.c.l.b16 %v9703
      %v9794 = vunpack.c.h.b16 %v9703
      %v9795 = vunpack.c.l.b16 %v9704
      %v9796 = vunpack.c.h.b16 %v9704
      %v9797 = vunpack.c.l.b16 %v9705
      %v9798 = vunpack.c.h.b16 %v9705
      %v9799 = vunpack.c.l.b16 %v9706
      %v9800 = vunpack.c.h.b16 %v9706
      %v9801 = vunpack.c.l.b16 %v9707
      %v9802 = vunpack.c.h.b16 %v9707
      %v9803 = vunpack.c.l.b16 %v9708
      %v9804 = vunpack.c.h.b16 %v9708
      %v9805 = vunpack.c.l.b16 %v9709
      %v9806 = vunpack.c.h.b16 %v9709
      %v9807 = vunpack.c.l.b16 %v9710
      %v9808 = vunpack.c.h.b16 %v9710
      %v9809 = vunpack.c.l.b16 %v9711
      %v9810 = vunpack.c.h.b16 %v9711
      %v9811 = vunpack.c.l.b16 %v9712
      %v9812 = vunpack.c.h.b16 %v9712
      %v9813 = vunpack.c.l.b16 %v9713
      %v9814 = vunpack.c.h.b16 %v9713
      %v9815 = vunpack.c.l.b16 %v9714
      %v9816 = vunpack.c.h.b16 %v9714
      %v9817 = vunpack.c.l.b16 %v9715
      %v9818 = vunpack.c.h.b16 %v9715
      %v9819 = vunpack.c.l.b16 %v9716
      %v9820 = vunpack.c.h.b16 %v9716
      %v9821 = vunpack.c.l.b16 %v9717
      %v9822 = vunpack.c.h.b16 %v9717
      %v9823 = vunpack.c.l.b16 %v9718
      %v9824 = vunpack.c.h.b16 %v9718
      %v9825 = vunpack.c.l.b16 %v9719
      %v9826 = vunpack.c.h.b16 %v9719
      %v9827 = vunpack.c.l.b16 %v9720
      %v9828 = vunpack.c.h.b16 %v9720
      %v9829 = vunpack.c.l.b16 %v9721
      %v9830 = vunpack.c.h.b16 %v9721
      %v9831 = vunpack.c.l.b16 %v9722
      %v9832 = vunpack.c.h.b16 %v9722
      %v9833 = vunpack.c.l.b16 %v9723
      %v9834 = vunpack.c.h.b16 %v9723
      %v9835 = vunpack.c.l.b16 %v9724
      %v9836 = vunpack.c.h.b16 %v9724
      %v9837 = vunpack.c.l.b16 %v9725
      %v9838 = vunpack.c.h.b16 %v9725
      %v9839 = vunpack.c.l.b16 %v9726
      %v9840 = vunpack.c.h.b16 %v9726
      %v9841 = vunpack.c.l.b16 %v9727
      %v9842 = vunpack.c.h.b16 %v9727
      %v9843 = vunpack.c.l.b16 %v9728
      %v9844 = vunpack.c.h.b16 %v9728
      %v9845 = vunpack.c.l.b16 %v9729
      %v9846 = vunpack.c.h.b16 %v9729
      %v9847 = vpack.c.b16 %v9785, %v9783
      %v9848 = vpack.c.b16 %v9786, %v9784
      %v9849 = vpack.c.b16 %v9789, %v9787
      %v9850 = vpack.c.b16 %v9790, %v9788
      %v9851 = vpack.c.b16 %v9793, %v9791
      %v9852 = vpack.c.b16 %v9794, %v9792
      %v9853 = vpack.c.b16 %v9797, %v9795
      %v9854 = vpack.c.b16 %v9798, %v9796
      %v9855 = vpack.c.b16 %v9801, %v9799
      %v9856 = vpack.c.b16 %v9802, %v9800
      %v9857 = vpack.c.b16 %v9805, %v9803
      %v9858 = vpack.c.b16 %v9806, %v9804
      %v9859 = vpack.c.b16 %v9809, %v9807
      %v9860 = vpack.c.b16 %v9810, %v9808
      %v9861 = vpack.c.b16 %v9813, %v9811
      %v9862 = vpack.c.b16 %v9814, %v9812
      %v9863 = vpack.c.b16 %v9817, %v9815
      %v9864 = vpack.c.b16 %v9818, %v9816
      %v9865 = vpack.c.b16 %v9821, %v9819
      %v9866 = vpack.c.b16 %v9822, %v9820
      %v9867 = vpack.c.b16 %v9825, %v9823
      %v9868 = vpack.c.b16 %v9826, %v9824
      %v9869 = vpack.c.b16 %v9829, %v9827
      %v9870 = vpack.c.b16 %v9830, %v9828
      %v9871 = vpack.c.b16 %v9833, %v9831
      %v9872 = vpack.c.b16 %v9834, %v9832
      %v9873 = vpack.c.b16 %v9837, %v9835
      %v9874 = vpack.c.b16 %v9838, %v9836
      %v9875 = vpack.c.b16 %v9841, %v9839
      %v9876 = vpack.c.b16 %v9842, %v9840
      %v9877 = vpack.c.b16 %v9845, %v9843
      %v9878 = vpack.c.b16 %v9846, %v9844
      %v9915 = vunpack.c.l.b16 %v9731
      %v9916 = vunpack.c.l.b16 %v9732
      %v9917 = vunpack.c.l.b16 %v9733
      %v9918 = vunpack.c.l.b16 %v9734
      %v9919 = vunpack.c.l.b16 %v9735
      %v9920 = vunpack.c.l.b16 %v9736
      %v9921 = vunpack.c.l.b16 %v9737
      %v9922 = vunpack.c.l.b16 %v9738
      %v9923 = vunpack.c.l.b16 %v9739
      %v9924 = vunpack.c.l.b16 %v9740
      %v9925 = vunpack.c.l.b16 %v9741
      %v9926 = vunpack.c.l.b16 %v9742
      %v9927 = vunpack.c.l.b16 %v9743
      %v9928 = vunpack.c.l.b16 %v9744
      %v9929 = vunpack.c.l.b16 %v9745
      %v9930 = vunpack.c.l.b16 %v9746
      %v9931 = vunpack.c.l.b16 %v9747
      %v9932 = vunpack.c.l.b16 %v9748
      %v9933 = vunpack.c.l.b16 %v9749
      %v9934 = vunpack.c.l.b16 %v9750
      %v9935 = vpack.c.b16 %v9916, %v9915
      %v9936 = vpack.c.b16 %v9918, %v9917
      %v9937 = vpack.c.b16 %v9920, %v9919
      %v9938 = vpack.c.b16 %v9922, %v9921
      %v9939 = vpack.c.b16 %v9924, %v9923
      %v9940 = vpack.c.b16 %v9926, %v9925
      %v9941 = vpack.c.b16 %v9928, %v9927
      %v9942 = vpack.c.b16 %v9930, %v9929
      %v9943 = vpack.c.b16 %v9932, %v9931
      %v9944 = vpack.c.b16 %v9934, %v9933
      %v9956 = vsel %vm9040, %v9848, 0
      %v9959 = vsel %vm9040, %v9850, 0
      %v9962 = vsel %vm9040, %v9852, 0
      %v9965 = vsel %vm9040, %v9854, 0
      %v9968 = vsel %vm9040, %v9856, 0
      %v9971 = vsel %vm9040, %v9858, 0
      %v9974 = vsel %vm9040, %v9860, 0
      %v9977 = vsel %vm9040, %v9862, 0
      %v9980 = vsel %vm9040, %v9864, 0
      %v9983 = vsel %vm9040, %v9866, 0
      %v9986 = vsel %vm9040, %v9868, 0
      %v9989 = vsel %vm9040, %v9870, 0
      %v9992 = vsel %vm9040, %v9872, 0
      %v9995 = vsel %vm9040, %v9874, 0
      %v9998 = vsel %vm9040, %v9876, 0
      %v10001 = vsel %vm9040, %v9878, 0
      %10003 = vmatpush.bf16.msra.mxu0 %v9942
      %10004 = vmatpush.bf16.msra.mxu0 %v9941
      %10005 = vmatpush.bf16.msra.mxu0 %v9940
      %10006 = vmatpush.bf16.msra.mxu0 %v9939
      %10007 = vmatpush.bf16.msra.mxu0 %v9938
      %10008 = vmatpush.bf16.msra.mxu0 %v9937
      %10009 = vmatpush.bf16.msra.mxu0 %v9936
      %10010 = vmatpush.bf16.msra.mxu0 %v9935
      %10011 = vmatmul.bf16.gmra.mxu0 %v9847
      %v10012 = vpop.f32.mrf.mxu0
      %v10013 = vadd.f32 0.0, %v10012
      %v10014 = vpop.f32.mrf.mxu0
      %v10015 = vadd.f32 0.0, %v10014
      %10016 = vmatmul.bf16.gmra.mxu0 %v9849
      %v10017 = vpop.f32.mrf.mxu0
      %v10018 = vadd.f32 0.0, %v10017
      %v10019 = vpop.f32.mrf.mxu0
      %v10020 = vadd.f32 0.0, %v10019
      %10021 = vmatmul.bf16.gmra.mxu0 %v9851
      %v10022 = vpop.f32.mrf.mxu0
      %v10023 = vadd.f32 0.0, %v10022
      %v10024 = vpop.f32.mrf.mxu0
      %v10025 = vadd.f32 0.0, %v10024
      %10026 = vmatmul.bf16.gmra.mxu0 %v9853
      %v10027 = vpop.f32.mrf.mxu0
      %v10028 = vadd.f32 0.0, %v10027
      %v10029 = vpop.f32.mrf.mxu0
      %v10030 = vadd.f32 0.0, %v10029
      %10031 = vmatmul.bf16.gmra.mxu0 %v9855
      %v10032 = vpop.f32.mrf.mxu0
      %v10033 = vadd.f32 0.0, %v10032
      %v10034 = vpop.f32.mrf.mxu0
      %v10035 = vadd.f32 0.0, %v10034
      %10036 = vmatmul.bf16.gmra.mxu0 %v9857
      %v10037 = vpop.f32.mrf.mxu0
      %v10038 = vadd.f32 0.0, %v10037
      %v10039 = vpop.f32.mrf.mxu0
      %v10040 = vadd.f32 0.0, %v10039
      %10041 = vmatmul.bf16.gmra.mxu0 %v9859
      %v10042 = vpop.f32.mrf.mxu0
      %v10043 = vadd.f32 0.0, %v10042
      %v10044 = vpop.f32.mrf.mxu0
      %v10045 = vadd.f32 0.0, %v10044
      %10046 = vmatmul.bf16.gmra.mxu0 %v9861
      %v10047 = vpop.f32.mrf.mxu0
      %v10048 = vadd.f32 0.0, %v10047
      %v10049 = vpop.f32.mrf.mxu0
      %v10050 = vadd.f32 0.0, %v10049
      %10051 = vmatmul.bf16.gmra.mxu0 %v9863
      %v10052 = vpop.f32.mrf.mxu0
      %v10053 = vadd.f32 0.0, %v10052
      %v10054 = vpop.f32.mrf.mxu0
      %v10055 = vadd.f32 0.0, %v10054
      %10056 = vmatmul.bf16.gmra.mxu0 %v9865
      %v10057 = vpop.f32.mrf.mxu0
      %v10058 = vadd.f32 0.0, %v10057
      %v10059 = vpop.f32.mrf.mxu0
      %v10060 = vadd.f32 0.0, %v10059
      %10061 = vmatmul.bf16.gmra.mxu0 %v9867
      %v10062 = vpop.f32.mrf.mxu0
      %v10063 = vadd.f32 0.0, %v10062
      %v10064 = vpop.f32.mrf.mxu0
      %v10065 = vadd.f32 0.0, %v10064
      %10066 = vmatmul.bf16.gmra.mxu0 %v9869
      %v10067 = vpop.f32.mrf.mxu0
      %v10068 = vadd.f32 0.0, %v10067
      %v10069 = vpop.f32.mrf.mxu0
      %v10070 = vadd.f32 0.0, %v10069
      %10071 = vmatmul.bf16.gmra.mxu0 %v9871
      %v10072 = vpop.f32.mrf.mxu0
      %v10073 = vadd.f32 0.0, %v10072
      %v10074 = vpop.f32.mrf.mxu0
      %v10075 = vadd.f32 0.0, %v10074
      %10076 = vmatmul.bf16.gmra.mxu0 %v9873
      %v10077 = vpop.f32.mrf.mxu0
      %v10078 = vadd.f32 0.0, %v10077
      %v10079 = vpop.f32.mrf.mxu0
      %v10080 = vadd.f32 0.0, %v10079
      %10081 = vmatmul.bf16.gmra.mxu0 %v9875
      %v10082 = vpop.f32.mrf.mxu0
      %v10083 = vadd.f32 0.0, %v10082
      %v10084 = vpop.f32.mrf.mxu0
      %v10085 = vadd.f32 0.0, %v10084
      %10086 = vmatmul.bf16.gmra.mxu0 %v9877
      %v10087 = vpop.f32.mrf.mxu0
      %v10088 = vadd.f32 0.0, %v10087
      %v10089 = vpop.f32.mrf.mxu0
      %v10090 = vadd.f32 0.0, %v10089
      %10091 = vdwg.mxu0
      %10092 = vmatpush.bf16.msra.mxu0 0
      %10093 = vmatpush.bf16.msra.mxu0 0
      %10094 = vmatpush.bf16.msra.mxu0 0
      %10095 = vmatpush.bf16.msra.mxu0 0
      %10096 = vmatpush.bf16.msra.mxu0 0
      %10097 = vmatpush.bf16.msra.mxu0 0
      %10098 = vmatpush.bf16.msra.mxu0 %v9944
      %10099 = vmatpush.bf16.msra.mxu0 %v9943
      %10100 = vmatmul.bf16.gmra.mxu0 %v9956
      %v10101 = vpop.f32.mrf.mxu0
      %v10102 = vadd.f32 %v10013, %v10101
      %v10103 = vpop.f32.mrf.mxu0
      %v10104 = vadd.f32 %v10015, %v10103
      %10105 = vmatmul.bf16.gmra.mxu0 %v9959
      %v10106 = vpop.f32.mrf.mxu0
      %v10107 = vadd.f32 %v10018, %v10106
      %v10108 = vpop.f32.mrf.mxu0
      %v10109 = vadd.f32 %v10020, %v10108
      %10110 = vmatmul.bf16.gmra.mxu0 %v9962
      %v10111 = vpop.f32.mrf.mxu0
      %v10112 = vadd.f32 %v10023, %v10111
      %v10113 = vpop.f32.mrf.mxu0
      %v10114 = vadd.f32 %v10025, %v10113
      %10115 = vmatmul.bf16.gmra.mxu0 %v9965
      %v10116 = vpop.f32.mrf.mxu0
      %v10117 = vadd.f32 %v10028, %v10116
      %v10118 = vpop.f32.mrf.mxu0
      %v10119 = vadd.f32 %v10030, %v10118
      %10120 = vmatmul.bf16.gmra.mxu0 %v9968
      %v10121 = vpop.f32.mrf.mxu0
      %v10122 = vadd.f32 %v10033, %v10121
      %v10123 = vpop.f32.mrf.mxu0
      %v10124 = vadd.f32 %v10035, %v10123
      %10125 = vmatmul.bf16.gmra.mxu0 %v9971
      %v10126 = vpop.f32.mrf.mxu0
      %v10127 = vadd.f32 %v10038, %v10126
      %v10128 = vpop.f32.mrf.mxu0
      %v10129 = vadd.f32 %v10040, %v10128
      %10130 = vmatmul.bf16.gmra.mxu0 %v9974
      %v10131 = vpop.f32.mrf.mxu0
      %v10132 = vadd.f32 %v10043, %v10131
      %v10133 = vpop.f32.mrf.mxu0
      %v10134 = vadd.f32 %v10045, %v10133
      %10135 = vmatmul.bf16.gmra.mxu0 %v9977
      %v10136 = vpop.f32.mrf.mxu0
      %v10137 = vadd.f32 %v10048, %v10136
      %v10138 = vpop.f32.mrf.mxu0
      %v10139 = vadd.f32 %v10050, %v10138
      %10140 = vmatmul.bf16.gmra.mxu0 %v9980
      %v10141 = vpop.f32.mrf.mxu0
      %v10142 = vadd.f32 %v10053, %v10141
      %v10143 = vpop.f32.mrf.mxu0
      %v10144 = vadd.f32 %v10055, %v10143
      %10145 = vmatmul.bf16.gmra.mxu0 %v9983
      %v10146 = vpop.f32.mrf.mxu0
      %v10147 = vadd.f32 %v10058, %v10146
      %v10148 = vpop.f32.mrf.mxu0
      %v10149 = vadd.f32 %v10060, %v10148
      %10150 = vmatmul.bf16.gmra.mxu0 %v9986
      %v10151 = vpop.f32.mrf.mxu0
      %v10152 = vadd.f32 %v10063, %v10151
      %v10153 = vpop.f32.mrf.mxu0
      %v10154 = vadd.f32 %v10065, %v10153
      %10155 = vmatmul.bf16.gmra.mxu0 %v9989
      %v10156 = vpop.f32.mrf.mxu0
      %v10157 = vadd.f32 %v10068, %v10156
      %v10158 = vpop.f32.mrf.mxu0
      %v10159 = vadd.f32 %v10070, %v10158
      %10160 = vmatmul.bf16.gmra.mxu0 %v9992
      %v10161 = vpop.f32.mrf.mxu0
      %v10162 = vadd.f32 %v10073, %v10161
      %v10163 = vpop.f32.mrf.mxu0
      %v10164 = vadd.f32 %v10075, %v10163
      %10165 = vmatmul.bf16.gmra.mxu0 %v9995
      %v10166 = vpop.f32.mrf.mxu0
      %v10167 = vadd.f32 %v10078, %v10166
      %v10168 = vpop.f32.mrf.mxu0
      %v10169 = vadd.f32 %v10080, %v10168
      %10170 = vmatmul.bf16.gmra.mxu0 %v9998
      %v10171 = vpop.f32.mrf.mxu0
      %v10172 = vadd.f32 %v10083, %v10171
      %v10173 = vpop.f32.mrf.mxu0
      %v10174 = vadd.f32 %v10085, %v10173
      %10175 = vmatmul.bf16.gmra.mxu0 %v10001
      %v10176 = vpop.f32.mrf.mxu0
      %v10177 = vadd.f32 %v10088, %v10176
      %v10178 = vpop.f32.mrf.mxu0
      %v10179 = vadd.f32 %v10090, %v10178
      %10180 = vdwg.mxu0
      %v10181 = vadd.f32 %v9618, %v10102
      %v10182 = vadd.f32 %v9620, %v10104
      %v10183 = vadd.f32 %v9623, %v10107
      %v10184 = vadd.f32 %v9625, %v10109
      %v10185 = vadd.f32 %v9628, %v10112
      %v10186 = vadd.f32 %v9630, %v10114
      %v10187 = vadd.f32 %v9633, %v10117
      %v10188 = vadd.f32 %v9635, %v10119
      %v10189 = vadd.f32 %v9638, %v10122
      %v10190 = vadd.f32 %v9640, %v10124
      %v10191 = vadd.f32 %v9643, %v10127
      %v10192 = vadd.f32 %v9645, %v10129
      %v10193 = vadd.f32 %v9648, %v10132
      %v10194 = vadd.f32 %v9650, %v10134
      %v10195 = vadd.f32 %v9653, %v10137
      %v10196 = vadd.f32 %v9655, %v10139
      %v10197 = vadd.f32 %v9658, %v10142
      %v10198 = vadd.f32 %v9660, %v10144
      %v10199 = vadd.f32 %v9663, %v10147
      %v10200 = vadd.f32 %v9665, %v10149
      %v10201 = vadd.f32 %v9668, %v10152
      %v10202 = vadd.f32 %v9670, %v10154
      %v10203 = vadd.f32 %v9673, %v10157
      %v10204 = vadd.f32 %v9675, %v10159
      %v10205 = vadd.f32 %v9678, %v10162
      %v10206 = vadd.f32 %v9680, %v10164
      %v10207 = vadd.f32 %v9683, %v10167
      %v10208 = vadd.f32 %v9685, %v10169
      %v10209 = vadd.f32 %v9688, %v10172
      %v10210 = vadd.f32 %v9690, %v10174
      %v10211 = vadd.f32 %v9693, %v10177
      %v10212 = vadd.f32 %v9695, %v10179
      %s10213 = scalar_lea.vmem [#allocation4], 48
      %v10214 = vld [vmem:[%s10213] sm:$0xff]
      %v10215 = vld [vmem:[%s10213 + $0x8] sm:$0xff]
      %v10216 = vld [vmem:[%s10213 + $0x10] sm:$0xff]
      %v10217 = vld [vmem:[%s10213 + $0x18] sm:$0xff]
      %v10218 = vld [vmem:[%s10213 + $0x20] sm:$0xff]
      %v10219 = vld [vmem:[%s10213 + $0x28] sm:$0xff]
      %v10220 = vld [vmem:[%s10213 + $0x30] sm:$0xff]
      %v10221 = vld [vmem:[%s10213 + $0x38] sm:$0xff]
      %v10222 = vld [vmem:[%s10213 + $0x40] sm:$0xff]
      %v10223 = vld [vmem:[%s10213 + $0x48] sm:$0xff]
      %v10224 = vld [vmem:[%s10213 + $0x50] sm:$0xff]
      %v10225 = vld [vmem:[%s10213 + $0x58] sm:$0xff]
      %v10226 = vld [vmem:[%s10213 + $0x60] sm:$0xff]
      %v10227 = vld [vmem:[%s10213 + $0x68] sm:$0xff]
      %v10228 = vld [vmem:[%s10213 + $0x70] sm:$0xff]
      %v10229 = vld [vmem:[%s10213 + $0x78] sm:$0xff]
      %v10230 = vld [vmem:[%s10213 + $0x80] sm:$0xff]
      %v10231 = vld [vmem:[%s10213 + $0x88] sm:$0xff]
      %v10232 = vld [vmem:[%s10213 + $0x90] sm:$0xff]
      %v10233 = vld [vmem:[%s10213 + $0x98] sm:$0xff]
      %v10234 = vld [vmem:[%s10213 + $0xa0] sm:$0xff]
      %v10235 = vld [vmem:[%s10213 + $0xa8] sm:$0xff]
      %v10236 = vld [vmem:[%s10213 + $0xb0] sm:$0xff]
      %v10237 = vld [vmem:[%s10213 + $0xb8] sm:$0xff]
      %v10238 = vld [vmem:[%s10213 + $0xc0] sm:$0xff]
      %v10239 = vld [vmem:[%s10213 + $0xc8] sm:$0xff]
      %v10240 = vld [vmem:[%s10213 + $0xd0] sm:$0xff]
      %v10241 = vld [vmem:[%s10213 + $0xd8] sm:$0xff]
      %v10242 = vld [vmem:[%s10213 + $0xe0] sm:$0xff]
      %v10243 = vld [vmem:[%s10213 + $0xe8] sm:$0xff]
      %v10244 = vld [vmem:[%s10213 + $0xf0] sm:$0xff]
      %v10245 = vld [vmem:[%s10213 + $0xf8] sm:$0xff]
      %s10246 = scalar_lea.vmem %s5, 240
      %v10247 = vld [vmem:[%s10246] sm:$0xf]
      %v10248 = vld [vmem:[%s10246 + $0x4] sm:$0xf]
      %v10249 = vld [vmem:[%s10246 + $0x8] sm:$0xf]
      %v10250 = vld [vmem:[%s10246 + $0xc] sm:$0xf]
      %v10251 = vld [vmem:[%s10246 + $0x10] sm:$0xf]
      %v10252 = vld [vmem:[%s10246 + $0x14] sm:$0xf]
      %v10253 = vld [vmem:[%s10246 + $0x18] sm:$0xf]
      %v10254 = vld [vmem:[%s10246 + $0x1c] sm:$0xf]
      %v10255 = vld [vmem:[%s10246 + $0x20] sm:$0xf]
      %v10256 = vld [vmem:[%s10246 + $0x24] sm:$0xf]
      %v10257 = vld [vmem:[%s10246 + $0x28] sm:$0xf]
      %v10258 = vld [vmem:[%s10246 + $0x2c] sm:$0xf]
      %v10259 = vld [vmem:[%s10246 + $0x30] sm:$0xf]
      %v10260 = vld [vmem:[%s10246 + $0x34] sm:$0xf]
      %v10261 = vld [vmem:[%s10246 + $0x38] sm:$0xf]
      %v10262 = vld [vmem:[%s10246 + $0x3c] sm:$0xf]
      %v10263 = vld [vmem:[%s10246 + $0x40] sm:$0xf]
      %v10264 = vld [vmem:[%s10246 + $0x44] sm:$0xf]
      %v10265 = vld [vmem:[%s10246 + $0x48] sm:$0xf]
      %v10266 = vld [vmem:[%s10246 + $0x4c] sm:$0xf]
      %v10299 = vunpack.c.l.b16 %v10214
      %v10300 = vunpack.c.h.b16 %v10214
      %v10301 = vunpack.c.l.b16 %v10215
      %v10302 = vunpack.c.h.b16 %v10215
      %v10303 = vunpack.c.l.b16 %v10216
      %v10304 = vunpack.c.h.b16 %v10216
      %v10305 = vunpack.c.l.b16 %v10217
      %v10306 = vunpack.c.h.b16 %v10217
      %v10307 = vunpack.c.l.b16 %v10218
      %v10308 = vunpack.c.h.b16 %v10218
      %v10309 = vunpack.c.l.b16 %v10219
      %v10310 = vunpack.c.h.b16 %v10219
      %v10311 = vunpack.c.l.b16 %v10220
      %v10312 = vunpack.c.h.b16 %v10220
      %v10313 = vunpack.c.l.b16 %v10221
      %v10314 = vunpack.c.h.b16 %v10221
      %v10315 = vunpack.c.l.b16 %v10222
      %v10316 = vunpack.c.h.b16 %v10222
      %v10317 = vunpack.c.l.b16 %v10223
      %v10318 = vunpack.c.h.b16 %v10223
      %v10319 = vunpack.c.l.b16 %v10224
      %v10320 = vunpack.c.h.b16 %v10224
      %v10321 = vunpack.c.l.b16 %v10225
      %v10322 = vunpack.c.h.b16 %v10225
      %v10323 = vunpack.c.l.b16 %v10226
      %v10324 = vunpack.c.h.b16 %v10226
      %v10325 = vunpack.c.l.b16 %v10227
      %v10326 = vunpack.c.h.b16 %v10227
      %v10327 = vunpack.c.l.b16 %v10228
      %v10328 = vunpack.c.h.b16 %v10228
      %v10329 = vunpack.c.l.b16 %v10229
      %v10330 = vunpack.c.h.b16 %v10229
      %v10331 = vunpack.c.l.b16 %v10230
      %v10332 = vunpack.c.h.b16 %v10230
      %v10333 = vunpack.c.l.b16 %v10231
      %v10334 = vunpack.c.h.b16 %v10231
      %v10335 = vunpack.c.l.b16 %v10232
      %v10336 = vunpack.c.h.b16 %v10232
      %v10337 = vunpack.c.l.b16 %v10233
      %v10338 = vunpack.c.h.b16 %v10233
      %v10339 = vunpack.c.l.b16 %v10234
      %v10340 = vunpack.c.h.b16 %v10234
      %v10341 = vunpack.c.l.b16 %v10235
      %v10342 = vunpack.c.h.b16 %v10235
      %v10343 = vunpack.c.l.b16 %v10236
      %v10344 = vunpack.c.h.b16 %v10236
      %v10345 = vunpack.c.l.b16 %v10237
      %v10346 = vunpack.c.h.b16 %v10237
      %v10347 = vunpack.c.l.b16 %v10238
      %v10348 = vunpack.c.h.b16 %v10238
      %v10349 = vunpack.c.l.b16 %v10239
      %v10350 = vunpack.c.h.b16 %v10239
      %v10351 = vunpack.c.l.b16 %v10240
      %v10352 = vunpack.c.h.b16 %v10240
      %v10353 = vunpack.c.l.b16 %v10241
      %v10354 = vunpack.c.h.b16 %v10241
      %v10355 = vunpack.c.l.b16 %v10242
      %v10356 = vunpack.c.h.b16 %v10242
      %v10357 = vunpack.c.l.b16 %v10243
      %v10358 = vunpack.c.h.b16 %v10243
      %v10359 = vunpack.c.l.b16 %v10244
      %v10360 = vunpack.c.h.b16 %v10244
      %v10361 = vunpack.c.l.b16 %v10245
      %v10362 = vunpack.c.h.b16 %v10245
      %v10363 = vpack.c.b16 %v10301, %v10299
      %v10364 = vpack.c.b16 %v10302, %v10300
      %v10365 = vpack.c.b16 %v10305, %v10303
      %v10366 = vpack.c.b16 %v10306, %v10304
      %v10367 = vpack.c.b16 %v10309, %v10307
      %v10368 = vpack.c.b16 %v10310, %v10308
      %v10369 = vpack.c.b16 %v10313, %v10311
      %v10370 = vpack.c.b16 %v10314, %v10312
      %v10371 = vpack.c.b16 %v10317, %v10315
      %v10372 = vpack.c.b16 %v10318, %v10316
      %v10373 = vpack.c.b16 %v10321, %v10319
      %v10374 = vpack.c.b16 %v10322, %v10320
      %v10375 = vpack.c.b16 %v10325, %v10323
      %v10376 = vpack.c.b16 %v10326, %v10324
      %v10377 = vpack.c.b16 %v10329, %v10327
      %v10378 = vpack.c.b16 %v10330, %v10328
      %v10379 = vpack.c.b16 %v10333, %v10331
      %v10380 = vpack.c.b16 %v10334, %v10332
      %v10381 = vpack.c.b16 %v10337, %v10335
      %v10382 = vpack.c.b16 %v10338, %v10336
      %v10383 = vpack.c.b16 %v10341, %v10339
      %v10384 = vpack.c.b16 %v10342, %v10340
      %v10385 = vpack.c.b16 %v10345, %v10343
      %v10386 = vpack.c.b16 %v10346, %v10344
      %v10387 = vpack.c.b16 %v10349, %v10347
      %v10388 = vpack.c.b16 %v10350, %v10348
      %v10389 = vpack.c.b16 %v10353, %v10351
      %v10390 = vpack.c.b16 %v10354, %v10352
      %v10391 = vpack.c.b16 %v10357, %v10355
      %v10392 = vpack.c.b16 %v10358, %v10356
      %v10393 = vpack.c.b16 %v10361, %v10359
      %v10394 = vpack.c.b16 %v10362, %v10360
      %v10431 = vunpack.c.l.b16 %v10247
      %v10432 = vunpack.c.l.b16 %v10248
      %v10433 = vunpack.c.l.b16 %v10249
      %v10434 = vunpack.c.l.b16 %v10250
      %v10435 = vunpack.c.l.b16 %v10251
      %v10436 = vunpack.c.l.b16 %v10252
      %v10437 = vunpack.c.l.b16 %v10253
      %v10438 = vunpack.c.l.b16 %v10254
      %v10439 = vunpack.c.l.b16 %v10255
      %v10440 = vunpack.c.l.b16 %v10256
      %v10441 = vunpack.c.l.b16 %v10257
      %v10442 = vunpack.c.l.b16 %v10258
      %v10443 = vunpack.c.l.b16 %v10259
      %v10444 = vunpack.c.l.b16 %v10260
      %v10445 = vunpack.c.l.b16 %v10261
      %v10446 = vunpack.c.l.b16 %v10262
      %v10447 = vunpack.c.l.b16 %v10263
      %v10448 = vunpack.c.l.b16 %v10264
      %v10449 = vunpack.c.l.b16 %v10265
      %v10450 = vunpack.c.l.b16 %v10266
      %v10451 = vpack.c.b16 %v10432, %v10431
      %v10452 = vpack.c.b16 %v10434, %v10433
      %v10453 = vpack.c.b16 %v10436, %v10435
      %v10454 = vpack.c.b16 %v10438, %v10437
      %v10455 = vpack.c.b16 %v10440, %v10439
      %v10456 = vpack.c.b16 %v10442, %v10441
      %v10457 = vpack.c.b16 %v10444, %v10443
      %v10458 = vpack.c.b16 %v10446, %v10445
      %v10459 = vpack.c.b16 %v10448, %v10447
      %v10460 = vpack.c.b16 %v10450, %v10449
      %v10472 = vsel %vm9040, %v10364, 0
      %v10475 = vsel %vm9040, %v10366, 0
      %v10478 = vsel %vm9040, %v10368, 0
      %v10481 = vsel %vm9040, %v10370, 0
      %v10484 = vsel %vm9040, %v10372, 0
      %v10487 = vsel %vm9040, %v10374, 0
      %v10490 = vsel %vm9040, %v10376, 0
      %v10493 = vsel %vm9040, %v10378, 0
      %v10496 = vsel %vm9040, %v10380, 0
      %v10499 = vsel %vm9040, %v10382, 0
      %v10502 = vsel %vm9040, %v10384, 0
      %v10505 = vsel %vm9040, %v10386, 0
      %v10508 = vsel %vm9040, %v10388, 0
      %v10511 = vsel %vm9040, %v10390, 0
      %v10514 = vsel %vm9040, %v10392, 0
      %v10517 = vsel %vm9040, %v10394, 0
      %10519 = vmatpush.bf16.msra.mxu0 %v10458
      %10520 = vmatpush.bf16.msra.mxu0 %v10457
      %10521 = vmatpush.bf16.msra.mxu0 %v10456
      %10522 = vmatpush.bf16.msra.mxu0 %v10455
      %10523 = vmatpush.bf16.msra.mxu0 %v10454
      %10524 = vmatpush.bf16.msra.mxu0 %v10453
      %10525 = vmatpush.bf16.msra.mxu0 %v10452
      %10526 = vmatpush.bf16.msra.mxu0 %v10451
      %10527 = vmatmul.bf16.gmra.mxu0 %v10363
      %v10528 = vpop.f32.mrf.mxu0
      %v10529 = vadd.f32 0.0, %v10528
      %v10530 = vpop.f32.mrf.mxu0
      %v10531 = vadd.f32 0.0, %v10530
      %10532 = vmatmul.bf16.gmra.mxu0 %v10365
      %v10533 = vpop.f32.mrf.mxu0
      %v10534 = vadd.f32 0.0, %v10533
      %v10535 = vpop.f32.mrf.mxu0
      %v10536 = vadd.f32 0.0, %v10535
      %10537 = vmatmul.bf16.gmra.mxu0 %v10367
      %v10538 = vpop.f32.mrf.mxu0
      %v10539 = vadd.f32 0.0, %v10538
      %v10540 = vpop.f32.mrf.mxu0
      %v10541 = vadd.f32 0.0, %v10540
      %10542 = vmatmul.bf16.gmra.mxu0 %v10369
      %v10543 = vpop.f32.mrf.mxu0
      %v10544 = vadd.f32 0.0, %v10543
      %v10545 = vpop.f32.mrf.mxu0
      %v10546 = vadd.f32 0.0, %v10545
      %10547 = vmatmul.bf16.gmra.mxu0 %v10371
      %v10548 = vpop.f32.mrf.mxu0
      %v10549 = vadd.f32 0.0, %v10548
      %v10550 = vpop.f32.mrf.mxu0
      %v10551 = vadd.f32 0.0, %v10550
      %10552 = vmatmul.bf16.gmra.mxu0 %v10373
      %v10553 = vpop.f32.mrf.mxu0
      %v10554 = vadd.f32 0.0, %v10553
      %v10555 = vpop.f32.mrf.mxu0
      %v10556 = vadd.f32 0.0, %v10555
      %10557 = vmatmul.bf16.gmra.mxu0 %v10375
      %v10558 = vpop.f32.mrf.mxu0
      %v10559 = vadd.f32 0.0, %v10558
      %v10560 = vpop.f32.mrf.mxu0
      %v10561 = vadd.f32 0.0, %v10560
      %10562 = vmatmul.bf16.gmra.mxu0 %v10377
      %v10563 = vpop.f32.mrf.mxu0
      %v10564 = vadd.f32 0.0, %v10563
      %v10565 = vpop.f32.mrf.mxu0
      %v10566 = vadd.f32 0.0, %v10565
      %10567 = vmatmul.bf16.gmra.mxu0 %v10379
      %v10568 = vpop.f32.mrf.mxu0
      %v10569 = vadd.f32 0.0, %v10568
      %v10570 = vpop.f32.mrf.mxu0
      %v10571 = vadd.f32 0.0, %v10570
      %10572 = vmatmul.bf16.gmra.mxu0 %v10381
      %v10573 = vpop.f32.mrf.mxu0
      %v10574 = vadd.f32 0.0, %v10573
      %v10575 = vpop.f32.mrf.mxu0
      %v10576 = vadd.f32 0.0, %v10575
      %10577 = vmatmul.bf16.gmra.mxu0 %v10383
      %v10578 = vpop.f32.mrf.mxu0
      %v10579 = vadd.f32 0.0, %v10578
      %v10580 = vpop.f32.mrf.mxu0
      %v10581 = vadd.f32 0.0, %v10580
      %10582 = vmatmul.bf16.gmra.mxu0 %v10385
      %v10583 = vpop.f32.mrf.mxu0
      %v10584 = vadd.f32 0.0, %v10583
      %v10585 = vpop.f32.mrf.mxu0
      %v10586 = vadd.f32 0.0, %v10585
      %10587 = vmatmul.bf16.gmra.mxu0 %v10387
      %v10588 = vpop.f32.mrf.mxu0
      %v10589 = vadd.f32 0.0, %v10588
      %v10590 = vpop.f32.mrf.mxu0
      %v10591 = vadd.f32 0.0, %v10590
      %10592 = vmatmul.bf16.gmra.mxu0 %v10389
      %v10593 = vpop.f32.mrf.mxu0
      %v10594 = vadd.f32 0.0, %v10593
      %v10595 = vpop.f32.mrf.mxu0
      %v10596 = vadd.f32 0.0, %v10595
      %10597 = vmatmul.bf16.gmra.mxu0 %v10391
      %v10598 = vpop.f32.mrf.mxu0
      %v10599 = vadd.f32 0.0, %v10598
      %v10600 = vpop.f32.mrf.mxu0
      %v10601 = vadd.f32 0.0, %v10600
      %10602 = vmatmul.bf16.gmra.mxu0 %v10393
      %v10603 = vpop.f32.mrf.mxu0
      %v10604 = vadd.f32 0.0, %v10603
      %v10605 = vpop.f32.mrf.mxu0
      %v10606 = vadd.f32 0.0, %v10605
      %10607 = vdwg.mxu0
      %10608 = vmatpush.bf16.msra.mxu0 0
      %10609 = vmatpush.bf16.msra.mxu0 0
      %10610 = vmatpush.bf16.msra.mxu0 0
      %10611 = vmatpush.bf16.msra.mxu0 0
      %10612 = vmatpush.bf16.msra.mxu0 0
      %10613 = vmatpush.bf16.msra.mxu0 0
      %10614 = vmatpush.bf16.msra.mxu0 %v10460
      %10615 = vmatpush.bf16.msra.mxu0 %v10459
      %10616 = vmatmul.bf16.gmra.mxu0 %v10472
      %v10617 = vpop.f32.mrf.mxu0
      %v10618 = vadd.f32 %v10529, %v10617
      %v10619 = vpop.f32.mrf.mxu0
      %v10620 = vadd.f32 %v10531, %v10619
      %10621 = vmatmul.bf16.gmra.mxu0 %v10475
      %v10622 = vpop.f32.mrf.mxu0
      %v10623 = vadd.f32 %v10534, %v10622
      %v10624 = vpop.f32.mrf.mxu0
      %v10625 = vadd.f32 %v10536, %v10624
      %10626 = vmatmul.bf16.gmra.mxu0 %v10478
      %v10627 = vpop.f32.mrf.mxu0
      %v10628 = vadd.f32 %v10539, %v10627
      %v10629 = vpop.f32.mrf.mxu0
      %v10630 = vadd.f32 %v10541, %v10629
      %10631 = vmatmul.bf16.gmra.mxu0 %v10481
      %v10632 = vpop.f32.mrf.mxu0
      %v10633 = vadd.f32 %v10544, %v10632
      %v10634 = vpop.f32.mrf.mxu0
      %v10635 = vadd.f32 %v10546, %v10634
      %10636 = vmatmul.bf16.gmra.mxu0 %v10484
      %v10637 = vpop.f32.mrf.mxu0
      %v10638 = vadd.f32 %v10549, %v10637
      %v10639 = vpop.f32.mrf.mxu0
      %v10640 = vadd.f32 %v10551, %v10639
      %10641 = vmatmul.bf16.gmra.mxu0 %v10487
      %v10642 = vpop.f32.mrf.mxu0
      %v10643 = vadd.f32 %v10554, %v10642
      %v10644 = vpop.f32.mrf.mxu0
      %v10645 = vadd.f32 %v10556, %v10644
      %10646 = vmatmul.bf16.gmra.mxu0 %v10490
      %v10647 = vpop.f32.mrf.mxu0
      %v10648 = vadd.f32 %v10559, %v10647
      %v10649 = vpop.f32.mrf.mxu0
      %v10650 = vadd.f32 %v10561, %v10649
      %10651 = vmatmul.bf16.gmra.mxu0 %v10493
      %v10652 = vpop.f32.mrf.mxu0
      %v10653 = vadd.f32 %v10564, %v10652
      %v10654 = vpop.f32.mrf.mxu0
      %v10655 = vadd.f32 %v10566, %v10654
      %10656 = vmatmul.bf16.gmra.mxu0 %v10496
      %v10657 = vpop.f32.mrf.mxu0
      %v10658 = vadd.f32 %v10569, %v10657
      %v10659 = vpop.f32.mrf.mxu0
      %v10660 = vadd.f32 %v10571, %v10659
      %10661 = vmatmul.bf16.gmra.mxu0 %v10499
      %v10662 = vpop.f32.mrf.mxu0
      %v10663 = vadd.f32 %v10574, %v10662
      %v10664 = vpop.f32.mrf.mxu0
      %v10665 = vadd.f32 %v10576, %v10664
      %10666 = vmatmul.bf16.gmra.mxu0 %v10502
      %v10667 = vpop.f32.mrf.mxu0
      %v10668 = vadd.f32 %v10579, %v10667
      %v10669 = vpop.f32.mrf.mxu0
      %v10670 = vadd.f32 %v10581, %v10669
      %10671 = vmatmul.bf16.gmra.mxu0 %v10505
      %v10672 = vpop.f32.mrf.mxu0
      %v10673 = vadd.f32 %v10584, %v10672
      %v10674 = vpop.f32.mrf.mxu0
      %v10675 = vadd.f32 %v10586, %v10674
      %10676 = vmatmul.bf16.gmra.mxu0 %v10508
      %v10677 = vpop.f32.mrf.mxu0
      %v10678 = vadd.f32 %v10589, %v10677
      %v10679 = vpop.f32.mrf.mxu0
      %v10680 = vadd.f32 %v10591, %v10679
      %10681 = vmatmul.bf16.gmra.mxu0 %v10511
      %v10682 = vpop.f32.mrf.mxu0
      %v10683 = vadd.f32 %v10594, %v10682
      %v10684 = vpop.f32.mrf.mxu0
      %v10685 = vadd.f32 %v10596, %v10684
      %10686 = vmatmul.bf16.gmra.mxu0 %v10514
      %v10687 = vpop.f32.mrf.mxu0
      %v10688 = vadd.f32 %v10599, %v10687
      %v10689 = vpop.f32.mrf.mxu0
      %v10690 = vadd.f32 %v10601, %v10689
      %10691 = vmatmul.bf16.gmra.mxu0 %v10517
      %v10692 = vpop.f32.mrf.mxu0
      %v10693 = vadd.f32 %v10604, %v10692
      %v10694 = vpop.f32.mrf.mxu0
      %v10695 = vadd.f32 %v10606, %v10694
      %10696 = vdwg.mxu0
      %v10697 = vadd.f32 %v10181, %v10618
      %v10698 = vadd.f32 %v10182, %v10620
      %v10699 = vadd.f32 %v10183, %v10623
      %v10700 = vadd.f32 %v10184, %v10625
      %v10701 = vadd.f32 %v10185, %v10628
      %v10702 = vadd.f32 %v10186, %v10630
      %v10703 = vadd.f32 %v10187, %v10633
      %v10704 = vadd.f32 %v10188, %v10635
      %v10705 = vadd.f32 %v10189, %v10638
      %v10706 = vadd.f32 %v10190, %v10640
      %v10707 = vadd.f32 %v10191, %v10643
      %v10708 = vadd.f32 %v10192, %v10645
      %v10709 = vadd.f32 %v10193, %v10648
      %v10710 = vadd.f32 %v10194, %v10650
      %v10711 = vadd.f32 %v10195, %v10653
      %v10712 = vadd.f32 %v10196, %v10655
      %v10713 = vadd.f32 %v10197, %v10658
      %v10714 = vadd.f32 %v10198, %v10660
      %v10715 = vadd.f32 %v10199, %v10663
      %v10716 = vadd.f32 %v10200, %v10665
      %v10717 = vadd.f32 %v10201, %v10668
      %v10718 = vadd.f32 %v10202, %v10670
      %v10719 = vadd.f32 %v10203, %v10673
      %v10720 = vadd.f32 %v10204, %v10675
      %v10721 = vadd.f32 %v10205, %v10678
      %v10722 = vadd.f32 %v10206, %v10680
      %v10723 = vadd.f32 %v10207, %v10683
      %v10724 = vadd.f32 %v10208, %v10685
      %v10725 = vadd.f32 %v10209, %v10688
      %v10726 = vadd.f32 %v10210, %v10690
      %v10727 = vadd.f32 %v10211, %v10693
      %v10728 = vadd.f32 %v10212, %v10695
      %s10729 = scalar_lea.vmem [#allocation4], 64
      %v10730 = vld [vmem:[%s10729] sm:$0xff]
      %v10731 = vld [vmem:[%s10729 + $0x8] sm:$0xff]
      %v10732 = vld [vmem:[%s10729 + $0x10] sm:$0xff]
      %v10733 = vld [vmem:[%s10729 + $0x18] sm:$0xff]
      %v10734 = vld [vmem:[%s10729 + $0x20] sm:$0xff]
      %v10735 = vld [vmem:[%s10729 + $0x28] sm:$0xff]
      %v10736 = vld [vmem:[%s10729 + $0x30] sm:$0xff]
      %v10737 = vld [vmem:[%s10729 + $0x38] sm:$0xff]
      %v10738 = vld [vmem:[%s10729 + $0x40] sm:$0xff]
      %v10739 = vld [vmem:[%s10729 + $0x48] sm:$0xff]
      %v10740 = vld [vmem:[%s10729 + $0x50] sm:$0xff]
      %v10741 = vld [vmem:[%s10729 + $0x58] sm:$0xff]
      %v10742 = vld [vmem:[%s10729 + $0x60] sm:$0xff]
      %v10743 = vld [vmem:[%s10729 + $0x68] sm:$0xff]
      %v10744 = vld [vmem:[%s10729 + $0x70] sm:$0xff]
      %v10745 = vld [vmem:[%s10729 + $0x78] sm:$0xff]
      %v10746 = vld [vmem:[%s10729 + $0x80] sm:$0xff]
      %v10747 = vld [vmem:[%s10729 + $0x88] sm:$0xff]
      %v10748 = vld [vmem:[%s10729 + $0x90] sm:$0xff]
      %v10749 = vld [vmem:[%s10729 + $0x98] sm:$0xff]
      %v10750 = vld [vmem:[%s10729 + $0xa0] sm:$0xff]
      %v10751 = vld [vmem:[%s10729 + $0xa8] sm:$0xff]
      %v10752 = vld [vmem:[%s10729 + $0xb0] sm:$0xff]
      %v10753 = vld [vmem:[%s10729 + $0xb8] sm:$0xff]
      %v10754 = vld [vmem:[%s10729 + $0xc0] sm:$0xff]
      %v10755 = vld [vmem:[%s10729 + $0xc8] sm:$0xff]
      %v10756 = vld [vmem:[%s10729 + $0xd0] sm:$0xff]
      %v10757 = vld [vmem:[%s10729 + $0xd8] sm:$0xff]
      %v10758 = vld [vmem:[%s10729 + $0xe0] sm:$0xff]
      %v10759 = vld [vmem:[%s10729 + $0xe8] sm:$0xff]
      %v10760 = vld [vmem:[%s10729 + $0xf0] sm:$0xff]
      %v10761 = vld [vmem:[%s10729 + $0xf8] sm:$0xff]
      %s10762 = scalar_lea.vmem %s5, 320
      %v10763 = vld [vmem:[%s10762] sm:$0xf]
      %v10764 = vld [vmem:[%s10762 + $0x4] sm:$0xf]
      %v10765 = vld [vmem:[%s10762 + $0x8] sm:$0xf]
      %v10766 = vld [vmem:[%s10762 + $0xc] sm:$0xf]
      %v10767 = vld [vmem:[%s10762 + $0x10] sm:$0xf]
      %v10768 = vld [vmem:[%s10762 + $0x14] sm:$0xf]
      %v10769 = vld [vmem:[%s10762 + $0x18] sm:$0xf]
      %v10770 = vld [vmem:[%s10762 + $0x1c] sm:$0xf]
      %v10771 = vld [vmem:[%s10762 + $0x20] sm:$0xf]
      %v10772 = vld [vmem:[%s10762 + $0x24] sm:$0xf]
      %v10773 = vld [vmem:[%s10762 + $0x28] sm:$0xf]
      %v10774 = vld [vmem:[%s10762 + $0x2c] sm:$0xf]
      %v10775 = vld [vmem:[%s10762 + $0x30] sm:$0xf]
      %v10776 = vld [vmem:[%s10762 + $0x34] sm:$0xf]
      %v10777 = vld [vmem:[%s10762 + $0x38] sm:$0xf]
      %v10778 = vld [vmem:[%s10762 + $0x3c] sm:$0xf]
      %v10779 = vld [vmem:[%s10762 + $0x40] sm:$0xf]
      %v10780 = vld [vmem:[%s10762 + $0x44] sm:$0xf]
      %v10781 = vld [vmem:[%s10762 + $0x48] sm:$0xf]
      %v10782 = vld [vmem:[%s10762 + $0x4c] sm:$0xf]
      %v10815 = vunpack.c.l.b16 %v10730
      %v10816 = vunpack.c.h.b16 %v10730
      %v10817 = vunpack.c.l.b16 %v10731
      %v10818 = vunpack.c.h.b16 %v10731
      %v10819 = vunpack.c.l.b16 %v10732
      %v10820 = vunpack.c.h.b16 %v10732
      %v10821 = vunpack.c.l.b16 %v10733
      %v10822 = vunpack.c.h.b16 %v10733
      %v10823 = vunpack.c.l.b16 %v10734
      %v10824 = vunpack.c.h.b16 %v10734
      %v10825 = vunpack.c.l.b16 %v10735
      %v10826 = vunpack.c.h.b16 %v10735
      %v10827 = vunpack.c.l.b16 %v10736
      %v10828 = vunpack.c.h.b16 %v10736
      %v10829 = vunpack.c.l.b16 %v10737
      %v10830 = vunpack.c.h.b16 %v10737
      %v10831 = vunpack.c.l.b16 %v10738
      %v10832 = vunpack.c.h.b16 %v10738
      %v10833 = vunpack.c.l.b16 %v10739
      %v10834 = vunpack.c.h.b16 %v10739
      %v10835 = vunpack.c.l.b16 %v10740
      %v10836 = vunpack.c.h.b16 %v10740
      %v10837 = vunpack.c.l.b16 %v10741
      %v10838 = vunpack.c.h.b16 %v10741
      %v10839 = vunpack.c.l.b16 %v10742
      %v10840 = vunpack.c.h.b16 %v10742
      %v10841 = vunpack.c.l.b16 %v10743
      %v10842 = vunpack.c.h.b16 %v10743
      %v10843 = vunpack.c.l.b16 %v10744
      %v10844 = vunpack.c.h.b16 %v10744
      %v10845 = vunpack.c.l.b16 %v10745
      %v10846 = vunpack.c.h.b16 %v10745
      %v10847 = vunpack.c.l.b16 %v10746
      %v10848 = vunpack.c.h.b16 %v10746
      %v10849 = vunpack.c.l.b16 %v10747
      %v10850 = vunpack.c.h.b16 %v10747
      %v10851 = vunpack.c.l.b16 %v10748
      %v10852 = vunpack.c.h.b16 %v10748
      %v10853 = vunpack.c.l.b16 %v10749
      %v10854 = vunpack.c.h.b16 %v10749
      %v10855 = vunpack.c.l.b16 %v10750
      %v10856 = vunpack.c.h.b16 %v10750
      %v10857 = vunpack.c.l.b16 %v10751
      %v10858 = vunpack.c.h.b16 %v10751
      %v10859 = vunpack.c.l.b16 %v10752
      %v10860 = vunpack.c.h.b16 %v10752
      %v10861 = vunpack.c.l.b16 %v10753
      %v10862 = vunpack.c.h.b16 %v10753
      %v10863 = vunpack.c.l.b16 %v10754
      %v10864 = vunpack.c.h.b16 %v10754
      %v10865 = vunpack.c.l.b16 %v10755
      %v10866 = vunpack.c.h.b16 %v10755
      %v10867 = vunpack.c.l.b16 %v10756
      %v10868 = vunpack.c.h.b16 %v10756
      %v10869 = vunpack.c.l.b16 %v10757
      %v10870 = vunpack.c.h.b16 %v10757
      %v10871 = vunpack.c.l.b16 %v10758
      %v10872 = vunpack.c.h.b16 %v10758
      %v10873 = vunpack.c.l.b16 %v10759
      %v10874 = vunpack.c.h.b16 %v10759
      %v10875 = vunpack.c.l.b16 %v10760
      %v10876 = vunpack.c.h.b16 %v10760
      %v10877 = vunpack.c.l.b16 %v10761
      %v10878 = vunpack.c.h.b16 %v10761
      %v10879 = vpack.c.b16 %v10817, %v10815
      %v10880 = vpack.c.b16 %v10818, %v10816
      %v10881 = vpack.c.b16 %v10821, %v10819
      %v10882 = vpack.c.b16 %v10822, %v10820
      %v10883 = vpack.c.b16 %v10825, %v10823
      %v10884 = vpack.c.b16 %v10826, %v10824
      %v10885 = vpack.c.b16 %v10829, %v10827
      %v10886 = vpack.c.b16 %v10830, %v10828
      %v10887 = vpack.c.b16 %v10833, %v10831
      %v10888 = vpack.c.b16 %v10834, %v10832
      %v10889 = vpack.c.b16 %v10837, %v10835
      %v10890 = vpack.c.b16 %v10838, %v10836
      %v10891 = vpack.c.b16 %v10841, %v10839
      %v10892 = vpack.c.b16 %v10842, %v10840
      %v10893 = vpack.c.b16 %v10845, %v10843
      %v10894 = vpack.c.b16 %v10846, %v10844
      %v10895 = vpack.c.b16 %v10849, %v10847
      %v10896 = vpack.c.b16 %v10850, %v10848
      %v10897 = vpack.c.b16 %v10853, %v10851
      %v10898 = vpack.c.b16 %v10854, %v10852
      %v10899 = vpack.c.b16 %v10857, %v10855
      %v10900 = vpack.c.b16 %v10858, %v10856
      %v10901 = vpack.c.b16 %v10861, %v10859
      %v10902 = vpack.c.b16 %v10862, %v10860
      %v10903 = vpack.c.b16 %v10865, %v10863
      %v10904 = vpack.c.b16 %v10866, %v10864
      %v10905 = vpack.c.b16 %v10869, %v10867
      %v10906 = vpack.c.b16 %v10870, %v10868
      %v10907 = vpack.c.b16 %v10873, %v10871
      %v10908 = vpack.c.b16 %v10874, %v10872
      %v10909 = vpack.c.b16 %v10877, %v10875
      %v10910 = vpack.c.b16 %v10878, %v10876
      %v10947 = vunpack.c.l.b16 %v10763
      %v10948 = vunpack.c.l.b16 %v10764
      %v10949 = vunpack.c.l.b16 %v10765
      %v10950 = vunpack.c.l.b16 %v10766
      %v10951 = vunpack.c.l.b16 %v10767
      %v10952 = vunpack.c.l.b16 %v10768
      %v10953 = vunpack.c.l.b16 %v10769
      %v10954 = vunpack.c.l.b16 %v10770
      %v10955 = vunpack.c.l.b16 %v10771
      %v10956 = vunpack.c.l.b16 %v10772
      %v10957 = vunpack.c.l.b16 %v10773
      %v10958 = vunpack.c.l.b16 %v10774
      %v10959 = vunpack.c.l.b16 %v10775
      %v10960 = vunpack.c.l.b16 %v10776
      %v10961 = vunpack.c.l.b16 %v10777
      %v10962 = vunpack.c.l.b16 %v10778
      %v10963 = vunpack.c.l.b16 %v10779
      %v10964 = vunpack.c.l.b16 %v10780
      %v10965 = vunpack.c.l.b16 %v10781
      %v10966 = vunpack.c.l.b16 %v10782
      %v10967 = vpack.c.b16 %v10948, %v10947
      %v10968 = vpack.c.b16 %v10950, %v10949
      %v10969 = vpack.c.b16 %v10952, %v10951
      %v10970 = vpack.c.b16 %v10954, %v10953
      %v10971 = vpack.c.b16 %v10956, %v10955
      %v10972 = vpack.c.b16 %v10958, %v10957
      %v10973 = vpack.c.b16 %v10960, %v10959
      %v10974 = vpack.c.b16 %v10962, %v10961
      %v10975 = vpack.c.b16 %v10964, %v10963
      %v10976 = vpack.c.b16 %v10966, %v10965
      %v10988 = vsel %vm9040, %v10880, 0
      %v10991 = vsel %vm9040, %v10882, 0
      %v10994 = vsel %vm9040, %v10884, 0
      %v10997 = vsel %vm9040, %v10886, 0
      %v11000 = vsel %vm9040, %v10888, 0
      %v11003 = vsel %vm9040, %v10890, 0
      %v11006 = vsel %vm9040, %v10892, 0
      %v11009 = vsel %vm9040, %v10894, 0
      %v11012 = vsel %vm9040, %v10896, 0
      %v11015 = vsel %vm9040, %v10898, 0
      %v11018 = vsel %vm9040, %v10900, 0
      %v11021 = vsel %vm9040, %v10902, 0
      %v11024 = vsel %vm9040, %v10904, 0
      %v11027 = vsel %vm9040, %v10906, 0
      %v11030 = vsel %vm9040, %v10908, 0
      %v11033 = vsel %vm9040, %v10910, 0
      %11035 = vmatpush.bf16.msra.mxu0 %v10974
      %11036 = vmatpush.bf16.msra.mxu0 %v10973
      %11037 = vmatpush.bf16.msra.mxu0 %v10972
      %11038 = vmatpush.bf16.msra.mxu0 %v10971
      %11039 = vmatpush.bf16.msra.mxu0 %v10970
      %11040 = vmatpush.bf16.msra.mxu0 %v10969
      %11041 = vmatpush.bf16.msra.mxu0 %v10968
      %11042 = vmatpush.bf16.msra.mxu0 %v10967
      %11043 = vmatmul.bf16.gmra.mxu0 %v10879
      %v11044 = vpop.f32.mrf.mxu0
      %v11045 = vadd.f32 0.0, %v11044
      %v11046 = vpop.f32.mrf.mxu0
      %v11047 = vadd.f32 0.0, %v11046
      %11048 = vmatmul.bf16.gmra.mxu0 %v10881
      %v11049 = vpop.f32.mrf.mxu0
      %v11050 = vadd.f32 0.0, %v11049
      %v11051 = vpop.f32.mrf.mxu0
      %v11052 = vadd.f32 0.0, %v11051
      %11053 = vmatmul.bf16.gmra.mxu0 %v10883
      %v11054 = vpop.f32.mrf.mxu0
      %v11055 = vadd.f32 0.0, %v11054
      %v11056 = vpop.f32.mrf.mxu0
      %v11057 = vadd.f32 0.0, %v11056
      %11058 = vmatmul.bf16.gmra.mxu0 %v10885
      %v11059 = vpop.f32.mrf.mxu0
      %v11060 = vadd.f32 0.0, %v11059
      %v11061 = vpop.f32.mrf.mxu0
      %v11062 = vadd.f32 0.0, %v11061
      %11063 = vmatmul.bf16.gmra.mxu0 %v10887
      %v11064 = vpop.f32.mrf.mxu0
      %v11065 = vadd.f32 0.0, %v11064
      %v11066 = vpop.f32.mrf.mxu0
      %v11067 = vadd.f32 0.0, %v11066
      %11068 = vmatmul.bf16.gmra.mxu0 %v10889
      %v11069 = vpop.f32.mrf.mxu0
      %v11070 = vadd.f32 0.0, %v11069
      %v11071 = vpop.f32.mrf.mxu0
      %v11072 = vadd.f32 0.0, %v11071
      %11073 = vmatmul.bf16.gmra.mxu0 %v10891
      %v11074 = vpop.f32.mrf.mxu0
      %v11075 = vadd.f32 0.0, %v11074
      %v11076 = vpop.f32.mrf.mxu0
      %v11077 = vadd.f32 0.0, %v11076
      %11078 = vmatmul.bf16.gmra.mxu0 %v10893
      %v11079 = vpop.f32.mrf.mxu0
      %v11080 = vadd.f32 0.0, %v11079
      %v11081 = vpop.f32.mrf.mxu0
      %v11082 = vadd.f32 0.0, %v11081
      %11083 = vmatmul.bf16.gmra.mxu0 %v10895
      %v11084 = vpop.f32.mrf.mxu0
      %v11085 = vadd.f32 0.0, %v11084
      %v11086 = vpop.f32.mrf.mxu0
      %v11087 = vadd.f32 0.0, %v11086
      %11088 = vmatmul.bf16.gmra.mxu0 %v10897
      %v11089 = vpop.f32.mrf.mxu0
      %v11090 = vadd.f32 0.0, %v11089
      %v11091 = vpop.f32.mrf.mxu0
      %v11092 = vadd.f32 0.0, %v11091
      %11093 = vmatmul.bf16.gmra.mxu0 %v10899
      %v11094 = vpop.f32.mrf.mxu0
      %v11095 = vadd.f32 0.0, %v11094
      %v11096 = vpop.f32.mrf.mxu0
      %v11097 = vadd.f32 0.0, %v11096
      %11098 = vmatmul.bf16.gmra.mxu0 %v10901
      %v11099 = vpop.f32.mrf.mxu0
      %v11100 = vadd.f32 0.0, %v11099
      %v11101 = vpop.f32.mrf.mxu0
      %v11102 = vadd.f32 0.0, %v11101
      %11103 = vmatmul.bf16.gmra.mxu0 %v10903
      %v11104 = vpop.f32.mrf.mxu0
      %v11105 = vadd.f32 0.0, %v11104
      %v11106 = vpop.f32.mrf.mxu0
      %v11107 = vadd.f32 0.0, %v11106
      %11108 = vmatmul.bf16.gmra.mxu0 %v10905
      %v11109 = vpop.f32.mrf.mxu0
      %v11110 = vadd.f32 0.0, %v11109
      %v11111 = vpop.f32.mrf.mxu0
      %v11112 = vadd.f32 0.0, %v11111
      %11113 = vmatmul.bf16.gmra.mxu0 %v10907
      %v11114 = vpop.f32.mrf.mxu0
      %v11115 = vadd.f32 0.0, %v11114
      %v11116 = vpop.f32.mrf.mxu0
      %v11117 = vadd.f32 0.0, %v11116
      %11118 = vmatmul.bf16.gmra.mxu0 %v10909
      %v11119 = vpop.f32.mrf.mxu0
      %v11120 = vadd.f32 0.0, %v11119
      %v11121 = vpop.f32.mrf.mxu0
      %v11122 = vadd.f32 0.0, %v11121
      %11123 = vdwg.mxu0
      %11124 = vmatpush.bf16.msra.mxu0 0
      %11125 = vmatpush.bf16.msra.mxu0 0
      %11126 = vmatpush.bf16.msra.mxu0 0
      %11127 = vmatpush.bf16.msra.mxu0 0
      %11128 = vmatpush.bf16.msra.mxu0 0
      %11129 = vmatpush.bf16.msra.mxu0 0
      %11130 = vmatpush.bf16.msra.mxu0 %v10976
      %11131 = vmatpush.bf16.msra.mxu0 %v10975
      %11132 = vmatmul.bf16.gmra.mxu0 %v10988
      %v11133 = vpop.f32.mrf.mxu0
      %v11134 = vadd.f32 %v11045, %v11133
      %v11135 = vpop.f32.mrf.mxu0
      %v11136 = vadd.f32 %v11047, %v11135
      %11137 = vmatmul.bf16.gmra.mxu0 %v10991
      %v11138 = vpop.f32.mrf.mxu0
      %v11139 = vadd.f32 %v11050, %v11138
      %v11140 = vpop.f32.mrf.mxu0
      %v11141 = vadd.f32 %v11052, %v11140
      %11142 = vmatmul.bf16.gmra.mxu0 %v10994
      %v11143 = vpop.f32.mrf.mxu0
      %v11144 = vadd.f32 %v11055, %v11143
      %v11145 = vpop.f32.mrf.mxu0
      %v11146 = vadd.f32 %v11057, %v11145
      %11147 = vmatmul.bf16.gmra.mxu0 %v10997
      %v11148 = vpop.f32.mrf.mxu0
      %v11149 = vadd.f32 %v11060, %v11148
      %v11150 = vpop.f32.mrf.mxu0
      %v11151 = vadd.f32 %v11062, %v11150
      %11152 = vmatmul.bf16.gmra.mxu0 %v11000
      %v11153 = vpop.f32.mrf.mxu0
      %v11154 = vadd.f32 %v11065, %v11153
      %v11155 = vpop.f32.mrf.mxu0
      %v11156 = vadd.f32 %v11067, %v11155
      %11157 = vmatmul.bf16.gmra.mxu0 %v11003
      %v11158 = vpop.f32.mrf.mxu0
      %v11159 = vadd.f32 %v11070, %v11158
      %v11160 = vpop.f32.mrf.mxu0
      %v11161 = vadd.f32 %v11072, %v11160
      %11162 = vmatmul.bf16.gmra.mxu0 %v11006
      %v11163 = vpop.f32.mrf.mxu0
      %v11164 = vadd.f32 %v11075, %v11163
      %v11165 = vpop.f32.mrf.mxu0
      %v11166 = vadd.f32 %v11077, %v11165
      %11167 = vmatmul.bf16.gmra.mxu0 %v11009
      %v11168 = vpop.f32.mrf.mxu0
      %v11169 = vadd.f32 %v11080, %v11168
      %v11170 = vpop.f32.mrf.mxu0
      %v11171 = vadd.f32 %v11082, %v11170
      %11172 = vmatmul.bf16.gmra.mxu0 %v11012
      %v11173 = vpop.f32.mrf.mxu0
      %v11174 = vadd.f32 %v11085, %v11173
      %v11175 = vpop.f32.mrf.mxu0
      %v11176 = vadd.f32 %v11087, %v11175
      %11177 = vmatmul.bf16.gmra.mxu0 %v11015
      %v11178 = vpop.f32.mrf.mxu0
      %v11179 = vadd.f32 %v11090, %v11178
      %v11180 = vpop.f32.mrf.mxu0
      %v11181 = vadd.f32 %v11092, %v11180
      %11182 = vmatmul.bf16.gmra.mxu0 %v11018
      %v11183 = vpop.f32.mrf.mxu0
      %v11184 = vadd.f32 %v11095, %v11183
      %v11185 = vpop.f32.mrf.mxu0
      %v11186 = vadd.f32 %v11097, %v11185
      %11187 = vmatmul.bf16.gmra.mxu0 %v11021
      %v11188 = vpop.f32.mrf.mxu0
      %v11189 = vadd.f32 %v11100, %v11188
      %v11190 = vpop.f32.mrf.mxu0
      %v11191 = vadd.f32 %v11102, %v11190
      %11192 = vmatmul.bf16.gmra.mxu0 %v11024
      %v11193 = vpop.f32.mrf.mxu0
      %v11194 = vadd.f32 %v11105, %v11193
      %v11195 = vpop.f32.mrf.mxu0
      %v11196 = vadd.f32 %v11107, %v11195
      %11197 = vmatmul.bf16.gmra.mxu0 %v11027
      %v11198 = vpop.f32.mrf.mxu0
      %v11199 = vadd.f32 %v11110, %v11198
      %v11200 = vpop.f32.mrf.mxu0
      %v11201 = vadd.f32 %v11112, %v11200
      %11202 = vmatmul.bf16.gmra.mxu0 %v11030
      %v11203 = vpop.f32.mrf.mxu0
      %v11204 = vadd.f32 %v11115, %v11203
      %v11205 = vpop.f32.mrf.mxu0
      %v11206 = vadd.f32 %v11117, %v11205
      %11207 = vmatmul.bf16.gmra.mxu0 %v11033
      %v11208 = vpop.f32.mrf.mxu0
      %v11209 = vadd.f32 %v11120, %v11208
      %v11210 = vpop.f32.mrf.mxu0
      %v11211 = vadd.f32 %v11122, %v11210
      %11212 = vdwg.mxu0
      %v11213 = vadd.f32 %v10697, %v11134
      %v11214 = vadd.f32 %v10698, %v11136
      %v11215 = vadd.f32 %v10699, %v11139
      %v11216 = vadd.f32 %v10700, %v11141
      %v11217 = vadd.f32 %v10701, %v11144
      %v11218 = vadd.f32 %v10702, %v11146
      %v11219 = vadd.f32 %v10703, %v11149
      %v11220 = vadd.f32 %v10704, %v11151
      %v11221 = vadd.f32 %v10705, %v11154
      %v11222 = vadd.f32 %v10706, %v11156
      %v11223 = vadd.f32 %v10707, %v11159
      %v11224 = vadd.f32 %v10708, %v11161
      %v11225 = vadd.f32 %v10709, %v11164
      %v11226 = vadd.f32 %v10710, %v11166
      %v11227 = vadd.f32 %v10711, %v11169
      %v11228 = vadd.f32 %v10712, %v11171
      %v11229 = vadd.f32 %v10713, %v11174
      %v11230 = vadd.f32 %v10714, %v11176
      %v11231 = vadd.f32 %v10715, %v11179
      %v11232 = vadd.f32 %v10716, %v11181
      %v11233 = vadd.f32 %v10717, %v11184
      %v11234 = vadd.f32 %v10718, %v11186
      %v11235 = vadd.f32 %v10719, %v11189
      %v11236 = vadd.f32 %v10720, %v11191
      %v11237 = vadd.f32 %v10721, %v11194
      %v11238 = vadd.f32 %v10722, %v11196
      %v11239 = vadd.f32 %v10723, %v11199
      %v11240 = vadd.f32 %v10724, %v11201
      %v11241 = vadd.f32 %v10725, %v11204
      %v11242 = vadd.f32 %v10726, %v11206
      %v11243 = vadd.f32 %v10727, %v11209
      %v11244 = vadd.f32 %v10728, %v11211
      %v11245 = vld [vmem:[%s6] sm:$0x1]
      %v11247 = vperm.slane %v11245, 0
      %v11249 = vadd.f32 %v11213, %v11247
      %v11250 = vadd.f32 %v11214, %v11247
      %v11251 = vadd.f32 %v11215, %v11247
      %v11252 = vadd.f32 %v11216, %v11247
      %v11253 = vadd.f32 %v11217, %v11247
      %v11254 = vadd.f32 %v11218, %v11247
      %v11255 = vadd.f32 %v11219, %v11247
      %v11256 = vadd.f32 %v11220, %v11247
      %v11257 = vadd.f32 %v11221, %v11247
      %v11258 = vadd.f32 %v11222, %v11247
      %v11259 = vadd.f32 %v11223, %v11247
      %v11260 = vadd.f32 %v11224, %v11247
      %v11261 = vadd.f32 %v11225, %v11247
      %v11262 = vadd.f32 %v11226, %v11247
      %v11263 = vadd.f32 %v11227, %v11247
      %v11264 = vadd.f32 %v11228, %v11247
      %v11265 = vadd.f32 %v11229, %v11247
      %v11266 = vadd.f32 %v11230, %v11247
      %v11267 = vadd.f32 %v11231, %v11247
      %v11268 = vadd.f32 %v11232, %v11247
      %v11269 = vadd.f32 %v11233, %v11247
      %v11270 = vadd.f32 %v11234, %v11247
      %v11271 = vadd.f32 %v11235, %v11247
      %v11272 = vadd.f32 %v11236, %v11247
      %v11273 = vadd.f32 %v11237, %v11247
      %v11274 = vadd.f32 %v11238, %v11247
      %v11275 = vadd.f32 %v11239, %v11247
      %v11276 = vadd.f32 %v11240, %v11247
      %v11277 = vadd.f32 %v11241, %v11247
      %v11278 = vadd.f32 %v11242, %v11247
      %v11279 = vadd.f32 %v11243, %v11247
      %v11280 = vadd.f32 %v11244, %v11247
      %v11281 = vmax.f32 %v11249, 0.0
      %v11282 = vmax.f32 %v11250, 0.0
      %v11283 = vmax.f32 %v11251, 0.0
      %v11284 = vmax.f32 %v11252, 0.0
      %v11285 = vmax.f32 %v11253, 0.0
      %v11286 = vmax.f32 %v11254, 0.0
      %v11287 = vmax.f32 %v11255, 0.0
      %v11288 = vmax.f32 %v11256, 0.0
      %v11289 = vmax.f32 %v11257, 0.0
      %v11290 = vmax.f32 %v11258, 0.0
      %v11291 = vmax.f32 %v11259, 0.0
      %v11292 = vmax.f32 %v11260, 0.0
      %v11293 = vmax.f32 %v11261, 0.0
      %v11294 = vmax.f32 %v11262, 0.0
      %v11295 = vmax.f32 %v11263, 0.0
      %v11296 = vmax.f32 %v11264, 0.0
      %v11297 = vmax.f32 %v11265, 0.0
      %v11298 = vmax.f32 %v11266, 0.0
      %v11299 = vmax.f32 %v11267, 0.0
      %v11300 = vmax.f32 %v11268, 0.0
      %v11301 = vmax.f32 %v11269, 0.0
      %v11302 = vmax.f32 %v11270, 0.0
      %v11303 = vmax.f32 %v11271, 0.0
      %v11304 = vmax.f32 %v11272, 0.0
      %v11305 = vmax.f32 %v11273, 0.0
      %v11306 = vmax.f32 %v11274, 0.0
      %v11307 = vmax.f32 %v11275, 0.0
      %v11308 = vmax.f32 %v11276, 0.0
      %v11309 = vmax.f32 %v11277, 0.0
      %v11310 = vmax.f32 %v11278, 0.0
      %v11311 = vmax.f32 %v11279, 0.0
      %v11312 = vmax.f32 %v11280, 0.0
      %11313 = vxpose.xlu0.b32.start [1/16] %v11281, 128
      %11314 = vxpose.xlu0.b32.cont [2/16] %v11282, 128
      %11315 = vxpose.xlu0.b32.cont [3/16] %v11283, 128
      %11316 = vxpose.xlu0.b32.cont [4/16] %v11284, 128
      %11317 = vxpose.xlu0.b32.cont [5/16] %v11285, 128
      %11318 = vxpose.xlu0.b32.cont [6/16] %v11286, 128
      %11319 = vxpose.xlu0.b32.cont [7/16] %v11287, 128
      %11320 = vxpose.xlu0.b32.cont [8/16] %v11288, 128
      %11321 = vxpose.xlu0.b32.cont [9/16] %v11289, 128
      %11322 = vxpose.xlu0.b32.cont [10/16] %v11290, 128
      %11323 = vxpose.xlu0.b32.cont [11/16] %v11291, 128
      %11324 = vxpose.xlu0.b32.cont [12/16] %v11292, 128
      %11325 = vxpose.xlu0.b32.cont [13/16] %v11293, 128
      %11326 = vxpose.xlu0.b32.cont [14/16] %v11294, 128
      %11327 = vxpose.xlu0.b32.cont [15/16] %v11295, 128
      %11328 = vxpose.xlu0.b32.end [16/16] %v11296, 128
      %v11329 = vpop.trf.xlu0
      %v11330 = vpop.trf.xlu0
      %v11331 = vpop.trf.xlu0
      %v11332 = vpop.trf.xlu0
      %v11333 = vpop.trf.xlu0
      %v11334 = vpop.trf.xlu0
      %v11335 = vpop.trf.xlu0
      %v11336 = vpop.trf.xlu0
      %v11337 = vpop.trf.xlu0
      %v11338 = vpop.trf.xlu0
      %v11339 = vpop.trf.xlu0
      %v11340 = vpop.trf.xlu0
      %v11341 = vpop.trf.xlu0
      %v11342 = vpop.trf.xlu0
      %v11343 = vpop.trf.xlu0
      %v11344 = vpop.trf.xlu0
      %11345 = vxpose.xlu0.b32.start [1/16] %v11297, 128
      %11346 = vxpose.xlu0.b32.cont [2/16] %v11298, 128
      %11347 = vxpose.xlu0.b32.cont [3/16] %v11299, 128
      %11348 = vxpose.xlu0.b32.cont [4/16] %v11300, 128
      %11349 = vxpose.xlu0.b32.cont [5/16] %v11301, 128
      %11350 = vxpose.xlu0.b32.cont [6/16] %v11302, 128
      %11351 = vxpose.xlu0.b32.cont [7/16] %v11303, 128
      %11352 = vxpose.xlu0.b32.cont [8/16] %v11304, 128
      %11353 = vxpose.xlu0.b32.cont [9/16] %v11305, 128
      %11354 = vxpose.xlu0.b32.cont [10/16] %v11306, 128
      %11355 = vxpose.xlu0.b32.cont [11/16] %v11307, 128
      %11356 = vxpose.xlu0.b32.cont [12/16] %v11308, 128
      %11357 = vxpose.xlu0.b32.cont [13/16] %v11309, 128
      %11358 = vxpose.xlu0.b32.cont [14/16] %v11310, 128
      %11359 = vxpose.xlu0.b32.cont [15/16] %v11311, 128
      %11360 = vxpose.xlu0.b32.end [16/16] %v11312, 128
      %v11361 = vpop.trf.xlu0
      %v11362 = vpop.trf.xlu0
      %v11363 = vpop.trf.xlu0
      %v11364 = vpop.trf.xlu0
      %v11365 = vpop.trf.xlu0
      %v11366 = vpop.trf.xlu0
      %v11367 = vpop.trf.xlu0
      %v11368 = vpop.trf.xlu0
      %v11369 = vpop.trf.xlu0
      %v11370 = vpop.trf.xlu0
      %v11371 = vpop.trf.xlu0
      %v11372 = vpop.trf.xlu0
      %v11373 = vpop.trf.xlu0
      %v11374 = vpop.trf.xlu0
      %v11375 = vpop.trf.xlu0
      %v11376 = vpop.trf.xlu0
      %11377 = vst [vmem:[%s278] sm:$0xff] %v11329
      %11378 = vst [vmem:[%s278 + $0x8] sm:$0xff] %v11361
      %p11379 = scmp.lt.s32.totalorder %s18, 1
      %s11380 = scalar_select %p11379, %s18, 1
      %s11381 = smul.addr %s11380, 2
      %s11382 = smul.addr %s11381, 8
      %s11383 = scalar_lea.vmem %s7, %s11382
      // Predicated region
      $region49: #{_srcnn_forward_impl.1} parent=47 // pred_check
        %p11384 = pneg %p188
      $region50: #{_srcnn_forward_impl.1} parent=47 // pred_check_branch
        %11386 = sbr.rel (%p11384) target = $region52
      $region51: #{_srcnn_forward_impl.1} parent=47 // pred_region
        _
      $region52: #{_srcnn_forward_impl.1} parent=47 // pred_fallthru
        _
    $region48: #{_srcnn_forward_impl.1} parent=5 // pred_fallthru
      _
    %p11387 = scmp.le.s32.totalorder 2, %s13
    // Predicated region
    $region53: #{_srcnn_forward_impl.1} parent=5 // pred_check
      %p11388 = pneg %p11387
    $region54: #{_srcnn_forward_impl.1} parent=5 // pred_check_branch
      %11390 = sbr.rel (%p11388) target = $region56
    $region55: #{_srcnn_forward_impl.1} parent=5 // pred_region
      %s11391 = ssub.s32 %s13, 2
      // Predicated region
      $region57: #{_srcnn_forward_impl.1} parent=55 // pred_check
        %p11392 = pneg %p194
      $region58: #{_srcnn_forward_impl.1} parent=55 // pred_check_branch
        %11394 = sbr.rel (%p11392) target = $region60
      $region59: #{_srcnn_forward_impl.1} parent=55 // pred_region
        %p11395 = scmp.lt.s32.totalorder %s19, 1
        %s11396 = scalar_select %p11395, %s19, 1
        %s11397 = smul.addr %s11396, 2
        %s11398 = smul.addr %s11397, 8
        %s11399 = scalar_lea.vmem %s7, %s11398
      $region60: #{_srcnn_forward_impl.1} parent=55 // pred_fallthru
        _
    $region56: #{_srcnn_forward_impl.1} parent=5 // pred_fallthru
      _
  $region6: #{_srcnn_forward_impl.1} parent=0 // loop_footer
    %s17 = sadd.s32 1, %s13
  $region7: #{_srcnn_forward_impl.1} parent=0 // loop_footer_branch
    %12 = sbr.rel target = $region3
  $region8: #{_srcnn_forward_impl.1} parent=0 // loop_exit
    _

</llo_original>
